<compile_context>
chip_gen: v7x
topology: tpu7x:2x2x1
jax: 0.10.0
libtpu: 0.0.40
codegen_flags: <defaults>
</compile_context>

<pallas_src>
import functools

import jax
import jax.numpy as jnp
from jax.experimental import pallas as pl
from jax.experimental.pallas import tpu as pltpu

LANE = 128


def round_up(x, m):
    return ((x + m - 1) // m) * m


# ------------------------------ Pallas kernel ------------------------------ #
def bottleneck_kernel(x_ref, m_ref, w1_ref, b1_ref, w2_ref, b2_ref,
                      w3_ref, b3_ref, ws_ref, bs_ref, o_ref,
                      h1_ref, acc_ref, *, wp, guard):
    """Fused 1x1 -> 3x3 -> 1x1 (+ 1x1 conv shortcut) bottleneck for one image.

    x_ref   (1, Rp, Cin)  zero-padded image, rows = flattened padded pixels
    m_ref   (1, Rp, 1)    1.0 on interior pixels, 0.0 on padding rows
    w*_ref  folded weights (BN scale already multiplied in); b*_ref biases
    o_ref   (1, Rp, Cout) output in padded coordinates (border rows = garbage)
    h1_ref  (guard + Rp + guard, Cmid) f32 scratch; guard rows stay zero
    acc_ref (Rp, Cmid)    f32 scratch accumulator for the 3x3 conv
    """
    rp = acc_ref.shape[0]
    cm = acc_ref.shape[1]

    x = x_ref[0]                                              # (Rp, Cin)

    # -- stage 1: 1x1 conv + folded BN + ReLU; zero the padding rows so the
    #    3x3 below sees correct zero spatial padding. --
    h1 = jnp.dot(x, w1_ref[...], preferred_element_type=jnp.float32)
    h1 = jnp.maximum(h1 + b1_ref[...], 0.0) * m_ref[0]
    h1_ref[0:guard, :] = jnp.zeros((guard, cm), jnp.float32)
    h1_ref[guard + rp:guard + rp + guard, :] = jnp.zeros((guard, cm), jnp.float32)
    h1_ref[guard:guard + rp, :] = h1

    # -- stage 2: 3x3 conv as 9 row-shifted matmuls accumulated in VMEM --
    acc_ref[...] = jnp.zeros_like(acc_ref)
    for t in range(9):
        dy, dx = divmod(t, 3)
        off = (dy - 1) * wp + (dx - 1)                        # constant row shift
        lhs = h1_ref[guard + off:guard + off + rp, :]         # (Rp, Cmid)
        acc_ref[...] += jnp.dot(lhs.astype(w2_ref.dtype), w2_ref[t],
                                preferred_element_type=jnp.float32)
    h2 = jnp.maximum(acc_ref[...] + b2_ref[...], 0.0)

    # -- stage 3: 1x1 conv (no act) + 1x1 conv shortcut + add + final ReLU --
    y = jnp.dot(h2.astype(w3_ref.dtype), w3_ref[...],
                preferred_element_type=jnp.float32) + b3_ref[...]
    sc = jnp.dot(x, ws_ref[...], preferred_element_type=jnp.float32) + bs_ref[...]
    o_ref[0] = jnp.maximum(y + sc, 0.0).astype(o_ref.dtype)


# ------------------------- weight / BN preparation ------------------------- #
def fold_bn(gamma, beta, mean, var, eps=1e-5):
    scale = gamma / jnp.sqrt(var + eps)
    bias = beta - mean * scale
    return scale, bias


def _prep_1x1(w_oihw, bn, k_pad, n_pad, dtype):
    scale, bias = fold_bn(*bn)
    w = jnp.transpose(w_oihw[:, :, 0, 0], (1, 0)) * scale[None, :]        # (I, O)
    w = jnp.pad(w, ((0, k_pad - w.shape[0]), (0, n_pad - w.shape[1])))
    b = jnp.pad(bias, (0, n_pad - bias.shape[0]))
    return w.astype(dtype), b.reshape(1, -1).astype(jnp.float32)


def _prep_3x3(w_oihw, bn, k_pad, n_pad, dtype):
    scale, bias = fold_bn(*bn)
    o, i = w_oihw.shape[0], w_oihw.shape[1]
    w = jnp.transpose(w_oihw, (2, 3, 1, 0)) * scale[None, None, None, :]  # (3,3,I,O)
    w = w.reshape(9, i, o)                                                # tap = dy*3+dx
    w = jnp.pad(w, ((0, 0), (0, k_pad - i), (0, n_pad - o)))
    b = jnp.pad(bias, (0, n_pad - bias.shape[0]))
    return w.astype(dtype), b.reshape(1, -1).astype(jnp.float32)


# --------------------------------- wrapper ---------------------------------- #
def bottleneck_forward(x_nchw, params, compute_dtype=jnp.float32):
    b, c_in, h, w = x_nchw.shape
    mid = params["w1"].shape[0]
    c_out = params["w3"].shape[0]

    hp, wp = h + 2, w + 2                      # spatially padded plane
    r = hp * wp                                # pixels per padded plane
    rp = round_up(r, 8)                        # rows per image (flat, padded)
    guard = round_up(wp + 1, 8)                # absorbs +/- (wp+1) 3x3 row shifts

    cin_p = round_up(c_in, LANE)
    cm = round_up(mid, LANE)
    co = round_up(c_out, LANE)

    # --- input: NCHW -> NHWC, zero-pad spatial + channels, flatten to rows ---
    x_nhwc = jnp.transpose(x_nchw, (0, 2, 3, 1))
    xp = jnp.pad(x_nhwc, ((0, 0), (1, 1), (1, 1), (0, cin_p - c_in)))
    xp = jnp.pad(xp.reshape(b, r, cin_p), ((0, 0), (0, rp - r), (0, 0)))
    xp = xp.astype(compute_dtype)

    # interior-pixel mask (shared by all images; resident in VMEM)
    yy = jnp.arange(hp)[:, None]
    xx = jnp.arange(wp)[None, :]
    interior = ((yy >= 1) & (yy <= h) & (xx >= 1) & (xx <= w)).astype(jnp.float32)
    mask = jnp.pad(interior.reshape(r), (0, rp - r)).reshape(1, rp, 1)

    # --- weights: fold BN scale into the conv weights, pad to lane width ---
    w1, b1 = _prep_1x1(params["w1"], params["bn1"], cin_p, cm, compute_dtype)
    w2, b2 = _prep_3x3(params["w2"], params["bn2"], cm, cm, compute_dtype)
    w3, b3 = _prep_1x1(params["w3"], params["bn3"], cm, co, compute_dtype)
    ws, bs = _prep_1x1(params["ws"], params["bns"], cin_p, co, compute_dtype)

    # --- VMEM budget: double-buffered IO blocks + resident weights + scratch ---
    dsz = jnp.dtype(compute_dtype).itemsize
    io_bytes = rp * cin_p * dsz + rp * 4 + rp * co * 4
    w_bytes = ((cin_p * cm + 9 * cm * cm + cm * co + cin_p * co) * dsz
               + (2 * cm + 2 * co) * 4)
    scratch_bytes = (guard + rp + guard) * cm * 4 + rp * cm * 4
    temp_bytes = 4 * rp * max(cm, co) * 4
    vmem_limit = int(max(2 * (io_bytes + w_bytes) + scratch_bytes + temp_bytes,
                         32 * 1024 * 1024))

    out = pl.pallas_call(
        functools.partial(bottleneck_kernel, wp=wp, guard=guard),
        out_shape=jax.ShapeDtypeStruct((b, rp, co), jnp.float32),
        grid=(b,),
        in_specs=[
            pl.BlockSpec((1, rp, cin_p), lambda i: (i, 0, 0)),   # x (per image)
            pl.BlockSpec((1, rp, 1), lambda i: (0, 0, 0)),       # interior mask
            pl.BlockSpec((cin_p, cm), lambda i: (0, 0)),         # w1 (BN-folded)
            pl.BlockSpec((1, cm), lambda i: (0, 0)),             # b1
            pl.BlockSpec((9, cm, cm), lambda i: (0, 0, 0)),      # w2 (per tap)
            pl.BlockSpec((1, cm), lambda i: (0, 0)),             # b2
            pl.BlockSpec((cm, co), lambda i: (0, 0)),            # w3
            pl.BlockSpec((1, co), lambda i: (0, 0)),             # b3
            pl.BlockSpec((cin_p, co), lambda i: (0, 0)),         # ws (shortcut)
            pl.BlockSpec((1, co), lambda i: (0, 0)),             # bs
        ],
        out_specs=pl.BlockSpec((1, rp, co), lambda i: (i, 0, 0)),
        scratch_shapes=[
            pltpu.VMEM((guard + rp + guard, cm), jnp.float32),   # guarded h1
            pltpu.VMEM((rp, cm), jnp.float32),                   # 3x3 accumulator
        ],
        compiler_params=pltpu.CompilerParams(
            dimension_semantics=("parallel",),
            vmem_limit_bytes=vmem_limit),
    )(xp, mask, w1, b1, w2, b2, w3, b3, ws, bs)

    # extract interior pixels / real channels, back to NCHW
    out = out[:, :r, :].reshape(b, hp, wp, co)[:, 1:1 + h, 1:1 + w, :c_out]
    return jnp.transpose(out, (0, 3, 1, 2))


# ---------------------------- pure-JAX reference ---------------------------- #
def conv_bn_ref(x_nhwc, w_oihw, bn, act):
    gamma, beta, mean, var = bn
    w = jnp.transpose(w_oihw, (2, 3, 1, 0))            # OIHW -> HWIO
    pad = w_oihw.shape[2] // 2
    y = jax.lax.conv_general_dilated(
        x_nhwc, w, (1, 1), [(pad, pad), (pad, pad)],
        dimension_numbers=("NHWC", "HWIO", "NHWC"))
    scale, bias = fold_bn(gamma, beta, mean, var)
    y = y * scale + bias
    if act == "relu":
        y = jnp.maximum(y, 0.0)
    return y


def bottleneck_ref(x_nchw, p):
    x = jnp.transpose(x_nchw, (0, 2, 3, 1))
    h = conv_bn_ref(x, p["w1"], p["bn1"], "relu")
    h = conv_bn_ref(h, p["w2"], p["bn2"], "relu")
    h = conv_bn_ref(h, p["w3"], p["bn3"], "none")
    sc = conv_bn_ref(x, p["ws"], p["bns"], "none")
    y = jnp.maximum(h + sc, 0.0)
    return jnp.transpose(y, (0, 3, 1, 2))


# ----------------------------------- main ------------------------------------ #
def make_params(key, c_in, c_out):
    mid = c_out // 4
    ks = jax.random.split(key, 16)

    def bn(k, c):
        k1, k2, k3, k4 = jax.random.split(k, 4)
        gamma = jax.random.uniform(k1, (c,), jnp.float32, 0.5, 1.5)
        beta = 0.1 * jax.random.normal(k2, (c,), jnp.float32)
        mean = 0.1 * jax.random.normal(k3, (c,), jnp.float32)
        var = jax.random.uniform(k4, (c,), jnp.float32, 0.5, 1.5)
        return (gamma, beta, mean, var)

    return {
        "w1": 0.5 * jax.random.normal(ks[0], (mid, c_in, 1, 1), jnp.float32),
        "bn1": bn(ks[1], mid),
        "w2": 0.3 * jax.random.normal(ks[2], (mid, mid, 3, 3), jnp.float32),
        "bn2": bn(ks[3], mid),
        "w3": 0.5 * jax.random.normal(ks[4], (c_out, mid, 1, 1), jnp.float32),
        "bn3": bn(ks[5], c_out),
        "ws": 0.5 * jax.random.normal(ks[6], (c_out, c_in, 1, 1), jnp.float32),
        "bns": bn(ks[7], c_out),
    }


if __name__ == "__main__":
    B, C_IN, H, W = 2, 4, 16, 16
    C_OUT = 8

    key = jax.random.PRNGKey(0)
    kx, kp = jax.random.split(key)
    x = jax.random.normal(kx, (B, C_IN, H, W), jnp.float32)   # NCHW, like PyTorch
    params = make_params(kp, C_IN, C_OUT)

    out = jax.jit(bottleneck_forward)(x, params)
    out = jax.block_until_ready(out)

    ref = bottleneck_ref(x, params)
    assert out.shape == (B, C_OUT, H, W), out.shape
    err = float(jnp.max(jnp.abs(out - ref)))
    assert err < 1e-3, err

    print("KERNEL_OK")
</pallas_src>

<mosaic_0001>
module attributes {stable_mosaic.version = 11 : i64} {
  func.func @bottleneck_kernel(%arg0: i32, %arg1: memref<1x328x128xf32, #tpu.memory_space<vmem>>, %arg2: memref<1x328x1xf32, #tpu.memory_space<vmem>>, %arg3: memref<128x128xf32, #tpu.memory_space<vmem>>, %arg4: memref<1x128xf32, #tpu.memory_space<vmem>>, %arg5: memref<9x128x128xf32, #tpu.memory_space<vmem>>, %arg6: memref<1x128xf32, #tpu.memory_space<vmem>>, %arg7: memref<128x128xf32, #tpu.memory_space<vmem>>, %arg8: memref<1x128xf32, #tpu.memory_space<vmem>>, %arg9: memref<128x128xf32, #tpu.memory_space<vmem>>, %arg10: memref<1x128xf32, #tpu.memory_space<vmem>>, %arg11: memref<1x328x128xf32, #tpu.memory_space<vmem>>, %arg12: memref<376x128xf32, #tpu.memory_space<vmem>>, %arg13: memref<328x128xf32, #tpu.memory_space<vmem>>) attributes {dimension_semantics = [#tpu.dimension_semantics<parallel>], iteration_bounds = array<i64: 2>, scalar_prefetch = 0 : i64, scratch_operands = 2 : i64, tpu.core_type = #tpu.core_type<tc>, window_params = [{transform_indices = @transform_0, window_bounds = array<i64: 1, 328, 128>}, {pipeline_mode = #tpu.pipeline_mode<synchronous>, transform_indices = @transform_1, window_bounds = array<i64: 1, 328, 1>}, {pipeline_mode = #tpu.pipeline_mode<synchronous>, transform_indices = @transform_2, window_bounds = array<i64: 128, 128>}, {pipeline_mode = #tpu.pipeline_mode<synchronous>, transform_indices = @transform_3, window_bounds = array<i64: 1, 128>}, {pipeline_mode = #tpu.pipeline_mode<synchronous>, transform_indices = @transform_4, window_bounds = array<i64: 9, 128, 128>}, {pipeline_mode = #tpu.pipeline_mode<synchronous>, transform_indices = @transform_5, window_bounds = array<i64: 1, 128>}, {pipeline_mode = #tpu.pipeline_mode<synchronous>, transform_indices = @transform_6, window_bounds = array<i64: 128, 128>}, {pipeline_mode = #tpu.pipeline_mode<synchronous>, transform_indices = @transform_7, window_bounds = array<i64: 1, 128>}, {pipeline_mode = #tpu.pipeline_mode<synchronous>, transform_indices = @transform_8, window_bounds = array<i64: 128, 128>}, {pipeline_mode = #tpu.pipeline_mode<synchronous>, transform_indices = @transform_9, window_bounds = array<i64: 1, 128>}, {transform_indices = @transform_10, window_bounds = array<i64: 1, 328, 128>}]} {
    %c0 = arith.constant 0 : index
    %c0_0 = arith.constant 0 : index
    %c0_1 = arith.constant 0 : index
    %0 = vector.load %arg1[%c0, %c0_0, %c0_1] : memref<1x328x128xf32, #tpu.memory_space<vmem>>, vector<1x328x128xf32>
    %1 = vector.shape_cast %0 : vector<1x328x128xf32> to vector<328x128xf32>
    %c0_2 = arith.constant 0 : index
    %c0_3 = arith.constant 0 : index
    %2 = vector.load %arg3[%c0_2, %c0_3] : memref<128x128xf32, #tpu.memory_space<vmem>>, vector<128x128xf32>
    %cst = arith.constant dense<0.000000e+00> : vector<328x128xf32>
    %3 = tpu.matmul %1, %2, %cst {dimension_numbers = #tpu.dot_dimension_numbers<[1], [0], [0], [1], [0, 0, 1, 1], [], []>} : vector<328x128xf32>, vector<128x128xf32>, vector<328x128xf32> -> vector<328x128xf32>
    %c0_4 = arith.constant 0 : index
    %c0_5 = arith.constant 0 : index
    %4 = vector.load %arg4[%c0_4, %c0_5] : memref<1x128xf32, #tpu.memory_space<vmem>>, vector<1x128xf32>
    %5 = vector.broadcast %4 : vector<1x128xf32> to vector<328x128xf32>
    %6 = arith.addf %3, %5 : vector<328x128xf32>
    %cst_6 = arith.constant 0.000000e+00 : f32
    %7 = vector.broadcast %cst_6 : f32 to vector<328x128xf32>
    %8 = arith.maximumf %6, %7 : vector<328x128xf32>
    %c0_7 = arith.constant 0 : index
    %c0_8 = arith.constant 0 : index
    %c0_9 = arith.constant 0 : index
    %9 = vector.load %arg2[%c0_7, %c0_8, %c0_9] : memref<1x328x1xf32, #tpu.memory_space<vmem>>, vector<1x328x1xf32>
    %10 = vector.shape_cast %9 : vector<1x328x1xf32> to vector<328x1xf32>
    %11 = vector.broadcast %10 : vector<328x1xf32> to vector<328x128xf32>
    %12 = arith.mulf %8, %11 : vector<328x128xf32>
    %cst_10 = arith.constant 0.000000e+00 : f32
    %13 = vector.broadcast %cst_10 : f32 to vector<24x128xf32>
    %c0_11 = arith.constant 0 : index
    %c0_12 = arith.constant 0 : index
    %14 = vector.load %arg12[%c0_11, %c0_12] : memref<376x128xf32, #tpu.memory_space<vmem>>, vector<24x128xf32>
    tpu.vector_store %arg12[%c0_11, %c0_12], %13 {strides = array<i32>} : memref<376x128xf32, #tpu.memory_space<vmem>>, vector<24x128xf32>,
    %cst_13 = arith.constant 0.000000e+00 : f32
    %15 = vector.broadcast %cst_13 : f32 to vector<24x128xf32>
    %c352 = arith.constant 352 : index
    %c0_14 = arith.constant 0 : index
    %16 = vector.load %arg12[%c352, %c0_14] : memref<376x128xf32, #tpu.memory_space<vmem>>, vector<24x128xf32>
    tpu.vector_store %arg12[%c352, %c0_14], %15 {strides = array<i32>} : memref<376x128xf32, #tpu.memory_space<vmem>>, vector<24x128xf32>,
    %c24 = arith.constant 24 : index
    %c0_15 = arith.constant 0 : index
    %17 = vector.load %arg12[%c24, %c0_15] : memref<376x128xf32, #tpu.memory_space<vmem>>, vector<328x128xf32>
    tpu.vector_store %arg12[%c24, %c0_15], %12 {strides = array<i32>} : memref<376x128xf32, #tpu.memory_space<vmem>>, vector<328x128xf32>,
    %cst_16 = arith.constant 0.000000e+00 : f32
    %18 = vector.broadcast %cst_16 : f32 to vector<328x128xf32>
    %c0_17 = arith.constant 0 : index
    %c0_18 = arith.constant 0 : index
    %19 = vector.load %arg13[%c0_17, %c0_18] : memref<328x128xf32, #tpu.memory_space<vmem>>, vector<328x128xf32>
    tpu.vector_store %arg13[%c0_17, %c0_18], %18 {strides = array<i32>} : memref<328x128xf32, #tpu.memory_space<vmem>>, vector<328x128xf32>,
    %c5 = arith.constant 5 : index
    %c0_19 = arith.constant 0 : index
    %20 = vector.load %arg12[%c5, %c0_19] : memref<376x128xf32, #tpu.memory_space<vmem>>, vector<328x128xf32>
    %c0_20 = arith.constant 0 : index
    %c0_21 = arith.constant 0 : index
    %21 = vector.load %arg13[%c0_20, %c0_21] : memref<328x128xf32, #tpu.memory_space<vmem>>, vector<328x128xf32>
    %c0_22 = arith.constant 0 : index
    %c0_23 = arith.constant 0 : index
    %c0_24 = arith.constant 0 : index
    %22 = vector.load %arg5[%c0_22, %c0_23, %c0_24] : memref<9x128x128xf32, #tpu.memory_space<vmem>>, vector<1x128x128xf32>
    %23 = vector.shape_cast %22 : vector<1x128x128xf32> to vector<128x128xf32>
    %cst_25 = arith.constant dense<0.000000e+00> : vector<328x128xf32>
    %24 = tpu.matmul %20, %23, %cst_25 {dimension_numbers = #tpu.dot_dimension_numbers<[1], [0], [0], [1], [0, 0, 1, 1], [], []>} : vector<328x128xf32>, vector<128x128xf32>, vector<328x128xf32> -> vector<328x128xf32>
    %25 = arith.addf %21, %24 : vector<328x128xf32>
    %c0_26 = arith.constant 0 : index
    %c0_27 = arith.constant 0 : index
    %26 = vector.load %arg13[%c0_26, %c0_27] : memref<328x128xf32, #tpu.memory_space<vmem>>, vector<328x128xf32>
    tpu.vector_store %arg13[%c0_26, %c0_27], %25 {strides = array<i32>} : memref<328x128xf32, #tpu.memory_space<vmem>>, vector<328x128xf32>,
    %c6 = arith.constant 6 : index
    %c0_28 = arith.constant 0 : index
    %27 = vector.load %arg12[%c6, %c0_28] : memref<376x128xf32, #tpu.memory_space<vmem>>, vector<328x128xf32>
    %c0_29 = arith.constant 0 : index
    %c0_30 = arith.constant 0 : index
    %28 = vector.load %arg13[%c0_29, %c0_30] : memref<328x128xf32, #tpu.memory_space<vmem>>, vector<328x128xf32>
    %c1 = arith.constant 1 : index
    %c0_31 = arith.constant 0 : index
    %c0_32 = arith.constant 0 : index
    %29 = vector.load %arg5[%c1, %c0_31, %c0_32] : memref<9x128x128xf32, #tpu.memory_space<vmem>>, vector<1x128x128xf32>
    %30 = vector.shape_cast %29 : vector<1x128x128xf32> to vector<128x128xf32>
    %cst_33 = arith.constant dense<0.000000e+00> : vector<328x128xf32>
    %31 = tpu.matmul %27, %30, %cst_33 {dimension_numbers = #tpu.dot_dimension_numbers<[1], [0], [0], [1], [0, 0, 1, 1], [], []>} : vector<328x128xf32>, vector<128x128xf32>, vector<328x128xf32> -> vector<328x128xf32>
    %32 = arith.addf %28, %31 : vector<328x128xf32>
    %c0_34 = arith.constant 0 : index
    %c0_35 = arith.constant 0 : index
    %33 = vector.load %arg13[%c0_34, %c0_35] : memref<328x128xf32, #tpu.memory_space<vmem>>, vector<328x128xf32>
    tpu.vector_store %arg13[%c0_34, %c0_35], %32 {strides = array<i32>} : memref<328x128xf32, #tpu.memory_space<vmem>>, vector<328x128xf32>,
    %c7 = arith.constant 7 : index
    %c0_36 = arith.constant 0 : index
    %34 = vector.load %arg12[%c7, %c0_36] : memref<376x128xf32, #tpu.memory_space<vmem>>, vector<328x128xf32>
    %c0_37 = arith.constant 0 : index
    %c0_38 = arith.constant 0 : index
    %35 = vector.load %arg13[%c0_37, %c0_38] : memref<328x128xf32, #tpu.memory_space<vmem>>, vector<328x128xf32>
    %c2 = arith.constant 2 : index
    %c0_39 = arith.constant 0 : index
    %c0_40 = arith.constant 0 : index
    %36 = vector.load %arg5[%c2, %c0_39, %c0_40] : memref<9x128x128xf32, #tpu.memory_space<vmem>>, vector<1x128x128xf32>
    %37 = vector.shape_cast %36 : vector<1x128x128xf32> to vector<128x128xf32>
    %cst_41 = arith.constant dense<0.000000e+00> : vector<328x128xf32>
    %38 = tpu.matmul %34, %37, %cst_41 {dimension_numbers = #tpu.dot_dimension_numbers<[1], [0], [0], [1], [0, 0, 1, 1], [], []>} : vector<328x128xf32>, vector<128x128xf32>, vector<328x128xf32> -> vector<328x128xf32>
    %39 = arith.addf %35, %38 : vector<328x128xf32>
    %c0_42 = arith.constant 0 : index
    %c0_43 = arith.constant 0 : index
    %40 = vector.load %arg13[%c0_42, %c0_43] : memref<328x128xf32, #tpu.memory_space<vmem>>, vector<328x128xf32>
    tpu.vector_store %arg13[%c0_42, %c0_43], %39 {strides = array<i32>} : memref<328x128xf32, #tpu.memory_space<vmem>>, vector<328x128xf32>,
    %c23 = arith.constant 23 : index
    %c0_44 = arith.constant 0 : index
    %41 = vector.load %arg12[%c23, %c0_44] : memref<376x128xf32, #tpu.memory_space<vmem>>, vector<328x128xf32>
    %c0_45 = arith.constant 0 : index
    %c0_46 = arith.constant 0 : index
    %42 = vector.load %arg13[%c0_45, %c0_46] : memref<328x128xf32, #tpu.memory_space<vmem>>, vector<328x128xf32>
    %c3 = arith.constant 3 : index
    %c0_47 = arith.constant 0 : index
    %c0_48 = arith.constant 0 : index
    %43 = vector.load %arg5[%c3, %c0_47, %c0_48] : memref<9x128x128xf32, #tpu.memory_space<vmem>>, vector<1x128x128xf32>
    %44 = vector.shape_cast %43 : vector<1x128x128xf32> to vector<128x128xf32>
    %cst_49 = arith.constant dense<0.000000e+00> : vector<328x128xf32>
    %45 = tpu.matmul %41, %44, %cst_49 {dimension_numbers = #tpu.dot_dimension_numbers<[1], [0], [0], [1], [0, 0, 1, 1], [], []>} : vector<328x128xf32>, vector<128x128xf32>, vector<328x128xf32> -> vector<328x128xf32>
    %46 = arith.addf %42, %45 : vector<328x128xf32>
    %c0_50 = arith.constant 0 : index
    %c0_51 = arith.constant 0 : index
    %47 = vector.load %arg13[%c0_50, %c0_51] : memref<328x128xf32, #tpu.memory_space<vmem>>, vector<328x128xf32>
    tpu.vector_store %arg13[%c0_50, %c0_51], %46 {strides = array<i32>} : memref<328x128xf32, #tpu.memory_space<vmem>>, vector<328x128xf32>,
    %c24_52 = arith.constant 24 : index
    %c0_53 = arith.constant 0 : index
    %48 = vector.load %arg12[%c24_52, %c0_53] : memref<376x128xf32, #tpu.memory_space<vmem>>, vector<328x128xf32>
    %c0_54 = arith.constant 0 : index
    %c0_55 = arith.constant 0 : index
    %49 = vector.load %arg13[%c0_54, %c0_55] : memref<328x128xf32, #tpu.memory_space<vmem>>, vector<328x128xf32>
    %c4 = arith.constant 4 : index
    %c0_56 = arith.constant 0 : index
    %c0_57 = arith.constant 0 : index
    %50 = vector.load %arg5[%c4, %c0_56, %c0_57] : memref<9x128x128xf32, #tpu.memory_space<vmem>>, vector<1x128x128xf32>
    %51 = vector.shape_cast %50 : vector<1x128x128xf32> to vector<128x128xf32>
    %cst_58 = arith.constant dense<0.000000e+00> : vector<328x128xf32>
    %52 = tpu.matmul %48, %51, %cst_58 {dimension_numbers = #tpu.dot_dimension_numbers<[1], [0], [0], [1], [0, 0, 1, 1], [], []>} : vector<328x128xf32>, vector<128x128xf32>, vector<328x128xf32> -> vector<328x128xf32>
    %53 = arith.addf %49, %52 : vector<328x128xf32>
    %c0_59 = arith.constant 0 : index
    %c0_60 = arith.constant 0 : index
    %54 = vector.load %arg13[%c0_59, %c0_60] : memref<328x128xf32, #tpu.memory_space<vmem>>, vector<328x128xf32>
    tpu.vector_store %arg13[%c0_59, %c0_60], %53 {strides = array<i32>} : memref<328x128xf32, #tpu.memory_space<vmem>>, vector<328x128xf32>,
    %c25 = arith.constant 25 : index
    %c0_61 = arith.constant 0 : index
    %55 = vector.load %arg12[%c25, %c0_61] : memref<376x128xf32, #tpu.memory_space<vmem>>, vector<328x128xf32>
    %c0_62 = arith.constant 0 : index
    %c0_63 = arith.constant 0 : index
    %56 = vector.load %arg13[%c0_62, %c0_63] : memref<328x128xf32, #tpu.memory_space<vmem>>, vector<328x128xf32>
    %c5_64 = arith.constant 5 : index
    %c0_65 = arith.constant 0 : index
    %c0_66 = arith.constant 0 : index
    %57 = vector.load %arg5[%c5_64, %c0_65, %c0_66] : memref<9x128x128xf32, #tpu.memory_space<vmem>>, vector<1x128x128xf32>
    %58 = vector.shape_cast %57 : vector<1x128x128xf32> to vector<128x128xf32>
    %cst_67 = arith.constant dense<0.000000e+00> : vector<328x128xf32>
    %59 = tpu.matmul %55, %58, %cst_67 {dimension_numbers = #tpu.dot_dimension_numbers<[1], [0], [0], [1], [0, 0, 1, 1], [], []>} : vector<328x128xf32>, vector<128x128xf32>, vector<328x128xf32> -> vector<328x128xf32>
    %60 = arith.addf %56, %59 : vector<328x128xf32>
    %c0_68 = arith.constant 0 : index
    %c0_69 = arith.constant 0 : index
    %61 = vector.load %arg13[%c0_68, %c0_69] : memref<328x128xf32, #tpu.memory_space<vmem>>, vector<328x128xf32>
    tpu.vector_store %arg13[%c0_68, %c0_69], %60 {strides = array<i32>} : memref<328x128xf32, #tpu.memory_space<vmem>>, vector<328x128xf32>,
    %c41 = arith.constant 41 : index
    %c0_70 = arith.constant 0 : index
    %62 = vector.load %arg12[%c41, %c0_70] : memref<376x128xf32, #tpu.memory_space<vmem>>, vector<328x128xf32>
    %c0_71 = arith.constant 0 : index
    %c0_72 = arith.constant 0 : index
    %63 = vector.load %arg13[%c0_71, %c0_72] : memref<328x128xf32, #tpu.memory_space<vmem>>, vector<328x128xf32>
    %c6_73 = arith.constant 6 : index
    %c0_74 = arith.constant 0 : index
    %c0_75 = arith.constant 0 : index
    %64 = vector.load %arg5[%c6_73, %c0_74, %c0_75] : memref<9x128x128xf32, #tpu.memory_space<vmem>>, vector<1x128x128xf32>
    %65 = vector.shape_cast %64 : vector<1x128x128xf32> to vector<128x128xf32>
    %cst_76 = arith.constant dense<0.000000e+00> : vector<328x128xf32>
    %66 = tpu.matmul %62, %65, %cst_76 {dimension_numbers = #tpu.dot_dimension_numbers<[1], [0], [0], [1], [0, 0, 1, 1], [], []>} : vector<328x128xf32>, vector<128x128xf32>, vector<328x128xf32> -> vector<328x128xf32>
    %67 = arith.addf %63, %66 : vector<328x128xf32>
    %c0_77 = arith.constant 0 : index
    %c0_78 = arith.constant 0 : index
    %68 = vector.load %arg13[%c0_77, %c0_78] : memref<328x128xf32, #tpu.memory_space<vmem>>, vector<328x128xf32>
    tpu.vector_store %arg13[%c0_77, %c0_78], %67 {strides = array<i32>} : memref<328x128xf32, #tpu.memory_space<vmem>>, vector<328x128xf32>,
    %c42 = arith.constant 42 : index
    %c0_79 = arith.constant 0 : index
    %69 = vector.load %arg12[%c42, %c0_79] : memref<376x128xf32, #tpu.memory_space<vmem>>, vector<328x128xf32>
    %c0_80 = arith.constant 0 : index
    %c0_81 = arith.constant 0 : index
    %70 = vector.load %arg13[%c0_80, %c0_81] : memref<328x128xf32, #tpu.memory_space<vmem>>, vector<328x128xf32>
    %c7_82 = arith.constant 7 : index
    %c0_83 = arith.constant 0 : index
    %c0_84 = arith.constant 0 : index
    %71 = vector.load %arg5[%c7_82, %c0_83, %c0_84] : memref<9x128x128xf32, #tpu.memory_space<vmem>>, vector<1x128x128xf32>
    %72 = vector.shape_cast %71 : vector<1x128x128xf32> to vector<128x128xf32>
    %cst_85 = arith.constant dense<0.000000e+00> : vector<328x128xf32>
    %73 = tpu.matmul %69, %72, %cst_85 {dimension_numbers = #tpu.dot_dimension_numbers<[1], [0], [0], [1], [0, 0, 1, 1], [], []>} : vector<328x128xf32>, vector<128x128xf32>, vector<328x128xf32> -> vector<328x128xf32>
    %74 = arith.addf %70, %73 : vector<328x128xf32>
    %c0_86 = arith.constant 0 : index
    %c0_87 = arith.constant 0 : index
    %75 = vector.load %arg13[%c0_86, %c0_87] : memref<328x128xf32, #tpu.memory_space<vmem>>, vector<328x128xf32>
    tpu.vector_store %arg13[%c0_86, %c0_87], %74 {strides = array<i32>} : memref<328x128xf32, #tpu.memory_space<vmem>>, vector<328x128xf32>,
    %c43 = arith.constant 43 : index
    %c0_88 = arith.constant 0 : index
    %76 = vector.load %arg12[%c43, %c0_88] : memref<376x128xf32, #tpu.memory_space<vmem>>, vector<328x128xf32>
    %c0_89 = arith.constant 0 : index
    %c0_90 = arith.constant 0 : index
    %77 = vector.load %arg13[%c0_89, %c0_90] : memref<328x128xf32, #tpu.memory_space<vmem>>, vector<328x128xf32>
    %c8 = arith.constant 8 : index
    %c0_91 = arith.constant 0 : index
    %c0_92 = arith.constant 0 : index
    %78 = vector.load %arg5[%c8, %c0_91, %c0_92] : memref<9x128x128xf32, #tpu.memory_space<vmem>>, vector<1x128x128xf32>
    %79 = vector.shape_cast %78 : vector<1x128x128xf32> to vector<128x128xf32>
    %cst_93 = arith.constant dense<0.000000e+00> : vector<328x128xf32>
    %80 = tpu.matmul %76, %79, %cst_93 {dimension_numbers = #tpu.dot_dimension_numbers<[1], [0], [0], [1], [0, 0, 1, 1], [], []>} : vector<328x128xf32>, vector<128x128xf32>, vector<328x128xf32> -> vector<328x128xf32>
    %81 = arith.addf %77, %80 : vector<328x128xf32>
    %c0_94 = arith.constant 0 : index
    %c0_95 = arith.constant 0 : index
    %82 = vector.load %arg13[%c0_94, %c0_95] : memref<328x128xf32, #tpu.memory_space<vmem>>, vector<328x128xf32>
    tpu.vector_store %arg13[%c0_94, %c0_95], %81 {strides = array<i32>} : memref<328x128xf32, #tpu.memory_space<vmem>>, vector<328x128xf32>,
    %c0_96 = arith.constant 0 : index
    %c0_97 = arith.constant 0 : index
    %83 = vector.load %arg13[%c0_96, %c0_97] : memref<328x128xf32, #tpu.memory_space<vmem>>, vector<328x128xf32>
    %c0_98 = arith.constant 0 : index
    %c0_99 = arith.constant 0 : index
    %84 = vector.load %arg6[%c0_98, %c0_99] : memref<1x128xf32, #tpu.memory_space<vmem>>, vector<1x128xf32>
    %85 = vector.broadcast %84 : vector<1x128xf32> to vector<328x128xf32>
    %86 = arith.addf %83, %85 : vector<328x128xf32>
    %cst_100 = arith.constant 0.000000e+00 : f32
    %87 = vector.broadcast %cst_100 : f32 to vector<328x128xf32>
    %88 = arith.maximumf %86, %87 : vector<328x128xf32>
    %c0_101 = arith.constant 0 : index
    %c0_102 = arith.constant 0 : index
    %89 = vector.load %arg7[%c0_101, %c0_102] : memref<128x128xf32, #tpu.memory_space<vmem>>, vector<128x128xf32>
    %cst_103 = arith.constant dense<0.000000e+00> : vector<328x128xf32>
    %90 = tpu.matmul %88, %89, %cst_103 {dimension_numbers = #tpu.dot_dimension_numbers<[1], [0], [0], [1], [0, 0, 1, 1], [], []>} : vector<328x128xf32>, vector<128x128xf32>, vector<328x128xf32> -> vector<328x128xf32>
    %c0_104 = arith.constant 0 : index
    %c0_105 = arith.constant 0 : index
    %91 = vector.load %arg8[%c0_104, %c0_105] : memref<1x128xf32, #tpu.memory_space<vmem>>, vector<1x128xf32>
    %92 = vector.broadcast %91 : vector<1x128xf32> to vector<328x128xf32>
    %93 = arith.addf %90, %92 : vector<328x128xf32>
    %c0_106 = arith.constant 0 : index
    %c0_107 = arith.constant 0 : index
    %94 = vector.load %arg9[%c0_106, %c0_107] : memref<128x128xf32, #tpu.memory_space<vmem>>, vector<128x128xf32>
    %cst_108 = arith.constant dense<0.000000e+00> : vector<328x128xf32>
    %95 = tpu.matmul %1, %94, %cst_108 {dimension_numbers = #tpu.dot_dimension_numbers<[1], [0], [0], [1], [0, 0, 1, 1], [], []>} : vector<328x128xf32>, vector<128x128xf32>, vector<328x128xf32> -> vector<328x128xf32>
    %c0_109 = arith.constant 0 : index
    %c0_110 = arith.constant 0 : index
    %96 = vector.load %arg10[%c0_109, %c0_110] : memref<1x128xf32, #tpu.memory_space<vmem>>, vector<1x128xf32>
    %97 = vector.broadcast %96 : vector<1x128xf32> to vector<328x128xf32>
    %98 = arith.addf %95, %97 : vector<328x128xf32>
    %99 = arith.addf %93, %98 : vector<328x128xf32>
    %cst_111 = arith.constant 0.000000e+00 : f32
    %100 = vector.broadcast %cst_111 : f32 to vector<328x128xf32>
    %101 = arith.maximumf %99, %100 : vector<328x128xf32>
    %c0_112 = arith.constant 0 : index
    %c0_113 = arith.constant 0 : index
    %c0_114 = arith.constant 0 : index
    %102 = vector.load %arg11[%c0_112, %c0_113, %c0_114] : memref<1x328x128xf32, #tpu.memory_space<vmem>>, vector<1x328x128xf32>
    %103 = vector.shape_cast %102 : vector<1x328x128xf32> to vector<328x128xf32>
    %104 = vector.shape_cast %101 : vector<328x128xf32> to vector<1x328x128xf32>
    tpu.vector_store %arg11[%c0_112, %c0_113, %c0_114], %104 {strides = array<i32>} : memref<1x328x128xf32, #tpu.memory_space<vmem>>, vector<1x328x128xf32>,
    return
  }
  func.func @transform_0(%arg0: i32) -> (i32, i32, i32) {
    %c0_i32 = arith.constant 0 : i32
    %c0_i32_0 = arith.constant 0 : i32
    %c0_i32_1 = arith.constant 0 : i32
    return %arg0, %c0_i32, %c0_i32_0 : i32, i32, i32
  }
  func.func @transform_1(%arg0: i32) -> (i32, i32, i32) {
    %c0_i32 = arith.constant 0 : i32
    %c0_i32_0 = arith.constant 0 : i32
    %c0_i32_1 = arith.constant 0 : i32
    %c0_i32_2 = arith.constant 0 : i32
    return %c0_i32, %c0_i32_0, %c0_i32_1 : i32, i32, i32
  }
  func.func @transform_2(%arg0: i32) -> (i32, i32) {
    %c0_i32 = arith.constant 0 : i32
    %c0_i32_0 = arith.constant 0 : i32
    %c0_i32_1 = arith.constant 0 : i32
    return %c0_i32, %c0_i32_0 : i32, i32
  }
  func.func @transform_3(%arg0: i32) -> (i32, i32) {
    %c0_i32 = arith.constant 0 : i32
    %c0_i32_0 = arith.constant 0 : i32
    %c0_i32_1 = arith.constant 0 : i32
    return %c0_i32, %c0_i32_0 : i32, i32
  }
  func.func @transform_4(%arg0: i32) -> (i32, i32, i32) {
    %c0_i32 = arith.constant 0 : i32
    %c0_i32_0 = arith.constant 0 : i32
    %c0_i32_1 = arith.constant 0 : i32
    %c0_i32_2 = arith.constant 0 : i32
    return %c0_i32, %c0_i32_0, %c0_i32_1 : i32, i32, i32
  }
  func.func @transform_5(%arg0: i32) -> (i32, i32) {
    %c0_i32 = arith.constant 0 : i32
    %c0_i32_0 = arith.constant 0 : i32
    %c0_i32_1 = arith.constant 0 : i32
    return %c0_i32, %c0_i32_0 : i32, i32
  }
  func.func @transform_6(%arg0: i32) -> (i32, i32) {
    %c0_i32 = arith.constant 0 : i32
    %c0_i32_0 = arith.constant 0 : i32
    %c0_i32_1 = arith.constant 0 : i32
    return %c0_i32, %c0_i32_0 : i32, i32
  }
  func.func @transform_7(%arg0: i32) -> (i32, i32) {
    %c0_i32 = arith.constant 0 : i32
    %c0_i32_0 = arith.constant 0 : i32
    %c0_i32_1 = arith.constant 0 : i32
    return %c0_i32, %c0_i32_0 : i32, i32
  }
  func.func @transform_8(%arg0: i32) -> (i32, i32) {
    %c0_i32 = arith.constant 0 : i32
    %c0_i32_0 = arith.constant 0 : i32
    %c0_i32_1 = arith.constant 0 : i32
    return %c0_i32, %c0_i32_0 : i32, i32
  }
  func.func @transform_9(%arg0: i32) -> (i32, i32) {
    %c0_i32 = arith.constant 0 : i32
    %c0_i32_0 = arith.constant 0 : i32
    %c0_i32_1 = arith.constant 0 : i32
    return %c0_i32, %c0_i32_0 : i32, i32
  }
  func.func @transform_10(%arg0: i32) -> (i32, i32, i32) {
    %c0_i32 = arith.constant 0 : i32
    %c0_i32_0 = arith.constant 0 : i32
    %c0_i32_1 = arith.constant 0 : i32
    return %arg0, %c0_i32, %c0_i32_0 : i32, i32, i32
  }
}

</mosaic_0001>

<llo_original>
// kernel: bottleneck_forward.1
$region0: #{bottleneck_forward.1}
  #allocation0 [shape = 'u32[]', space=smem, size = 0x4, offset = 0x4, fixed_abs, tag = 'smem constant byte address 0x4 - core index']
  #allocation1 [shape = 'u32[144,128]{1,0:T(1,128)}', space=vmem, size = 0x12000, scoped, tag = 'internal scratch']
  #allocation2 [shape = 'f32[376,128]{1,0:T(8,128)}', space=vmem, size = 0x2f000, scoped, tag = 'scratch operand']
  #allocation3 [shape = 'f32[328,128]{1,0:T(8,128)}', space=vmem, size = 0x29000, scoped, tag = 'scratch operand']
  %s0 = inlined_call_operand.vmem [shape: f32[2,328,128], index: 0, kind: input, shape index: {}]
  %s1 = inlined_call_operand.vmem [shape: f32[1,328,1], index: 1, kind: input, shape index: {}]
  %s2 = inlined_call_operand.vmem [shape: f32[128,128], index: 2, kind: input, shape index: {}]
  %s3 = inlined_call_operand.vmem [shape: f32[1,128], index: 3, kind: input, shape index: {}]
  %s4 = inlined_call_operand.vmem [shape: f32[9,128,128], index: 4, kind: input, shape index: {}]
  %s5 = inlined_call_operand.vmem [shape: f32[1,128], index: 5, kind: input, shape index: {}]
  %s6 = inlined_call_operand.vmem [shape: f32[128,128], index: 6, kind: input, shape index: {}]
  %s7 = inlined_call_operand.vmem [shape: f32[1,128], index: 7, kind: input, shape index: {}]
  %s8 = inlined_call_operand.vmem [shape: f32[128,128], index: 8, kind: input, shape index: {}]
  %s9 = inlined_call_operand.vmem [shape: f32[1,128], index: 9, kind: input, shape index: {}]
  %s10 = inlined_call_operand.vmem [shape: f32[2,328,128], index: 10, kind: output, shape index: {}]
  %s11 = sld [smem:[#allocation0]]
  $region73: #{bottleneck_forward.1} parent=0
    _
  %s13 = ssub.s32 1, %s11
  %s14 = scalar_select 0, %s13, %s11
  loop: start=0, step=1, limit=4
  $region2: #{bottleneck_forward.1} parent=0 // loop_pre_header
    _
  $region3: #{bottleneck_forward.1} parent=0 // loop_header
    %s16 = sphi 0, %s20
    %p17 = scmp.ge.s32.totalorder %s16, 4
    %s26 = sphi 0, %s28
    %s29 = sphi 0, %s26
    %s30 = sphi 0, %s29
    %s46 = sphi 0, %s30
    %s50 = sphi 0, %s50
    %s52 = sphi 0, %s50
    %s53 = sphi 0, %s52
    %s67 = sphi 0, %s53
    %s71 = sphi 0, %s71
    %s73 = sphi 0, %s71
    %s74 = sphi 0, %s73
    %s88 = sphi 0, %s74
    %s92 = sphi 0, %s92
    %s94 = sphi 0, %s92
    %s95 = sphi 0, %s94
    %s109 = sphi 0, %s95
    %s113 = sphi 0, %s113
    %s115 = sphi 0, %s113
    %s116 = sphi 0, %s115
    %s130 = sphi 0, %s116
    %s134 = sphi 0, %s134
    %s136 = sphi 0, %s134
    %s137 = sphi 0, %s136
    %s151 = sphi 0, %s137
    %s155 = sphi 0, %s155
    %s157 = sphi 0, %s155
    %s158 = sphi 0, %s157
    %s172 = sphi 0, %s158
    %s176 = sphi 0, %s176
    %s178 = sphi 0, %s176
    %s179 = sphi 0, %s178
    %s193 = sphi 0, %s179
    %s197 = sphi 0, %s197
    %s199 = sphi 0, %s197
    %s200 = sphi 0, %s199
    %s214 = sphi 0, %s200
    %s218 = sphi 0, %s218
    %s220 = sphi 0, %s218
    %s221 = sphi 0, %s220
    %s235 = sphi 0, %s221
    %s241 = sphi 0, %s243
    %s244 = sphi 0, %s241
    %s245 = sphi 0, %s244
    %s261 = sphi 0, %s245
  $region4: #{bottleneck_forward.1} parent=0 // loop_header_branch
    %19 = sbr.rel (%p17) target = $region8
  $region5: #{bottleneck_forward.1} parent=0 // loop_body
    %s21 = ssub.s32 %s16, 1
    %s22 = ssub.s32 %s16, 2
    %s23 = sadd.s32 %s16, 1
    %s24 = ssub.s32 %s16, %s23
    %p25 = scmp.eq.s32.totalorder %s24, 0
    %s27 = sadd.s32 %s26, 1
    %s28 = scalar_select %p25, %s26, %s27
    %p31 = pneg %p25
    %p32 = scmp.eq.s32.totalorder %s16, 1
    %p33 = por %p31, %p32
    %p34 = scmp.ne.s32.totalorder %s26, %s29
    %p35 = scmp.eq.s32.totalorder %s16, 0
    %p36 = por %p34, %p35
    %p37 = scmp.ne.s32.totalorder %s26, %s29
    %p38 = scmp.eq.s32.totalorder %s21, 1
    %p39 = por %p37, %p38
    %p40 = scmp.ne.s32.totalorder %s29, %s30
    %p41 = scmp.eq.s32.totalorder %s21, 0
    %p42 = por %p40, %p41
    %p43 = scmp.ne.s32.totalorder %s29, %s30
    %p44 = scmp.eq.s32.totalorder %s22, 1
    %p45 = por %p43, %p44
    %p47 = scmp.ne.s32.totalorder %s30, %s46
    %p48 = scmp.eq.s32.totalorder %s22, 0
    %p49 = por %p47, %p48
    %s51 = sadd.s32 %s50, 1
    %p54 = scmp.eq.s32.totalorder %s16, 1
    %p55 = scmp.ne.s32.totalorder %s50, %s52
    %p56 = scmp.eq.s32.totalorder %s16, 0
    %p57 = por %p55, %p56
    %p58 = scmp.ne.s32.totalorder %s50, %s52
    %p59 = scmp.eq.s32.totalorder %s21, 1
    %p60 = por %p58, %p59
    %p61 = scmp.ne.s32.totalorder %s52, %s53
    %p62 = scmp.eq.s32.totalorder %s21, 0
    %p63 = por %p61, %p62
    %p64 = scmp.ne.s32.totalorder %s52, %s53
    %p65 = scmp.eq.s32.totalorder %s22, 1
    %p66 = por %p64, %p65
    %p68 = scmp.ne.s32.totalorder %s53, %s67
    %p69 = scmp.eq.s32.totalorder %s22, 0
    %p70 = por %p68, %p69
    %s72 = sadd.s32 %s71, 1
    %p75 = scmp.eq.s32.totalorder %s16, 1
    %p76 = scmp.ne.s32.totalorder %s71, %s73
    %p77 = scmp.eq.s32.totalorder %s16, 0
    %p78 = por %p76, %p77
    %p79 = scmp.ne.s32.totalorder %s71, %s73
    %p80 = scmp.eq.s32.totalorder %s21, 1
    %p81 = por %p79, %p80
    %p82 = scmp.ne.s32.totalorder %s73, %s74
    %p83 = scmp.eq.s32.totalorder %s21, 0
    %p84 = por %p82, %p83
    %p85 = scmp.ne.s32.totalorder %s73, %s74
    %p86 = scmp.eq.s32.totalorder %s22, 1
    %p87 = por %p85, %p86
    %p89 = scmp.ne.s32.totalorder %s74, %s88
    %p90 = scmp.eq.s32.totalorder %s22, 0
    %p91 = por %p89, %p90
    %s93 = sadd.s32 %s92, 1
    %p96 = scmp.eq.s32.totalorder %s16, 1
    %p97 = scmp.ne.s32.totalorder %s92, %s94
    %p98 = scmp.eq.s32.totalorder %s16, 0
    %p99 = por %p97, %p98
    %p100 = scmp.ne.s32.totalorder %s92, %s94
    %p101 = scmp.eq.s32.totalorder %s21, 1
    %p102 = por %p100, %p101
    %p103 = scmp.ne.s32.totalorder %s94, %s95
    %p104 = scmp.eq.s32.totalorder %s21, 0
    %p105 = por %p103, %p104
    %p106 = scmp.ne.s32.totalorder %s94, %s95
    %p107 = scmp.eq.s32.totalorder %s22, 1
    %p108 = por %p106, %p107
    %p110 = scmp.ne.s32.totalorder %s95, %s109
    %p111 = scmp.eq.s32.totalorder %s22, 0
    %p112 = por %p110, %p111
    %s114 = sadd.s32 %s113, 1
    %p117 = scmp.eq.s32.totalorder %s16, 1
    %p118 = scmp.ne.s32.totalorder %s113, %s115
    %p119 = scmp.eq.s32.totalorder %s16, 0
    %p120 = por %p118, %p119
    %p121 = scmp.ne.s32.totalorder %s113, %s115
    %p122 = scmp.eq.s32.totalorder %s21, 1
    %p123 = por %p121, %p122
    %p124 = scmp.ne.s32.totalorder %s115, %s116
    %p125 = scmp.eq.s32.totalorder %s21, 0
    %p126 = por %p124, %p125
    %p127 = scmp.ne.s32.totalorder %s115, %s116
    %p128 = scmp.eq.s32.totalorder %s22, 1
    %p129 = por %p127, %p128
    %p131 = scmp.ne.s32.totalorder %s116, %s130
    %p132 = scmp.eq.s32.totalorder %s22, 0
    %p133 = por %p131, %p132
    %s135 = sadd.s32 %s134, 1
    %p138 = scmp.eq.s32.totalorder %s16, 1
    %p139 = scmp.ne.s32.totalorder %s134, %s136
    %p140 = scmp.eq.s32.totalorder %s16, 0
    %p141 = por %p139, %p140
    %p142 = scmp.ne.s32.totalorder %s134, %s136
    %p143 = scmp.eq.s32.totalorder %s21, 1
    %p144 = por %p142, %p143
    %p145 = scmp.ne.s32.totalorder %s136, %s137
    %p146 = scmp.eq.s32.totalorder %s21, 0
    %p147 = por %p145, %p146
    %p148 = scmp.ne.s32.totalorder %s136, %s137
    %p149 = scmp.eq.s32.totalorder %s22, 1
    %p150 = por %p148, %p149
    %p152 = scmp.ne.s32.totalorder %s137, %s151
    %p153 = scmp.eq.s32.totalorder %s22, 0
    %p154 = por %p152, %p153
    %s156 = sadd.s32 %s155, 1
    %p159 = scmp.eq.s32.totalorder %s16, 1
    %p160 = scmp.ne.s32.totalorder %s155, %s157
    %p161 = scmp.eq.s32.totalorder %s16, 0
    %p162 = por %p160, %p161
    %p163 = scmp.ne.s32.totalorder %s155, %s157
    %p164 = scmp.eq.s32.totalorder %s21, 1
    %p165 = por %p163, %p164
    %p166 = scmp.ne.s32.totalorder %s157, %s158
    %p167 = scmp.eq.s32.totalorder %s21, 0
    %p168 = por %p166, %p167
    %p169 = scmp.ne.s32.totalorder %s157, %s158
    %p170 = scmp.eq.s32.totalorder %s22, 1
    %p171 = por %p169, %p170
    %p173 = scmp.ne.s32.totalorder %s158, %s172
    %p174 = scmp.eq.s32.totalorder %s22, 0
    %p175 = por %p173, %p174
    %s177 = sadd.s32 %s176, 1
    %p180 = scmp.eq.s32.totalorder %s16, 1
    %p181 = scmp.ne.s32.totalorder %s176, %s178
    %p182 = scmp.eq.s32.totalorder %s16, 0
    %p183 = por %p181, %p182
    %p184 = scmp.ne.s32.totalorder %s176, %s178
    %p185 = scmp.eq.s32.totalorder %s21, 1
    %p186 = por %p184, %p185
    %p187 = scmp.ne.s32.totalorder %s178, %s179
    %p188 = scmp.eq.s32.totalorder %s21, 0
    %p189 = por %p187, %p188
    %p190 = scmp.ne.s32.totalorder %s178, %s179
    %p191 = scmp.eq.s32.totalorder %s22, 1
    %p192 = por %p190, %p191
    %p194 = scmp.ne.s32.totalorder %s179, %s193
    %p195 = scmp.eq.s32.totalorder %s22, 0
    %p196 = por %p194, %p195
    %s198 = sadd.s32 %s197, 1
    %p201 = scmp.eq.s32.totalorder %s16, 1
    %p202 = scmp.ne.s32.totalorder %s197, %s199
    %p203 = scmp.eq.s32.totalorder %s16, 0
    %p204 = por %p202, %p203
    %p205 = scmp.ne.s32.totalorder %s197, %s199
    %p206 = scmp.eq.s32.totalorder %s21, 1
    %p207 = por %p205, %p206
    %p208 = scmp.ne.s32.totalorder %s199, %s200
    %p209 = scmp.eq.s32.totalorder %s21, 0
    %p210 = por %p208, %p209
    %p211 = scmp.ne.s32.totalorder %s199, %s200
    %p212 = scmp.eq.s32.totalorder %s22, 1
    %p213 = por %p211, %p212
    %p215 = scmp.ne.s32.totalorder %s200, %s214
    %p216 = scmp.eq.s32.totalorder %s22, 0
    %p217 = por %p215, %p216
    %s219 = sadd.s32 %s218, 1
    %p222 = scmp.eq.s32.totalorder %s16, 1
    %p223 = scmp.ne.s32.totalorder %s218, %s220
    %p224 = scmp.eq.s32.totalorder %s16, 0
    %p225 = por %p223, %p224
    %p226 = scmp.ne.s32.totalorder %s218, %s220
    %p227 = scmp.eq.s32.totalorder %s21, 1
    %p228 = por %p226, %p227
    %p229 = scmp.ne.s32.totalorder %s220, %s221
    %p230 = scmp.eq.s32.totalorder %s21, 0
    %p231 = por %p229, %p230
    %p232 = scmp.ne.s32.totalorder %s220, %s221
    %p233 = scmp.eq.s32.totalorder %s22, 1
    %p234 = por %p232, %p233
    %p236 = scmp.ne.s32.totalorder %s221, %s235
    %p237 = scmp.eq.s32.totalorder %s22, 0
    %p238 = por %p236, %p237
    %s239 = ssub.s32 %s16, %s23
    %p240 = scmp.eq.s32.totalorder %s239, 0
    %s242 = sadd.s32 %s241, 1
    %s243 = scalar_select %p240, %s241, %s242
    %p246 = pneg %p240
    %p247 = scmp.eq.s32.totalorder %s16, 1
    %p248 = por %p246, %p247
    %p249 = scmp.ne.s32.totalorder %s241, %s244
    %p250 = scmp.eq.s32.totalorder %s16, 0
    %p251 = por %p249, %p250
    %p252 = scmp.ne.s32.totalorder %s241, %s244
    %p253 = scmp.eq.s32.totalorder %s21, 1
    %p254 = por %p252, %p253
    %p255 = scmp.ne.s32.totalorder %s244, %s245
    %p256 = scmp.eq.s32.totalorder %s21, 0
    %p257 = por %p255, %p256
    %p258 = scmp.ne.s32.totalorder %s244, %s245
    %p259 = scmp.eq.s32.totalorder %s22, 1
    %p260 = por %p258, %p259
    %p262 = scmp.ne.s32.totalorder %s245, %s261
    %p263 = scmp.eq.s32.totalorder %s22, 0
    %p264 = por %p262, %p263
    %p265 = scmp.le.s32.totalorder 1, %s16
    %p266 = scmp.lt.s32.totalorder %s16, 3
    %p267 = pnand %p265, %p266
    %p268 = pneg %p267
    // Predicated region
    $region9: #{bottleneck_forward.1} parent=5 // pred_check
      _
    $region10: #{bottleneck_forward.1} parent=5 // pred_check_branch
      %270 = sbr.rel (%p267) target = $region12
    $region11: #{bottleneck_forward.1} parent=5 // pred_region
      %s271 = ssub.s32 %s16, 1
      // Predicated region
      $region13: #{bottleneck_forward.1} parent=11 // pred_check
        %p272 = pneg %p63
      $region14: #{bottleneck_forward.1} parent=11 // pred_check_branch
        %274 = sbr.rel (%p272) target = $region16
      $region15: #{bottleneck_forward.1} parent=11 // pred_region
        _
      $region16: #{bottleneck_forward.1} parent=11 // pred_fallthru
        _
      // Predicated region
      $region17: #{bottleneck_forward.1} parent=11 // pred_check
        %p275 = pneg %p84
      $region18: #{bottleneck_forward.1} parent=11 // pred_check_branch
        %277 = sbr.rel (%p275) target = $region20
      $region19: #{bottleneck_forward.1} parent=11 // pred_region
        _
      $region20: #{bottleneck_forward.1} parent=11 // pred_fallthru
        _
      // Predicated region
      $region21: #{bottleneck_forward.1} parent=11 // pred_check
        %p278 = pneg %p105
      $region22: #{bottleneck_forward.1} parent=11 // pred_check_branch
        %280 = sbr.rel (%p278) target = $region24
      $region23: #{bottleneck_forward.1} parent=11 // pred_region
        _
      $region24: #{bottleneck_forward.1} parent=11 // pred_fallthru
        _
      // Predicated region
      $region25: #{bottleneck_forward.1} parent=11 // pred_check
        %p281 = pneg %p126
      $region26: #{bottleneck_forward.1} parent=11 // pred_check_branch
        %283 = sbr.rel (%p281) target = $region28
      $region27: #{bottleneck_forward.1} parent=11 // pred_region
        _
      $region28: #{bottleneck_forward.1} parent=11 // pred_fallthru
        _
      // Predicated region
      $region29: #{bottleneck_forward.1} parent=11 // pred_check
        %p284 = pneg %p147
      $region30: #{bottleneck_forward.1} parent=11 // pred_check_branch
        %286 = sbr.rel (%p284) target = $region32
      $region31: #{bottleneck_forward.1} parent=11 // pred_region
        _
      $region32: #{bottleneck_forward.1} parent=11 // pred_fallthru
        _
      // Predicated region
      $region33: #{bottleneck_forward.1} parent=11 // pred_check
        %p287 = pneg %p168
      $region34: #{bottleneck_forward.1} parent=11 // pred_check_branch
        %289 = sbr.rel (%p287) target = $region36
      $region35: #{bottleneck_forward.1} parent=11 // pred_region
        _
      $region36: #{bottleneck_forward.1} parent=11 // pred_fallthru
        _
      // Predicated region
      $region37: #{bottleneck_forward.1} parent=11 // pred_check
        %p290 = pneg %p189
      $region38: #{bottleneck_forward.1} parent=11 // pred_check_branch
        %292 = sbr.rel (%p290) target = $region40
      $region39: #{bottleneck_forward.1} parent=11 // pred_region
        _
      $region40: #{bottleneck_forward.1} parent=11 // pred_fallthru
        _
      // Predicated region
      $region41: #{bottleneck_forward.1} parent=11 // pred_check
        %p293 = pneg %p210
      $region42: #{bottleneck_forward.1} parent=11 // pred_check_branch
        %295 = sbr.rel (%p293) target = $region44
      $region43: #{bottleneck_forward.1} parent=11 // pred_region
        _
      $region44: #{bottleneck_forward.1} parent=11 // pred_fallthru
        _
      // Predicated region
      $region45: #{bottleneck_forward.1} parent=11 // pred_check
        %p296 = pneg %p231
      $region46: #{bottleneck_forward.1} parent=11 // pred_check_branch
        %298 = sbr.rel (%p296) target = $region48
      $region47: #{bottleneck_forward.1} parent=11 // pred_region
        _
      $region48: #{bottleneck_forward.1} parent=11 // pred_fallthru
        _
    $region12: #{bottleneck_forward.1} parent=5 // pred_fallthru
      _
    %p299 = scmp.lt.s32.totalorder %s16, 2
    // Predicated region
    $region49: #{bottleneck_forward.1} parent=5 // pred_check
      %p300 = pneg %p299
    $region50: #{bottleneck_forward.1} parent=5 // pred_check_branch
      %302 = sbr.rel (%p300) target = $region52
    $region51: #{bottleneck_forward.1} parent=5 // pred_region
      // Predicated region
      $region53: #{bottleneck_forward.1} parent=51 // pred_check
        %p303 = pneg %p36
      $region54: #{bottleneck_forward.1} parent=51 // pred_check_branch
        %305 = sbr.rel (%p303) target = $region56
      $region55: #{bottleneck_forward.1} parent=51 // pred_region
        %p306 = scmp.lt.s32.totalorder %s16, 1
        %s307 = scalar_select %p306, %s16, 1
        %s308 = smul.addr %s307, 41
        %s309 = smul.addr %s308, 8
        %s310 = scalar_lea.vmem %s0, %s309
      $region56: #{bottleneck_forward.1} parent=51 // pred_fallthru
        _
    $region52: #{bottleneck_forward.1} parent=5 // pred_fallthru
      _
    %p311 = scmp.le.s32.totalorder 1, %s16
    %p312 = scmp.lt.s32.totalorder %s16, 3
    %p313 = pnand %p311, %p312
    %p314 = pneg %p313
    // Predicated region
    $region57: #{bottleneck_forward.1} parent=5 // pred_check
      _
    $region58: #{bottleneck_forward.1} parent=5 // pred_check_branch
      %316 = sbr.rel (%p313) target = $region60
    $region59: #{bottleneck_forward.1} parent=5 // pred_region
      %s317 = ssub.s32 %s16, 1
      %p318 = scmp.lt.s32.totalorder %s21, 1
      %s319 = scalar_select %p318, %s21, 1
      %s320 = smul.addr %s319, 41
      %s321 = smul.addr %s320, 8
      %s322 = scalar_lea.vmem %s0, %s321
      %p323 = pneg %p42
      %p324 = pneg %p39
      %p325 = pneg %p63
      %p326 = pneg %p60
      %p327 = pneg %p84
      %p328 = pneg %p81
      %p329 = pneg %p105
      %p330 = pneg %p102
      %p331 = pneg %p126
      %p332 = pneg %p123
      %p333 = pneg %p147
      %p334 = pneg %p144
      %p335 = pneg %p168
      %p336 = pneg %p165
      %p337 = pneg %p189
      %p338 = pneg %p186
      %p339 = pneg %p210
      %p340 = pneg %p207
      %p341 = pneg %p231
      %p342 = pneg %p228
      %p343 = pneg %p257
      %p344 = pneg %p254
      %p345 = scmp.lt.s32.totalorder %s21, 1
      %s346 = scalar_select %p345, %s21, 1
      %s347 = smul.addr %s346, 41
      %s348 = smul.addr %s347, 8
      %s349 = scalar_lea.vmem %s10, %s348
      %p350 = scmp.lt.s32.totalorder %s21, 1
      %s351 = scalar_select %p350, %s21, 1
      %s352 = smul.addr %s351, 41
      %s353 = smul.addr %s352, 8
      %s354 = scalar_lea.vmem %s0, %s353
      %p355 = scmp.lt.s32.totalorder %s21, 1
      %s356 = scalar_select %p355, %s21, 1
      %s357 = smul.addr %s356, 41
      %s358 = smul.addr %s357, 8
      %s359 = scalar_lea.vmem %s10, %s358
      %v360 = vld [vmem:[%s354] sm:$0xff]
      %v361 = vld [vmem:[%s354 + $0x8] sm:$0xff]
      %v362 = vld [vmem:[%s354 + $0x10] sm:$0xff]
      %v363 = vld [vmem:[%s354 + $0x18] sm:$0xff]
      %v364 = vld [vmem:[%s354 + $0x20] sm:$0xff]
      %v365 = vld [vmem:[%s354 + $0x28] sm:$0xff]
      %v366 = vld [vmem:[%s354 + $0x30] sm:$0xff]
      %v367 = vld [vmem:[%s354 + $0x38] sm:$0xff]
      %v368 = vld [vmem:[%s354 + $0x40] sm:$0xff]
      %v369 = vld [vmem:[%s354 + $0x48] sm:$0xff]
      %v370 = vld [vmem:[%s354 + $0x50] sm:$0xff]
      %v371 = vld [vmem:[%s354 + $0x58] sm:$0xff]
      %v372 = vld [vmem:[%s354 + $0x60] sm:$0xff]
      %v373 = vld [vmem:[%s354 + $0x68] sm:$0xff]
      %v374 = vld [vmem:[%s354 + $0x70] sm:$0xff]
      %v375 = vld [vmem:[%s354 + $0x78] sm:$0xff]
      %v376 = vld [vmem:[%s354 + $0x80] sm:$0xff]
      %v377 = vld [vmem:[%s354 + $0x88] sm:$0xff]
      %v378 = vld [vmem:[%s354 + $0x90] sm:$0xff]
      %v379 = vld [vmem:[%s354 + $0x98] sm:$0xff]
      %v380 = vld [vmem:[%s354 + $0xa0] sm:$0xff]
      %v381 = vld [vmem:[%s354 + $0xa8] sm:$0xff]
      %v382 = vld [vmem:[%s354 + $0xb0] sm:$0xff]
      %v383 = vld [vmem:[%s354 + $0xb8] sm:$0xff]
      %v384 = vld [vmem:[%s354 + $0xc0] sm:$0xff]
      %v385 = vld [vmem:[%s354 + $0xc8] sm:$0xff]
      %v386 = vld [vmem:[%s354 + $0xd0] sm:$0xff]
      %v387 = vld [vmem:[%s354 + $0xd8] sm:$0xff]
      %v388 = vld [vmem:[%s354 + $0xe0] sm:$0xff]
      %v389 = vld [vmem:[%s354 + $0xe8] sm:$0xff]
      %v390 = vld [vmem:[%s354 + $0xf0] sm:$0xff]
      %v391 = vld [vmem:[%s354 + $0xf8] sm:$0xff]
      %v392 = vld [vmem:[%s354 + $0x100] sm:$0xff]
      %v393 = vld [vmem:[%s354 + $0x108] sm:$0xff]
      %v394 = vld [vmem:[%s354 + $0x110] sm:$0xff]
      %v395 = vld [vmem:[%s354 + $0x118] sm:$0xff]
      %v396 = vld [vmem:[%s354 + $0x120] sm:$0xff]
      %v397 = vld [vmem:[%s354 + $0x128] sm:$0xff]
      %v398 = vld [vmem:[%s354 + $0x130] sm:$0xff]
      %v399 = vld [vmem:[%s354 + $0x138] sm:$0xff]
      %v400 = vld [vmem:[%s354 + $0x140] sm:$0xff]
      %v401 = vld [vmem:[%s2] sm:$0xff]
      %v402 = vld [vmem:[%s2 + $0x8] sm:$0xff]
      %v403 = vld [vmem:[%s2 + $0x10] sm:$0xff]
      %v404 = vld [vmem:[%s2 + $0x18] sm:$0xff]
      %v405 = vld [vmem:[%s2 + $0x20] sm:$0xff]
      %v406 = vld [vmem:[%s2 + $0x28] sm:$0xff]
      %v407 = vld [vmem:[%s2 + $0x30] sm:$0xff]
      %v408 = vld [vmem:[%s2 + $0x38] sm:$0xff]
      %v409 = vld [vmem:[%s2 + $0x40] sm:$0xff]
      %v410 = vld [vmem:[%s2 + $0x48] sm:$0xff]
      %v411 = vld [vmem:[%s2 + $0x50] sm:$0xff]
      %v412 = vld [vmem:[%s2 + $0x58] sm:$0xff]
      %v413 = vld [vmem:[%s2 + $0x60] sm:$0xff]
      %v414 = vld [vmem:[%s2 + $0x68] sm:$0xff]
      %v415 = vld [vmem:[%s2 + $0x70] sm:$0xff]
      %v416 = vld [vmem:[%s2 + $0x78] sm:$0xff]
      %v417 = vld [vmem:[%s3] sm:$0x1]
      %v419 = vlaneseq
      %v420 = vshrl.u32 %v419, 7
      %v421 = vsub.s32 0, %v420
      %v422 = vrot.slane %v417, %v421
      %424 = vmatprep.subr.mxu0 0.0
      %425 = vmatpush1.msra.mxu0 %v401
      %426 = vmatprep.subr.mxu0 0.0
      %427 = vmatpush1.msra.mxu0 %v402
      %428 = vmatprep.subr.mxu0 0.0
      %429 = vmatpush1.msra.mxu0 %v403
      %430 = vmatprep.subr.mxu0 0.0
      %431 = vmatpush1.msra.mxu0 %v404
      %432 = vmatprep.subr.mxu0 0.0
      %433 = vmatpush1.msra.mxu0 %v405
      %434 = vmatprep.subr.mxu0 0.0
      %435 = vmatpush1.msra.mxu0 %v406
      %436 = vmatprep.subr.mxu0 0.0
      %437 = vmatpush1.msra.mxu0 %v407
      %438 = vmatprep.subr.mxu0 0.0
      %439 = vmatpush1.msra.mxu0 %v408
      %440 = vmatprep.subr.mxu0 0.0
      %441 = vmatpush1.msra.mxu0 %v409
      %442 = vmatprep.subr.mxu0 0.0
      %443 = vmatpush1.msra.mxu0 %v410
      %444 = vmatprep.subr.mxu0 0.0
      %445 = vmatpush1.msra.mxu0 %v411
      %446 = vmatprep.subr.mxu0 0.0
      %447 = vmatpush1.msra.mxu0 %v412
      %448 = vmatprep.subr.mxu0 0.0
      %449 = vmatpush1.msra.mxu0 %v413
      %450 = vmatprep.subr.mxu0 0.0
      %451 = vmatpush1.msra.mxu0 %v414
      %452 = vmatprep.subr.mxu0 0.0
      %453 = vmatpush1.msra.mxu0 %v415
      %454 = vmatprep.subr.mxu0 0.0
      %455 = vmatpush1.msra.mxu0 %v416
      %456 = vmatprep.subr.mxu0 0.0
      %457 = vmatpush1.msra.mxu0 0.0
      %458 = vmatprep.subr.mxu0 0.0
      %459 = vmatpush1.msra.mxu0 0.0
      %460 = vmatprep.subr.mxu0 0.0
      %461 = vmatpush1.msra.mxu0 0.0
      %462 = vmatprep.subr.mxu0 0.0
      %463 = vmatpush1.msra.mxu0 0.0
      %464 = vmatprep.subr.mxu0 0.0
      %465 = vmatpush1.msra.mxu0 0.0
      %466 = vmatprep.subr.mxu0 0.0
      %467 = vmatpush1.msra.mxu0 0.0
      %468 = vmatprep.subr.mxu0 0.0
      %469 = vmatpush1.msra.mxu0 0.0
      %470 = vmatprep.subr.mxu0 0.0
      %471 = vmatpush1.msra.mxu0 0.0
      %472 = vmatprep.subr.mxu0 0.0
      %473 = vmatpush1.msra.mxu0 0.0
      %474 = vmatprep.subr.mxu0 0.0
      %475 = vmatpush1.msra.mxu0 0.0
      %476 = vmatprep.subr.mxu0 0.0
      %477 = vmatpush1.msra.mxu0 0.0
      %478 = vmatprep.subr.mxu0 0.0
      %479 = vmatpush1.msra.mxu0 0.0
      %480 = vmatprep.subr.mxu0 0.0
      %481 = vmatpush1.msra.mxu0 0.0
      %482 = vmatprep.subr.mxu0 0.0
      %483 = vmatpush1.msra.mxu0 0.0
      %484 = vmatprep.subr.mxu0 0.0
      %485 = vmatpush1.msra.mxu0 0.0
      %486 = vmatprep.subr.mxu0 0.0
      %487 = vmatpush1.msra.mxu0 0.0
      %488 = vmatprep.mubr.f32.mxu0 0.0
      %489 = vmatmul.mubr.f32.gmra.mrb[0].mxu0 %v360
      %v490 = vpop.f32.mrb[0].mxu0
      %v491 = vadd.f32 %v422, %v490
      %v492 = vpop.f32.mrb[0].mxu0
      %493 = vmatprep.mubr.f32.mxu0 0.0
      %494 = vmatmul.mubr.f32.gmra.mrb[0].mxu0 %v361
      %v495 = vpop.f32.mrb[0].mxu0
      %v496 = vadd.f32 %v422, %v495
      %v497 = vpop.f32.mrb[0].mxu0
      %498 = vmatprep.mubr.f32.mxu0 0.0
      %499 = vmatmul.mubr.f32.gmra.mrb[0].mxu0 %v362
      %v500 = vpop.f32.mrb[0].mxu0
      %v501 = vadd.f32 %v422, %v500
      %v502 = vpop.f32.mrb[0].mxu0
      %503 = vmatprep.mubr.f32.mxu0 0.0
      %504 = vmatmul.mubr.f32.gmra.mrb[0].mxu0 %v363
      %v505 = vpop.f32.mrb[0].mxu0
      %v506 = vadd.f32 %v422, %v505
      %v507 = vpop.f32.mrb[0].mxu0
      %508 = vmatprep.mubr.f32.mxu0 0.0
      %509 = vmatmul.mubr.f32.gmra.mrb[0].mxu0 %v364
      %v510 = vpop.f32.mrb[0].mxu0
      %v511 = vadd.f32 %v422, %v510
      %v512 = vpop.f32.mrb[0].mxu0
      %513 = vmatprep.mubr.f32.mxu0 0.0
      %514 = vmatmul.mubr.f32.gmra.mrb[0].mxu0 %v365
      %v515 = vpop.f32.mrb[0].mxu0
      %v516 = vadd.f32 %v422, %v515
      %v517 = vpop.f32.mrb[0].mxu0
      %518 = vmatprep.mubr.f32.mxu0 0.0
      %519 = vmatmul.mubr.f32.gmra.mrb[0].mxu0 %v366
      %v520 = vpop.f32.mrb[0].mxu0
      %v521 = vadd.f32 %v422, %v520
      %v522 = vpop.f32.mrb[0].mxu0
      %523 = vmatprep.mubr.f32.mxu0 0.0
      %524 = vmatmul.mubr.f32.gmra.mrb[0].mxu0 %v367
      %v525 = vpop.f32.mrb[0].mxu0
      %v526 = vadd.f32 %v422, %v525
      %v527 = vpop.f32.mrb[0].mxu0
      %528 = vmatprep.mubr.f32.mxu0 0.0
      %529 = vmatmul.mubr.f32.gmra.mrb[0].mxu0 %v368
      %v530 = vpop.f32.mrb[0].mxu0
      %v531 = vadd.f32 %v422, %v530
      %v532 = vpop.f32.mrb[0].mxu0
      %533 = vmatprep.mubr.f32.mxu0 0.0
      %534 = vmatmul.mubr.f32.gmra.mrb[0].mxu0 %v369
      %v535 = vpop.f32.mrb[0].mxu0
      %v536 = vadd.f32 %v422, %v535
      %v537 = vpop.f32.mrb[0].mxu0
      %538 = vmatprep.mubr.f32.mxu0 0.0
      %539 = vmatmul.mubr.f32.gmra.mrb[0].mxu0 %v370
      %v540 = vpop.f32.mrb[0].mxu0
      %v541 = vadd.f32 %v422, %v540
      %v542 = vpop.f32.mrb[0].mxu0
      %543 = vmatprep.mubr.f32.mxu0 0.0
      %544 = vmatmul.mubr.f32.gmra.mrb[0].mxu0 %v371
      %v545 = vpop.f32.mrb[0].mxu0
      %v546 = vadd.f32 %v422, %v545
      %v547 = vpop.f32.mrb[0].mxu0
      %548 = vmatprep.mubr.f32.mxu0 0.0
      %549 = vmatmul.mubr.f32.gmra.mrb[0].mxu0 %v372
      %v550 = vpop.f32.mrb[0].mxu0
      %v551 = vadd.f32 %v422, %v550
      %v552 = vpop.f32.mrb[0].mxu0
      %553 = vmatprep.mubr.f32.mxu0 0.0
      %554 = vmatmul.mubr.f32.gmra.mrb[0].mxu0 %v373
      %v555 = vpop.f32.mrb[0].mxu0
      %v556 = vadd.f32 %v422, %v555
      %v557 = vpop.f32.mrb[0].mxu0
      %558 = vmatprep.mubr.f32.mxu0 0.0
      %559 = vmatmul.mubr.f32.gmra.mrb[0].mxu0 %v374
      %v560 = vpop.f32.mrb[0].mxu0
      %v561 = vadd.f32 %v422, %v560
      %v562 = vpop.f32.mrb[0].mxu0
      %563 = vmatprep.mubr.f32.mxu0 0.0
      %564 = vmatmul.mubr.f32.gmra.mrb[0].mxu0 %v375
      %v565 = vpop.f32.mrb[0].mxu0
      %v566 = vadd.f32 %v422, %v565
      %v567 = vpop.f32.mrb[0].mxu0
      %568 = vmatprep.mubr.f32.mxu0 0.0
      %569 = vmatmul.mubr.f32.gmra.mrb[0].mxu0 %v376
      %v570 = vpop.f32.mrb[0].mxu0
      %v571 = vadd.f32 %v422, %v570
      %v572 = vpop.f32.mrb[0].mxu0
      %573 = vmatprep.mubr.f32.mxu0 0.0
      %574 = vmatmul.mubr.f32.gmra.mrb[0].mxu0 %v377
      %v575 = vpop.f32.mrb[0].mxu0
      %v576 = vadd.f32 %v422, %v575
      %v577 = vpop.f32.mrb[0].mxu0
      %578 = vmatprep.mubr.f32.mxu0 0.0
      %579 = vmatmul.mubr.f32.gmra.mrb[0].mxu0 %v378
      %v580 = vpop.f32.mrb[0].mxu0
      %v581 = vadd.f32 %v422, %v580
      %v582 = vpop.f32.mrb[0].mxu0
      %583 = vmatprep.mubr.f32.mxu0 0.0
      %584 = vmatmul.mubr.f32.gmra.mrb[0].mxu0 %v379
      %v585 = vpop.f32.mrb[0].mxu0
      %v586 = vadd.f32 %v422, %v585
      %v587 = vpop.f32.mrb[0].mxu0
      %588 = vmatprep.mubr.f32.mxu0 0.0
      %589 = vmatmul.mubr.f32.gmra.mrb[0].mxu0 %v380
      %v590 = vpop.f32.mrb[0].mxu0
      %v591 = vadd.f32 %v422, %v590
      %v592 = vpop.f32.mrb[0].mxu0
      %593 = vmatprep.mubr.f32.mxu0 0.0
      %594 = vmatmul.mubr.f32.gmra.mrb[0].mxu0 %v381
      %v595 = vpop.f32.mrb[0].mxu0
      %v596 = vadd.f32 %v422, %v595
      %v597 = vpop.f32.mrb[0].mxu0
      %598 = vmatprep.mubr.f32.mxu0 0.0
      %599 = vmatmul.mubr.f32.gmra.mrb[0].mxu0 %v382
      %v600 = vpop.f32.mrb[0].mxu0
      %v601 = vadd.f32 %v422, %v600
      %v602 = vpop.f32.mrb[0].mxu0
      %603 = vmatprep.mubr.f32.mxu0 0.0
      %604 = vmatmul.mubr.f32.gmra.mrb[0].mxu0 %v383
      %v605 = vpop.f32.mrb[0].mxu0
      %v606 = vadd.f32 %v422, %v605
      %v607 = vpop.f32.mrb[0].mxu0
      %608 = vmatprep.mubr.f32.mxu0 0.0
      %609 = vmatmul.mubr.f32.gmra.mrb[0].mxu0 %v384
      %v610 = vpop.f32.mrb[0].mxu0
      %v611 = vadd.f32 %v422, %v610
      %v612 = vpop.f32.mrb[0].mxu0
      %613 = vmatprep.mubr.f32.mxu0 0.0
      %614 = vmatmul.mubr.f32.gmra.mrb[0].mxu0 %v385
      %v615 = vpop.f32.mrb[0].mxu0
      %v616 = vadd.f32 %v422, %v615
      %v617 = vpop.f32.mrb[0].mxu0
      %618 = vmatprep.mubr.f32.mxu0 0.0
      %619 = vmatmul.mubr.f32.gmra.mrb[0].mxu0 %v386
      %v620 = vpop.f32.mrb[0].mxu0
      %v621 = vadd.f32 %v422, %v620
      %v622 = vpop.f32.mrb[0].mxu0
      %623 = vmatprep.mubr.f32.mxu0 0.0
      %624 = vmatmul.mubr.f32.gmra.mrb[0].mxu0 %v387
      %v625 = vpop.f32.mrb[0].mxu0
      %v626 = vadd.f32 %v422, %v625
      %v627 = vpop.f32.mrb[0].mxu0
      %628 = vmatprep.mubr.f32.mxu0 0.0
      %629 = vmatmul.mubr.f32.gmra.mrb[0].mxu0 %v388
      %v630 = vpop.f32.mrb[0].mxu0
      %v631 = vadd.f32 %v422, %v630
      %v632 = vpop.f32.mrb[0].mxu0
      %633 = vmatprep.mubr.f32.mxu0 0.0
      %634 = vmatmul.mubr.f32.gmra.mrb[0].mxu0 %v389
      %v635 = vpop.f32.mrb[0].mxu0
      %v636 = vadd.f32 %v422, %v635
      %v637 = vpop.f32.mrb[0].mxu0
      %638 = vmatprep.mubr.f32.mxu0 0.0
      %639 = vmatmul.mubr.f32.gmra.mrb[0].mxu0 %v390
      %v640 = vpop.f32.mrb[0].mxu0
      %v641 = vadd.f32 %v422, %v640
      %v642 = vpop.f32.mrb[0].mxu0
      %643 = vmatprep.mubr.f32.mxu0 0.0
      %644 = vmatmul.mubr.f32.gmra.mrb[0].mxu0 %v391
      %v645 = vpop.f32.mrb[0].mxu0
      %v646 = vadd.f32 %v422, %v645
      %v647 = vpop.f32.mrb[0].mxu0
      %648 = vmatprep.mubr.f32.mxu0 0.0
      %649 = vmatmul.mubr.f32.gmra.mrb[0].mxu0 %v392
      %v650 = vpop.f32.mrb[0].mxu0
      %v651 = vadd.f32 %v422, %v650
      %v652 = vpop.f32.mrb[0].mxu0
      %653 = vmatprep.mubr.f32.mxu0 0.0
      %654 = vmatmul.mubr.f32.gmra.mrb[0].mxu0 %v393
      %v655 = vpop.f32.mrb[0].mxu0
      %v656 = vadd.f32 %v422, %v655
      %v657 = vpop.f32.mrb[0].mxu0
      %658 = vmatprep.mubr.f32.mxu0 0.0
      %659 = vmatmul.mubr.f32.gmra.mrb[0].mxu0 %v394
      %v660 = vpop.f32.mrb[0].mxu0
      %v661 = vadd.f32 %v422, %v660
      %v662 = vpop.f32.mrb[0].mxu0
      %663 = vmatprep.mubr.f32.mxu0 0.0
      %664 = vmatmul.mubr.f32.gmra.mrb[0].mxu0 %v395
      %v665 = vpop.f32.mrb[0].mxu0
      %v666 = vadd.f32 %v422, %v665
      %v667 = vpop.f32.mrb[0].mxu0
      %668 = vmatprep.mubr.f32.mxu0 0.0
      %669 = vmatmul.mubr.f32.gmra.mrb[0].mxu0 %v396
      %v670 = vpop.f32.mrb[0].mxu0
      %v671 = vadd.f32 %v422, %v670
      %v672 = vpop.f32.mrb[0].mxu0
      %673 = vmatprep.mubr.f32.mxu0 0.0
      %674 = vmatmul.mubr.f32.gmra.mrb[0].mxu0 %v397
      %v675 = vpop.f32.mrb[0].mxu0
      %v676 = vadd.f32 %v422, %v675
      %v677 = vpop.f32.mrb[0].mxu0
      %678 = vmatprep.mubr.f32.mxu0 0.0
      %679 = vmatmul.mubr.f32.gmra.mrb[0].mxu0 %v398
      %v680 = vpop.f32.mrb[0].mxu0
      %v681 = vadd.f32 %v422, %v680
      %v682 = vpop.f32.mrb[0].mxu0
      %683 = vmatprep.mubr.f32.mxu0 0.0
      %684 = vmatmul.mubr.f32.gmra.mrb[0].mxu0 %v399
      %v685 = vpop.f32.mrb[0].mxu0
      %v686 = vadd.f32 %v422, %v685
      %v687 = vpop.f32.mrb[0].mxu0
      %688 = vmatprep.mubr.f32.mxu0 0.0
      %689 = vmatmul.mubr.f32.gmra.mrb[0].mxu0 %v400
      %v690 = vpop.f32.mrb[0].mxu0
      %v691 = vadd.f32 %v422, %v690
      %v692 = vpop.f32.mrb[0].mxu0
      %693 = vdwg.mxu0
      %v694 = vmax.f32 %v491, 0.0
      %v695 = vmax.f32 %v496, 0.0
      %v696 = vmax.f32 %v501, 0.0
      %v697 = vmax.f32 %v506, 0.0
      %v698 = vmax.f32 %v511, 0.0
      %v699 = vmax.f32 %v516, 0.0
      %v700 = vmax.f32 %v521, 0.0
      %v701 = vmax.f32 %v526, 0.0
      %v702 = vmax.f32 %v531, 0.0
      %v703 = vmax.f32 %v536, 0.0
      %v704 = vmax.f32 %v541, 0.0
      %v705 = vmax.f32 %v546, 0.0
      %v706 = vmax.f32 %v551, 0.0
      %v707 = vmax.f32 %v556, 0.0
      %v708 = vmax.f32 %v561, 0.0
      %v709 = vmax.f32 %v566, 0.0
      %v710 = vmax.f32 %v571, 0.0
      %v711 = vmax.f32 %v576, 0.0
      %v712 = vmax.f32 %v581, 0.0
      %v713 = vmax.f32 %v586, 0.0
      %v714 = vmax.f32 %v591, 0.0
      %v715 = vmax.f32 %v596, 0.0
      %v716 = vmax.f32 %v601, 0.0
      %v717 = vmax.f32 %v606, 0.0
      %v718 = vmax.f32 %v611, 0.0
      %v719 = vmax.f32 %v616, 0.0
      %v720 = vmax.f32 %v621, 0.0
      %v721 = vmax.f32 %v626, 0.0
      %v722 = vmax.f32 %v631, 0.0
      %v723 = vmax.f32 %v636, 0.0
      %v724 = vmax.f32 %v641, 0.0
      %v725 = vmax.f32 %v646, 0.0
      %v726 = vmax.f32 %v651, 0.0
      %v727 = vmax.f32 %v656, 0.0
      %v728 = vmax.f32 %v661, 0.0
      %v729 = vmax.f32 %v666, 0.0
      %v730 = vmax.f32 %v671, 0.0
      %v731 = vmax.f32 %v676, 0.0
      %v732 = vmax.f32 %v681, 0.0
      %v733 = vmax.f32 %v686, 0.0
      %v734 = vmax.f32 %v691, 0.0
      %v735 = vld [vmem:[%s1] sm:$0xff]
      %v736 = vld [vmem:[%s1 + $0x8] sm:$0xff]
      %v737 = vld [vmem:[%s1 + $0x10] sm:$0xff]
      %v738 = vld [vmem:[%s1 + $0x18] sm:$0xff]
      %v739 = vld [vmem:[%s1 + $0x20] sm:$0xff]
      %v740 = vld [vmem:[%s1 + $0x28] sm:$0xff]
      %v741 = vld [vmem:[%s1 + $0x30] sm:$0xff]
      %v742 = vld [vmem:[%s1 + $0x38] sm:$0xff]
      %v743 = vld [vmem:[%s1 + $0x40] sm:$0xff]
      %v744 = vld [vmem:[%s1 + $0x48] sm:$0xff]
      %v745 = vld [vmem:[%s1 + $0x50] sm:$0xff]
      %v746 = vld [vmem:[%s1 + $0x58] sm:$0xff]
      %v747 = vld [vmem:[%s1 + $0x60] sm:$0xff]
      %v748 = vld [vmem:[%s1 + $0x68] sm:$0xff]
      %v749 = vld [vmem:[%s1 + $0x70] sm:$0xff]
      %v750 = vld [vmem:[%s1 + $0x78] sm:$0xff]
      %v751 = vld [vmem:[%s1 + $0x80] sm:$0xff]
      %v752 = vld [vmem:[%s1 + $0x88] sm:$0xff]
      %v753 = vld [vmem:[%s1 + $0x90] sm:$0xff]
      %v754 = vld [vmem:[%s1 + $0x98] sm:$0xff]
      %v755 = vld [vmem:[%s1 + $0xa0] sm:$0xff]
      %v756 = vld [vmem:[%s1 + $0xa8] sm:$0xff]
      %v757 = vld [vmem:[%s1 + $0xb0] sm:$0xff]
      %v758 = vld [vmem:[%s1 + $0xb8] sm:$0xff]
      %v759 = vld [vmem:[%s1 + $0xc0] sm:$0xff]
      %v760 = vld [vmem:[%s1 + $0xc8] sm:$0xff]
      %v761 = vld [vmem:[%s1 + $0xd0] sm:$0xff]
      %v762 = vld [vmem:[%s1 + $0xd8] sm:$0xff]
      %v763 = vld [vmem:[%s1 + $0xe0] sm:$0xff]
      %v764 = vld [vmem:[%s1 + $0xe8] sm:$0xff]
      %v765 = vld [vmem:[%s1 + $0xf0] sm:$0xff]
      %v766 = vld [vmem:[%s1 + $0xf8] sm:$0xff]
      %v767 = vld [vmem:[%s1 + $0x100] sm:$0xff]
      %v768 = vld [vmem:[%s1 + $0x108] sm:$0xff]
      %v769 = vld [vmem:[%s1 + $0x110] sm:$0xff]
      %v770 = vld [vmem:[%s1 + $0x118] sm:$0xff]
      %v771 = vld [vmem:[%s1 + $0x120] sm:$0xff]
      %v772 = vld [vmem:[%s1 + $0x128] sm:$0xff]
      %v773 = vld [vmem:[%s1 + $0x130] sm:$0xff]
      %v774 = vld [vmem:[%s1 + $0x138] sm:$0xff]
      %v775 = vld [vmem:[%s1 + $0x140] sm:$0xff]
      %777 = vset.pattern.permute.xlu0 0
      %778 = vperm.xlu0 %777, %v735
      %v779 = vpop.permute.xlu0 %778
      %782 = vset.pattern.permute.xlu0 0
      %783 = vperm.xlu0 %782, %v736
      %v784 = vpop.permute.xlu0 %783
      %787 = vset.pattern.permute.xlu0 0
      %788 = vperm.xlu0 %787, %v737
      %v789 = vpop.permute.xlu0 %788
      %792 = vset.pattern.permute.xlu0 0
      %793 = vperm.xlu0 %792, %v738
      %v794 = vpop.permute.xlu0 %793
      %797 = vset.pattern.permute.xlu0 0
      %798 = vperm.xlu0 %797, %v739
      %v799 = vpop.permute.xlu0 %798
      %802 = vset.pattern.permute.xlu0 0
      %803 = vperm.xlu0 %802, %v740
      %v804 = vpop.permute.xlu0 %803
      %807 = vset.pattern.permute.xlu0 0
      %808 = vperm.xlu0 %807, %v741
      %v809 = vpop.permute.xlu0 %808
      %812 = vset.pattern.permute.xlu0 0
      %813 = vperm.xlu0 %812, %v742
      %v814 = vpop.permute.xlu0 %813
      %817 = vset.pattern.permute.xlu0 0
      %818 = vperm.xlu0 %817, %v743
      %v819 = vpop.permute.xlu0 %818
      %822 = vset.pattern.permute.xlu0 0
      %823 = vperm.xlu0 %822, %v744
      %v824 = vpop.permute.xlu0 %823
      %827 = vset.pattern.permute.xlu0 0
      %828 = vperm.xlu0 %827, %v745
      %v829 = vpop.permute.xlu0 %828
      %832 = vset.pattern.permute.xlu0 0
      %833 = vperm.xlu0 %832, %v746
      %v834 = vpop.permute.xlu0 %833
      %837 = vset.pattern.permute.xlu0 0
      %838 = vperm.xlu0 %837, %v747
      %v839 = vpop.permute.xlu0 %838
      %842 = vset.pattern.permute.xlu0 0
      %843 = vperm.xlu0 %842, %v748
      %v844 = vpop.permute.xlu0 %843
      %847 = vset.pattern.permute.xlu0 0
      %848 = vperm.xlu0 %847, %v749
      %v849 = vpop.permute.xlu0 %848
      %852 = vset.pattern.permute.xlu0 0
      %853 = vperm.xlu0 %852, %v750
      %v854 = vpop.permute.xlu0 %853
      %857 = vset.pattern.permute.xlu0 0
      %858 = vperm.xlu0 %857, %v751
      %v859 = vpop.permute.xlu0 %858
      %862 = vset.pattern.permute.xlu0 0
      %863 = vperm.xlu0 %862, %v752
      %v864 = vpop.permute.xlu0 %863
      %867 = vset.pattern.permute.xlu0 0
      %868 = vperm.xlu0 %867, %v753
      %v869 = vpop.permute.xlu0 %868
      %872 = vset.pattern.permute.xlu0 0
      %873 = vperm.xlu0 %872, %v754
      %v874 = vpop.permute.xlu0 %873
      %877 = vset.pattern.permute.xlu0 0
      %878 = vperm.xlu0 %877, %v755
      %v879 = vpop.permute.xlu0 %878
      %882 = vset.pattern.permute.xlu0 0
      %883 = vperm.xlu0 %882, %v756
      %v884 = vpop.permute.xlu0 %883
      %887 = vset.pattern.permute.xlu0 0
      %888 = vperm.xlu0 %887, %v757
      %v889 = vpop.permute.xlu0 %888
      %892 = vset.pattern.permute.xlu0 0
      %893 = vperm.xlu0 %892, %v758
      %v894 = vpop.permute.xlu0 %893
      %897 = vset.pattern.permute.xlu0 0
      %898 = vperm.xlu0 %897, %v759
      %v899 = vpop.permute.xlu0 %898
      %902 = vset.pattern.permute.xlu0 0
      %903 = vperm.xlu0 %902, %v760
      %v904 = vpop.permute.xlu0 %903
      %907 = vset.pattern.permute.xlu0 0
      %908 = vperm.xlu0 %907, %v761
      %v909 = vpop.permute.xlu0 %908
      %912 = vset.pattern.permute.xlu0 0
      %913 = vperm.xlu0 %912, %v762
      %v914 = vpop.permute.xlu0 %913
      %917 = vset.pattern.permute.xlu0 0
      %918 = vperm.xlu0 %917, %v763
      %v919 = vpop.permute.xlu0 %918
      %922 = vset.pattern.permute.xlu0 0
      %923 = vperm.xlu0 %922, %v764
      %v924 = vpop.permute.xlu0 %923
      %927 = vset.pattern.permute.xlu0 0
      %928 = vperm.xlu0 %927, %v765
      %v929 = vpop.permute.xlu0 %928
      %932 = vset.pattern.permute.xlu0 0
      %933 = vperm.xlu0 %932, %v766
      %v934 = vpop.permute.xlu0 %933
      %937 = vset.pattern.permute.xlu0 0
      %938 = vperm.xlu0 %937, %v767
      %v939 = vpop.permute.xlu0 %938
      %942 = vset.pattern.permute.xlu0 0
      %943 = vperm.xlu0 %942, %v768
      %v944 = vpop.permute.xlu0 %943
      %947 = vset.pattern.permute.xlu0 0
      %948 = vperm.xlu0 %947, %v769
      %v949 = vpop.permute.xlu0 %948
      %952 = vset.pattern.permute.xlu0 0
      %953 = vperm.xlu0 %952, %v770
      %v954 = vpop.permute.xlu0 %953
      %957 = vset.pattern.permute.xlu0 0
      %958 = vperm.xlu0 %957, %v771
      %v959 = vpop.permute.xlu0 %958
      %962 = vset.pattern.permute.xlu0 0
      %963 = vperm.xlu0 %962, %v772
      %v964 = vpop.permute.xlu0 %963
      %967 = vset.pattern.permute.xlu0 0
      %968 = vperm.xlu0 %967, %v773
      %v969 = vpop.permute.xlu0 %968
      %972 = vset.pattern.permute.xlu0 0
      %973 = vperm.xlu0 %972, %v774
      %v974 = vpop.permute.xlu0 %973
      %977 = vset.pattern.permute.xlu0 0
      %978 = vperm.xlu0 %977, %v775
      %v979 = vpop.permute.xlu0 %978
      %v981 = vmul.f32 %v694, %v779
      %v982 = vmul.f32 %v695, %v784
      %v983 = vmul.f32 %v696, %v789
      %v984 = vmul.f32 %v697, %v794
      %v985 = vmul.f32 %v698, %v799
      %v986 = vmul.f32 %v699, %v804
      %v987 = vmul.f32 %v700, %v809
      %v988 = vmul.f32 %v701, %v814
      %v989 = vmul.f32 %v702, %v819
      %v990 = vmul.f32 %v703, %v824
      %v991 = vmul.f32 %v704, %v829
      %v992 = vmul.f32 %v705, %v834
      %v993 = vmul.f32 %v706, %v839
      %v994 = vmul.f32 %v707, %v844
      %v995 = vmul.f32 %v708, %v849
      %v996 = vmul.f32 %v709, %v854
      %v997 = vmul.f32 %v710, %v859
      %v998 = vmul.f32 %v711, %v864
      %v999 = vmul.f32 %v712, %v869
      %v1000 = vmul.f32 %v713, %v874
      %v1001 = vmul.f32 %v714, %v879
      %v1002 = vmul.f32 %v715, %v884
      %v1003 = vmul.f32 %v716, %v889
      %v1004 = vmul.f32 %v717, %v894
      %v1005 = vmul.f32 %v718, %v899
      %v1006 = vmul.f32 %v719, %v904
      %v1007 = vmul.f32 %v720, %v909
      %v1008 = vmul.f32 %v721, %v914
      %v1009 = vmul.f32 %v722, %v919
      %v1010 = vmul.f32 %v723, %v924
      %v1011 = vmul.f32 %v724, %v929
      %v1012 = vmul.f32 %v725, %v934
      %v1013 = vmul.f32 %v726, %v939
      %v1014 = vmul.f32 %v727, %v944
      %v1015 = vmul.f32 %v728, %v949
      %v1016 = vmul.f32 %v729, %v954
      %v1017 = vmul.f32 %v730, %v959
      %v1018 = vmul.f32 %v731, %v964
      %v1019 = vmul.f32 %v732, %v969
      %v1020 = vmul.f32 %v733, %v974
      %v1021 = vmul.f32 %v734, %v979
      %1022 = vst [vmem:[#allocation2] sm:$0xff] 0.0
      %1023 = vst [vmem:[#allocation2 + $0x8] sm:$0xff] 0.0
      %1024 = vst [vmem:[#allocation2 + $0x10] sm:$0xff] 0.0
      %1025 = vst [vmem:[#allocation2 + $0x160] sm:$0xff] 0.0
      %1026 = vst [vmem:[#allocation2 + $0x168] sm:$0xff] 0.0
      %1027 = vst [vmem:[#allocation2 + $0x170] sm:$0xff] 0.0
      %1028 = vst [vmem:[#allocation2 + $0x18] sm:$0xff] %v981
      %1029 = vst [vmem:[#allocation2 + $0x20] sm:$0xff] %v982
      %1030 = vst [vmem:[#allocation2 + $0x28] sm:$0xff] %v983
      %1031 = vst [vmem:[#allocation2 + $0x30] sm:$0xff] %v984
      %1032 = vst [vmem:[#allocation2 + $0x38] sm:$0xff] %v985
      %1033 = vst [vmem:[#allocation2 + $0x40] sm:$0xff] %v986
      %1034 = vst [vmem:[#allocation2 + $0x48] sm:$0xff] %v987
      %1035 = vst [vmem:[#allocation2 + $0x50] sm:$0xff] %v988
      %1036 = vst [vmem:[#allocation2 + $0x58] sm:$0xff] %v989
      %1037 = vst [vmem:[#allocation2 + $0x60] sm:$0xff] %v990
      %1038 = vst [vmem:[#allocation2 + $0x68] sm:$0xff] %v991
      %1039 = vst [vmem:[#allocation2 + $0x70] sm:$0xff] %v992
      %1040 = vst [vmem:[#allocation2 + $0x78] sm:$0xff] %v993
      %1041 = vst [vmem:[#allocation2 + $0x80] sm:$0xff] %v994
      %1042 = vst [vmem:[#allocation2 + $0x88] sm:$0xff] %v995
      %1043 = vst [vmem:[#allocation2 + $0x90] sm:$0xff] %v996
      %1044 = vst [vmem:[#allocation2 + $0x98] sm:$0xff] %v997
      %1045 = vst [vmem:[#allocation2 + $0xa0] sm:$0xff] %v998
      %1046 = vst [vmem:[#allocation2 + $0xa8] sm:$0xff] %v999
      %1047 = vst [vmem:[#allocation2 + $0xb0] sm:$0xff] %v1000
      %1048 = vst [vmem:[#allocation2 + $0xb8] sm:$0xff] %v1001
      %1049 = vst [vmem:[#allocation2 + $0xc0] sm:$0xff] %v1002
      %1050 = vst [vmem:[#allocation2 + $0xc8] sm:$0xff] %v1003
      %1051 = vst [vmem:[#allocation2 + $0xd0] sm:$0xff] %v1004
      %1052 = vst [vmem:[#allocation2 + $0xd8] sm:$0xff] %v1005
      %1053 = vst [vmem:[#allocation2 + $0xe0] sm:$0xff] %v1006
      %1054 = vst [vmem:[#allocation2 + $0xe8] sm:$0xff] %v1007
      %1055 = vst [vmem:[#allocation2 + $0xf0] sm:$0xff] %v1008
      %1056 = vst [vmem:[#allocation2 + $0xf8] sm:$0xff] %v1009
      %1057 = vst [vmem:[#allocation2 + $0x100] sm:$0xff] %v1010
      %1058 = vst [vmem:[#allocation2 + $0x108] sm:$0xff] %v1011
      %1059 = vst [vmem:[#allocation2 + $0x110] sm:$0xff] %v1012
      %1060 = vst [vmem:[#allocation2 + $0x118] sm:$0xff] %v1013
      %1061 = vst [vmem:[#allocation2 + $0x120] sm:$0xff] %v1014
      %1062 = vst [vmem:[#allocation2 + $0x128] sm:$0xff] %v1015
      %1063 = vst [vmem:[#allocation2 + $0x130] sm:$0xff] %v1016
      %1064 = vst [vmem:[#allocation2 + $0x138] sm:$0xff] %v1017
      %1065 = vst [vmem:[#allocation2 + $0x140] sm:$0xff] %v1018
      %1066 = vst [vmem:[#allocation2 + $0x148] sm:$0xff] %v1019
      %1067 = vst [vmem:[#allocation2 + $0x150] sm:$0xff] %v1020
      %1068 = vst [vmem:[#allocation2 + $0x158] sm:$0xff] %v1021
      %1069 = vst [vmem:[#allocation3] sm:$0xff] 0.0
      %1070 = vst [vmem:[#allocation3 + $0x8] sm:$0xff] 0.0
      %1071 = vst [vmem:[#allocation3 + $0x10] sm:$0xff] 0.0
      %1072 = vst [vmem:[#allocation3 + $0x18] sm:$0xff] 0.0
      %1073 = vst [vmem:[#allocation3 + $0x20] sm:$0xff] 0.0
      %1074 = vst [vmem:[#allocation3 + $0x28] sm:$0xff] 0.0
      %1075 = vst [vmem:[#allocation3 + $0x30] sm:$0xff] 0.0
      %1076 = vst [vmem:[#allocation3 + $0x38] sm:$0xff] 0.0
      %1077 = vst [vmem:[#allocation3 + $0x40] sm:$0xff] 0.0
      %1078 = vst [vmem:[#allocation3 + $0x48] sm:$0xff] 0.0
      %1079 = vst [vmem:[#allocation3 + $0x50] sm:$0xff] 0.0
      %1080 = vst [vmem:[#allocation3 + $0x58] sm:$0xff] 0.0
      %1081 = vst [vmem:[#allocation3 + $0x60] sm:$0xff] 0.0
      %1082 = vst [vmem:[#allocation3 + $0x68] sm:$0xff] 0.0
      %1083 = vst [vmem:[#allocation3 + $0x70] sm:$0xff] 0.0
      %1084 = vst [vmem:[#allocation3 + $0x78] sm:$0xff] 0.0
      %1085 = vst [vmem:[#allocation3 + $0x80] sm:$0xff] 0.0
      %1086 = vst [vmem:[#allocation3 + $0x88] sm:$0xff] 0.0
      %1087 = vst [vmem:[#allocation3 + $0x90] sm:$0xff] 0.0
      %1088 = vst [vmem:[#allocation3 + $0x98] sm:$0xff] 0.0
      %1089 = vst [vmem:[#allocation3 + $0xa0] sm:$0xff] 0.0
      %1090 = vst [vmem:[#allocation3 + $0xa8] sm:$0xff] 0.0
      %1091 = vst [vmem:[#allocation3 + $0xb0] sm:$0xff] 0.0
      %1092 = vst [vmem:[#allocation3 + $0xb8] sm:$0xff] 0.0
      %1093 = vst [vmem:[#allocation3 + $0xc0] sm:$0xff] 0.0
      %1094 = vst [vmem:[#allocation3 + $0xc8] sm:$0xff] 0.0
      %1095 = vst [vmem:[#allocation3 + $0xd0] sm:$0xff] 0.0
      %1096 = vst [vmem:[#allocation3 + $0xd8] sm:$0xff] 0.0
      %1097 = vst [vmem:[#allocation3 + $0xe0] sm:$0xff] 0.0
      %1098 = vst [vmem:[#allocation3 + $0xe8] sm:$0xff] 0.0
      %1099 = vst [vmem:[#allocation3 + $0xf0] sm:$0xff] 0.0
      %1100 = vst [vmem:[#allocation3 + $0xf8] sm:$0xff] 0.0
      %1101 = vst [vmem:[#allocation3 + $0x100] sm:$0xff] 0.0
      %1102 = vst [vmem:[#allocation3 + $0x108] sm:$0xff] 0.0
      %1103 = vst [vmem:[#allocation3 + $0x110] sm:$0xff] 0.0
      %1104 = vst [vmem:[#allocation3 + $0x118] sm:$0xff] 0.0
      %1105 = vst [vmem:[#allocation3 + $0x120] sm:$0xff] 0.0
      %1106 = vst [vmem:[#allocation3 + $0x128] sm:$0xff] 0.0
      %1107 = vst [vmem:[#allocation3 + $0x130] sm:$0xff] 0.0
      %1108 = vst [vmem:[#allocation3 + $0x138] sm:$0xff] 0.0
      %1109 = vst [vmem:[#allocation3 + $0x140] sm:$0xff] 0.0
      %v1110 = vld [vmem:[#allocation2 + $0x5] sm:$0xff]
      %v1111 = vld [vmem:[#allocation2 + $0xd] sm:$0xff]
      %v1112 = vld [vmem:[#allocation2 + $0x15] sm:$0xff]
      %v1113 = vld [vmem:[#allocation2 + $0x1d] sm:$0xff]
      %v1114 = vld [vmem:[#allocation2 + $0x25] sm:$0xff]
      %v1115 = vld [vmem:[#allocation2 + $0x2d] sm:$0xff]
      %v1116 = vld [vmem:[#allocation2 + $0x35] sm:$0xff]
      %v1117 = vld [vmem:[#allocation2 + $0x3d] sm:$0xff]
      %v1118 = vld [vmem:[#allocation2 + $0x45] sm:$0xff]
      %v1119 = vld [vmem:[#allocation2 + $0x4d] sm:$0xff]
      %v1120 = vld [vmem:[#allocation2 + $0x55] sm:$0xff]
      %v1121 = vld [vmem:[#allocation2 + $0x5d] sm:$0xff]
      %v1122 = vld [vmem:[#allocation2 + $0x65] sm:$0xff]
      %v1123 = vld [vmem:[#allocation2 + $0x6d] sm:$0xff]
      %v1124 = vld [vmem:[#allocation2 + $0x75] sm:$0xff]
      %v1125 = vld [vmem:[#allocation2 + $0x7d] sm:$0xff]
      %v1126 = vld [vmem:[#allocation2 + $0x85] sm:$0xff]
      %v1127 = vld [vmem:[#allocation2 + $0x8d] sm:$0xff]
      %v1128 = vld [vmem:[#allocation2 + $0x95] sm:$0xff]
      %v1129 = vld [vmem:[#allocation2 + $0x9d] sm:$0xff]
      %v1130 = vld [vmem:[#allocation2 + $0xa5] sm:$0xff]
      %v1131 = vld [vmem:[#allocation2 + $0xad] sm:$0xff]
      %v1132 = vld [vmem:[#allocation2 + $0xb5] sm:$0xff]
      %v1133 = vld [vmem:[#allocation2 + $0xbd] sm:$0xff]
      %v1134 = vld [vmem:[#allocation2 + $0xc5] sm:$0xff]
      %v1135 = vld [vmem:[#allocation2 + $0xcd] sm:$0xff]
      %v1136 = vld [vmem:[#allocation2 + $0xd5] sm:$0xff]
      %v1137 = vld [vmem:[#allocation2 + $0xdd] sm:$0xff]
      %v1138 = vld [vmem:[#allocation2 + $0xe5] sm:$0xff]
      %v1139 = vld [vmem:[#allocation2 + $0xed] sm:$0xff]
      %v1140 = vld [vmem:[#allocation2 + $0xf5] sm:$0xff]
      %v1141 = vld [vmem:[#allocation2 + $0xfd] sm:$0xff]
      %v1142 = vld [vmem:[#allocation2 + $0x105] sm:$0xff]
      %v1143 = vld [vmem:[#allocation2 + $0x10d] sm:$0xff]
      %v1144 = vld [vmem:[#allocation2 + $0x115] sm:$0xff]
      %v1145 = vld [vmem:[#allocation2 + $0x11d] sm:$0xff]
      %v1146 = vld [vmem:[#allocation2 + $0x125] sm:$0xff]
      %v1147 = vld [vmem:[#allocation2 + $0x12d] sm:$0xff]
      %v1148 = vld [vmem:[#allocation2 + $0x135] sm:$0xff]
      %v1149 = vld [vmem:[#allocation2 + $0x13d] sm:$0xff]
      %v1150 = vld [vmem:[#allocation2 + $0x145] sm:$0xff]
      %v1151 = vld [vmem:[#allocation3] sm:$0xff]
      %v1152 = vld [vmem:[#allocation3 + $0x8] sm:$0xff]
      %v1153 = vld [vmem:[#allocation3 + $0x10] sm:$0xff]
      %v1154 = vld [vmem:[#allocation3 + $0x18] sm:$0xff]
      %v1155 = vld [vmem:[#allocation3 + $0x20] sm:$0xff]
      %v1156 = vld [vmem:[#allocation3 + $0x28] sm:$0xff]
      %v1157 = vld [vmem:[#allocation3 + $0x30] sm:$0xff]
      %v1158 = vld [vmem:[#allocation3 + $0x38] sm:$0xff]
      %v1159 = vld [vmem:[#allocation3 + $0x40] sm:$0xff]
      %v1160 = vld [vmem:[#allocation3 + $0x48] sm:$0xff]
      %v1161 = vld [vmem:[#allocation3 + $0x50] sm:$0xff]
      %v1162 = vld [vmem:[#allocation3 + $0x58] sm:$0xff]
      %v1163 = vld [vmem:[#allocation3 + $0x60] sm:$0xff]
      %v1164 = vld [vmem:[#allocation3 + $0x68] sm:$0xff]
      %v1165 = vld [vmem:[#allocation3 + $0x70] sm:$0xff]
      %v1166 = vld [vmem:[#allocation3 + $0x78] sm:$0xff]
      %v1167 = vld [vmem:[#allocation3 + $0x80] sm:$0xff]
      %v1168 = vld [vmem:[#allocation3 + $0x88] sm:$0xff]
      %v1169 = vld [vmem:[#allocation3 + $0x90] sm:$0xff]
      %v1170 = vld [vmem:[#allocation3 + $0x98] sm:$0xff]
      %v1171 = vld [vmem:[#allocation3 + $0xa0] sm:$0xff]
      %v1172 = vld [vmem:[#allocation3 + $0xa8] sm:$0xff]
      %v1173 = vld [vmem:[#allocation3 + $0xb0] sm:$0xff]
      %v1174 = vld [vmem:[#allocation3 + $0xb8] sm:$0xff]
      %v1175 = vld [vmem:[#allocation3 + $0xc0] sm:$0xff]
      %v1176 = vld [vmem:[#allocation3 + $0xc8] sm:$0xff]
      %v1177 = vld [vmem:[#allocation3 + $0xd0] sm:$0xff]
      %v1178 = vld [vmem:[#allocation3 + $0xd8] sm:$0xff]
      %v1179 = vld [vmem:[#allocation3 + $0xe0] sm:$0xff]
      %v1180 = vld [vmem:[#allocation3 + $0xe8] sm:$0xff]
      %v1181 = vld [vmem:[#allocation3 + $0xf0] sm:$0xff]
      %v1182 = vld [vmem:[#allocation3 + $0xf8] sm:$0xff]
      %v1183 = vld [vmem:[#allocation3 + $0x100] sm:$0xff]
      %v1184 = vld [vmem:[#allocation3 + $0x108] sm:$0xff]
      %v1185 = vld [vmem:[#allocation3 + $0x110] sm:$0xff]
      %v1186 = vld [vmem:[#allocation3 + $0x118] sm:$0xff]
      %v1187 = vld [vmem:[#allocation3 + $0x120] sm:$0xff]
      %v1188 = vld [vmem:[#allocation3 + $0x128] sm:$0xff]
      %v1189 = vld [vmem:[#allocation3 + $0x130] sm:$0xff]
      %v1190 = vld [vmem:[#allocation3 + $0x138] sm:$0xff]
      %v1191 = vld [vmem:[#allocation3 + $0x140] sm:$0xff]
      %v1192 = vld [vmem:[%s4] sm:$0xff]
      %v1193 = vld [vmem:[%s4 + $0x8] sm:$0xff]
      %v1194 = vld [vmem:[%s4 + $0x10] sm:$0xff]
      %v1195 = vld [vmem:[%s4 + $0x18] sm:$0xff]
      %v1196 = vld [vmem:[%s4 + $0x20] sm:$0xff]
      %v1197 = vld [vmem:[%s4 + $0x28] sm:$0xff]
      %v1198 = vld [vmem:[%s4 + $0x30] sm:$0xff]
      %v1199 = vld [vmem:[%s4 + $0x38] sm:$0xff]
      %v1200 = vld [vmem:[%s4 + $0x40] sm:$0xff]
      %v1201 = vld [vmem:[%s4 + $0x48] sm:$0xff]
      %v1202 = vld [vmem:[%s4 + $0x50] sm:$0xff]
      %v1203 = vld [vmem:[%s4 + $0x58] sm:$0xff]
      %v1204 = vld [vmem:[%s4 + $0x60] sm:$0xff]
      %v1205 = vld [vmem:[%s4 + $0x68] sm:$0xff]
      %v1206 = vld [vmem:[%s4 + $0x70] sm:$0xff]
      %v1207 = vld [vmem:[%s4 + $0x78] sm:$0xff]
      %1208 = vmatprep.subr.mxu0 0.0
      %1209 = vmatpush1.msra.mxu0 %v1192
      %1210 = vmatprep.subr.mxu0 0.0
      %1211 = vmatpush1.msra.mxu0 %v1193
      %1212 = vmatprep.subr.mxu0 0.0
      %1213 = vmatpush1.msra.mxu0 %v1194
      %1214 = vmatprep.subr.mxu0 0.0
      %1215 = vmatpush1.msra.mxu0 %v1195
      %1216 = vmatprep.subr.mxu0 0.0
      %1217 = vmatpush1.msra.mxu0 %v1196
      %1218 = vmatprep.subr.mxu0 0.0
      %1219 = vmatpush1.msra.mxu0 %v1197
      %1220 = vmatprep.subr.mxu0 0.0
      %1221 = vmatpush1.msra.mxu0 %v1198
      %1222 = vmatprep.subr.mxu0 0.0
      %1223 = vmatpush1.msra.mxu0 %v1199
      %1224 = vmatprep.subr.mxu0 0.0
      %1225 = vmatpush1.msra.mxu0 %v1200
      %1226 = vmatprep.subr.mxu0 0.0
      %1227 = vmatpush1.msra.mxu0 %v1201
      %1228 = vmatprep.subr.mxu0 0.0
      %1229 = vmatpush1.msra.mxu0 %v1202
      %1230 = vmatprep.subr.mxu0 0.0
      %1231 = vmatpush1.msra.mxu0 %v1203
      %1232 = vmatprep.subr.mxu0 0.0
      %1233 = vmatpush1.msra.mxu0 %v1204
      %1234 = vmatprep.subr.mxu0 0.0
      %1235 = vmatpush1.msra.mxu0 %v1205
      %1236 = vmatprep.subr.mxu0 0.0
      %1237 = vmatpush1.msra.mxu0 %v1206
      %1238 = vmatprep.subr.mxu0 0.0
      %1239 = vmatpush1.msra.mxu0 %v1207
      %1240 = vmatprep.subr.mxu0 0.0
      %1241 = vmatpush1.msra.mxu0 0.0
      %1242 = vmatprep.subr.mxu0 0.0
      %1243 = vmatpush1.msra.mxu0 0.0
      %1244 = vmatprep.subr.mxu0 0.0
      %1245 = vmatpush1.msra.mxu0 0.0
      %1246 = vmatprep.subr.mxu0 0.0
      %1247 = vmatpush1.msra.mxu0 0.0
      %1248 = vmatprep.subr.mxu0 0.0
      %1249 = vmatpush1.msra.mxu0 0.0
      %1250 = vmatprep.subr.mxu0 0.0
      %1251 = vmatpush1.msra.mxu0 0.0
      %1252 = vmatprep.subr.mxu0 0.0
      %1253 = vmatpush1.msra.mxu0 0.0
      %1254 = vmatprep.subr.mxu0 0.0
      %1255 = vmatpush1.msra.mxu0 0.0
      %1256 = vmatprep.subr.mxu0 0.0
      %1257 = vmatpush1.msra.mxu0 0.0
      %1258 = vmatprep.subr.mxu0 0.0
      %1259 = vmatpush1.msra.mxu0 0.0
      %1260 = vmatprep.subr.mxu0 0.0
      %1261 = vmatpush1.msra.mxu0 0.0
      %1262 = vmatprep.subr.mxu0 0.0
      %1263 = vmatpush1.msra.mxu0 0.0
      %1264 = vmatprep.subr.mxu0 0.0
      %1265 = vmatpush1.msra.mxu0 0.0
      %1266 = vmatprep.subr.mxu0 0.0
      %1267 = vmatpush1.msra.mxu0 0.0
      %1268 = vmatprep.subr.mxu0 0.0
      %1269 = vmatpush1.msra.mxu0 0.0
      %1270 = vmatprep.subr.mxu0 0.0
      %1271 = vmatpush1.msra.mxu0 0.0
      %1272 = vmatprep.mubr.f32.mxu0 0.0
      %1273 = vmatmul.mubr.f32.gmra.mrb[0].mxu0 %v1110
      %v1274 = vpop.f32.mrb[0].mxu0
      %v1275 = vadd.f32 0.0, %v1274
      %v1276 = vpop.f32.mrb[0].mxu0
      %1277 = vmatprep.mubr.f32.mxu0 0.0
      %1278 = vmatmul.mubr.f32.gmra.mrb[0].mxu0 %v1111
      %v1279 = vpop.f32.mrb[0].mxu0
      %v1280 = vadd.f32 0.0, %v1279
      %v1281 = vpop.f32.mrb[0].mxu0
      %1282 = vmatprep.mubr.f32.mxu0 0.0
      %1283 = vmatmul.mubr.f32.gmra.mrb[0].mxu0 %v1112
      %v1284 = vpop.f32.mrb[0].mxu0
      %v1285 = vadd.f32 0.0, %v1284
      %v1286 = vpop.f32.mrb[0].mxu0
      %1287 = vmatprep.mubr.f32.mxu0 0.0
      %1288 = vmatmul.mubr.f32.gmra.mrb[0].mxu0 %v1113
      %v1289 = vpop.f32.mrb[0].mxu0
      %v1290 = vadd.f32 0.0, %v1289
      %v1291 = vpop.f32.mrb[0].mxu0
      %1292 = vmatprep.mubr.f32.mxu0 0.0
      %1293 = vmatmul.mubr.f32.gmra.mrb[0].mxu0 %v1114
      %v1294 = vpop.f32.mrb[0].mxu0
      %v1295 = vadd.f32 0.0, %v1294
      %v1296 = vpop.f32.mrb[0].mxu0
      %1297 = vmatprep.mubr.f32.mxu0 0.0
      %1298 = vmatmul.mubr.f32.gmra.mrb[0].mxu0 %v1115
      %v1299 = vpop.f32.mrb[0].mxu0
      %v1300 = vadd.f32 0.0, %v1299
      %v1301 = vpop.f32.mrb[0].mxu0
      %1302 = vmatprep.mubr.f32.mxu0 0.0
      %1303 = vmatmul.mubr.f32.gmra.mrb[0].mxu0 %v1116
      %v1304 = vpop.f32.mrb[0].mxu0
      %v1305 = vadd.f32 0.0, %v1304
      %v1306 = vpop.f32.mrb[0].mxu0
      %1307 = vmatprep.mubr.f32.mxu0 0.0
      %1308 = vmatmul.mubr.f32.gmra.mrb[0].mxu0 %v1117
      %v1309 = vpop.f32.mrb[0].mxu0
      %v1310 = vadd.f32 0.0, %v1309
      %v1311 = vpop.f32.mrb[0].mxu0
      %1312 = vmatprep.mubr.f32.mxu0 0.0
      %1313 = vmatmul.mubr.f32.gmra.mrb[0].mxu0 %v1118
      %v1314 = vpop.f32.mrb[0].mxu0
      %v1315 = vadd.f32 0.0, %v1314
      %v1316 = vpop.f32.mrb[0].mxu0
      %1317 = vmatprep.mubr.f32.mxu0 0.0
      %1318 = vmatmul.mubr.f32.gmra.mrb[0].mxu0 %v1119
      %v1319 = vpop.f32.mrb[0].mxu0
      %v1320 = vadd.f32 0.0, %v1319
      %v1321 = vpop.f32.mrb[0].mxu0
      %1322 = vmatprep.mubr.f32.mxu0 0.0
      %1323 = vmatmul.mubr.f32.gmra.mrb[0].mxu0 %v1120
      %v1324 = vpop.f32.mrb[0].mxu0
      %v1325 = vadd.f32 0.0, %v1324
      %v1326 = vpop.f32.mrb[0].mxu0
      %1327 = vmatprep.mubr.f32.mxu0 0.0
      %1328 = vmatmul.mubr.f32.gmra.mrb[0].mxu0 %v1121
      %v1329 = vpop.f32.mrb[0].mxu0
      %v1330 = vadd.f32 0.0, %v1329
      %v1331 = vpop.f32.mrb[0].mxu0
      %1332 = vmatprep.mubr.f32.mxu0 0.0
      %1333 = vmatmul.mubr.f32.gmra.mrb[0].mxu0 %v1122
      %v1334 = vpop.f32.mrb[0].mxu0
      %v1335 = vadd.f32 0.0, %v1334
      %v1336 = vpop.f32.mrb[0].mxu0
      %1337 = vmatprep.mubr.f32.mxu0 0.0
      %1338 = vmatmul.mubr.f32.gmra.mrb[0].mxu0 %v1123
      %v1339 = vpop.f32.mrb[0].mxu0
      %v1340 = vadd.f32 0.0, %v1339
      %v1341 = vpop.f32.mrb[0].mxu0
      %1342 = vmatprep.mubr.f32.mxu0 0.0
      %1343 = vmatmul.mubr.f32.gmra.mrb[0].mxu0 %v1124
      %v1344 = vpop.f32.mrb[0].mxu0
      %v1345 = vadd.f32 0.0, %v1344
      %v1346 = vpop.f32.mrb[0].mxu0
      %1347 = vmatprep.mubr.f32.mxu0 0.0
      %1348 = vmatmul.mubr.f32.gmra.mrb[0].mxu0 %v1125
      %v1349 = vpop.f32.mrb[0].mxu0
      %v1350 = vadd.f32 0.0, %v1349
      %v1351 = vpop.f32.mrb[0].mxu0
      %1352 = vmatprep.mubr.f32.mxu0 0.0
      %1353 = vmatmul.mubr.f32.gmra.mrb[0].mxu0 %v1126
      %v1354 = vpop.f32.mrb[0].mxu0
      %v1355 = vadd.f32 0.0, %v1354
      %v1356 = vpop.f32.mrb[0].mxu0
      %1357 = vmatprep.mubr.f32.mxu0 0.0
      %1358 = vmatmul.mubr.f32.gmra.mrb[0].mxu0 %v1127
      %v1359 = vpop.f32.mrb[0].mxu0
      %v1360 = vadd.f32 0.0, %v1359
      %v1361 = vpop.f32.mrb[0].mxu0
      %1362 = vmatprep.mubr.f32.mxu0 0.0
      %1363 = vmatmul.mubr.f32.gmra.mrb[0].mxu0 %v1128
      %v1364 = vpop.f32.mrb[0].mxu0
      %v1365 = vadd.f32 0.0, %v1364
      %v1366 = vpop.f32.mrb[0].mxu0
      %1367 = vmatprep.mubr.f32.mxu0 0.0
      %1368 = vmatmul.mubr.f32.gmra.mrb[0].mxu0 %v1129
      %v1369 = vpop.f32.mrb[0].mxu0
      %v1370 = vadd.f32 0.0, %v1369
      %v1371 = vpop.f32.mrb[0].mxu0
      %1372 = vmatprep.mubr.f32.mxu0 0.0
      %1373 = vmatmul.mubr.f32.gmra.mrb[0].mxu0 %v1130
      %v1374 = vpop.f32.mrb[0].mxu0
      %v1375 = vadd.f32 0.0, %v1374
      %v1376 = vpop.f32.mrb[0].mxu0
      %1377 = vmatprep.mubr.f32.mxu0 0.0
      %1378 = vmatmul.mubr.f32.gmra.mrb[0].mxu0 %v1131
      %v1379 = vpop.f32.mrb[0].mxu0
      %v1380 = vadd.f32 0.0, %v1379
      %v1381 = vpop.f32.mrb[0].mxu0
      %1382 = vmatprep.mubr.f32.mxu0 0.0
      %1383 = vmatmul.mubr.f32.gmra.mrb[0].mxu0 %v1132
      %v1384 = vpop.f32.mrb[0].mxu0
      %v1385 = vadd.f32 0.0, %v1384
      %v1386 = vpop.f32.mrb[0].mxu0
      %1387 = vmatprep.mubr.f32.mxu0 0.0
      %1388 = vmatmul.mubr.f32.gmra.mrb[0].mxu0 %v1133
      %v1389 = vpop.f32.mrb[0].mxu0
      %v1390 = vadd.f32 0.0, %v1389
      %v1391 = vpop.f32.mrb[0].mxu0
      %1392 = vmatprep.mubr.f32.mxu0 0.0
      %1393 = vmatmul.mubr.f32.gmra.mrb[0].mxu0 %v1134
      %v1394 = vpop.f32.mrb[0].mxu0
      %v1395 = vadd.f32 0.0, %v1394
      %v1396 = vpop.f32.mrb[0].mxu0
      %1397 = vmatprep.mubr.f32.mxu0 0.0
      %1398 = vmatmul.mubr.f32.gmra.mrb[0].mxu0 %v1135
      %v1399 = vpop.f32.mrb[0].mxu0
      %v1400 = vadd.f32 0.0, %v1399
      %v1401 = vpop.f32.mrb[0].mxu0
      %1402 = vmatprep.mubr.f32.mxu0 0.0
      %1403 = vmatmul.mubr.f32.gmra.mrb[0].mxu0 %v1136
      %v1404 = vpop.f32.mrb[0].mxu0
      %v1405 = vadd.f32 0.0, %v1404
      %v1406 = vpop.f32.mrb[0].mxu0
      %1407 = vmatprep.mubr.f32.mxu0 0.0
      %1408 = vmatmul.mubr.f32.gmra.mrb[0].mxu0 %v1137
      %v1409 = vpop.f32.mrb[0].mxu0
      %v1410 = vadd.f32 0.0, %v1409
      %v1411 = vpop.f32.mrb[0].mxu0
      %1412 = vmatprep.mubr.f32.mxu0 0.0
      %1413 = vmatmul.mubr.f32.gmra.mrb[0].mxu0 %v1138
      %v1414 = vpop.f32.mrb[0].mxu0
      %v1415 = vadd.f32 0.0, %v1414
      %v1416 = vpop.f32.mrb[0].mxu0
      %1417 = vmatprep.mubr.f32.mxu0 0.0
      %1418 = vmatmul.mubr.f32.gmra.mrb[0].mxu0 %v1139
      %v1419 = vpop.f32.mrb[0].mxu0
      %v1420 = vadd.f32 0.0, %v1419
      %v1421 = vpop.f32.mrb[0].mxu0
      %1422 = vmatprep.mubr.f32.mxu0 0.0
      %1423 = vmatmul.mubr.f32.gmra.mrb[0].mxu0 %v1140
      %v1424 = vpop.f32.mrb[0].mxu0
      %v1425 = vadd.f32 0.0, %v1424
      %v1426 = vpop.f32.mrb[0].mxu0
      %1427 = vmatprep.mubr.f32.mxu0 0.0
      %1428 = vmatmul.mubr.f32.gmra.mrb[0].mxu0 %v1141
      %v1429 = vpop.f32.mrb[0].mxu0
      %v1430 = vadd.f32 0.0, %v1429
      %v1431 = vpop.f32.mrb[0].mxu0
      %1432 = vmatprep.mubr.f32.mxu0 0.0
      %1433 = vmatmul.mubr.f32.gmra.mrb[0].mxu0 %v1142
      %v1434 = vpop.f32.mrb[0].mxu0
      %v1435 = vadd.f32 0.0, %v1434
      %v1436 = vpop.f32.mrb[0].mxu0
      %1437 = vmatprep.mubr.f32.mxu0 0.0
      %1438 = vmatmul.mubr.f32.gmra.mrb[0].mxu0 %v1143
      %v1439 = vpop.f32.mrb[0].mxu0
      %v1440 = vadd.f32 0.0, %v1439
      %v1441 = vpop.f32.mrb[0].mxu0
      %1442 = vmatprep.mubr.f32.mxu0 0.0
      %1443 = vmatmul.mubr.f32.gmra.mrb[0].mxu0 %v1144
      %v1444 = vpop.f32.mrb[0].mxu0
      %v1445 = vadd.f32 0.0, %v1444
      %v1446 = vpop.f32.mrb[0].mxu0
      %1447 = vmatprep.mubr.f32.mxu0 0.0
      %1448 = vmatmul.mubr.f32.gmra.mrb[0].mxu0 %v1145
      %v1449 = vpop.f32.mrb[0].mxu0
      %v1450 = vadd.f32 0.0, %v1449
      %v1451 = vpop.f32.mrb[0].mxu0
      %1452 = vmatprep.mubr.f32.mxu0 0.0
      %1453 = vmatmul.mubr.f32.gmra.mrb[0].mxu0 %v1146
      %v1454 = vpop.f32.mrb[0].mxu0
      %v1455 = vadd.f32 0.0, %v1454
      %v1456 = vpop.f32.mrb[0].mxu0
      %1457 = vmatprep.mubr.f32.mxu0 0.0
      %1458 = vmatmul.mubr.f32.gmra.mrb[0].mxu0 %v1147
      %v1459 = vpop.f32.mrb[0].mxu0
      %v1460 = vadd.f32 0.0, %v1459
      %v1461 = vpop.f32.mrb[0].mxu0
      %1462 = vmatprep.mubr.f32.mxu0 0.0
      %1463 = vmatmul.mubr.f32.gmra.mrb[0].mxu0 %v1148
      %v1464 = vpop.f32.mrb[0].mxu0
      %v1465 = vadd.f32 0.0, %v1464
      %v1466 = vpop.f32.mrb[0].mxu0
      %1467 = vmatprep.mubr.f32.mxu0 0.0
      %1468 = vmatmul.mubr.f32.gmra.mrb[0].mxu0 %v1149
      %v1469 = vpop.f32.mrb[0].mxu0
      %v1470 = vadd.f32 0.0, %v1469
      %v1471 = vpop.f32.mrb[0].mxu0
      %1472 = vmatprep.mubr.f32.mxu0 0.0
      %1473 = vmatmul.mubr.f32.gmra.mrb[0].mxu0 %v1150
      %v1474 = vpop.f32.mrb[0].mxu0
      %v1475 = vadd.f32 0.0, %v1474
      %v1476 = vpop.f32.mrb[0].mxu0
      %1477 = vdwg.mxu0
      %v1478 = vadd.f32 %v1151, %v1275
      %v1479 = vadd.f32 %v1152, %v1280
      %v1480 = vadd.f32 %v1153, %v1285
      %v1481 = vadd.f32 %v1154, %v1290
      %v1482 = vadd.f32 %v1155, %v1295
      %v1483 = vadd.f32 %v1156, %v1300
      %v1484 = vadd.f32 %v1157, %v1305
      %v1485 = vadd.f32 %v1158, %v1310
      %v1486 = vadd.f32 %v1159, %v1315
      %v1487 = vadd.f32 %v1160, %v1320
      %v1488 = vadd.f32 %v1161, %v1325
      %v1489 = vadd.f32 %v1162, %v1330
      %v1490 = vadd.f32 %v1163, %v1335
      %v1491 = vadd.f32 %v1164, %v1340
      %v1492 = vadd.f32 %v1165, %v1345
      %v1493 = vadd.f32 %v1166, %v1350
      %v1494 = vadd.f32 %v1167, %v1355
      %v1495 = vadd.f32 %v1168, %v1360
      %v1496 = vadd.f32 %v1169, %v1365
      %v1497 = vadd.f32 %v1170, %v1370
      %v1498 = vadd.f32 %v1171, %v1375
      %v1499 = vadd.f32 %v1172, %v1380
      %v1500 = vadd.f32 %v1173, %v1385
      %v1501 = vadd.f32 %v1174, %v1390
      %v1502 = vadd.f32 %v1175, %v1395
      %v1503 = vadd.f32 %v1176, %v1400
      %v1504 = vadd.f32 %v1177, %v1405
      %v1505 = vadd.f32 %v1178, %v1410
      %v1506 = vadd.f32 %v1179, %v1415
      %v1507 = vadd.f32 %v1180, %v1420
      %v1508 = vadd.f32 %v1181, %v1425
      %v1509 = vadd.f32 %v1182, %v1430
      %v1510 = vadd.f32 %v1183, %v1435
      %v1511 = vadd.f32 %v1184, %v1440
      %v1512 = vadd.f32 %v1185, %v1445
      %v1513 = vadd.f32 %v1186, %v1450
      %v1514 = vadd.f32 %v1187, %v1455
      %v1515 = vadd.f32 %v1188, %v1460
      %v1516 = vadd.f32 %v1189, %v1465
      %v1517 = vadd.f32 %v1190, %v1470
      %v1518 = vadd.f32 %v1191, %v1475
      %1519 = vst [vmem:[#allocation3] sm:$0xff] %v1478
      %1520 = vst [vmem:[#allocation3 + $0x8] sm:$0xff] %v1479
      %1521 = vst [vmem:[#allocation3 + $0x10] sm:$0xff] %v1480
      %1522 = vst [vmem:[#allocation3 + $0x18] sm:$0xff] %v1481
      %1523 = vst [vmem:[#allocation3 + $0x20] sm:$0xff] %v1482
      %1524 = vst [vmem:[#allocation3 + $0x28] sm:$0xff] %v1483
      %1525 = vst [vmem:[#allocation3 + $0x30] sm:$0xff] %v1484
      %1526 = vst [vmem:[#allocation3 + $0x38] sm:$0xff] %v1485
      %1527 = vst [vmem:[#allocation3 + $0x40] sm:$0xff] %v1486
      %1528 = vst [vmem:[#allocation3 + $0x48] sm:$0xff] %v1487
      %1529 = vst [vmem:[#allocation3 + $0x50] sm:$0xff] %v1488
      %1530 = vst [vmem:[#allocation3 + $0x58] sm:$0xff] %v1489
      %1531 = vst [vmem:[#allocation3 + $0x60] sm:$0xff] %v1490
      %1532 = vst [vmem:[#allocation3 + $0x68] sm:$0xff] %v1491
      %1533 = vst [vmem:[#allocation3 + $0x70] sm:$0xff] %v1492
      %1534 = vst [vmem:[#allocation3 + $0x78] sm:$0xff] %v1493
      %1535 = vst [vmem:[#allocation3 + $0x80] sm:$0xff] %v1494
      %1536 = vst [vmem:[#allocation3 + $0x88] sm:$0xff] %v1495
      %1537 = vst [vmem:[#allocation3 + $0x90] sm:$0xff] %v1496
      %1538 = vst [vmem:[#allocation3 + $0x98] sm:$0xff] %v1497
      %1539 = vst [vmem:[#allocation3 + $0xa0] sm:$0xff] %v1498
      %1540 = vst [vmem:[#allocation3 + $0xa8] sm:$0xff] %v1499
      %1541 = vst [vmem:[#allocation3 + $0xb0] sm:$0xff] %v1500
      %1542 = vst [vmem:[#allocation3 + $0xb8] sm:$0xff] %v1501
      %1543 = vst [vmem:[#allocation3 + $0xc0] sm:$0xff] %v1502
      %1544 = vst [vmem:[#allocation3 + $0xc8] sm:$0xff] %v1503
      %1545 = vst [vmem:[#allocation3 + $0xd0] sm:$0xff] %v1504
      %1546 = vst [vmem:[#allocation3 + $0xd8] sm:$0xff] %v1505
      %1547 = vst [vmem:[#allocation3 + $0xe0] sm:$0xff] %v1506
      %1548 = vst [vmem:[#allocation3 + $0xe8] sm:$0xff] %v1507
      %1549 = vst [vmem:[#allocation3 + $0xf0] sm:$0xff] %v1508
      %1550 = vst [vmem:[#allocation3 + $0xf8] sm:$0xff] %v1509
      %1551 = vst [vmem:[#allocation3 + $0x100] sm:$0xff] %v1510
      %1552 = vst [vmem:[#allocation3 + $0x108] sm:$0xff] %v1511
      %1553 = vst [vmem:[#allocation3 + $0x110] sm:$0xff] %v1512
      %1554 = vst [vmem:[#allocation3 + $0x118] sm:$0xff] %v1513
      %1555 = vst [vmem:[#allocation3 + $0x120] sm:$0xff] %v1514
      %1556 = vst [vmem:[#allocation3 + $0x128] sm:$0xff] %v1515
      %1557 = vst [vmem:[#allocation3 + $0x130] sm:$0xff] %v1516
      %1558 = vst [vmem:[#allocation3 + $0x138] sm:$0xff] %v1517
      %1559 = vst [vmem:[#allocation3 + $0x140] sm:$0xff] %v1518
      %v1560 = vld [vmem:[#allocation2 + $0x6] sm:$0xff]
      %v1561 = vld [vmem:[#allocation2 + $0xe] sm:$0xff]
      %v1562 = vld [vmem:[#allocation2 + $0x16] sm:$0xff]
      %v1563 = vld [vmem:[#allocation2 + $0x1e] sm:$0xff]
      %v1564 = vld [vmem:[#allocation2 + $0x26] sm:$0xff]
      %v1565 = vld [vmem:[#allocation2 + $0x2e] sm:$0xff]
      %v1566 = vld [vmem:[#allocation2 + $0x36] sm:$0xff]
      %v1567 = vld [vmem:[#allocation2 + $0x3e] sm:$0xff]
      %v1568 = vld [vmem:[#allocation2 + $0x46] sm:$0xff]
      %v1569 = vld [vmem:[#allocation2 + $0x4e] sm:$0xff]
      %v1570 = vld [vmem:[#allocation2 + $0x56] sm:$0xff]
      %v1571 = vld [vmem:[#allocation2 + $0x5e] sm:$0xff]
      %v1572 = vld [vmem:[#allocation2 + $0x66] sm:$0xff]
      %v1573 = vld [vmem:[#allocation2 + $0x6e] sm:$0xff]
      %v1574 = vld [vmem:[#allocation2 + $0x76] sm:$0xff]
      %v1575 = vld [vmem:[#allocation2 + $0x7e] sm:$0xff]
      %v1576 = vld [vmem:[#allocation2 + $0x86] sm:$0xff]
      %v1577 = vld [vmem:[#allocation2 + $0x8e] sm:$0xff]
      %v1578 = vld [vmem:[#allocation2 + $0x96] sm:$0xff]
      %v1579 = vld [vmem:[#allocation2 + $0x9e] sm:$0xff]
      %v1580 = vld [vmem:[#allocation2 + $0xa6] sm:$0xff]
      %v1581 = vld [vmem:[#allocation2 + $0xae] sm:$0xff]
      %v1582 = vld [vmem:[#allocation2 + $0xb6] sm:$0xff]
      %v1583 = vld [vmem:[#allocation2 + $0xbe] sm:$0xff]
      %v1584 = vld [vmem:[#allocation2 + $0xc6] sm:$0xff]
      %v1585 = vld [vmem:[#allocation2 + $0xce] sm:$0xff]
      %v1586 = vld [vmem:[#allocation2 + $0xd6] sm:$0xff]
      %v1587 = vld [vmem:[#allocation2 + $0xde] sm:$0xff]
      %v1588 = vld [vmem:[#allocation2 + $0xe6] sm:$0xff]
      %v1589 = vld [vmem:[#allocation2 + $0xee] sm:$0xff]
      %v1590 = vld [vmem:[#allocation2 + $0xf6] sm:$0xff]
      %v1591 = vld [vmem:[#allocation2 + $0xfe] sm:$0xff]
      %v1592 = vld [vmem:[#allocation2 + $0x106] sm:$0xff]
      %v1593 = vld [vmem:[#allocation2 + $0x10e] sm:$0xff]
      %v1594 = vld [vmem:[#allocation2 + $0x116] sm:$0xff]
      %v1595 = vld [vmem:[#allocation2 + $0x11e] sm:$0xff]
      %v1596 = vld [vmem:[#allocation2 + $0x126] sm:$0xff]
      %v1597 = vld [vmem:[#allocation2 + $0x12e] sm:$0xff]
      %v1598 = vld [vmem:[#allocation2 + $0x136] sm:$0xff]
      %v1599 = vld [vmem:[#allocation2 + $0x13e] sm:$0xff]
      %v1600 = vld [vmem:[#allocation2 + $0x146] sm:$0xff]
      %v1601 = vld [vmem:[#allocation3] sm:$0xff]
      %v1602 = vld [vmem:[#allocation3 + $0x8] sm:$0xff]
      %v1603 = vld [vmem:[#allocation3 + $0x10] sm:$0xff]
      %v1604 = vld [vmem:[#allocation3 + $0x18] sm:$0xff]
      %v1605 = vld [vmem:[#allocation3 + $0x20] sm:$0xff]
      %v1606 = vld [vmem:[#allocation3 + $0x28] sm:$0xff]
      %v1607 = vld [vmem:[#allocation3 + $0x30] sm:$0xff]
      %v1608 = vld [vmem:[#allocation3 + $0x38] sm:$0xff]
      %v1609 = vld [vmem:[#allocation3 + $0x40] sm:$0xff]
      %v1610 = vld [vmem:[#allocation3 + $0x48] sm:$0xff]
      %v1611 = vld [vmem:[#allocation3 + $0x50] sm:$0xff]
      %v1612 = vld [vmem:[#allocation3 + $0x58] sm:$0xff]
      %v1613 = vld [vmem:[#allocation3 + $0x60] sm:$0xff]
      %v1614 = vld [vmem:[#allocation3 + $0x68] sm:$0xff]
      %v1615 = vld [vmem:[#allocation3 + $0x70] sm:$0xff]
      %v1616 = vld [vmem:[#allocation3 + $0x78] sm:$0xff]
      %v1617 = vld [vmem:[#allocation3 + $0x80] sm:$0xff]
      %v1618 = vld [vmem:[#allocation3 + $0x88] sm:$0xff]
      %v1619 = vld [vmem:[#allocation3 + $0x90] sm:$0xff]
      %v1620 = vld [vmem:[#allocation3 + $0x98] sm:$0xff]
      %v1621 = vld [vmem:[#allocation3 + $0xa0] sm:$0xff]
      %v1622 = vld [vmem:[#allocation3 + $0xa8] sm:$0xff]
      %v1623 = vld [vmem:[#allocation3 + $0xb0] sm:$0xff]
      %v1624 = vld [vmem:[#allocation3 + $0xb8] sm:$0xff]
      %v1625 = vld [vmem:[#allocation3 + $0xc0] sm:$0xff]
      %v1626 = vld [vmem:[#allocation3 + $0xc8] sm:$0xff]
      %v1627 = vld [vmem:[#allocation3 + $0xd0] sm:$0xff]
      %v1628 = vld [vmem:[#allocation3 + $0xd8] sm:$0xff]
      %v1629 = vld [vmem:[#allocation3 + $0xe0] sm:$0xff]
      %v1630 = vld [vmem:[#allocation3 + $0xe8] sm:$0xff]
      %v1631 = vld [vmem:[#allocation3 + $0xf0] sm:$0xff]
      %v1632 = vld [vmem:[#allocation3 + $0xf8] sm:$0xff]
      %v1633 = vld [vmem:[#allocation3 + $0x100] sm:$0xff]
      %v1634 = vld [vmem:[#allocation3 + $0x108] sm:$0xff]
      %v1635 = vld [vmem:[#allocation3 + $0x110] sm:$0xff]
      %v1636 = vld [vmem:[#allocation3 + $0x118] sm:$0xff]
      %v1637 = vld [vmem:[#allocation3 + $0x120] sm:$0xff]
      %v1638 = vld [vmem:[#allocation3 + $0x128] sm:$0xff]
      %v1639 = vld [vmem:[#allocation3 + $0x130] sm:$0xff]
      %v1640 = vld [vmem:[#allocation3 + $0x138] sm:$0xff]
      %v1641 = vld [vmem:[#allocation3 + $0x140] sm:$0xff]
      %s1642 = scalar_lea.vmem %s4, 128
      %v1643 = vld [vmem:[%s1642] sm:$0xff]
      %v1644 = vld [vmem:[%s1642 + $0x8] sm:$0xff]
      %v1645 = vld [vmem:[%s1642 + $0x10] sm:$0xff]
      %v1646 = vld [vmem:[%s1642 + $0x18] sm:$0xff]
      %v1647 = vld [vmem:[%s1642 + $0x20] sm:$0xff]
      %v1648 = vld [vmem:[%s1642 + $0x28] sm:$0xff]
      %v1649 = vld [vmem:[%s1642 + $0x30] sm:$0xff]
      %v1650 = vld [vmem:[%s1642 + $0x38] sm:$0xff]
      %v1651 = vld [vmem:[%s1642 + $0x40] sm:$0xff]
      %v1652 = vld [vmem:[%s1642 + $0x48] sm:$0xff]
      %v1653 = vld [vmem:[%s1642 + $0x50] sm:$0xff]
      %v1654 = vld [vmem:[%s1642 + $0x58] sm:$0xff]
      %v1655 = vld [vmem:[%s1642 + $0x60] sm:$0xff]
      %v1656 = vld [vmem:[%s1642 + $0x68] sm:$0xff]
      %v1657 = vld [vmem:[%s1642 + $0x70] sm:$0xff]
      %v1658 = vld [vmem:[%s1642 + $0x78] sm:$0xff]
      %1659 = vmatprep.subr.mxu0 0.0
      %1660 = vmatpush1.msra.mxu0 %v1643
      %1661 = vmatprep.subr.mxu0 0.0
      %1662 = vmatpush1.msra.mxu0 %v1644
      %1663 = vmatprep.subr.mxu0 0.0
      %1664 = vmatpush1.msra.mxu0 %v1645
      %1665 = vmatprep.subr.mxu0 0.0
      %1666 = vmatpush1.msra.mxu0 %v1646
      %1667 = vmatprep.subr.mxu0 0.0
      %1668 = vmatpush1.msra.mxu0 %v1647
      %1669 = vmatprep.subr.mxu0 0.0
      %1670 = vmatpush1.msra.mxu0 %v1648
      %1671 = vmatprep.subr.mxu0 0.0
      %1672 = vmatpush1.msra.mxu0 %v1649
      %1673 = vmatprep.subr.mxu0 0.0
      %1674 = vmatpush1.msra.mxu0 %v1650
      %1675 = vmatprep.subr.mxu0 0.0
      %1676 = vmatpush1.msra.mxu0 %v1651
      %1677 = vmatprep.subr.mxu0 0.0
      %1678 = vmatpush1.msra.mxu0 %v1652
      %1679 = vmatprep.subr.mxu0 0.0
      %1680 = vmatpush1.msra.mxu0 %v1653
      %1681 = vmatprep.subr.mxu0 0.0
      %1682 = vmatpush1.msra.mxu0 %v1654
      %1683 = vmatprep.subr.mxu0 0.0
      %1684 = vmatpush1.msra.mxu0 %v1655
      %1685 = vmatprep.subr.mxu0 0.0
      %1686 = vmatpush1.msra.mxu0 %v1656
      %1687 = vmatprep.subr.mxu0 0.0
      %1688 = vmatpush1.msra.mxu0 %v1657
      %1689 = vmatprep.subr.mxu0 0.0
      %1690 = vmatpush1.msra.mxu0 %v1658
      %1691 = vmatprep.subr.mxu0 0.0
      %1692 = vmatpush1.msra.mxu0 0.0
      %1693 = vmatprep.subr.mxu0 0.0
      %1694 = vmatpush1.msra.mxu0 0.0
      %1695 = vmatprep.subr.mxu0 0.0
      %1696 = vmatpush1.msra.mxu0 0.0
      %1697 = vmatprep.subr.mxu0 0.0
      %1698 = vmatpush1.msra.mxu0 0.0
      %1699 = vmatprep.subr.mxu0 0.0
      %1700 = vmatpush1.msra.mxu0 0.0
      %1701 = vmatprep.subr.mxu0 0.0
      %1702 = vmatpush1.msra.mxu0 0.0
      %1703 = vmatprep.subr.mxu0 0.0
      %1704 = vmatpush1.msra.mxu0 0.0
      %1705 = vmatprep.subr.mxu0 0.0
      %1706 = vmatpush1.msra.mxu0 0.0
      %1707 = vmatprep.subr.mxu0 0.0
      %1708 = vmatpush1.msra.mxu0 0.0
      %1709 = vmatprep.subr.mxu0 0.0
      %1710 = vmatpush1.msra.mxu0 0.0
      %1711 = vmatprep.subr.mxu0 0.0
      %1712 = vmatpush1.msra.mxu0 0.0
      %1713 = vmatprep.subr.mxu0 0.0
      %1714 = vmatpush1.msra.mxu0 0.0
      %1715 = vmatprep.subr.mxu0 0.0
      %1716 = vmatpush1.msra.mxu0 0.0
      %1717 = vmatprep.subr.mxu0 0.0
      %1718 = vmatpush1.msra.mxu0 0.0
      %1719 = vmatprep.subr.mxu0 0.0
      %1720 = vmatpush1.msra.mxu0 0.0
      %1721 = vmatprep.subr.mxu0 0.0
      %1722 = vmatpush1.msra.mxu0 0.0
      %1723 = vmatprep.mubr.f32.mxu0 0.0
      %1724 = vmatmul.mubr.f32.gmra.mrb[0].mxu0 %v1560
      %v1725 = vpop.f32.mrb[0].mxu0
      %v1726 = vadd.f32 0.0, %v1725
      %v1727 = vpop.f32.mrb[0].mxu0
      %1728 = vmatprep.mubr.f32.mxu0 0.0
      %1729 = vmatmul.mubr.f32.gmra.mrb[0].mxu0 %v1561
      %v1730 = vpop.f32.mrb[0].mxu0
      %v1731 = vadd.f32 0.0, %v1730
      %v1732 = vpop.f32.mrb[0].mxu0
      %1733 = vmatprep.mubr.f32.mxu0 0.0
      %1734 = vmatmul.mubr.f32.gmra.mrb[0].mxu0 %v1562
      %v1735 = vpop.f32.mrb[0].mxu0
      %v1736 = vadd.f32 0.0, %v1735
      %v1737 = vpop.f32.mrb[0].mxu0
      %1738 = vmatprep.mubr.f32.mxu0 0.0
      %1739 = vmatmul.mubr.f32.gmra.mrb[0].mxu0 %v1563
      %v1740 = vpop.f32.mrb[0].mxu0
      %v1741 = vadd.f32 0.0, %v1740
      %v1742 = vpop.f32.mrb[0].mxu0
      %1743 = vmatprep.mubr.f32.mxu0 0.0
      %1744 = vmatmul.mubr.f32.gmra.mrb[0].mxu0 %v1564
      %v1745 = vpop.f32.mrb[0].mxu0
      %v1746 = vadd.f32 0.0, %v1745
      %v1747 = vpop.f32.mrb[0].mxu0
      %1748 = vmatprep.mubr.f32.mxu0 0.0
      %1749 = vmatmul.mubr.f32.gmra.mrb[0].mxu0 %v1565
      %v1750 = vpop.f32.mrb[0].mxu0
      %v1751 = vadd.f32 0.0, %v1750
      %v1752 = vpop.f32.mrb[0].mxu0
      %1753 = vmatprep.mubr.f32.mxu0 0.0
      %1754 = vmatmul.mubr.f32.gmra.mrb[0].mxu0 %v1566
      %v1755 = vpop.f32.mrb[0].mxu0
      %v1756 = vadd.f32 0.0, %v1755
      %v1757 = vpop.f32.mrb[0].mxu0
      %1758 = vmatprep.mubr.f32.mxu0 0.0
      %1759 = vmatmul.mubr.f32.gmra.mrb[0].mxu0 %v1567
      %v1760 = vpop.f32.mrb[0].mxu0
      %v1761 = vadd.f32 0.0, %v1760
      %v1762 = vpop.f32.mrb[0].mxu0
      %1763 = vmatprep.mubr.f32.mxu0 0.0
      %1764 = vmatmul.mubr.f32.gmra.mrb[0].mxu0 %v1568
      %v1765 = vpop.f32.mrb[0].mxu0
      %v1766 = vadd.f32 0.0, %v1765
      %v1767 = vpop.f32.mrb[0].mxu0
      %1768 = vmatprep.mubr.f32.mxu0 0.0
      %1769 = vmatmul.mubr.f32.gmra.mrb[0].mxu0 %v1569
      %v1770 = vpop.f32.mrb[0].mxu0
      %v1771 = vadd.f32 0.0, %v1770
      %v1772 = vpop.f32.mrb[0].mxu0
      %1773 = vmatprep.mubr.f32.mxu0 0.0
      %1774 = vmatmul.mubr.f32.gmra.mrb[0].mxu0 %v1570
      %v1775 = vpop.f32.mrb[0].mxu0
      %v1776 = vadd.f32 0.0, %v1775
      %v1777 = vpop.f32.mrb[0].mxu0
      %1778 = vmatprep.mubr.f32.mxu0 0.0
      %1779 = vmatmul.mubr.f32.gmra.mrb[0].mxu0 %v1571
      %v1780 = vpop.f32.mrb[0].mxu0
      %v1781 = vadd.f32 0.0, %v1780
      %v1782 = vpop.f32.mrb[0].mxu0
      %1783 = vmatprep.mubr.f32.mxu0 0.0
      %1784 = vmatmul.mubr.f32.gmra.mrb[0].mxu0 %v1572
      %v1785 = vpop.f32.mrb[0].mxu0
      %v1786 = vadd.f32 0.0, %v1785
      %v1787 = vpop.f32.mrb[0].mxu0
      %1788 = vmatprep.mubr.f32.mxu0 0.0
      %1789 = vmatmul.mubr.f32.gmra.mrb[0].mxu0 %v1573
      %v1790 = vpop.f32.mrb[0].mxu0
      %v1791 = vadd.f32 0.0, %v1790
      %v1792 = vpop.f32.mrb[0].mxu0
      %1793 = vmatprep.mubr.f32.mxu0 0.0
      %1794 = vmatmul.mubr.f32.gmra.mrb[0].mxu0 %v1574
      %v1795 = vpop.f32.mrb[0].mxu0
      %v1796 = vadd.f32 0.0, %v1795
      %v1797 = vpop.f32.mrb[0].mxu0
      %1798 = vmatprep.mubr.f32.mxu0 0.0
      %1799 = vmatmul.mubr.f32.gmra.mrb[0].mxu0 %v1575
      %v1800 = vpop.f32.mrb[0].mxu0
      %v1801 = vadd.f32 0.0, %v1800
      %v1802 = vpop.f32.mrb[0].mxu0
      %1803 = vmatprep.mubr.f32.mxu0 0.0
      %1804 = vmatmul.mubr.f32.gmra.mrb[0].mxu0 %v1576
      %v1805 = vpop.f32.mrb[0].mxu0
      %v1806 = vadd.f32 0.0, %v1805
      %v1807 = vpop.f32.mrb[0].mxu0
      %1808 = vmatprep.mubr.f32.mxu0 0.0
      %1809 = vmatmul.mubr.f32.gmra.mrb[0].mxu0 %v1577
      %v1810 = vpop.f32.mrb[0].mxu0
      %v1811 = vadd.f32 0.0, %v1810
      %v1812 = vpop.f32.mrb[0].mxu0
      %1813 = vmatprep.mubr.f32.mxu0 0.0
      %1814 = vmatmul.mubr.f32.gmra.mrb[0].mxu0 %v1578
      %v1815 = vpop.f32.mrb[0].mxu0
      %v1816 = vadd.f32 0.0, %v1815
      %v1817 = vpop.f32.mrb[0].mxu0
      %1818 = vmatprep.mubr.f32.mxu0 0.0
      %1819 = vmatmul.mubr.f32.gmra.mrb[0].mxu0 %v1579
      %v1820 = vpop.f32.mrb[0].mxu0
      %v1821 = vadd.f32 0.0, %v1820
      %v1822 = vpop.f32.mrb[0].mxu0
      %1823 = vmatprep.mubr.f32.mxu0 0.0
      %1824 = vmatmul.mubr.f32.gmra.mrb[0].mxu0 %v1580
      %v1825 = vpop.f32.mrb[0].mxu0
      %v1826 = vadd.f32 0.0, %v1825
      %v1827 = vpop.f32.mrb[0].mxu0
      %1828 = vmatprep.mubr.f32.mxu0 0.0
      %1829 = vmatmul.mubr.f32.gmra.mrb[0].mxu0 %v1581
      %v1830 = vpop.f32.mrb[0].mxu0
      %v1831 = vadd.f32 0.0, %v1830
      %v1832 = vpop.f32.mrb[0].mxu0
      %1833 = vmatprep.mubr.f32.mxu0 0.0
      %1834 = vmatmul.mubr.f32.gmra.mrb[0].mxu0 %v1582
      %v1835 = vpop.f32.mrb[0].mxu0
      %v1836 = vadd.f32 0.0, %v1835
      %v1837 = vpop.f32.mrb[0].mxu0
      %1838 = vmatprep.mubr.f32.mxu0 0.0
      %1839 = vmatmul.mubr.f32.gmra.mrb[0].mxu0 %v1583
      %v1840 = vpop.f32.mrb[0].mxu0
      %v1841 = vadd.f32 0.0, %v1840
      %v1842 = vpop.f32.mrb[0].mxu0
      %1843 = vmatprep.mubr.f32.mxu0 0.0
      %1844 = vmatmul.mubr.f32.gmra.mrb[0].mxu0 %v1584
      %v1845 = vpop.f32.mrb[0].mxu0
      %v1846 = vadd.f32 0.0, %v1845
      %v1847 = vpop.f32.mrb[0].mxu0
      %1848 = vmatprep.mubr.f32.mxu0 0.0
      %1849 = vmatmul.mubr.f32.gmra.mrb[0].mxu0 %v1585
      %v1850 = vpop.f32.mrb[0].mxu0
      %v1851 = vadd.f32 0.0, %v1850
      %v1852 = vpop.f32.mrb[0].mxu0
      %1853 = vmatprep.mubr.f32.mxu0 0.0
      %1854 = vmatmul.mubr.f32.gmra.mrb[0].mxu0 %v1586
      %v1855 = vpop.f32.mrb[0].mxu0
      %v1856 = vadd.f32 0.0, %v1855
      %v1857 = vpop.f32.mrb[0].mxu0
      %1858 = vmatprep.mubr.f32.mxu0 0.0
      %1859 = vmatmul.mubr.f32.gmra.mrb[0].mxu0 %v1587
      %v1860 = vpop.f32.mrb[0].mxu0
      %v1861 = vadd.f32 0.0, %v1860
      %v1862 = vpop.f32.mrb[0].mxu0
      %1863 = vmatprep.mubr.f32.mxu0 0.0
      %1864 = vmatmul.mubr.f32.gmra.mrb[0].mxu0 %v1588
      %v1865 = vpop.f32.mrb[0].mxu0
      %v1866 = vadd.f32 0.0, %v1865
      %v1867 = vpop.f32.mrb[0].mxu0
      %1868 = vmatprep.mubr.f32.mxu0 0.0
      %1869 = vmatmul.mubr.f32.gmra.mrb[0].mxu0 %v1589
      %v1870 = vpop.f32.mrb[0].mxu0
      %v1871 = vadd.f32 0.0, %v1870
      %v1872 = vpop.f32.mrb[0].mxu0
      %1873 = vmatprep.mubr.f32.mxu0 0.0
      %1874 = vmatmul.mubr.f32.gmra.mrb[0].mxu0 %v1590
      %v1875 = vpop.f32.mrb[0].mxu0
      %v1876 = vadd.f32 0.0, %v1875
      %v1877 = vpop.f32.mrb[0].mxu0
      %1878 = vmatprep.mubr.f32.mxu0 0.0
      %1879 = vmatmul.mubr.f32.gmra.mrb[0].mxu0 %v1591
      %v1880 = vpop.f32.mrb[0].mxu0
      %v1881 = vadd.f32 0.0, %v1880
      %v1882 = vpop.f32.mrb[0].mxu0
      %1883 = vmatprep.mubr.f32.mxu0 0.0
      %1884 = vmatmul.mubr.f32.gmra.mrb[0].mxu0 %v1592
      %v1885 = vpop.f32.mrb[0].mxu0
      %v1886 = vadd.f32 0.0, %v1885
      %v1887 = vpop.f32.mrb[0].mxu0
      %1888 = vmatprep.mubr.f32.mxu0 0.0
      %1889 = vmatmul.mubr.f32.gmra.mrb[0].mxu0 %v1593
      %v1890 = vpop.f32.mrb[0].mxu0
      %v1891 = vadd.f32 0.0, %v1890
      %v1892 = vpop.f32.mrb[0].mxu0
      %1893 = vmatprep.mubr.f32.mxu0 0.0
      %1894 = vmatmul.mubr.f32.gmra.mrb[0].mxu0 %v1594
      %v1895 = vpop.f32.mrb[0].mxu0
      %v1896 = vadd.f32 0.0, %v1895
      %v1897 = vpop.f32.mrb[0].mxu0
      %1898 = vmatprep.mubr.f32.mxu0 0.0
      %1899 = vmatmul.mubr.f32.gmra.mrb[0].mxu0 %v1595
      %v1900 = vpop.f32.mrb[0].mxu0
      %v1901 = vadd.f32 0.0, %v1900
      %v1902 = vpop.f32.mrb[0].mxu0
      %1903 = vmatprep.mubr.f32.mxu0 0.0
      %1904 = vmatmul.mubr.f32.gmra.mrb[0].mxu0 %v1596
      %v1905 = vpop.f32.mrb[0].mxu0
      %v1906 = vadd.f32 0.0, %v1905
      %v1907 = vpop.f32.mrb[0].mxu0
      %1908 = vmatprep.mubr.f32.mxu0 0.0
      %1909 = vmatmul.mubr.f32.gmra.mrb[0].mxu0 %v1597
      %v1910 = vpop.f32.mrb[0].mxu0
      %v1911 = vadd.f32 0.0, %v1910
      %v1912 = vpop.f32.mrb[0].mxu0
      %1913 = vmatprep.mubr.f32.mxu0 0.0
      %1914 = vmatmul.mubr.f32.gmra.mrb[0].mxu0 %v1598
      %v1915 = vpop.f32.mrb[0].mxu0
      %v1916 = vadd.f32 0.0, %v1915
      %v1917 = vpop.f32.mrb[0].mxu0
      %1918 = vmatprep.mubr.f32.mxu0 0.0
      %1919 = vmatmul.mubr.f32.gmra.mrb[0].mxu0 %v1599
      %v1920 = vpop.f32.mrb[0].mxu0
      %v1921 = vadd.f32 0.0, %v1920
      %v1922 = vpop.f32.mrb[0].mxu0
      %1923 = vmatprep.mubr.f32.mxu0 0.0
      %1924 = vmatmul.mubr.f32.gmra.mrb[0].mxu0 %v1600
      %v1925 = vpop.f32.mrb[0].mxu0
      %v1926 = vadd.f32 0.0, %v1925
      %v1927 = vpop.f32.mrb[0].mxu0
      %1928 = vdwg.mxu0
      %v1929 = vadd.f32 %v1601, %v1726
      %v1930 = vadd.f32 %v1602, %v1731
      %v1931 = vadd.f32 %v1603, %v1736
      %v1932 = vadd.f32 %v1604, %v1741
      %v1933 = vadd.f32 %v1605, %v1746
      %v1934 = vadd.f32 %v1606, %v1751
      %v1935 = vadd.f32 %v1607, %v1756
      %v1936 = vadd.f32 %v1608, %v1761
      %v1937 = vadd.f32 %v1609, %v1766
      %v1938 = vadd.f32 %v1610, %v1771
      %v1939 = vadd.f32 %v1611, %v1776
      %v1940 = vadd.f32 %v1612, %v1781
      %v1941 = vadd.f32 %v1613, %v1786
      %v1942 = vadd.f32 %v1614, %v1791
      %v1943 = vadd.f32 %v1615, %v1796
      %v1944 = vadd.f32 %v1616, %v1801
      %v1945 = vadd.f32 %v1617, %v1806
      %v1946 = vadd.f32 %v1618, %v1811
      %v1947 = vadd.f32 %v1619, %v1816
      %v1948 = vadd.f32 %v1620, %v1821
      %v1949 = vadd.f32 %v1621, %v1826
      %v1950 = vadd.f32 %v1622, %v1831
      %v1951 = vadd.f32 %v1623, %v1836
      %v1952 = vadd.f32 %v1624, %v1841
      %v1953 = vadd.f32 %v1625, %v1846
      %v1954 = vadd.f32 %v1626, %v1851
      %v1955 = vadd.f32 %v1627, %v1856
      %v1956 = vadd.f32 %v1628, %v1861
      %v1957 = vadd.f32 %v1629, %v1866
      %v1958 = vadd.f32 %v1630, %v1871
      %v1959 = vadd.f32 %v1631, %v1876
      %v1960 = vadd.f32 %v1632, %v1881
      %v1961 = vadd.f32 %v1633, %v1886
      %v1962 = vadd.f32 %v1634, %v1891
      %v1963 = vadd.f32 %v1635, %v1896
      %v1964 = vadd.f32 %v1636, %v1901
      %v1965 = vadd.f32 %v1637, %v1906
      %v1966 = vadd.f32 %v1638, %v1911
      %v1967 = vadd.f32 %v1639, %v1916
      %v1968 = vadd.f32 %v1640, %v1921
      %v1969 = vadd.f32 %v1641, %v1926
      %1970 = vst [vmem:[#allocation3] sm:$0xff] %v1929
      %1971 = vst [vmem:[#allocation3 + $0x8] sm:$0xff] %v1930
      %1972 = vst [vmem:[#allocation3 + $0x10] sm:$0xff] %v1931
      %1973 = vst [vmem:[#allocation3 + $0x18] sm:$0xff] %v1932
      %1974 = vst [vmem:[#allocation3 + $0x20] sm:$0xff] %v1933
      %1975 = vst [vmem:[#allocation3 + $0x28] sm:$0xff] %v1934
      %1976 = vst [vmem:[#allocation3 + $0x30] sm:$0xff] %v1935
      %1977 = vst [vmem:[#allocation3 + $0x38] sm:$0xff] %v1936
      %1978 = vst [vmem:[#allocation3 + $0x40] sm:$0xff] %v1937
      %1979 = vst [vmem:[#allocation3 + $0x48] sm:$0xff] %v1938
      %1980 = vst [vmem:[#allocation3 + $0x50] sm:$0xff] %v1939
      %1981 = vst [vmem:[#allocation3 + $0x58] sm:$0xff] %v1940
      %1982 = vst [vmem:[#allocation3 + $0x60] sm:$0xff] %v1941
      %1983 = vst [vmem:[#allocation3 + $0x68] sm:$0xff] %v1942
      %1984 = vst [vmem:[#allocation3 + $0x70] sm:$0xff] %v1943
      %1985 = vst [vmem:[#allocation3 + $0x78] sm:$0xff] %v1944
      %1986 = vst [vmem:[#allocation3 + $0x80] sm:$0xff] %v1945
      %1987 = vst [vmem:[#allocation3 + $0x88] sm:$0xff] %v1946
      %1988 = vst [vmem:[#allocation3 + $0x90] sm:$0xff] %v1947
      %1989 = vst [vmem:[#allocation3 + $0x98] sm:$0xff] %v1948
      %1990 = vst [vmem:[#allocation3 + $0xa0] sm:$0xff] %v1949
      %1991 = vst [vmem:[#allocation3 + $0xa8] sm:$0xff] %v1950
      %1992 = vst [vmem:[#allocation3 + $0xb0] sm:$0xff] %v1951
      %1993 = vst [vmem:[#allocation3 + $0xb8] sm:$0xff] %v1952
      %1994 = vst [vmem:[#allocation3 + $0xc0] sm:$0xff] %v1953
      %1995 = vst [vmem:[#allocation3 + $0xc8] sm:$0xff] %v1954
      %1996 = vst [vmem:[#allocation3 + $0xd0] sm:$0xff] %v1955
      %1997 = vst [vmem:[#allocation3 + $0xd8] sm:$0xff] %v1956
      %1998 = vst [vmem:[#allocation3 + $0xe0] sm:$0xff] %v1957
      %1999 = vst [vmem:[#allocation3 + $0xe8] sm:$0xff] %v1958
      %2000 = vst [vmem:[#allocation3 + $0xf0] sm:$0xff] %v1959
      %2001 = vst [vmem:[#allocation3 + $0xf8] sm:$0xff] %v1960
      %2002 = vst [vmem:[#allocation3 + $0x100] sm:$0xff] %v1961
      %2003 = vst [vmem:[#allocation3 + $0x108] sm:$0xff] %v1962
      %2004 = vst [vmem:[#allocation3 + $0x110] sm:$0xff] %v1963
      %2005 = vst [vmem:[#allocation3 + $0x118] sm:$0xff] %v1964
      %2006 = vst [vmem:[#allocation3 + $0x120] sm:$0xff] %v1965
      %2007 = vst [vmem:[#allocation3 + $0x128] sm:$0xff] %v1966
      %2008 = vst [vmem:[#allocation3 + $0x130] sm:$0xff] %v1967
      %2009 = vst [vmem:[#allocation3 + $0x138] sm:$0xff] %v1968
      %2010 = vst [vmem:[#allocation3 + $0x140] sm:$0xff] %v1969
      %v2011 = vld [vmem:[#allocation2 + $0x7] sm:$0xff]
      %v2012 = vld [vmem:[#allocation2 + $0xf] sm:$0xff]
      %v2013 = vld [vmem:[#allocation2 + $0x17] sm:$0xff]
      %v2014 = vld [vmem:[#allocation2 + $0x1f] sm:$0xff]
      %v2015 = vld [vmem:[#allocation2 + $0x27] sm:$0xff]
      %v2016 = vld [vmem:[#allocation2 + $0x2f] sm:$0xff]
      %v2017 = vld [vmem:[#allocation2 + $0x37] sm:$0xff]
      %v2018 = vld [vmem:[#allocation2 + $0x3f] sm:$0xff]
      %v2019 = vld [vmem:[#allocation2 + $0x47] sm:$0xff]
      %v2020 = vld [vmem:[#allocation2 + $0x4f] sm:$0xff]
      %v2021 = vld [vmem:[#allocation2 + $0x57] sm:$0xff]
      %v2022 = vld [vmem:[#allocation2 + $0x5f] sm:$0xff]
      %v2023 = vld [vmem:[#allocation2 + $0x67] sm:$0xff]
      %v2024 = vld [vmem:[#allocation2 + $0x6f] sm:$0xff]
      %v2025 = vld [vmem:[#allocation2 + $0x77] sm:$0xff]
      %v2026 = vld [vmem:[#allocation2 + $0x7f] sm:$0xff]
      %v2027 = vld [vmem:[#allocation2 + $0x87] sm:$0xff]
      %v2028 = vld [vmem:[#allocation2 + $0x8f] sm:$0xff]
      %v2029 = vld [vmem:[#allocation2 + $0x97] sm:$0xff]
      %v2030 = vld [vmem:[#allocation2 + $0x9f] sm:$0xff]
      %v2031 = vld [vmem:[#allocation2 + $0xa7] sm:$0xff]
      %v2032 = vld [vmem:[#allocation2 + $0xaf] sm:$0xff]
      %v2033 = vld [vmem:[#allocation2 + $0xb7] sm:$0xff]
      %v2034 = vld [vmem:[#allocation2 + $0xbf] sm:$0xff]
      %v2035 = vld [vmem:[#allocation2 + $0xc7] sm:$0xff]
      %v2036 = vld [vmem:[#allocation2 + $0xcf] sm:$0xff]
      %v2037 = vld [vmem:[#allocation2 + $0xd7] sm:$0xff]
      %v2038 = vld [vmem:[#allocation2 + $0xdf] sm:$0xff]
      %v2039 = vld [vmem:[#allocation2 + $0xe7] sm:$0xff]
      %v2040 = vld [vmem:[#allocation2 + $0xef] sm:$0xff]
      %v2041 = vld [vmem:[#allocation2 + $0xf7] sm:$0xff]
      %v2042 = vld [vmem:[#allocation2 + $0xff] sm:$0xff]
      %v2043 = vld [vmem:[#allocation2 + $0x107] sm:$0xff]
      %v2044 = vld [vmem:[#allocation2 + $0x10f] sm:$0xff]
      %v2045 = vld [vmem:[#allocation2 + $0x117] sm:$0xff]
      %v2046 = vld [vmem:[#allocation2 + $0x11f] sm:$0xff]
      %v2047 = vld [vmem:[#allocation2 + $0x127] sm:$0xff]
      %v2048 = vld [vmem:[#allocation2 + $0x12f] sm:$0xff]
      %v2049 = vld [vmem:[#allocation2 + $0x137] sm:$0xff]
      %v2050 = vld [vmem:[#allocation2 + $0x13f] sm:$0xff]
      %v2051 = vld [vmem:[#allocation2 + $0x147] sm:$0xff]
      %v2052 = vld [vmem:[#allocation3] sm:$0xff]
      %v2053 = vld [vmem:[#allocation3 + $0x8] sm:$0xff]
      %v2054 = vld [vmem:[#allocation3 + $0x10] sm:$0xff]
      %v2055 = vld [vmem:[#allocation3 + $0x18] sm:$0xff]
      %v2056 = vld [vmem:[#allocation3 + $0x20] sm:$0xff]
      %v2057 = vld [vmem:[#allocation3 + $0x28] sm:$0xff]
      %v2058 = vld [vmem:[#allocation3 + $0x30] sm:$0xff]
      %v2059 = vld [vmem:[#allocation3 + $0x38] sm:$0xff]
      %v2060 = vld [vmem:[#allocation3 + $0x40] sm:$0xff]
      %v2061 = vld [vmem:[#allocation3 + $0x48] sm:$0xff]
      %v2062 = vld [vmem:[#allocation3 + $0x50] sm:$0xff]
      %v2063 = vld [vmem:[#allocation3 + $0x58] sm:$0xff]
      %v2064 = vld [vmem:[#allocation3 + $0x60] sm:$0xff]
      %v2065 = vld [vmem:[#allocation3 + $0x68] sm:$0xff]
      %v2066 = vld [vmem:[#allocation3 + $0x70] sm:$0xff]
      %v2067 = vld [vmem:[#allocation3 + $0x78] sm:$0xff]
      %v2068 = vld [vmem:[#allocation3 + $0x80] sm:$0xff]
      %v2069 = vld [vmem:[#allocation3 + $0x88] sm:$0xff]
      %v2070 = vld [vmem:[#allocation3 + $0x90] sm:$0xff]
      %v2071 = vld [vmem:[#allocation3 + $0x98] sm:$0xff]
      %v2072 = vld [vmem:[#allocation3 + $0xa0] sm:$0xff]
      %v2073 = vld [vmem:[#allocation3 + $0xa8] sm:$0xff]
      %v2074 = vld [vmem:[#allocation3 + $0xb0] sm:$0xff]
      %v2075 = vld [vmem:[#allocation3 + $0xb8] sm:$0xff]
      %v2076 = vld [vmem:[#allocation3 + $0xc0] sm:$0xff]
      %v2077 = vld [vmem:[#allocation3 + $0xc8] sm:$0xff]
      %v2078 = vld [vmem:[#allocation3 + $0xd0] sm:$0xff]
      %v2079 = vld [vmem:[#allocation3 + $0xd8] sm:$0xff]
      %v2080 = vld [vmem:[#allocation3 + $0xe0] sm:$0xff]
      %v2081 = vld [vmem:[#allocation3 + $0xe8] sm:$0xff]
      %v2082 = vld [vmem:[#allocation3 + $0xf0] sm:$0xff]
      %v2083 = vld [vmem:[#allocation3 + $0xf8] sm:$0xff]
      %v2084 = vld [vmem:[#allocation3 + $0x100] sm:$0xff]
      %v2085 = vld [vmem:[#allocation3 + $0x108] sm:$0xff]
      %v2086 = vld [vmem:[#allocation3 + $0x110] sm:$0xff]
      %v2087 = vld [vmem:[#allocation3 + $0x118] sm:$0xff]
      %v2088 = vld [vmem:[#allocation3 + $0x120] sm:$0xff]
      %v2089 = vld [vmem:[#allocation3 + $0x128] sm:$0xff]
      %v2090 = vld [vmem:[#allocation3 + $0x130] sm:$0xff]
      %v2091 = vld [vmem:[#allocation3 + $0x138] sm:$0xff]
      %v2092 = vld [vmem:[#allocation3 + $0x140] sm:$0xff]
      %s2093 = scalar_lea.vmem %s4, 256
      %v2094 = vld [vmem:[%s2093] sm:$0xff]
      %v2095 = vld [vmem:[%s2093 + $0x8] sm:$0xff]
      %v2096 = vld [vmem:[%s2093 + $0x10] sm:$0xff]
      %v2097 = vld [vmem:[%s2093 + $0x18] sm:$0xff]
      %v2098 = vld [vmem:[%s2093 + $0x20] sm:$0xff]
      %v2099 = vld [vmem:[%s2093 + $0x28] sm:$0xff]
      %v2100 = vld [vmem:[%s2093 + $0x30] sm:$0xff]
      %v2101 = vld [vmem:[%s2093 + $0x38] sm:$0xff]
      %v2102 = vld [vmem:[%s2093 + $0x40] sm:$0xff]
      %v2103 = vld [vmem:[%s2093 + $0x48] sm:$0xff]
      %v2104 = vld [vmem:[%s2093 + $0x50] sm:$0xff]
      %v2105 = vld [vmem:[%s2093 + $0x58] sm:$0xff]
      %v2106 = vld [vmem:[%s2093 + $0x60] sm:$0xff]
      %v2107 = vld [vmem:[%s2093 + $0x68] sm:$0xff]
      %v2108 = vld [vmem:[%s2093 + $0x70] sm:$0xff]
      %v2109 = vld [vmem:[%s2093 + $0x78] sm:$0xff]
      %2110 = vmatprep.subr.mxu0 0.0
      %2111 = vmatpush1.msra.mxu0 %v2094
      %2112 = vmatprep.subr.mxu0 0.0
      %2113 = vmatpush1.msra.mxu0 %v2095
      %2114 = vmatprep.subr.mxu0 0.0
      %2115 = vmatpush1.msra.mxu0 %v2096
      %2116 = vmatprep.subr.mxu0 0.0
      %2117 = vmatpush1.msra.mxu0 %v2097
      %2118 = vmatprep.subr.mxu0 0.0
      %2119 = vmatpush1.msra.mxu0 %v2098
      %2120 = vmatprep.subr.mxu0 0.0
      %2121 = vmatpush1.msra.mxu0 %v2099
      %2122 = vmatprep.subr.mxu0 0.0
      %2123 = vmatpush1.msra.mxu0 %v2100
      %2124 = vmatprep.subr.mxu0 0.0
      %2125 = vmatpush1.msra.mxu0 %v2101
      %2126 = vmatprep.subr.mxu0 0.0
      %2127 = vmatpush1.msra.mxu0 %v2102
      %2128 = vmatprep.subr.mxu0 0.0
      %2129 = vmatpush1.msra.mxu0 %v2103
      %2130 = vmatprep.subr.mxu0 0.0
      %2131 = vmatpush1.msra.mxu0 %v2104
      %2132 = vmatprep.subr.mxu0 0.0
      %2133 = vmatpush1.msra.mxu0 %v2105
      %2134 = vmatprep.subr.mxu0 0.0
      %2135 = vmatpush1.msra.mxu0 %v2106
      %2136 = vmatprep.subr.mxu0 0.0
      %2137 = vmatpush1.msra.mxu0 %v2107
      %2138 = vmatprep.subr.mxu0 0.0
      %2139 = vmatpush1.msra.mxu0 %v2108
      %2140 = vmatprep.subr.mxu0 0.0
      %2141 = vmatpush1.msra.mxu0 %v2109
      %2142 = vmatprep.subr.mxu0 0.0
      %2143 = vmatpush1.msra.mxu0 0.0
      %2144 = vmatprep.subr.mxu0 0.0
      %2145 = vmatpush1.msra.mxu0 0.0
      %2146 = vmatprep.subr.mxu0 0.0
      %2147 = vmatpush1.msra.mxu0 0.0
      %2148 = vmatprep.subr.mxu0 0.0
      %2149 = vmatpush1.msra.mxu0 0.0
      %2150 = vmatprep.subr.mxu0 0.0
      %2151 = vmatpush1.msra.mxu0 0.0
      %2152 = vmatprep.subr.mxu0 0.0
      %2153 = vmatpush1.msra.mxu0 0.0
      %2154 = vmatprep.subr.mxu0 0.0
      %2155 = vmatpush1.msra.mxu0 0.0
      %2156 = vmatprep.subr.mxu0 0.0
      %2157 = vmatpush1.msra.mxu0 0.0
      %2158 = vmatprep.subr.mxu0 0.0
      %2159 = vmatpush1.msra.mxu0 0.0
      %2160 = vmatprep.subr.mxu0 0.0
      %2161 = vmatpush1.msra.mxu0 0.0
      %2162 = vmatprep.subr.mxu0 0.0
      %2163 = vmatpush1.msra.mxu0 0.0
      %2164 = vmatprep.subr.mxu0 0.0
      %2165 = vmatpush1.msra.mxu0 0.0
      %2166 = vmatprep.subr.mxu0 0.0
      %2167 = vmatpush1.msra.mxu0 0.0
      %2168 = vmatprep.subr.mxu0 0.0
      %2169 = vmatpush1.msra.mxu0 0.0
      %2170 = vmatprep.subr.mxu0 0.0
      %2171 = vmatpush1.msra.mxu0 0.0
      %2172 = vmatprep.subr.mxu0 0.0
      %2173 = vmatpush1.msra.mxu0 0.0
      %2174 = vmatprep.mubr.f32.mxu0 0.0
      %2175 = vmatmul.mubr.f32.gmra.mrb[0].mxu0 %v2011
      %v2176 = vpop.f32.mrb[0].mxu0
      %v2177 = vadd.f32 0.0, %v2176
      %v2178 = vpop.f32.mrb[0].mxu0
      %2179 = vmatprep.mubr.f32.mxu0 0.0
      %2180 = vmatmul.mubr.f32.gmra.mrb[0].mxu0 %v2012
      %v2181 = vpop.f32.mrb[0].mxu0
      %v2182 = vadd.f32 0.0, %v2181
      %v2183 = vpop.f32.mrb[0].mxu0
      %2184 = vmatprep.mubr.f32.mxu0 0.0
      %2185 = vmatmul.mubr.f32.gmra.mrb[0].mxu0 %v2013
      %v2186 = vpop.f32.mrb[0].mxu0
      %v2187 = vadd.f32 0.0, %v2186
      %v2188 = vpop.f32.mrb[0].mxu0
      %2189 = vmatprep.mubr.f32.mxu0 0.0
      %2190 = vmatmul.mubr.f32.gmra.mrb[0].mxu0 %v2014
      %v2191 = vpop.f32.mrb[0].mxu0
      %v2192 = vadd.f32 0.0, %v2191
      %v2193 = vpop.f32.mrb[0].mxu0
      %2194 = vmatprep.mubr.f32.mxu0 0.0
      %2195 = vmatmul.mubr.f32.gmra.mrb[0].mxu0 %v2015
      %v2196 = vpop.f32.mrb[0].mxu0
      %v2197 = vadd.f32 0.0, %v2196
      %v2198 = vpop.f32.mrb[0].mxu0
      %2199 = vmatprep.mubr.f32.mxu0 0.0
      %2200 = vmatmul.mubr.f32.gmra.mrb[0].mxu0 %v2016
      %v2201 = vpop.f32.mrb[0].mxu0
      %v2202 = vadd.f32 0.0, %v2201
      %v2203 = vpop.f32.mrb[0].mxu0
      %2204 = vmatprep.mubr.f32.mxu0 0.0
      %2205 = vmatmul.mubr.f32.gmra.mrb[0].mxu0 %v2017
      %v2206 = vpop.f32.mrb[0].mxu0
      %v2207 = vadd.f32 0.0, %v2206
      %v2208 = vpop.f32.mrb[0].mxu0
      %2209 = vmatprep.mubr.f32.mxu0 0.0
      %2210 = vmatmul.mubr.f32.gmra.mrb[0].mxu0 %v2018
      %v2211 = vpop.f32.mrb[0].mxu0
      %v2212 = vadd.f32 0.0, %v2211
      %v2213 = vpop.f32.mrb[0].mxu0
      %2214 = vmatprep.mubr.f32.mxu0 0.0
      %2215 = vmatmul.mubr.f32.gmra.mrb[0].mxu0 %v2019
      %v2216 = vpop.f32.mrb[0].mxu0
      %v2217 = vadd.f32 0.0, %v2216
      %v2218 = vpop.f32.mrb[0].mxu0
      %2219 = vmatprep.mubr.f32.mxu0 0.0
      %2220 = vmatmul.mubr.f32.gmra.mrb[0].mxu0 %v2020
      %v2221 = vpop.f32.mrb[0].mxu0
      %v2222 = vadd.f32 0.0, %v2221
      %v2223 = vpop.f32.mrb[0].mxu0
      %2224 = vmatprep.mubr.f32.mxu0 0.0
      %2225 = vmatmul.mubr.f32.gmra.mrb[0].mxu0 %v2021
      %v2226 = vpop.f32.mrb[0].mxu0
      %v2227 = vadd.f32 0.0, %v2226
      %v2228 = vpop.f32.mrb[0].mxu0
      %2229 = vmatprep.mubr.f32.mxu0 0.0
      %2230 = vmatmul.mubr.f32.gmra.mrb[0].mxu0 %v2022
      %v2231 = vpop.f32.mrb[0].mxu0
      %v2232 = vadd.f32 0.0, %v2231
      %v2233 = vpop.f32.mrb[0].mxu0
      %2234 = vmatprep.mubr.f32.mxu0 0.0
      %2235 = vmatmul.mubr.f32.gmra.mrb[0].mxu0 %v2023
      %v2236 = vpop.f32.mrb[0].mxu0
      %v2237 = vadd.f32 0.0, %v2236
      %v2238 = vpop.f32.mrb[0].mxu0
      %2239 = vmatprep.mubr.f32.mxu0 0.0
      %2240 = vmatmul.mubr.f32.gmra.mrb[0].mxu0 %v2024
      %v2241 = vpop.f32.mrb[0].mxu0
      %v2242 = vadd.f32 0.0, %v2241
      %v2243 = vpop.f32.mrb[0].mxu0
      %2244 = vmatprep.mubr.f32.mxu0 0.0
      %2245 = vmatmul.mubr.f32.gmra.mrb[0].mxu0 %v2025
      %v2246 = vpop.f32.mrb[0].mxu0
      %v2247 = vadd.f32 0.0, %v2246
      %v2248 = vpop.f32.mrb[0].mxu0
      %2249 = vmatprep.mubr.f32.mxu0 0.0
      %2250 = vmatmul.mubr.f32.gmra.mrb[0].mxu0 %v2026
      %v2251 = vpop.f32.mrb[0].mxu0
      %v2252 = vadd.f32 0.0, %v2251
      %v2253 = vpop.f32.mrb[0].mxu0
      %2254 = vmatprep.mubr.f32.mxu0 0.0
      %2255 = vmatmul.mubr.f32.gmra.mrb[0].mxu0 %v2027
      %v2256 = vpop.f32.mrb[0].mxu0
      %v2257 = vadd.f32 0.0, %v2256
      %v2258 = vpop.f32.mrb[0].mxu0
      %2259 = vmatprep.mubr.f32.mxu0 0.0
      %2260 = vmatmul.mubr.f32.gmra.mrb[0].mxu0 %v2028
      %v2261 = vpop.f32.mrb[0].mxu0
      %v2262 = vadd.f32 0.0, %v2261
      %v2263 = vpop.f32.mrb[0].mxu0
      %2264 = vmatprep.mubr.f32.mxu0 0.0
      %2265 = vmatmul.mubr.f32.gmra.mrb[0].mxu0 %v2029
      %v2266 = vpop.f32.mrb[0].mxu0
      %v2267 = vadd.f32 0.0, %v2266
      %v2268 = vpop.f32.mrb[0].mxu0
      %2269 = vmatprep.mubr.f32.mxu0 0.0
      %2270 = vmatmul.mubr.f32.gmra.mrb[0].mxu0 %v2030
      %v2271 = vpop.f32.mrb[0].mxu0
      %v2272 = vadd.f32 0.0, %v2271
      %v2273 = vpop.f32.mrb[0].mxu0
      %2274 = vmatprep.mubr.f32.mxu0 0.0
      %2275 = vmatmul.mubr.f32.gmra.mrb[0].mxu0 %v2031
      %v2276 = vpop.f32.mrb[0].mxu0
      %v2277 = vadd.f32 0.0, %v2276
      %v2278 = vpop.f32.mrb[0].mxu0
      %2279 = vmatprep.mubr.f32.mxu0 0.0
      %2280 = vmatmul.mubr.f32.gmra.mrb[0].mxu0 %v2032
      %v2281 = vpop.f32.mrb[0].mxu0
      %v2282 = vadd.f32 0.0, %v2281
      %v2283 = vpop.f32.mrb[0].mxu0
      %2284 = vmatprep.mubr.f32.mxu0 0.0
      %2285 = vmatmul.mubr.f32.gmra.mrb[0].mxu0 %v2033
      %v2286 = vpop.f32.mrb[0].mxu0
      %v2287 = vadd.f32 0.0, %v2286
      %v2288 = vpop.f32.mrb[0].mxu0
      %2289 = vmatprep.mubr.f32.mxu0 0.0
      %2290 = vmatmul.mubr.f32.gmra.mrb[0].mxu0 %v2034
      %v2291 = vpop.f32.mrb[0].mxu0
      %v2292 = vadd.f32 0.0, %v2291
      %v2293 = vpop.f32.mrb[0].mxu0
      %2294 = vmatprep.mubr.f32.mxu0 0.0
      %2295 = vmatmul.mubr.f32.gmra.mrb[0].mxu0 %v2035
      %v2296 = vpop.f32.mrb[0].mxu0
      %v2297 = vadd.f32 0.0, %v2296
      %v2298 = vpop.f32.mrb[0].mxu0
      %2299 = vmatprep.mubr.f32.mxu0 0.0
      %2300 = vmatmul.mubr.f32.gmra.mrb[0].mxu0 %v2036
      %v2301 = vpop.f32.mrb[0].mxu0
      %v2302 = vadd.f32 0.0, %v2301
      %v2303 = vpop.f32.mrb[0].mxu0
      %2304 = vmatprep.mubr.f32.mxu0 0.0
      %2305 = vmatmul.mubr.f32.gmra.mrb[0].mxu0 %v2037
      %v2306 = vpop.f32.mrb[0].mxu0
      %v2307 = vadd.f32 0.0, %v2306
      %v2308 = vpop.f32.mrb[0].mxu0
      %2309 = vmatprep.mubr.f32.mxu0 0.0
      %2310 = vmatmul.mubr.f32.gmra.mrb[0].mxu0 %v2038
      %v2311 = vpop.f32.mrb[0].mxu0
      %v2312 = vadd.f32 0.0, %v2311
      %v2313 = vpop.f32.mrb[0].mxu0
      %2314 = vmatprep.mubr.f32.mxu0 0.0
      %2315 = vmatmul.mubr.f32.gmra.mrb[0].mxu0 %v2039
      %v2316 = vpop.f32.mrb[0].mxu0
      %v2317 = vadd.f32 0.0, %v2316
      %v2318 = vpop.f32.mrb[0].mxu0
      %2319 = vmatprep.mubr.f32.mxu0 0.0
      %2320 = vmatmul.mubr.f32.gmra.mrb[0].mxu0 %v2040
      %v2321 = vpop.f32.mrb[0].mxu0
      %v2322 = vadd.f32 0.0, %v2321
      %v2323 = vpop.f32.mrb[0].mxu0
      %2324 = vmatprep.mubr.f32.mxu0 0.0
      %2325 = vmatmul.mubr.f32.gmra.mrb[0].mxu0 %v2041
      %v2326 = vpop.f32.mrb[0].mxu0
      %v2327 = vadd.f32 0.0, %v2326
      %v2328 = vpop.f32.mrb[0].mxu0
      %2329 = vmatprep.mubr.f32.mxu0 0.0
      %2330 = vmatmul.mubr.f32.gmra.mrb[0].mxu0 %v2042
      %v2331 = vpop.f32.mrb[0].mxu0
      %v2332 = vadd.f32 0.0, %v2331
      %v2333 = vpop.f32.mrb[0].mxu0
      %2334 = vmatprep.mubr.f32.mxu0 0.0
      %2335 = vmatmul.mubr.f32.gmra.mrb[0].mxu0 %v2043
      %v2336 = vpop.f32.mrb[0].mxu0
      %v2337 = vadd.f32 0.0, %v2336
      %v2338 = vpop.f32.mrb[0].mxu0
      %2339 = vmatprep.mubr.f32.mxu0 0.0
      %2340 = vmatmul.mubr.f32.gmra.mrb[0].mxu0 %v2044
      %v2341 = vpop.f32.mrb[0].mxu0
      %v2342 = vadd.f32 0.0, %v2341
      %v2343 = vpop.f32.mrb[0].mxu0
      %2344 = vmatprep.mubr.f32.mxu0 0.0
      %2345 = vmatmul.mubr.f32.gmra.mrb[0].mxu0 %v2045
      %v2346 = vpop.f32.mrb[0].mxu0
      %v2347 = vadd.f32 0.0, %v2346
      %v2348 = vpop.f32.mrb[0].mxu0
      %2349 = vmatprep.mubr.f32.mxu0 0.0
      %2350 = vmatmul.mubr.f32.gmra.mrb[0].mxu0 %v2046
      %v2351 = vpop.f32.mrb[0].mxu0
      %v2352 = vadd.f32 0.0, %v2351
      %v2353 = vpop.f32.mrb[0].mxu0
      %2354 = vmatprep.mubr.f32.mxu0 0.0
      %2355 = vmatmul.mubr.f32.gmra.mrb[0].mxu0 %v2047
      %v2356 = vpop.f32.mrb[0].mxu0
      %v2357 = vadd.f32 0.0, %v2356
      %v2358 = vpop.f32.mrb[0].mxu0
      %2359 = vmatprep.mubr.f32.mxu0 0.0
      %2360 = vmatmul.mubr.f32.gmra.mrb[0].mxu0 %v2048
      %v2361 = vpop.f32.mrb[0].mxu0
      %v2362 = vadd.f32 0.0, %v2361
      %v2363 = vpop.f32.mrb[0].mxu0
      %2364 = vmatprep.mubr.f32.mxu0 0.0
      %2365 = vmatmul.mubr.f32.gmra.mrb[0].mxu0 %v2049
      %v2366 = vpop.f32.mrb[0].mxu0
      %v2367 = vadd.f32 0.0, %v2366
      %v2368 = vpop.f32.mrb[0].mxu0
      %2369 = vmatprep.mubr.f32.mxu0 0.0
      %2370 = vmatmul.mubr.f32.gmra.mrb[0].mxu0 %v2050
      %v2371 = vpop.f32.mrb[0].mxu0
      %v2372 = vadd.f32 0.0, %v2371
      %v2373 = vpop.f32.mrb[0].mxu0
      %2374 = vmatprep.mubr.f32.mxu0 0.0
      %2375 = vmatmul.mubr.f32.gmra.mrb[0].mxu0 %v2051
      %v2376 = vpop.f32.mrb[0].mxu0
      %v2377 = vadd.f32 0.0, %v2376
      %v2378 = vpop.f32.mrb[0].mxu0
      %2379 = vdwg.mxu0
      %v2380 = vadd.f32 %v2052, %v2177
      %v2381 = vadd.f32 %v2053, %v2182
      %v2382 = vadd.f32 %v2054, %v2187
      %v2383 = vadd.f32 %v2055, %v2192
      %v2384 = vadd.f32 %v2056, %v2197
      %v2385 = vadd.f32 %v2057, %v2202
      %v2386 = vadd.f32 %v2058, %v2207
      %v2387 = vadd.f32 %v2059, %v2212
      %v2388 = vadd.f32 %v2060, %v2217
      %v2389 = vadd.f32 %v2061, %v2222
      %v2390 = vadd.f32 %v2062, %v2227
      %v2391 = vadd.f32 %v2063, %v2232
      %v2392 = vadd.f32 %v2064, %v2237
      %v2393 = vadd.f32 %v2065, %v2242
      %v2394 = vadd.f32 %v2066, %v2247
      %v2395 = vadd.f32 %v2067, %v2252
      %v2396 = vadd.f32 %v2068, %v2257
      %v2397 = vadd.f32 %v2069, %v2262
      %v2398 = vadd.f32 %v2070, %v2267
      %v2399 = vadd.f32 %v2071, %v2272
      %v2400 = vadd.f32 %v2072, %v2277
      %v2401 = vadd.f32 %v2073, %v2282
      %v2402 = vadd.f32 %v2074, %v2287
      %v2403 = vadd.f32 %v2075, %v2292
      %v2404 = vadd.f32 %v2076, %v2297
      %v2405 = vadd.f32 %v2077, %v2302
      %v2406 = vadd.f32 %v2078, %v2307
      %v2407 = vadd.f32 %v2079, %v2312
      %v2408 = vadd.f32 %v2080, %v2317
      %v2409 = vadd.f32 %v2081, %v2322
      %v2410 = vadd.f32 %v2082, %v2327
      %v2411 = vadd.f32 %v2083, %v2332
      %v2412 = vadd.f32 %v2084, %v2337
      %v2413 = vadd.f32 %v2085, %v2342
      %v2414 = vadd.f32 %v2086, %v2347
      %v2415 = vadd.f32 %v2087, %v2352
      %v2416 = vadd.f32 %v2088, %v2357
      %v2417 = vadd.f32 %v2089, %v2362
      %v2418 = vadd.f32 %v2090, %v2367
      %v2419 = vadd.f32 %v2091, %v2372
      %v2420 = vadd.f32 %v2092, %v2377
      %2421 = vst [vmem:[#allocation3] sm:$0xff] %v2380
      %2422 = vst [vmem:[#allocation3 + $0x8] sm:$0xff] %v2381
      %2423 = vst [vmem:[#allocation3 + $0x10] sm:$0xff] %v2382
      %2424 = vst [vmem:[#allocation3 + $0x18] sm:$0xff] %v2383
      %2425 = vst [vmem:[#allocation3 + $0x20] sm:$0xff] %v2384
      %2426 = vst [vmem:[#allocation3 + $0x28] sm:$0xff] %v2385
      %2427 = vst [vmem:[#allocation3 + $0x30] sm:$0xff] %v2386
      %2428 = vst [vmem:[#allocation3 + $0x38] sm:$0xff] %v2387
      %2429 = vst [vmem:[#allocation3 + $0x40] sm:$0xff] %v2388
      %2430 = vst [vmem:[#allocation3 + $0x48] sm:$0xff] %v2389
      %2431 = vst [vmem:[#allocation3 + $0x50] sm:$0xff] %v2390
      %2432 = vst [vmem:[#allocation3 + $0x58] sm:$0xff] %v2391
      %2433 = vst [vmem:[#allocation3 + $0x60] sm:$0xff] %v2392
      %2434 = vst [vmem:[#allocation3 + $0x68] sm:$0xff] %v2393
      %2435 = vst [vmem:[#allocation3 + $0x70] sm:$0xff] %v2394
      %2436 = vst [vmem:[#allocation3 + $0x78] sm:$0xff] %v2395
      %2437 = vst [vmem:[#allocation3 + $0x80] sm:$0xff] %v2396
      %2438 = vst [vmem:[#allocation3 + $0x88] sm:$0xff] %v2397
      %2439 = vst [vmem:[#allocation3 + $0x90] sm:$0xff] %v2398
      %2440 = vst [vmem:[#allocation3 + $0x98] sm:$0xff] %v2399
      %2441 = vst [vmem:[#allocation3 + $0xa0] sm:$0xff] %v2400
      %2442 = vst [vmem:[#allocation3 + $0xa8] sm:$0xff] %v2401
      %2443 = vst [vmem:[#allocation3 + $0xb0] sm:$0xff] %v2402
      %2444 = vst [vmem:[#allocation3 + $0xb8] sm:$0xff] %v2403
      %2445 = vst [vmem:[#allocation3 + $0xc0] sm:$0xff] %v2404
      %2446 = vst [vmem:[#allocation3 + $0xc8] sm:$0xff] %v2405
      %2447 = vst [vmem:[#allocation3 + $0xd0] sm:$0xff] %v2406
      %2448 = vst [vmem:[#allocation3 + $0xd8] sm:$0xff] %v2407
      %2449 = vst [vmem:[#allocation3 + $0xe0] sm:$0xff] %v2408
      %2450 = vst [vmem:[#allocation3 + $0xe8] sm:$0xff] %v2409
      %2451 = vst [vmem:[#allocation3 + $0xf0] sm:$0xff] %v2410
      %2452 = vst [vmem:[#allocation3 + $0xf8] sm:$0xff] %v2411
      %2453 = vst [vmem:[#allocation3 + $0x100] sm:$0xff] %v2412
      %2454 = vst [vmem:[#allocation3 + $0x108] sm:$0xff] %v2413
      %2455 = vst [vmem:[#allocation3 + $0x110] sm:$0xff] %v2414
      %2456 = vst [vmem:[#allocation3 + $0x118] sm:$0xff] %v2415
      %2457 = vst [vmem:[#allocation3 + $0x120] sm:$0xff] %v2416
      %2458 = vst [vmem:[#allocation3 + $0x128] sm:$0xff] %v2417
      %2459 = vst [vmem:[#allocation3 + $0x130] sm:$0xff] %v2418
      %2460 = vst [vmem:[#allocation3 + $0x138] sm:$0xff] %v2419
      %2461 = vst [vmem:[#allocation3 + $0x140] sm:$0xff] %v2420
      %v2462 = vld [vmem:[#allocation2 + $0x17] sm:$0xff]
      %v2463 = vld [vmem:[#allocation2 + $0x1f] sm:$0xff]
      %v2464 = vld [vmem:[#allocation2 + $0x27] sm:$0xff]
      %v2465 = vld [vmem:[#allocation2 + $0x2f] sm:$0xff]
      %v2466 = vld [vmem:[#allocation2 + $0x37] sm:$0xff]
      %v2467 = vld [vmem:[#allocation2 + $0x3f] sm:$0xff]
      %v2468 = vld [vmem:[#allocation2 + $0x47] sm:$0xff]
      %v2469 = vld [vmem:[#allocation2 + $0x4f] sm:$0xff]
      %v2470 = vld [vmem:[#allocation2 + $0x57] sm:$0xff]
      %v2471 = vld [vmem:[#allocation2 + $0x5f] sm:$0xff]
      %v2472 = vld [vmem:[#allocation2 + $0x67] sm:$0xff]
      %v2473 = vld [vmem:[#allocation2 + $0x6f] sm:$0xff]
      %v2474 = vld [vmem:[#allocation2 + $0x77] sm:$0xff]
      %v2475 = vld [vmem:[#allocation2 + $0x7f] sm:$0xff]
      %v2476 = vld [vmem:[#allocation2 + $0x87] sm:$0xff]
      %v2477 = vld [vmem:[#allocation2 + $0x8f] sm:$0xff]
      %v2478 = vld [vmem:[#allocation2 + $0x97] sm:$0xff]
      %v2479 = vld [vmem:[#allocation2 + $0x9f] sm:$0xff]
      %v2480 = vld [vmem:[#allocation2 + $0xa7] sm:$0xff]
      %v2481 = vld [vmem:[#allocation2 + $0xaf] sm:$0xff]
      %v2482 = vld [vmem:[#allocation2 + $0xb7] sm:$0xff]
      %v2483 = vld [vmem:[#allocation2 + $0xbf] sm:$0xff]
      %v2484 = vld [vmem:[#allocation2 + $0xc7] sm:$0xff]
      %v2485 = vld [vmem:[#allocation2 + $0xcf] sm:$0xff]
      %v2486 = vld [vmem:[#allocation2 + $0xd7] sm:$0xff]
      %v2487 = vld [vmem:[#allocation2 + $0xdf] sm:$0xff]
      %v2488 = vld [vmem:[#allocation2 + $0xe7] sm:$0xff]
      %v2489 = vld [vmem:[#allocation2 + $0xef] sm:$0xff]
      %v2490 = vld [vmem:[#allocation2 + $0xf7] sm:$0xff]
      %v2491 = vld [vmem:[#allocation2 + $0xff] sm:$0xff]
      %v2492 = vld [vmem:[#allocation2 + $0x107] sm:$0xff]
      %v2493 = vld [vmem:[#allocation2 + $0x10f] sm:$0xff]
      %v2494 = vld [vmem:[#allocation2 + $0x117] sm:$0xff]
      %v2495 = vld [vmem:[#allocation2 + $0x11f] sm:$0xff]
      %v2496 = vld [vmem:[#allocation2 + $0x127] sm:$0xff]
      %v2497 = vld [vmem:[#allocation2 + $0x12f] sm:$0xff]
      %v2498 = vld [vmem:[#allocation2 + $0x137] sm:$0xff]
      %v2499 = vld [vmem:[#allocation2 + $0x13f] sm:$0xff]
      %v2500 = vld [vmem:[#allocation2 + $0x147] sm:$0xff]
      %v2501 = vld [vmem:[#allocation2 + $0x14f] sm:$0xff]
      %v2502 = vld [vmem:[#allocation2 + $0x157] sm:$0xff]
      %v2503 = vld [vmem:[#allocation3] sm:$0xff]
      %v2504 = vld [vmem:[#allocation3 + $0x8] sm:$0xff]
      %v2505 = vld [vmem:[#allocation3 + $0x10] sm:$0xff]
      %v2506 = vld [vmem:[#allocation3 + $0x18] sm:$0xff]
      %v2507 = vld [vmem:[#allocation3 + $0x20] sm:$0xff]
      %v2508 = vld [vmem:[#allocation3 + $0x28] sm:$0xff]
      %v2509 = vld [vmem:[#allocation3 + $0x30] sm:$0xff]
      %v2510 = vld [vmem:[#allocation3 + $0x38] sm:$0xff]
      %v2511 = vld [vmem:[#allocation3 + $0x40] sm:$0xff]
      %v2512 = vld [vmem:[#allocation3 + $0x48] sm:$0xff]
      %v2513 = vld [vmem:[#allocation3 + $0x50] sm:$0xff]
      %v2514 = vld [vmem:[#allocation3 + $0x58] sm:$0xff]
      %v2515 = vld [vmem:[#allocation3 + $0x60] sm:$0xff]
      %v2516 = vld [vmem:[#allocation3 + $0x68] sm:$0xff]
      %v2517 = vld [vmem:[#allocation3 + $0x70] sm:$0xff]
      %v2518 = vld [vmem:[#allocation3 + $0x78] sm:$0xff]
      %v2519 = vld [vmem:[#allocation3 + $0x80] sm:$0xff]
      %v2520 = vld [vmem:[#allocation3 + $0x88] sm:$0xff]
      %v2521 = vld [vmem:[#allocation3 + $0x90] sm:$0xff]
      %v2522 = vld [vmem:[#allocation3 + $0x98] sm:$0xff]
      %v2523 = vld [vmem:[#allocation3 + $0xa0] sm:$0xff]
      %v2524 = vld [vmem:[#allocation3 + $0xa8] sm:$0xff]
      %v2525 = vld [vmem:[#allocation3 + $0xb0] sm:$0xff]
      %v2526 = vld [vmem:[#allocation3 + $0xb8] sm:$0xff]
      %v2527 = vld [vmem:[#allocation3 + $0xc0] sm:$0xff]
      %v2528 = vld [vmem:[#allocation3 + $0xc8] sm:$0xff]
      %v2529 = vld [vmem:[#allocation3 + $0xd0] sm:$0xff]
      %v2530 = vld [vmem:[#allocation3 + $0xd8] sm:$0xff]
      %v2531 = vld [vmem:[#allocation3 + $0xe0] sm:$0xff]
      %v2532 = vld [vmem:[#allocation3 + $0xe8] sm:$0xff]
      %v2533 = vld [vmem:[#allocation3 + $0xf0] sm:$0xff]
      %v2534 = vld [vmem:[#allocation3 + $0xf8] sm:$0xff]
      %v2535 = vld [vmem:[#allocation3 + $0x100] sm:$0xff]
      %v2536 = vld [vmem:[#allocation3 + $0x108] sm:$0xff]
      %v2537 = vld [vmem:[#allocation3 + $0x110] sm:$0xff]
      %v2538 = vld [vmem:[#allocation3 + $0x118] sm:$0xff]
      %v2539 = vld [vmem:[#allocation3 + $0x120] sm:$0xff]
      %v2540 = vld [vmem:[#allocation3 + $0x128] sm:$0xff]
      %v2541 = vld [vmem:[#allocation3 + $0x130] sm:$0xff]
      %v2542 = vld [vmem:[#allocation3 + $0x138] sm:$0xff]
      %v2543 = vld [vmem:[#allocation3 + $0x140] sm:$0xff]
      %s2544 = scalar_lea.vmem %s4, 384
      %v2545 = vld [vmem:[%s2544] sm:$0xff]
      %v2546 = vld [vmem:[%s2544 + $0x8] sm:$0xff]
      %v2547 = vld [vmem:[%s2544 + $0x10] sm:$0xff]
      %v2548 = vld [vmem:[%s2544 + $0x18] sm:$0xff]
      %v2549 = vld [vmem:[%s2544 + $0x20] sm:$0xff]
      %v2550 = vld [vmem:[%s2544 + $0x28] sm:$0xff]
      %v2551 = vld [vmem:[%s2544 + $0x30] sm:$0xff]
      %v2552 = vld [vmem:[%s2544 + $0x38] sm:$0xff]
      %v2553 = vld [vmem:[%s2544 + $0x40] sm:$0xff]
      %v2554 = vld [vmem:[%s2544 + $0x48] sm:$0xff]
      %v2555 = vld [vmem:[%s2544 + $0x50] sm:$0xff]
      %v2556 = vld [vmem:[%s2544 + $0x58] sm:$0xff]
      %v2557 = vld [vmem:[%s2544 + $0x60] sm:$0xff]
      %v2558 = vld [vmem:[%s2544 + $0x68] sm:$0xff]
      %v2559 = vld [vmem:[%s2544 + $0x70] sm:$0xff]
      %v2560 = vld [vmem:[%s2544 + $0x78] sm:$0xff]
      %2561 = vmatprep.subr.mxu0 0.0
      %2562 = vmatpush1.msra.mxu0 %v2545
      %2563 = vmatprep.subr.mxu0 0.0
      %2564 = vmatpush1.msra.mxu0 %v2546
      %2565 = vmatprep.subr.mxu0 0.0
      %2566 = vmatpush1.msra.mxu0 %v2547
      %2567 = vmatprep.subr.mxu0 0.0
      %2568 = vmatpush1.msra.mxu0 %v2548
      %2569 = vmatprep.subr.mxu0 0.0
      %2570 = vmatpush1.msra.mxu0 %v2549
      %2571 = vmatprep.subr.mxu0 0.0
      %2572 = vmatpush1.msra.mxu0 %v2550
      %2573 = vmatprep.subr.mxu0 0.0
      %2574 = vmatpush1.msra.mxu0 %v2551
      %2575 = vmatprep.subr.mxu0 0.0
      %2576 = vmatpush1.msra.mxu0 %v2552
      %2577 = vmatprep.subr.mxu0 0.0
      %2578 = vmatpush1.msra.mxu0 %v2553
      %2579 = vmatprep.subr.mxu0 0.0
      %2580 = vmatpush1.msra.mxu0 %v2554
      %2581 = vmatprep.subr.mxu0 0.0
      %2582 = vmatpush1.msra.mxu0 %v2555
      %2583 = vmatprep.subr.mxu0 0.0
      %2584 = vmatpush1.msra.mxu0 %v2556
      %2585 = vmatprep.subr.mxu0 0.0
      %2586 = vmatpush1.msra.mxu0 %v2557
      %2587 = vmatprep.subr.mxu0 0.0
      %2588 = vmatpush1.msra.mxu0 %v2558
      %2589 = vmatprep.subr.mxu0 0.0
      %2590 = vmatpush1.msra.mxu0 %v2559
      %2591 = vmatprep.subr.mxu0 0.0
      %2592 = vmatpush1.msra.mxu0 %v2560
      %2593 = vmatprep.subr.mxu0 0.0
      %2594 = vmatpush1.msra.mxu0 0.0
      %2595 = vmatprep.subr.mxu0 0.0
      %2596 = vmatpush1.msra.mxu0 0.0
      %2597 = vmatprep.subr.mxu0 0.0
      %2598 = vmatpush1.msra.mxu0 0.0
      %2599 = vmatprep.subr.mxu0 0.0
      %2600 = vmatpush1.msra.mxu0 0.0
      %2601 = vmatprep.subr.mxu0 0.0
      %2602 = vmatpush1.msra.mxu0 0.0
      %2603 = vmatprep.subr.mxu0 0.0
      %2604 = vmatpush1.msra.mxu0 0.0
      %2605 = vmatprep.subr.mxu0 0.0
      %2606 = vmatpush1.msra.mxu0 0.0
      %2607 = vmatprep.subr.mxu0 0.0
      %2608 = vmatpush1.msra.mxu0 0.0
      %2609 = vmatprep.subr.mxu0 0.0
      %2610 = vmatpush1.msra.mxu0 0.0
      %2611 = vmatprep.subr.mxu0 0.0
      %2612 = vmatpush1.msra.mxu0 0.0
      %2613 = vmatprep.subr.mxu0 0.0
      %2614 = vmatpush1.msra.mxu0 0.0
      %2615 = vmatprep.subr.mxu0 0.0
      %2616 = vmatpush1.msra.mxu0 0.0
      %2617 = vmatprep.subr.mxu0 0.0
      %2618 = vmatpush1.msra.mxu0 0.0
      %2619 = vmatprep.subr.mxu0 0.0
      %2620 = vmatpush1.msra.mxu0 0.0
      %2621 = vmatprep.subr.mxu0 0.0
      %2622 = vmatpush1.msra.mxu0 0.0
      %2623 = vmatprep.subr.mxu0 0.0
      %2624 = vmatpush1.msra.mxu0 0.0
      %2625 = vmatprep.mubr.f32.mxu0 0.0
      %2626 = vmatmul.mubr.f32.gmra.mrb[0].mxu0 %v2462
      %v2627 = vpop.f32.mrb[0].mxu0
      %v2628 = vadd.f32 0.0, %v2627
      %v2629 = vpop.f32.mrb[0].mxu0
      %2630 = vmatprep.mubr.f32.mxu0 0.0
      %2631 = vmatmul.mubr.f32.gmra.mrb[0].mxu0 %v2463
      %v2632 = vpop.f32.mrb[0].mxu0
      %v2633 = vadd.f32 0.0, %v2632
      %v2634 = vpop.f32.mrb[0].mxu0
      %2635 = vmatprep.mubr.f32.mxu0 0.0
      %2636 = vmatmul.mubr.f32.gmra.mrb[0].mxu0 %v2464
      %v2637 = vpop.f32.mrb[0].mxu0
      %v2638 = vadd.f32 0.0, %v2637
      %v2639 = vpop.f32.mrb[0].mxu0
      %2640 = vmatprep.mubr.f32.mxu0 0.0
      %2641 = vmatmul.mubr.f32.gmra.mrb[0].mxu0 %v2465
      %v2642 = vpop.f32.mrb[0].mxu0
      %v2643 = vadd.f32 0.0, %v2642
      %v2644 = vpop.f32.mrb[0].mxu0
      %2645 = vmatprep.mubr.f32.mxu0 0.0
      %2646 = vmatmul.mubr.f32.gmra.mrb[0].mxu0 %v2466
      %v2647 = vpop.f32.mrb[0].mxu0
      %v2648 = vadd.f32 0.0, %v2647
      %v2649 = vpop.f32.mrb[0].mxu0
      %2650 = vmatprep.mubr.f32.mxu0 0.0
      %2651 = vmatmul.mubr.f32.gmra.mrb[0].mxu0 %v2467
      %v2652 = vpop.f32.mrb[0].mxu0
      %v2653 = vadd.f32 0.0, %v2652
      %v2654 = vpop.f32.mrb[0].mxu0
      %2655 = vmatprep.mubr.f32.mxu0 0.0
      %2656 = vmatmul.mubr.f32.gmra.mrb[0].mxu0 %v2468
      %v2657 = vpop.f32.mrb[0].mxu0
      %v2658 = vadd.f32 0.0, %v2657
      %v2659 = vpop.f32.mrb[0].mxu0
      %2660 = vmatprep.mubr.f32.mxu0 0.0
      %2661 = vmatmul.mubr.f32.gmra.mrb[0].mxu0 %v2469
      %v2662 = vpop.f32.mrb[0].mxu0
      %v2663 = vadd.f32 0.0, %v2662
      %v2664 = vpop.f32.mrb[0].mxu0
      %2665 = vmatprep.mubr.f32.mxu0 0.0
      %2666 = vmatmul.mubr.f32.gmra.mrb[0].mxu0 %v2470
      %v2667 = vpop.f32.mrb[0].mxu0
      %v2668 = vadd.f32 0.0, %v2667
      %v2669 = vpop.f32.mrb[0].mxu0
      %2670 = vmatprep.mubr.f32.mxu0 0.0
      %2671 = vmatmul.mubr.f32.gmra.mrb[0].mxu0 %v2471
      %v2672 = vpop.f32.mrb[0].mxu0
      %v2673 = vadd.f32 0.0, %v2672
      %v2674 = vpop.f32.mrb[0].mxu0
      %2675 = vmatprep.mubr.f32.mxu0 0.0
      %2676 = vmatmul.mubr.f32.gmra.mrb[0].mxu0 %v2472
      %v2677 = vpop.f32.mrb[0].mxu0
      %v2678 = vadd.f32 0.0, %v2677
      %v2679 = vpop.f32.mrb[0].mxu0
      %2680 = vmatprep.mubr.f32.mxu0 0.0
      %2681 = vmatmul.mubr.f32.gmra.mrb[0].mxu0 %v2473
      %v2682 = vpop.f32.mrb[0].mxu0
      %v2683 = vadd.f32 0.0, %v2682
      %v2684 = vpop.f32.mrb[0].mxu0
      %2685 = vmatprep.mubr.f32.mxu0 0.0
      %2686 = vmatmul.mubr.f32.gmra.mrb[0].mxu0 %v2474
      %v2687 = vpop.f32.mrb[0].mxu0
      %v2688 = vadd.f32 0.0, %v2687
      %v2689 = vpop.f32.mrb[0].mxu0
      %2690 = vmatprep.mubr.f32.mxu0 0.0
      %2691 = vmatmul.mubr.f32.gmra.mrb[0].mxu0 %v2475
      %v2692 = vpop.f32.mrb[0].mxu0
      %v2693 = vadd.f32 0.0, %v2692
      %v2694 = vpop.f32.mrb[0].mxu0
      %2695 = vmatprep.mubr.f32.mxu0 0.0
      %2696 = vmatmul.mubr.f32.gmra.mrb[0].mxu0 %v2476
      %v2697 = vpop.f32.mrb[0].mxu0
      %v2698 = vadd.f32 0.0, %v2697
      %v2699 = vpop.f32.mrb[0].mxu0
      %2700 = vmatprep.mubr.f32.mxu0 0.0
      %2701 = vmatmul.mubr.f32.gmra.mrb[0].mxu0 %v2477
      %v2702 = vpop.f32.mrb[0].mxu0
      %v2703 = vadd.f32 0.0, %v2702
      %v2704 = vpop.f32.mrb[0].mxu0
      %2705 = vmatprep.mubr.f32.mxu0 0.0
      %2706 = vmatmul.mubr.f32.gmra.mrb[0].mxu0 %v2478
      %v2707 = vpop.f32.mrb[0].mxu0
      %v2708 = vadd.f32 0.0, %v2707
      %v2709 = vpop.f32.mrb[0].mxu0
      %2710 = vmatprep.mubr.f32.mxu0 0.0
      %2711 = vmatmul.mubr.f32.gmra.mrb[0].mxu0 %v2479
      %v2712 = vpop.f32.mrb[0].mxu0
      %v2713 = vadd.f32 0.0, %v2712
      %v2714 = vpop.f32.mrb[0].mxu0
      %2715 = vmatprep.mubr.f32.mxu0 0.0
      %2716 = vmatmul.mubr.f32.gmra.mrb[0].mxu0 %v2480
      %v2717 = vpop.f32.mrb[0].mxu0
      %v2718 = vadd.f32 0.0, %v2717
      %v2719 = vpop.f32.mrb[0].mxu0
      %2720 = vmatprep.mubr.f32.mxu0 0.0
      %2721 = vmatmul.mubr.f32.gmra.mrb[0].mxu0 %v2481
      %v2722 = vpop.f32.mrb[0].mxu0
      %v2723 = vadd.f32 0.0, %v2722
      %v2724 = vpop.f32.mrb[0].mxu0
      %2725 = vmatprep.mubr.f32.mxu0 0.0
      %2726 = vmatmul.mubr.f32.gmra.mrb[0].mxu0 %v2482
      %v2727 = vpop.f32.mrb[0].mxu0
      %v2728 = vadd.f32 0.0, %v2727
      %v2729 = vpop.f32.mrb[0].mxu0
      %2730 = vmatprep.mubr.f32.mxu0 0.0
      %2731 = vmatmul.mubr.f32.gmra.mrb[0].mxu0 %v2483
      %v2732 = vpop.f32.mrb[0].mxu0
      %v2733 = vadd.f32 0.0, %v2732
      %v2734 = vpop.f32.mrb[0].mxu0
      %2735 = vmatprep.mubr.f32.mxu0 0.0
      %2736 = vmatmul.mubr.f32.gmra.mrb[0].mxu0 %v2484
      %v2737 = vpop.f32.mrb[0].mxu0
      %v2738 = vadd.f32 0.0, %v2737
      %v2739 = vpop.f32.mrb[0].mxu0
      %2740 = vmatprep.mubr.f32.mxu0 0.0
      %2741 = vmatmul.mubr.f32.gmra.mrb[0].mxu0 %v2485
      %v2742 = vpop.f32.mrb[0].mxu0
      %v2743 = vadd.f32 0.0, %v2742
      %v2744 = vpop.f32.mrb[0].mxu0
      %2745 = vmatprep.mubr.f32.mxu0 0.0
      %2746 = vmatmul.mubr.f32.gmra.mrb[0].mxu0 %v2486
      %v2747 = vpop.f32.mrb[0].mxu0
      %v2748 = vadd.f32 0.0, %v2747
      %v2749 = vpop.f32.mrb[0].mxu0
      %2750 = vmatprep.mubr.f32.mxu0 0.0
      %2751 = vmatmul.mubr.f32.gmra.mrb[0].mxu0 %v2487
      %v2752 = vpop.f32.mrb[0].mxu0
      %v2753 = vadd.f32 0.0, %v2752
      %v2754 = vpop.f32.mrb[0].mxu0
      %2755 = vmatprep.mubr.f32.mxu0 0.0
      %2756 = vmatmul.mubr.f32.gmra.mrb[0].mxu0 %v2488
      %v2757 = vpop.f32.mrb[0].mxu0
      %v2758 = vadd.f32 0.0, %v2757
      %v2759 = vpop.f32.mrb[0].mxu0
      %2760 = vmatprep.mubr.f32.mxu0 0.0
      %2761 = vmatmul.mubr.f32.gmra.mrb[0].mxu0 %v2489
      %v2762 = vpop.f32.mrb[0].mxu0
      %v2763 = vadd.f32 0.0, %v2762
      %v2764 = vpop.f32.mrb[0].mxu0
      %2765 = vmatprep.mubr.f32.mxu0 0.0
      %2766 = vmatmul.mubr.f32.gmra.mrb[0].mxu0 %v2490
      %v2767 = vpop.f32.mrb[0].mxu0
      %v2768 = vadd.f32 0.0, %v2767
      %v2769 = vpop.f32.mrb[0].mxu0
      %2770 = vmatprep.mubr.f32.mxu0 0.0
      %2771 = vmatmul.mubr.f32.gmra.mrb[0].mxu0 %v2491
      %v2772 = vpop.f32.mrb[0].mxu0
      %v2773 = vadd.f32 0.0, %v2772
      %v2774 = vpop.f32.mrb[0].mxu0
      %2775 = vmatprep.mubr.f32.mxu0 0.0
      %2776 = vmatmul.mubr.f32.gmra.mrb[0].mxu0 %v2492
      %v2777 = vpop.f32.mrb[0].mxu0
      %v2778 = vadd.f32 0.0, %v2777
      %v2779 = vpop.f32.mrb[0].mxu0
      %2780 = vmatprep.mubr.f32.mxu0 0.0
      %2781 = vmatmul.mubr.f32.gmra.mrb[0].mxu0 %v2493
      %v2782 = vpop.f32.mrb[0].mxu0
      %v2783 = vadd.f32 0.0, %v2782
      %v2784 = vpop.f32.mrb[0].mxu0
      %2785 = vmatprep.mubr.f32.mxu0 0.0
      %2786 = vmatmul.mubr.f32.gmra.mrb[0].mxu0 %v2494
      %v2787 = vpop.f32.mrb[0].mxu0
      %v2788 = vadd.f32 0.0, %v2787
      %v2789 = vpop.f32.mrb[0].mxu0
      %2790 = vmatprep.mubr.f32.mxu0 0.0
      %2791 = vmatmul.mubr.f32.gmra.mrb[0].mxu0 %v2495
      %v2792 = vpop.f32.mrb[0].mxu0
      %v2793 = vadd.f32 0.0, %v2792
      %v2794 = vpop.f32.mrb[0].mxu0
      %2795 = vmatprep.mubr.f32.mxu0 0.0
      %2796 = vmatmul.mubr.f32.gmra.mrb[0].mxu0 %v2496
      %v2797 = vpop.f32.mrb[0].mxu0
      %v2798 = vadd.f32 0.0, %v2797
      %v2799 = vpop.f32.mrb[0].mxu0
      %2800 = vmatprep.mubr.f32.mxu0 0.0
      %2801 = vmatmul.mubr.f32.gmra.mrb[0].mxu0 %v2497
      %v2802 = vpop.f32.mrb[0].mxu0
      %v2803 = vadd.f32 0.0, %v2802
      %v2804 = vpop.f32.mrb[0].mxu0
      %2805 = vmatprep.mubr.f32.mxu0 0.0
      %2806 = vmatmul.mubr.f32.gmra.mrb[0].mxu0 %v2498
      %v2807 = vpop.f32.mrb[0].mxu0
      %v2808 = vadd.f32 0.0, %v2807
      %v2809 = vpop.f32.mrb[0].mxu0
      %2810 = vmatprep.mubr.f32.mxu0 0.0
      %2811 = vmatmul.mubr.f32.gmra.mrb[0].mxu0 %v2499
      %v2812 = vpop.f32.mrb[0].mxu0
      %v2813 = vadd.f32 0.0, %v2812
      %v2814 = vpop.f32.mrb[0].mxu0
      %2815 = vmatprep.mubr.f32.mxu0 0.0
      %2816 = vmatmul.mubr.f32.gmra.mrb[0].mxu0 %v2500
      %v2817 = vpop.f32.mrb[0].mxu0
      %v2818 = vadd.f32 0.0, %v2817
      %v2819 = vpop.f32.mrb[0].mxu0
      %2820 = vmatprep.mubr.f32.mxu0 0.0
      %2821 = vmatmul.mubr.f32.gmra.mrb[0].mxu0 %v2501
      %v2822 = vpop.f32.mrb[0].mxu0
      %v2823 = vadd.f32 0.0, %v2822
      %v2824 = vpop.f32.mrb[0].mxu0
      %2825 = vmatprep.mubr.f32.mxu0 0.0
      %2826 = vmatmul.mubr.f32.gmra.mrb[0].mxu0 %v2502
      %v2827 = vpop.f32.mrb[0].mxu0
      %v2828 = vadd.f32 0.0, %v2827
      %v2829 = vpop.f32.mrb[0].mxu0
      %2830 = vdwg.mxu0
      %v2831 = vadd.f32 %v2503, %v2628
      %v2832 = vadd.f32 %v2504, %v2633
      %v2833 = vadd.f32 %v2505, %v2638
      %v2834 = vadd.f32 %v2506, %v2643
      %v2835 = vadd.f32 %v2507, %v2648
      %v2836 = vadd.f32 %v2508, %v2653
      %v2837 = vadd.f32 %v2509, %v2658
      %v2838 = vadd.f32 %v2510, %v2663
      %v2839 = vadd.f32 %v2511, %v2668
      %v2840 = vadd.f32 %v2512, %v2673
      %v2841 = vadd.f32 %v2513, %v2678
      %v2842 = vadd.f32 %v2514, %v2683
      %v2843 = vadd.f32 %v2515, %v2688
      %v2844 = vadd.f32 %v2516, %v2693
      %v2845 = vadd.f32 %v2517, %v2698
      %v2846 = vadd.f32 %v2518, %v2703
      %v2847 = vadd.f32 %v2519, %v2708
      %v2848 = vadd.f32 %v2520, %v2713
      %v2849 = vadd.f32 %v2521, %v2718
      %v2850 = vadd.f32 %v2522, %v2723
      %v2851 = vadd.f32 %v2523, %v2728
      %v2852 = vadd.f32 %v2524, %v2733
      %v2853 = vadd.f32 %v2525, %v2738
      %v2854 = vadd.f32 %v2526, %v2743
      %v2855 = vadd.f32 %v2527, %v2748
      %v2856 = vadd.f32 %v2528, %v2753
      %v2857 = vadd.f32 %v2529, %v2758
      %v2858 = vadd.f32 %v2530, %v2763
      %v2859 = vadd.f32 %v2531, %v2768
      %v2860 = vadd.f32 %v2532, %v2773
      %v2861 = vadd.f32 %v2533, %v2778
      %v2862 = vadd.f32 %v2534, %v2783
      %v2863 = vadd.f32 %v2535, %v2788
      %v2864 = vadd.f32 %v2536, %v2793
      %v2865 = vadd.f32 %v2537, %v2798
      %v2866 = vadd.f32 %v2538, %v2803
      %v2867 = vadd.f32 %v2539, %v2808
      %v2868 = vadd.f32 %v2540, %v2813
      %v2869 = vadd.f32 %v2541, %v2818
      %v2870 = vadd.f32 %v2542, %v2823
      %v2871 = vadd.f32 %v2543, %v2828
      %2872 = vst [vmem:[#allocation3] sm:$0xff] %v2831
      %2873 = vst [vmem:[#allocation3 + $0x8] sm:$0xff] %v2832
      %2874 = vst [vmem:[#allocation3 + $0x10] sm:$0xff] %v2833
      %2875 = vst [vmem:[#allocation3 + $0x18] sm:$0xff] %v2834
      %2876 = vst [vmem:[#allocation3 + $0x20] sm:$0xff] %v2835
      %2877 = vst [vmem:[#allocation3 + $0x28] sm:$0xff] %v2836
      %2878 = vst [vmem:[#allocation3 + $0x30] sm:$0xff] %v2837
      %2879 = vst [vmem:[#allocation3 + $0x38] sm:$0xff] %v2838
      %2880 = vst [vmem:[#allocation3 + $0x40] sm:$0xff] %v2839
      %2881 = vst [vmem:[#allocation3 + $0x48] sm:$0xff] %v2840
      %2882 = vst [vmem:[#allocation3 + $0x50] sm:$0xff] %v2841
      %2883 = vst [vmem:[#allocation3 + $0x58] sm:$0xff] %v2842
      %2884 = vst [vmem:[#allocation3 + $0x60] sm:$0xff] %v2843
      %2885 = vst [vmem:[#allocation3 + $0x68] sm:$0xff] %v2844
      %2886 = vst [vmem:[#allocation3 + $0x70] sm:$0xff] %v2845
      %2887 = vst [vmem:[#allocation3 + $0x78] sm:$0xff] %v2846
      %2888 = vst [vmem:[#allocation3 + $0x80] sm:$0xff] %v2847
      %2889 = vst [vmem:[#allocation3 + $0x88] sm:$0xff] %v2848
      %2890 = vst [vmem:[#allocation3 + $0x90] sm:$0xff] %v2849
      %2891 = vst [vmem:[#allocation3 + $0x98] sm:$0xff] %v2850
      %2892 = vst [vmem:[#allocation3 + $0xa0] sm:$0xff] %v2851
      %2893 = vst [vmem:[#allocation3 + $0xa8] sm:$0xff] %v2852
      %2894 = vst [vmem:[#allocation3 + $0xb0] sm:$0xff] %v2853
      %2895 = vst [vmem:[#allocation3 + $0xb8] sm:$0xff] %v2854
      %2896 = vst [vmem:[#allocation3 + $0xc0] sm:$0xff] %v2855
      %2897 = vst [vmem:[#allocation3 + $0xc8] sm:$0xff] %v2856
      %2898 = vst [vmem:[#allocation3 + $0xd0] sm:$0xff] %v2857
      %2899 = vst [vmem:[#allocation3 + $0xd8] sm:$0xff] %v2858
      %2900 = vst [vmem:[#allocation3 + $0xe0] sm:$0xff] %v2859
      %2901 = vst [vmem:[#allocation3 + $0xe8] sm:$0xff] %v2860
      %2902 = vst [vmem:[#allocation3 + $0xf0] sm:$0xff] %v2861
      %2903 = vst [vmem:[#allocation3 + $0xf8] sm:$0xff] %v2862
      %2904 = vst [vmem:[#allocation3 + $0x100] sm:$0xff] %v2863
      %2905 = vst [vmem:[#allocation3 + $0x108] sm:$0xff] %v2864
      %2906 = vst [vmem:[#allocation3 + $0x110] sm:$0xff] %v2865
      %2907 = vst [vmem:[#allocation3 + $0x118] sm:$0xff] %v2866
      %2908 = vst [vmem:[#allocation3 + $0x120] sm:$0xff] %v2867
      %2909 = vst [vmem:[#allocation3 + $0x128] sm:$0xff] %v2868
      %2910 = vst [vmem:[#allocation3 + $0x130] sm:$0xff] %v2869
      %2911 = vst [vmem:[#allocation3 + $0x138] sm:$0xff] %v2870
      %2912 = vst [vmem:[#allocation3 + $0x140] sm:$0xff] %v2871
      %v2913 = vld [vmem:[#allocation2 + $0x18] sm:$0xff]
      %v2914 = vld [vmem:[#allocation2 + $0x20] sm:$0xff]
      %v2915 = vld [vmem:[#allocation2 + $0x28] sm:$0xff]
      %v2916 = vld [vmem:[#allocation2 + $0x30] sm:$0xff]
      %v2917 = vld [vmem:[#allocation2 + $0x38] sm:$0xff]
      %v2918 = vld [vmem:[#allocation2 + $0x40] sm:$0xff]
      %v2919 = vld [vmem:[#allocation2 + $0x48] sm:$0xff]
      %v2920 = vld [vmem:[#allocation2 + $0x50] sm:$0xff]
      %v2921 = vld [vmem:[#allocation2 + $0x58] sm:$0xff]
      %v2922 = vld [vmem:[#allocation2 + $0x60] sm:$0xff]
      %v2923 = vld [vmem:[#allocation2 + $0x68] sm:$0xff]
      %v2924 = vld [vmem:[#allocation2 + $0x70] sm:$0xff]
      %v2925 = vld [vmem:[#allocation2 + $0x78] sm:$0xff]
      %v2926 = vld [vmem:[#allocation2 + $0x80] sm:$0xff]
      %v2927 = vld [vmem:[#allocation2 + $0x88] sm:$0xff]
      %v2928 = vld [vmem:[#allocation2 + $0x90] sm:$0xff]
      %v2929 = vld [vmem:[#allocation2 + $0x98] sm:$0xff]
      %v2930 = vld [vmem:[#allocation2 + $0xa0] sm:$0xff]
      %v2931 = vld [vmem:[#allocation2 + $0xa8] sm:$0xff]
      %v2932 = vld [vmem:[#allocation2 + $0xb0] sm:$0xff]
      %v2933 = vld [vmem:[#allocation2 + $0xb8] sm:$0xff]
      %v2934 = vld [vmem:[#allocation2 + $0xc0] sm:$0xff]
      %v2935 = vld [vmem:[#allocation2 + $0xc8] sm:$0xff]
      %v2936 = vld [vmem:[#allocation2 + $0xd0] sm:$0xff]
      %v2937 = vld [vmem:[#allocation2 + $0xd8] sm:$0xff]
      %v2938 = vld [vmem:[#allocation2 + $0xe0] sm:$0xff]
      %v2939 = vld [vmem:[#allocation2 + $0xe8] sm:$0xff]
      %v2940 = vld [vmem:[#allocation2 + $0xf0] sm:$0xff]
      %v2941 = vld [vmem:[#allocation2 + $0xf8] sm:$0xff]
      %v2942 = vld [vmem:[#allocation2 + $0x100] sm:$0xff]
      %v2943 = vld [vmem:[#allocation2 + $0x108] sm:$0xff]
      %v2944 = vld [vmem:[#allocation2 + $0x110] sm:$0xff]
      %v2945 = vld [vmem:[#allocation2 + $0x118] sm:$0xff]
      %v2946 = vld [vmem:[#allocation2 + $0x120] sm:$0xff]
      %v2947 = vld [vmem:[#allocation2 + $0x128] sm:$0xff]
      %v2948 = vld [vmem:[#allocation2 + $0x130] sm:$0xff]
      %v2949 = vld [vmem:[#allocation2 + $0x138] sm:$0xff]
      %v2950 = vld [vmem:[#allocation2 + $0x140] sm:$0xff]
      %v2951 = vld [vmem:[#allocation2 + $0x148] sm:$0xff]
      %v2952 = vld [vmem:[#allocation2 + $0x150] sm:$0xff]
      %v2953 = vld [vmem:[#allocation2 + $0x158] sm:$0xff]
      %v2954 = vld [vmem:[#allocation3] sm:$0xff]
      %v2955 = vld [vmem:[#allocation3 + $0x8] sm:$0xff]
      %v2956 = vld [vmem:[#allocation3 + $0x10] sm:$0xff]
      %v2957 = vld [vmem:[#allocation3 + $0x18] sm:$0xff]
      %v2958 = vld [vmem:[#allocation3 + $0x20] sm:$0xff]
      %v2959 = vld [vmem:[#allocation3 + $0x28] sm:$0xff]
      %v2960 = vld [vmem:[#allocation3 + $0x30] sm:$0xff]
      %v2961 = vld [vmem:[#allocation3 + $0x38] sm:$0xff]
      %v2962 = vld [vmem:[#allocation3 + $0x40] sm:$0xff]
      %v2963 = vld [vmem:[#allocation3 + $0x48] sm:$0xff]
      %v2964 = vld [vmem:[#allocation3 + $0x50] sm:$0xff]
      %v2965 = vld [vmem:[#allocation3 + $0x58] sm:$0xff]
      %v2966 = vld [vmem:[#allocation3 + $0x60] sm:$0xff]
      %v2967 = vld [vmem:[#allocation3 + $0x68] sm:$0xff]
      %v2968 = vld [vmem:[#allocation3 + $0x70] sm:$0xff]
      %v2969 = vld [vmem:[#allocation3 + $0x78] sm:$0xff]
      %v2970 = vld [vmem:[#allocation3 + $0x80] sm:$0xff]
      %v2971 = vld [vmem:[#allocation3 + $0x88] sm:$0xff]
      %v2972 = vld [vmem:[#allocation3 + $0x90] sm:$0xff]
      %v2973 = vld [vmem:[#allocation3 + $0x98] sm:$0xff]
      %v2974 = vld [vmem:[#allocation3 + $0xa0] sm:$0xff]
      %v2975 = vld [vmem:[#allocation3 + $0xa8] sm:$0xff]
      %v2976 = vld [vmem:[#allocation3 + $0xb0] sm:$0xff]
      %v2977 = vld [vmem:[#allocation3 + $0xb8] sm:$0xff]
      %v2978 = vld [vmem:[#allocation3 + $0xc0] sm:$0xff]
      %v2979 = vld [vmem:[#allocation3 + $0xc8] sm:$0xff]
      %v2980 = vld [vmem:[#allocation3 + $0xd0] sm:$0xff]
      %v2981 = vld [vmem:[#allocation3 + $0xd8] sm:$0xff]
      %v2982 = vld [vmem:[#allocation3 + $0xe0] sm:$0xff]
      %v2983 = vld [vmem:[#allocation3 + $0xe8] sm:$0xff]
      %v2984 = vld [vmem:[#allocation3 + $0xf0] sm:$0xff]
      %v2985 = vld [vmem:[#allocation3 + $0xf8] sm:$0xff]
      %v2986 = vld [vmem:[#allocation3 + $0x100] sm:$0xff]
      %v2987 = vld [vmem:[#allocation3 + $0x108] sm:$0xff]
      %v2988 = vld [vmem:[#allocation3 + $0x110] sm:$0xff]
      %v2989 = vld [vmem:[#allocation3 + $0x118] sm:$0xff]
      %v2990 = vld [vmem:[#allocation3 + $0x120] sm:$0xff]
      %v2991 = vld [vmem:[#allocation3 + $0x128] sm:$0xff]
      %v2992 = vld [vmem:[#allocation3 + $0x130] sm:$0xff]
      %v2993 = vld [vmem:[#allocation3 + $0x138] sm:$0xff]
      %v2994 = vld [vmem:[#allocation3 + $0x140] sm:$0xff]
      %s2995 = scalar_lea.vmem %s4, 512
      %v2996 = vld [vmem:[%s2995] sm:$0xff]
      %v2997 = vld [vmem:[%s2995 + $0x8] sm:$0xff]
      %v2998 = vld [vmem:[%s2995 + $0x10] sm:$0xff]
      %v2999 = vld [vmem:[%s2995 + $0x18] sm:$0xff]
      %v3000 = vld [vmem:[%s2995 + $0x20] sm:$0xff]
      %v3001 = vld [vmem:[%s2995 + $0x28] sm:$0xff]
      %v3002 = vld [vmem:[%s2995 + $0x30] sm:$0xff]
      %v3003 = vld [vmem:[%s2995 + $0x38] sm:$0xff]
      %v3004 = vld [vmem:[%s2995 + $0x40] sm:$0xff]
      %v3005 = vld [vmem:[%s2995 + $0x48] sm:$0xff]
      %v3006 = vld [vmem:[%s2995 + $0x50] sm:$0xff]
      %v3007 = vld [vmem:[%s2995 + $0x58] sm:$0xff]
      %v3008 = vld [vmem:[%s2995 + $0x60] sm:$0xff]
      %v3009 = vld [vmem:[%s2995 + $0x68] sm:$0xff]
      %v3010 = vld [vmem:[%s2995 + $0x70] sm:$0xff]
      %v3011 = vld [vmem:[%s2995 + $0x78] sm:$0xff]
      %3012 = vmatprep.subr.mxu0 0.0
      %3013 = vmatpush1.msra.mxu0 %v2996
      %3014 = vmatprep.subr.mxu0 0.0
      %3015 = vmatpush1.msra.mxu0 %v2997
      %3016 = vmatprep.subr.mxu0 0.0
      %3017 = vmatpush1.msra.mxu0 %v2998
      %3018 = vmatprep.subr.mxu0 0.0
      %3019 = vmatpush1.msra.mxu0 %v2999
      %3020 = vmatprep.subr.mxu0 0.0
      %3021 = vmatpush1.msra.mxu0 %v3000
      %3022 = vmatprep.subr.mxu0 0.0
      %3023 = vmatpush1.msra.mxu0 %v3001
      %3024 = vmatprep.subr.mxu0 0.0
      %3025 = vmatpush1.msra.mxu0 %v3002
      %3026 = vmatprep.subr.mxu0 0.0
      %3027 = vmatpush1.msra.mxu0 %v3003
      %3028 = vmatprep.subr.mxu0 0.0
      %3029 = vmatpush1.msra.mxu0 %v3004
      %3030 = vmatprep.subr.mxu0 0.0
      %3031 = vmatpush1.msra.mxu0 %v3005
      %3032 = vmatprep.subr.mxu0 0.0
      %3033 = vmatpush1.msra.mxu0 %v3006
      %3034 = vmatprep.subr.mxu0 0.0
      %3035 = vmatpush1.msra.mxu0 %v3007
      %3036 = vmatprep.subr.mxu0 0.0
      %3037 = vmatpush1.msra.mxu0 %v3008
      %3038 = vmatprep.subr.mxu0 0.0
      %3039 = vmatpush1.msra.mxu0 %v3009
      %3040 = vmatprep.subr.mxu0 0.0
      %3041 = vmatpush1.msra.mxu0 %v3010
      %3042 = vmatprep.subr.mxu0 0.0
      %3043 = vmatpush1.msra.mxu0 %v3011
      %3044 = vmatprep.subr.mxu0 0.0
      %3045 = vmatpush1.msra.mxu0 0.0
      %3046 = vmatprep.subr.mxu0 0.0
      %3047 = vmatpush1.msra.mxu0 0.0
      %3048 = vmatprep.subr.mxu0 0.0
      %3049 = vmatpush1.msra.mxu0 0.0
      %3050 = vmatprep.subr.mxu0 0.0
      %3051 = vmatpush1.msra.mxu0 0.0
      %3052 = vmatprep.subr.mxu0 0.0
      %3053 = vmatpush1.msra.mxu0 0.0
      %3054 = vmatprep.subr.mxu0 0.0
      %3055 = vmatpush1.msra.mxu0 0.0
      %3056 = vmatprep.subr.mxu0 0.0
      %3057 = vmatpush1.msra.mxu0 0.0
      %3058 = vmatprep.subr.mxu0 0.0
      %3059 = vmatpush1.msra.mxu0 0.0
      %3060 = vmatprep.subr.mxu0 0.0
      %3061 = vmatpush1.msra.mxu0 0.0
      %3062 = vmatprep.subr.mxu0 0.0
      %3063 = vmatpush1.msra.mxu0 0.0
      %3064 = vmatprep.subr.mxu0 0.0
      %3065 = vmatpush1.msra.mxu0 0.0
      %3066 = vmatprep.subr.mxu0 0.0
      %3067 = vmatpush1.msra.mxu0 0.0
      %3068 = vmatprep.subr.mxu0 0.0
      %3069 = vmatpush1.msra.mxu0 0.0
      %3070 = vmatprep.subr.mxu0 0.0
      %3071 = vmatpush1.msra.mxu0 0.0
      %3072 = vmatprep.subr.mxu0 0.0
      %3073 = vmatpush1.msra.mxu0 0.0
      %3074 = vmatprep.subr.mxu0 0.0
      %3075 = vmatpush1.msra.mxu0 0.0
      %3076 = vmatprep.mubr.f32.mxu0 0.0
      %3077 = vmatmul.mubr.f32.gmra.mrb[0].mxu0 %v2913
      %v3078 = vpop.f32.mrb[0].mxu0
      %v3079 = vadd.f32 0.0, %v3078
      %v3080 = vpop.f32.mrb[0].mxu0
      %3081 = vmatprep.mubr.f32.mxu0 0.0
      %3082 = vmatmul.mubr.f32.gmra.mrb[0].mxu0 %v2914
      %v3083 = vpop.f32.mrb[0].mxu0
      %v3084 = vadd.f32 0.0, %v3083
      %v3085 = vpop.f32.mrb[0].mxu0
      %3086 = vmatprep.mubr.f32.mxu0 0.0
      %3087 = vmatmul.mubr.f32.gmra.mrb[0].mxu0 %v2915
      %v3088 = vpop.f32.mrb[0].mxu0
      %v3089 = vadd.f32 0.0, %v3088
      %v3090 = vpop.f32.mrb[0].mxu0
      %3091 = vmatprep.mubr.f32.mxu0 0.0
      %3092 = vmatmul.mubr.f32.gmra.mrb[0].mxu0 %v2916
      %v3093 = vpop.f32.mrb[0].mxu0
      %v3094 = vadd.f32 0.0, %v3093
      %v3095 = vpop.f32.mrb[0].mxu0
      %3096 = vmatprep.mubr.f32.mxu0 0.0
      %3097 = vmatmul.mubr.f32.gmra.mrb[0].mxu0 %v2917
      %v3098 = vpop.f32.mrb[0].mxu0
      %v3099 = vadd.f32 0.0, %v3098
      %v3100 = vpop.f32.mrb[0].mxu0
      %3101 = vmatprep.mubr.f32.mxu0 0.0
      %3102 = vmatmul.mubr.f32.gmra.mrb[0].mxu0 %v2918
      %v3103 = vpop.f32.mrb[0].mxu0
      %v3104 = vadd.f32 0.0, %v3103
      %v3105 = vpop.f32.mrb[0].mxu0
      %3106 = vmatprep.mubr.f32.mxu0 0.0
      %3107 = vmatmul.mubr.f32.gmra.mrb[0].mxu0 %v2919
      %v3108 = vpop.f32.mrb[0].mxu0
      %v3109 = vadd.f32 0.0, %v3108
      %v3110 = vpop.f32.mrb[0].mxu0
      %3111 = vmatprep.mubr.f32.mxu0 0.0
      %3112 = vmatmul.mubr.f32.gmra.mrb[0].mxu0 %v2920
      %v3113 = vpop.f32.mrb[0].mxu0
      %v3114 = vadd.f32 0.0, %v3113
      %v3115 = vpop.f32.mrb[0].mxu0
      %3116 = vmatprep.mubr.f32.mxu0 0.0
      %3117 = vmatmul.mubr.f32.gmra.mrb[0].mxu0 %v2921
      %v3118 = vpop.f32.mrb[0].mxu0
      %v3119 = vadd.f32 0.0, %v3118
      %v3120 = vpop.f32.mrb[0].mxu0
      %3121 = vmatprep.mubr.f32.mxu0 0.0
      %3122 = vmatmul.mubr.f32.gmra.mrb[0].mxu0 %v2922
      %v3123 = vpop.f32.mrb[0].mxu0
      %v3124 = vadd.f32 0.0, %v3123
      %v3125 = vpop.f32.mrb[0].mxu0
      %3126 = vmatprep.mubr.f32.mxu0 0.0
      %3127 = vmatmul.mubr.f32.gmra.mrb[0].mxu0 %v2923
      %v3128 = vpop.f32.mrb[0].mxu0
      %v3129 = vadd.f32 0.0, %v3128
      %v3130 = vpop.f32.mrb[0].mxu0
      %3131 = vmatprep.mubr.f32.mxu0 0.0
      %3132 = vmatmul.mubr.f32.gmra.mrb[0].mxu0 %v2924
      %v3133 = vpop.f32.mrb[0].mxu0
      %v3134 = vadd.f32 0.0, %v3133
      %v3135 = vpop.f32.mrb[0].mxu0
      %3136 = vmatprep.mubr.f32.mxu0 0.0
      %3137 = vmatmul.mubr.f32.gmra.mrb[0].mxu0 %v2925
      %v3138 = vpop.f32.mrb[0].mxu0
      %v3139 = vadd.f32 0.0, %v3138
      %v3140 = vpop.f32.mrb[0].mxu0
      %3141 = vmatprep.mubr.f32.mxu0 0.0
      %3142 = vmatmul.mubr.f32.gmra.mrb[0].mxu0 %v2926
      %v3143 = vpop.f32.mrb[0].mxu0
      %v3144 = vadd.f32 0.0, %v3143
      %v3145 = vpop.f32.mrb[0].mxu0
      %3146 = vmatprep.mubr.f32.mxu0 0.0
      %3147 = vmatmul.mubr.f32.gmra.mrb[0].mxu0 %v2927
      %v3148 = vpop.f32.mrb[0].mxu0
      %v3149 = vadd.f32 0.0, %v3148
      %v3150 = vpop.f32.mrb[0].mxu0
      %3151 = vmatprep.mubr.f32.mxu0 0.0
      %3152 = vmatmul.mubr.f32.gmra.mrb[0].mxu0 %v2928
      %v3153 = vpop.f32.mrb[0].mxu0
      %v3154 = vadd.f32 0.0, %v3153
      %v3155 = vpop.f32.mrb[0].mxu0
      %3156 = vmatprep.mubr.f32.mxu0 0.0
      %3157 = vmatmul.mubr.f32.gmra.mrb[0].mxu0 %v2929
      %v3158 = vpop.f32.mrb[0].mxu0
      %v3159 = vadd.f32 0.0, %v3158
      %v3160 = vpop.f32.mrb[0].mxu0
      %3161 = vmatprep.mubr.f32.mxu0 0.0
      %3162 = vmatmul.mubr.f32.gmra.mrb[0].mxu0 %v2930
      %v3163 = vpop.f32.mrb[0].mxu0
      %v3164 = vadd.f32 0.0, %v3163
      %v3165 = vpop.f32.mrb[0].mxu0
      %3166 = vmatprep.mubr.f32.mxu0 0.0
      %3167 = vmatmul.mubr.f32.gmra.mrb[0].mxu0 %v2931
      %v3168 = vpop.f32.mrb[0].mxu0
      %v3169 = vadd.f32 0.0, %v3168
      %v3170 = vpop.f32.mrb[0].mxu0
      %3171 = vmatprep.mubr.f32.mxu0 0.0
      %3172 = vmatmul.mubr.f32.gmra.mrb[0].mxu0 %v2932
      %v3173 = vpop.f32.mrb[0].mxu0
      %v3174 = vadd.f32 0.0, %v3173
      %v3175 = vpop.f32.mrb[0].mxu0
      %3176 = vmatprep.mubr.f32.mxu0 0.0
      %3177 = vmatmul.mubr.f32.gmra.mrb[0].mxu0 %v2933
      %v3178 = vpop.f32.mrb[0].mxu0
      %v3179 = vadd.f32 0.0, %v3178
      %v3180 = vpop.f32.mrb[0].mxu0
      %3181 = vmatprep.mubr.f32.mxu0 0.0
      %3182 = vmatmul.mubr.f32.gmra.mrb[0].mxu0 %v2934
      %v3183 = vpop.f32.mrb[0].mxu0
      %v3184 = vadd.f32 0.0, %v3183
      %v3185 = vpop.f32.mrb[0].mxu0
      %3186 = vmatprep.mubr.f32.mxu0 0.0
      %3187 = vmatmul.mubr.f32.gmra.mrb[0].mxu0 %v2935
      %v3188 = vpop.f32.mrb[0].mxu0
      %v3189 = vadd.f32 0.0, %v3188
      %v3190 = vpop.f32.mrb[0].mxu0
      %3191 = vmatprep.mubr.f32.mxu0 0.0
      %3192 = vmatmul.mubr.f32.gmra.mrb[0].mxu0 %v2936
      %v3193 = vpop.f32.mrb[0].mxu0
      %v3194 = vadd.f32 0.0, %v3193
      %v3195 = vpop.f32.mrb[0].mxu0
      %3196 = vmatprep.mubr.f32.mxu0 0.0
      %3197 = vmatmul.mubr.f32.gmra.mrb[0].mxu0 %v2937
      %v3198 = vpop.f32.mrb[0].mxu0
      %v3199 = vadd.f32 0.0, %v3198
      %v3200 = vpop.f32.mrb[0].mxu0
      %3201 = vmatprep.mubr.f32.mxu0 0.0
      %3202 = vmatmul.mubr.f32.gmra.mrb[0].mxu0 %v2938
      %v3203 = vpop.f32.mrb[0].mxu0
      %v3204 = vadd.f32 0.0, %v3203
      %v3205 = vpop.f32.mrb[0].mxu0
      %3206 = vmatprep.mubr.f32.mxu0 0.0
      %3207 = vmatmul.mubr.f32.gmra.mrb[0].mxu0 %v2939
      %v3208 = vpop.f32.mrb[0].mxu0
      %v3209 = vadd.f32 0.0, %v3208
      %v3210 = vpop.f32.mrb[0].mxu0
      %3211 = vmatprep.mubr.f32.mxu0 0.0
      %3212 = vmatmul.mubr.f32.gmra.mrb[0].mxu0 %v2940
      %v3213 = vpop.f32.mrb[0].mxu0
      %v3214 = vadd.f32 0.0, %v3213
      %v3215 = vpop.f32.mrb[0].mxu0
      %3216 = vmatprep.mubr.f32.mxu0 0.0
      %3217 = vmatmul.mubr.f32.gmra.mrb[0].mxu0 %v2941
      %v3218 = vpop.f32.mrb[0].mxu0
      %v3219 = vadd.f32 0.0, %v3218
      %v3220 = vpop.f32.mrb[0].mxu0
      %3221 = vmatprep.mubr.f32.mxu0 0.0
      %3222 = vmatmul.mubr.f32.gmra.mrb[0].mxu0 %v2942
      %v3223 = vpop.f32.mrb[0].mxu0
      %v3224 = vadd.f32 0.0, %v3223
      %v3225 = vpop.f32.mrb[0].mxu0
      %3226 = vmatprep.mubr.f32.mxu0 0.0
      %3227 = vmatmul.mubr.f32.gmra.mrb[0].mxu0 %v2943
      %v3228 = vpop.f32.mrb[0].mxu0
      %v3229 = vadd.f32 0.0, %v3228
      %v3230 = vpop.f32.mrb[0].mxu0
      %3231 = vmatprep.mubr.f32.mxu0 0.0
      %3232 = vmatmul.mubr.f32.gmra.mrb[0].mxu0 %v2944
      %v3233 = vpop.f32.mrb[0].mxu0
      %v3234 = vadd.f32 0.0, %v3233
      %v3235 = vpop.f32.mrb[0].mxu0
      %3236 = vmatprep.mubr.f32.mxu0 0.0
      %3237 = vmatmul.mubr.f32.gmra.mrb[0].mxu0 %v2945
      %v3238 = vpop.f32.mrb[0].mxu0
      %v3239 = vadd.f32 0.0, %v3238
      %v3240 = vpop.f32.mrb[0].mxu0
      %3241 = vmatprep.mubr.f32.mxu0 0.0
      %3242 = vmatmul.mubr.f32.gmra.mrb[0].mxu0 %v2946
      %v3243 = vpop.f32.mrb[0].mxu0
      %v3244 = vadd.f32 0.0, %v3243
      %v3245 = vpop.f32.mrb[0].mxu0
      %3246 = vmatprep.mubr.f32.mxu0 0.0
      %3247 = vmatmul.mubr.f32.gmra.mrb[0].mxu0 %v2947
      %v3248 = vpop.f32.mrb[0].mxu0
      %v3249 = vadd.f32 0.0, %v3248
      %v3250 = vpop.f32.mrb[0].mxu0
      %3251 = vmatprep.mubr.f32.mxu0 0.0
      %3252 = vmatmul.mubr.f32.gmra.mrb[0].mxu0 %v2948
      %v3253 = vpop.f32.mrb[0].mxu0
      %v3254 = vadd.f32 0.0, %v3253
      %v3255 = vpop.f32.mrb[0].mxu0
      %3256 = vmatprep.mubr.f32.mxu0 0.0
      %3257 = vmatmul.mubr.f32.gmra.mrb[0].mxu0 %v2949
      %v3258 = vpop.f32.mrb[0].mxu0
      %v3259 = vadd.f32 0.0, %v3258
      %v3260 = vpop.f32.mrb[0].mxu0
      %3261 = vmatprep.mubr.f32.mxu0 0.0
      %3262 = vmatmul.mubr.f32.gmra.mrb[0].mxu0 %v2950
      %v3263 = vpop.f32.mrb[0].mxu0
      %v3264 = vadd.f32 0.0, %v3263
      %v3265 = vpop.f32.mrb[0].mxu0
      %3266 = vmatprep.mubr.f32.mxu0 0.0
      %3267 = vmatmul.mubr.f32.gmra.mrb[0].mxu0 %v2951
      %v3268 = vpop.f32.mrb[0].mxu0
      %v3269 = vadd.f32 0.0, %v3268
      %v3270 = vpop.f32.mrb[0].mxu0
      %3271 = vmatprep.mubr.f32.mxu0 0.0
      %3272 = vmatmul.mubr.f32.gmra.mrb[0].mxu0 %v2952
      %v3273 = vpop.f32.mrb[0].mxu0
      %v3274 = vadd.f32 0.0, %v3273
      %v3275 = vpop.f32.mrb[0].mxu0
      %3276 = vmatprep.mubr.f32.mxu0 0.0
      %3277 = vmatmul.mubr.f32.gmra.mrb[0].mxu0 %v2953
      %v3278 = vpop.f32.mrb[0].mxu0
      %v3279 = vadd.f32 0.0, %v3278
      %v3280 = vpop.f32.mrb[0].mxu0
      %3281 = vdwg.mxu0
      %v3282 = vadd.f32 %v2954, %v3079
      %v3283 = vadd.f32 %v2955, %v3084
      %v3284 = vadd.f32 %v2956, %v3089
      %v3285 = vadd.f32 %v2957, %v3094
      %v3286 = vadd.f32 %v2958, %v3099
      %v3287 = vadd.f32 %v2959, %v3104
      %v3288 = vadd.f32 %v2960, %v3109
      %v3289 = vadd.f32 %v2961, %v3114
      %v3290 = vadd.f32 %v2962, %v3119
      %v3291 = vadd.f32 %v2963, %v3124
      %v3292 = vadd.f32 %v2964, %v3129
      %v3293 = vadd.f32 %v2965, %v3134
      %v3294 = vadd.f32 %v2966, %v3139
      %v3295 = vadd.f32 %v2967, %v3144
      %v3296 = vadd.f32 %v2968, %v3149
      %v3297 = vadd.f32 %v2969, %v3154
      %v3298 = vadd.f32 %v2970, %v3159
      %v3299 = vadd.f32 %v2971, %v3164
      %v3300 = vadd.f32 %v2972, %v3169
      %v3301 = vadd.f32 %v2973, %v3174
      %v3302 = vadd.f32 %v2974, %v3179
      %v3303 = vadd.f32 %v2975, %v3184
      %v3304 = vadd.f32 %v2976, %v3189
      %v3305 = vadd.f32 %v2977, %v3194
      %v3306 = vadd.f32 %v2978, %v3199
      %v3307 = vadd.f32 %v2979, %v3204
      %v3308 = vadd.f32 %v2980, %v3209
      %v3309 = vadd.f32 %v2981, %v3214
      %v3310 = vadd.f32 %v2982, %v3219
      %v3311 = vadd.f32 %v2983, %v3224
      %v3312 = vadd.f32 %v2984, %v3229
      %v3313 = vadd.f32 %v2985, %v3234
      %v3314 = vadd.f32 %v2986, %v3239
      %v3315 = vadd.f32 %v2987, %v3244
      %v3316 = vadd.f32 %v2988, %v3249
      %v3317 = vadd.f32 %v2989, %v3254
      %v3318 = vadd.f32 %v2990, %v3259
      %v3319 = vadd.f32 %v2991, %v3264
      %v3320 = vadd.f32 %v2992, %v3269
      %v3321 = vadd.f32 %v2993, %v3274
      %v3322 = vadd.f32 %v2994, %v3279
      %3323 = vst [vmem:[#allocation3] sm:$0xff] %v3282
      %3324 = vst [vmem:[#allocation3 + $0x8] sm:$0xff] %v3283
      %3325 = vst [vmem:[#allocation3 + $0x10] sm:$0xff] %v3284
      %3326 = vst [vmem:[#allocation3 + $0x18] sm:$0xff] %v3285
      %3327 = vst [vmem:[#allocation3 + $0x20] sm:$0xff] %v3286
      %3328 = vst [vmem:[#allocation3 + $0x28] sm:$0xff] %v3287
      %3329 = vst [vmem:[#allocation3 + $0x30] sm:$0xff] %v3288
      %3330 = vst [vmem:[#allocation3 + $0x38] sm:$0xff] %v3289
      %3331 = vst [vmem:[#allocation3 + $0x40] sm:$0xff] %v3290
      %3332 = vst [vmem:[#allocation3 + $0x48] sm:$0xff] %v3291
      %3333 = vst [vmem:[#allocation3 + $0x50] sm:$0xff] %v3292
      %3334 = vst [vmem:[#allocation3 + $0x58] sm:$0xff] %v3293
      %3335 = vst [vmem:[#allocation3 + $0x60] sm:$0xff] %v3294
      %3336 = vst [vmem:[#allocation3 + $0x68] sm:$0xff] %v3295
      %3337 = vst [vmem:[#allocation3 + $0x70] sm:$0xff] %v3296
      %3338 = vst [vmem:[#allocation3 + $0x78] sm:$0xff] %v3297
      %3339 = vst [vmem:[#allocation3 + $0x80] sm:$0xff] %v3298
      %3340 = vst [vmem:[#allocation3 + $0x88] sm:$0xff] %v3299
      %3341 = vst [vmem:[#allocation3 + $0x90] sm:$0xff] %v3300
      %3342 = vst [vmem:[#allocation3 + $0x98] sm:$0xff] %v3301
      %3343 = vst [vmem:[#allocation3 + $0xa0] sm:$0xff] %v3302
      %3344 = vst [vmem:[#allocation3 + $0xa8] sm:$0xff] %v3303
      %3345 = vst [vmem:[#allocation3 + $0xb0] sm:$0xff] %v3304
      %3346 = vst [vmem:[#allocation3 + $0xb8] sm:$0xff] %v3305
      %3347 = vst [vmem:[#allocation3 + $0xc0] sm:$0xff] %v3306
      %3348 = vst [vmem:[#allocation3 + $0xc8] sm:$0xff] %v3307
      %3349 = vst [vmem:[#allocation3 + $0xd0] sm:$0xff] %v3308
      %3350 = vst [vmem:[#allocation3 + $0xd8] sm:$0xff] %v3309
      %3351 = vst [vmem:[#allocation3 + $0xe0] sm:$0xff] %v3310
      %3352 = vst [vmem:[#allocation3 + $0xe8] sm:$0xff] %v3311
      %3353 = vst [vmem:[#allocation3 + $0xf0] sm:$0xff] %v3312
      %3354 = vst [vmem:[#allocation3 + $0xf8] sm:$0xff] %v3313
      %3355 = vst [vmem:[#allocation3 + $0x100] sm:$0xff] %v3314
      %3356 = vst [vmem:[#allocation3 + $0x108] sm:$0xff] %v3315
      %3357 = vst [vmem:[#allocation3 + $0x110] sm:$0xff] %v3316
      %3358 = vst [vmem:[#allocation3 + $0x118] sm:$0xff] %v3317
      %3359 = vst [vmem:[#allocation3 + $0x120] sm:$0xff] %v3318
      %3360 = vst [vmem:[#allocation3 + $0x128] sm:$0xff] %v3319
      %3361 = vst [vmem:[#allocation3 + $0x130] sm:$0xff] %v3320
      %3362 = vst [vmem:[#allocation3 + $0x138] sm:$0xff] %v3321
      %3363 = vst [vmem:[#allocation3 + $0x140] sm:$0xff] %v3322
      %v3364 = vld [vmem:[#allocation2 + $0x19] sm:$0xff]
      %v3365 = vld [vmem:[#allocation2 + $0x21] sm:$0xff]
      %v3366 = vld [vmem:[#allocation2 + $0x29] sm:$0xff]
      %v3367 = vld [vmem:[#allocation2 + $0x31] sm:$0xff]
      %v3368 = vld [vmem:[#allocation2 + $0x39] sm:$0xff]
      %v3369 = vld [vmem:[#allocation2 + $0x41] sm:$0xff]
      %v3370 = vld [vmem:[#allocation2 + $0x49] sm:$0xff]
      %v3371 = vld [vmem:[#allocation2 + $0x51] sm:$0xff]
      %v3372 = vld [vmem:[#allocation2 + $0x59] sm:$0xff]
      %v3373 = vld [vmem:[#allocation2 + $0x61] sm:$0xff]
      %v3374 = vld [vmem:[#allocation2 + $0x69] sm:$0xff]
      %v3375 = vld [vmem:[#allocation2 + $0x71] sm:$0xff]
      %v3376 = vld [vmem:[#allocation2 + $0x79] sm:$0xff]
      %v3377 = vld [vmem:[#allocation2 + $0x81] sm:$0xff]
      %v3378 = vld [vmem:[#allocation2 + $0x89] sm:$0xff]
      %v3379 = vld [vmem:[#allocation2 + $0x91] sm:$0xff]
      %v3380 = vld [vmem:[#allocation2 + $0x99] sm:$0xff]
      %v3381 = vld [vmem:[#allocation2 + $0xa1] sm:$0xff]
      %v3382 = vld [vmem:[#allocation2 + $0xa9] sm:$0xff]
      %v3383 = vld [vmem:[#allocation2 + $0xb1] sm:$0xff]
      %v3384 = vld [vmem:[#allocation2 + $0xb9] sm:$0xff]
      %v3385 = vld [vmem:[#allocation2 + $0xc1] sm:$0xff]
      %v3386 = vld [vmem:[#allocation2 + $0xc9] sm:$0xff]
      %v3387 = vld [vmem:[#allocation2 + $0xd1] sm:$0xff]
      %v3388 = vld [vmem:[#allocation2 + $0xd9] sm:$0xff]
      %v3389 = vld [vmem:[#allocation2 + $0xe1] sm:$0xff]
      %v3390 = vld [vmem:[#allocation2 + $0xe9] sm:$0xff]
      %v3391 = vld [vmem:[#allocation2 + $0xf1] sm:$0xff]
      %v3392 = vld [vmem:[#allocation2 + $0xf9] sm:$0xff]
      %v3393 = vld [vmem:[#allocation2 + $0x101] sm:$0xff]
      %v3394 = vld [vmem:[#allocation2 + $0x109] sm:$0xff]
      %v3395 = vld [vmem:[#allocation2 + $0x111] sm:$0xff]
      %v3396 = vld [vmem:[#allocation2 + $0x119] sm:$0xff]
      %v3397 = vld [vmem:[#allocation2 + $0x121] sm:$0xff]
      %v3398 = vld [vmem:[#allocation2 + $0x129] sm:$0xff]
      %v3399 = vld [vmem:[#allocation2 + $0x131] sm:$0xff]
      %v3400 = vld [vmem:[#allocation2 + $0x139] sm:$0xff]
      %v3401 = vld [vmem:[#allocation2 + $0x141] sm:$0xff]
      %v3402 = vld [vmem:[#allocation2 + $0x149] sm:$0xff]
      %v3403 = vld [vmem:[#allocation2 + $0x151] sm:$0xff]
      %v3404 = vld [vmem:[#allocation2 + $0x159] sm:$0xff]
      %v3405 = vld [vmem:[#allocation3] sm:$0xff]
      %v3406 = vld [vmem:[#allocation3 + $0x8] sm:$0xff]
      %v3407 = vld [vmem:[#allocation3 + $0x10] sm:$0xff]
      %v3408 = vld [vmem:[#allocation3 + $0x18] sm:$0xff]
      %v3409 = vld [vmem:[#allocation3 + $0x20] sm:$0xff]
      %v3410 = vld [vmem:[#allocation3 + $0x28] sm:$0xff]
      %v3411 = vld [vmem:[#allocation3 + $0x30] sm:$0xff]
      %v3412 = vld [vmem:[#allocation3 + $0x38] sm:$0xff]
      %v3413 = vld [vmem:[#allocation3 + $0x40] sm:$0xff]
      %v3414 = vld [vmem:[#allocation3 + $0x48] sm:$0xff]
      %v3415 = vld [vmem:[#allocation3 + $0x50] sm:$0xff]
      %v3416 = vld [vmem:[#allocation3 + $0x58] sm:$0xff]
      %v3417 = vld [vmem:[#allocation3 + $0x60] sm:$0xff]
      %v3418 = vld [vmem:[#allocation3 + $0x68] sm:$0xff]
      %v3419 = vld [vmem:[#allocation3 + $0x70] sm:$0xff]
      %v3420 = vld [vmem:[#allocation3 + $0x78] sm:$0xff]
      %v3421 = vld [vmem:[#allocation3 + $0x80] sm:$0xff]
      %v3422 = vld [vmem:[#allocation3 + $0x88] sm:$0xff]
      %v3423 = vld [vmem:[#allocation3 + $0x90] sm:$0xff]
      %v3424 = vld [vmem:[#allocation3 + $0x98] sm:$0xff]
      %v3425 = vld [vmem:[#allocation3 + $0xa0] sm:$0xff]
      %v3426 = vld [vmem:[#allocation3 + $0xa8] sm:$0xff]
      %v3427 = vld [vmem:[#allocation3 + $0xb0] sm:$0xff]
      %v3428 = vld [vmem:[#allocation3 + $0xb8] sm:$0xff]
      %v3429 = vld [vmem:[#allocation3 + $0xc0] sm:$0xff]
      %v3430 = vld [vmem:[#allocation3 + $0xc8] sm:$0xff]
      %v3431 = vld [vmem:[#allocation3 + $0xd0] sm:$0xff]
      %v3432 = vld [vmem:[#allocation3 + $0xd8] sm:$0xff]
      %v3433 = vld [vmem:[#allocation3 + $0xe0] sm:$0xff]
      %v3434 = vld [vmem:[#allocation3 + $0xe8] sm:$0xff]
      %v3435 = vld [vmem:[#allocation3 + $0xf0] sm:$0xff]
      %v3436 = vld [vmem:[#allocation3 + $0xf8] sm:$0xff]
      %v3437 = vld [vmem:[#allocation3 + $0x100] sm:$0xff]
      %v3438 = vld [vmem:[#allocation3 + $0x108] sm:$0xff]
      %v3439 = vld [vmem:[#allocation3 + $0x110] sm:$0xff]
      %v3440 = vld [vmem:[#allocation3 + $0x118] sm:$0xff]
      %v3441 = vld [vmem:[#allocation3 + $0x120] sm:$0xff]
      %v3442 = vld [vmem:[#allocation3 + $0x128] sm:$0xff]
      %v3443 = vld [vmem:[#allocation3 + $0x130] sm:$0xff]
      %v3444 = vld [vmem:[#allocation3 + $0x138] sm:$0xff]
      %v3445 = vld [vmem:[#allocation3 + $0x140] sm:$0xff]
      %s3446 = scalar_lea.vmem %s4, 640
      %v3447 = vld [vmem:[%s3446] sm:$0xff]
      %v3448 = vld [vmem:[%s3446 + $0x8] sm:$0xff]
      %v3449 = vld [vmem:[%s3446 + $0x10] sm:$0xff]
      %v3450 = vld [vmem:[%s3446 + $0x18] sm:$0xff]
      %v3451 = vld [vmem:[%s3446 + $0x20] sm:$0xff]
      %v3452 = vld [vmem:[%s3446 + $0x28] sm:$0xff]
      %v3453 = vld [vmem:[%s3446 + $0x30] sm:$0xff]
      %v3454 = vld [vmem:[%s3446 + $0x38] sm:$0xff]
      %v3455 = vld [vmem:[%s3446 + $0x40] sm:$0xff]
      %v3456 = vld [vmem:[%s3446 + $0x48] sm:$0xff]
      %v3457 = vld [vmem:[%s3446 + $0x50] sm:$0xff]
      %v3458 = vld [vmem:[%s3446 + $0x58] sm:$0xff]
      %v3459 = vld [vmem:[%s3446 + $0x60] sm:$0xff]
      %v3460 = vld [vmem:[%s3446 + $0x68] sm:$0xff]
      %v3461 = vld [vmem:[%s3446 + $0x70] sm:$0xff]
      %v3462 = vld [vmem:[%s3446 + $0x78] sm:$0xff]
      %3463 = vmatprep.subr.mxu0 0.0
      %3464 = vmatpush1.msra.mxu0 %v3447
      %3465 = vmatprep.subr.mxu0 0.0
      %3466 = vmatpush1.msra.mxu0 %v3448
      %3467 = vmatprep.subr.mxu0 0.0
      %3468 = vmatpush1.msra.mxu0 %v3449
      %3469 = vmatprep.subr.mxu0 0.0
      %3470 = vmatpush1.msra.mxu0 %v3450
      %3471 = vmatprep.subr.mxu0 0.0
      %3472 = vmatpush1.msra.mxu0 %v3451
      %3473 = vmatprep.subr.mxu0 0.0
      %3474 = vmatpush1.msra.mxu0 %v3452
      %3475 = vmatprep.subr.mxu0 0.0
      %3476 = vmatpush1.msra.mxu0 %v3453
      %3477 = vmatprep.subr.mxu0 0.0
      %3478 = vmatpush1.msra.mxu0 %v3454
      %3479 = vmatprep.subr.mxu0 0.0
      %3480 = vmatpush1.msra.mxu0 %v3455
      %3481 = vmatprep.subr.mxu0 0.0
      %3482 = vmatpush1.msra.mxu0 %v3456
      %3483 = vmatprep.subr.mxu0 0.0
      %3484 = vmatpush1.msra.mxu0 %v3457
      %3485 = vmatprep.subr.mxu0 0.0
      %3486 = vmatpush1.msra.mxu0 %v3458
      %3487 = vmatprep.subr.mxu0 0.0
      %3488 = vmatpush1.msra.mxu0 %v3459
      %3489 = vmatprep.subr.mxu0 0.0
      %3490 = vmatpush1.msra.mxu0 %v3460
      %3491 = vmatprep.subr.mxu0 0.0
      %3492 = vmatpush1.msra.mxu0 %v3461
      %3493 = vmatprep.subr.mxu0 0.0
      %3494 = vmatpush1.msra.mxu0 %v3462
      %3495 = vmatprep.subr.mxu0 0.0
      %3496 = vmatpush1.msra.mxu0 0.0
      %3497 = vmatprep.subr.mxu0 0.0
      %3498 = vmatpush1.msra.mxu0 0.0
      %3499 = vmatprep.subr.mxu0 0.0
      %3500 = vmatpush1.msra.mxu0 0.0
      %3501 = vmatprep.subr.mxu0 0.0
      %3502 = vmatpush1.msra.mxu0 0.0
      %3503 = vmatprep.subr.mxu0 0.0
      %3504 = vmatpush1.msra.mxu0 0.0
      %3505 = vmatprep.subr.mxu0 0.0
      %3506 = vmatpush1.msra.mxu0 0.0
      %3507 = vmatprep.subr.mxu0 0.0
      %3508 = vmatpush1.msra.mxu0 0.0
      %3509 = vmatprep.subr.mxu0 0.0
      %3510 = vmatpush1.msra.mxu0 0.0
      %3511 = vmatprep.subr.mxu0 0.0
      %3512 = vmatpush1.msra.mxu0 0.0
      %3513 = vmatprep.subr.mxu0 0.0
      %3514 = vmatpush1.msra.mxu0 0.0
      %3515 = vmatprep.subr.mxu0 0.0
      %3516 = vmatpush1.msra.mxu0 0.0
      %3517 = vmatprep.subr.mxu0 0.0
      %3518 = vmatpush1.msra.mxu0 0.0
      %3519 = vmatprep.subr.mxu0 0.0
      %3520 = vmatpush1.msra.mxu0 0.0
      %3521 = vmatprep.subr.mxu0 0.0
      %3522 = vmatpush1.msra.mxu0 0.0
      %3523 = vmatprep.subr.mxu0 0.0
      %3524 = vmatpush1.msra.mxu0 0.0
      %3525 = vmatprep.subr.mxu0 0.0
      %3526 = vmatpush1.msra.mxu0 0.0
      %3527 = vmatprep.mubr.f32.mxu0 0.0
      %3528 = vmatmul.mubr.f32.gmra.mrb[0].mxu0 %v3364
      %v3529 = vpop.f32.mrb[0].mxu0
      %v3530 = vadd.f32 0.0, %v3529
      %v3531 = vpop.f32.mrb[0].mxu0
      %3532 = vmatprep.mubr.f32.mxu0 0.0
      %3533 = vmatmul.mubr.f32.gmra.mrb[0].mxu0 %v3365
      %v3534 = vpop.f32.mrb[0].mxu0
      %v3535 = vadd.f32 0.0, %v3534
      %v3536 = vpop.f32.mrb[0].mxu0
      %3537 = vmatprep.mubr.f32.mxu0 0.0
      %3538 = vmatmul.mubr.f32.gmra.mrb[0].mxu0 %v3366
      %v3539 = vpop.f32.mrb[0].mxu0
      %v3540 = vadd.f32 0.0, %v3539
      %v3541 = vpop.f32.mrb[0].mxu0
      %3542 = vmatprep.mubr.f32.mxu0 0.0
      %3543 = vmatmul.mubr.f32.gmra.mrb[0].mxu0 %v3367
      %v3544 = vpop.f32.mrb[0].mxu0
      %v3545 = vadd.f32 0.0, %v3544
      %v3546 = vpop.f32.mrb[0].mxu0
      %3547 = vmatprep.mubr.f32.mxu0 0.0
      %3548 = vmatmul.mubr.f32.gmra.mrb[0].mxu0 %v3368
      %v3549 = vpop.f32.mrb[0].mxu0
      %v3550 = vadd.f32 0.0, %v3549
      %v3551 = vpop.f32.mrb[0].mxu0
      %3552 = vmatprep.mubr.f32.mxu0 0.0
      %3553 = vmatmul.mubr.f32.gmra.mrb[0].mxu0 %v3369
      %v3554 = vpop.f32.mrb[0].mxu0
      %v3555 = vadd.f32 0.0, %v3554
      %v3556 = vpop.f32.mrb[0].mxu0
      %3557 = vmatprep.mubr.f32.mxu0 0.0
      %3558 = vmatmul.mubr.f32.gmra.mrb[0].mxu0 %v3370
      %v3559 = vpop.f32.mrb[0].mxu0
      %v3560 = vadd.f32 0.0, %v3559
      %v3561 = vpop.f32.mrb[0].mxu0
      %3562 = vmatprep.mubr.f32.mxu0 0.0
      %3563 = vmatmul.mubr.f32.gmra.mrb[0].mxu0 %v3371
      %v3564 = vpop.f32.mrb[0].mxu0
      %v3565 = vadd.f32 0.0, %v3564
      %v3566 = vpop.f32.mrb[0].mxu0
      %3567 = vmatprep.mubr.f32.mxu0 0.0
      %3568 = vmatmul.mubr.f32.gmra.mrb[0].mxu0 %v3372
      %v3569 = vpop.f32.mrb[0].mxu0
      %v3570 = vadd.f32 0.0, %v3569
      %v3571 = vpop.f32.mrb[0].mxu0
      %3572 = vmatprep.mubr.f32.mxu0 0.0
      %3573 = vmatmul.mubr.f32.gmra.mrb[0].mxu0 %v3373
      %v3574 = vpop.f32.mrb[0].mxu0
      %v3575 = vadd.f32 0.0, %v3574
      %v3576 = vpop.f32.mrb[0].mxu0
      %3577 = vmatprep.mubr.f32.mxu0 0.0
      %3578 = vmatmul.mubr.f32.gmra.mrb[0].mxu0 %v3374
      %v3579 = vpop.f32.mrb[0].mxu0
      %v3580 = vadd.f32 0.0, %v3579
      %v3581 = vpop.f32.mrb[0].mxu0
      %3582 = vmatprep.mubr.f32.mxu0 0.0
      %3583 = vmatmul.mubr.f32.gmra.mrb[0].mxu0 %v3375
      %v3584 = vpop.f32.mrb[0].mxu0
      %v3585 = vadd.f32 0.0, %v3584
      %v3586 = vpop.f32.mrb[0].mxu0
      %3587 = vmatprep.mubr.f32.mxu0 0.0
      %3588 = vmatmul.mubr.f32.gmra.mrb[0].mxu0 %v3376
      %v3589 = vpop.f32.mrb[0].mxu0
      %v3590 = vadd.f32 0.0, %v3589
      %v3591 = vpop.f32.mrb[0].mxu0
      %3592 = vmatprep.mubr.f32.mxu0 0.0
      %3593 = vmatmul.mubr.f32.gmra.mrb[0].mxu0 %v3377
      %v3594 = vpop.f32.mrb[0].mxu0
      %v3595 = vadd.f32 0.0, %v3594
      %v3596 = vpop.f32.mrb[0].mxu0
      %3597 = vmatprep.mubr.f32.mxu0 0.0
      %3598 = vmatmul.mubr.f32.gmra.mrb[0].mxu0 %v3378
      %v3599 = vpop.f32.mrb[0].mxu0
      %v3600 = vadd.f32 0.0, %v3599
      %v3601 = vpop.f32.mrb[0].mxu0
      %3602 = vmatprep.mubr.f32.mxu0 0.0
      %3603 = vmatmul.mubr.f32.gmra.mrb[0].mxu0 %v3379
      %v3604 = vpop.f32.mrb[0].mxu0
      %v3605 = vadd.f32 0.0, %v3604
      %v3606 = vpop.f32.mrb[0].mxu0
      %3607 = vmatprep.mubr.f32.mxu0 0.0
      %3608 = vmatmul.mubr.f32.gmra.mrb[0].mxu0 %v3380
      %v3609 = vpop.f32.mrb[0].mxu0
      %v3610 = vadd.f32 0.0, %v3609
      %v3611 = vpop.f32.mrb[0].mxu0
      %3612 = vmatprep.mubr.f32.mxu0 0.0
      %3613 = vmatmul.mubr.f32.gmra.mrb[0].mxu0 %v3381
      %v3614 = vpop.f32.mrb[0].mxu0
      %v3615 = vadd.f32 0.0, %v3614
      %v3616 = vpop.f32.mrb[0].mxu0
      %3617 = vmatprep.mubr.f32.mxu0 0.0
      %3618 = vmatmul.mubr.f32.gmra.mrb[0].mxu0 %v3382
      %v3619 = vpop.f32.mrb[0].mxu0
      %v3620 = vadd.f32 0.0, %v3619
      %v3621 = vpop.f32.mrb[0].mxu0
      %3622 = vmatprep.mubr.f32.mxu0 0.0
      %3623 = vmatmul.mubr.f32.gmra.mrb[0].mxu0 %v3383
      %v3624 = vpop.f32.mrb[0].mxu0
      %v3625 = vadd.f32 0.0, %v3624
      %v3626 = vpop.f32.mrb[0].mxu0
      %3627 = vmatprep.mubr.f32.mxu0 0.0
      %3628 = vmatmul.mubr.f32.gmra.mrb[0].mxu0 %v3384
      %v3629 = vpop.f32.mrb[0].mxu0
      %v3630 = vadd.f32 0.0, %v3629
      %v3631 = vpop.f32.mrb[0].mxu0
      %3632 = vmatprep.mubr.f32.mxu0 0.0
      %3633 = vmatmul.mubr.f32.gmra.mrb[0].mxu0 %v3385
      %v3634 = vpop.f32.mrb[0].mxu0
      %v3635 = vadd.f32 0.0, %v3634
      %v3636 = vpop.f32.mrb[0].mxu0
      %3637 = vmatprep.mubr.f32.mxu0 0.0
      %3638 = vmatmul.mubr.f32.gmra.mrb[0].mxu0 %v3386
      %v3639 = vpop.f32.mrb[0].mxu0
      %v3640 = vadd.f32 0.0, %v3639
      %v3641 = vpop.f32.mrb[0].mxu0
      %3642 = vmatprep.mubr.f32.mxu0 0.0
      %3643 = vmatmul.mubr.f32.gmra.mrb[0].mxu0 %v3387
      %v3644 = vpop.f32.mrb[0].mxu0
      %v3645 = vadd.f32 0.0, %v3644
      %v3646 = vpop.f32.mrb[0].mxu0
      %3647 = vmatprep.mubr.f32.mxu0 0.0
      %3648 = vmatmul.mubr.f32.gmra.mrb[0].mxu0 %v3388
      %v3649 = vpop.f32.mrb[0].mxu0
      %v3650 = vadd.f32 0.0, %v3649
      %v3651 = vpop.f32.mrb[0].mxu0
      %3652 = vmatprep.mubr.f32.mxu0 0.0
      %3653 = vmatmul.mubr.f32.gmra.mrb[0].mxu0 %v3389
      %v3654 = vpop.f32.mrb[0].mxu0
      %v3655 = vadd.f32 0.0, %v3654
      %v3656 = vpop.f32.mrb[0].mxu0
      %3657 = vmatprep.mubr.f32.mxu0 0.0
      %3658 = vmatmul.mubr.f32.gmra.mrb[0].mxu0 %v3390
      %v3659 = vpop.f32.mrb[0].mxu0
      %v3660 = vadd.f32 0.0, %v3659
      %v3661 = vpop.f32.mrb[0].mxu0
      %3662 = vmatprep.mubr.f32.mxu0 0.0
      %3663 = vmatmul.mubr.f32.gmra.mrb[0].mxu0 %v3391
      %v3664 = vpop.f32.mrb[0].mxu0
      %v3665 = vadd.f32 0.0, %v3664
      %v3666 = vpop.f32.mrb[0].mxu0
      %3667 = vmatprep.mubr.f32.mxu0 0.0
      %3668 = vmatmul.mubr.f32.gmra.mrb[0].mxu0 %v3392
      %v3669 = vpop.f32.mrb[0].mxu0
      %v3670 = vadd.f32 0.0, %v3669
      %v3671 = vpop.f32.mrb[0].mxu0
      %3672 = vmatprep.mubr.f32.mxu0 0.0
      %3673 = vmatmul.mubr.f32.gmra.mrb[0].mxu0 %v3393
      %v3674 = vpop.f32.mrb[0].mxu0
      %v3675 = vadd.f32 0.0, %v3674
      %v3676 = vpop.f32.mrb[0].mxu0
      %3677 = vmatprep.mubr.f32.mxu0 0.0
      %3678 = vmatmul.mubr.f32.gmra.mrb[0].mxu0 %v3394
      %v3679 = vpop.f32.mrb[0].mxu0
      %v3680 = vadd.f32 0.0, %v3679
      %v3681 = vpop.f32.mrb[0].mxu0
      %3682 = vmatprep.mubr.f32.mxu0 0.0
      %3683 = vmatmul.mubr.f32.gmra.mrb[0].mxu0 %v3395
      %v3684 = vpop.f32.mrb[0].mxu0
      %v3685 = vadd.f32 0.0, %v3684
      %v3686 = vpop.f32.mrb[0].mxu0
      %3687 = vmatprep.mubr.f32.mxu0 0.0
      %3688 = vmatmul.mubr.f32.gmra.mrb[0].mxu0 %v3396
      %v3689 = vpop.f32.mrb[0].mxu0
      %v3690 = vadd.f32 0.0, %v3689
      %v3691 = vpop.f32.mrb[0].mxu0
      %3692 = vmatprep.mubr.f32.mxu0 0.0
      %3693 = vmatmul.mubr.f32.gmra.mrb[0].mxu0 %v3397
      %v3694 = vpop.f32.mrb[0].mxu0
      %v3695 = vadd.f32 0.0, %v3694
      %v3696 = vpop.f32.mrb[0].mxu0
      %3697 = vmatprep.mubr.f32.mxu0 0.0
      %3698 = vmatmul.mubr.f32.gmra.mrb[0].mxu0 %v3398
      %v3699 = vpop.f32.mrb[0].mxu0
      %v3700 = vadd.f32 0.0, %v3699
      %v3701 = vpop.f32.mrb[0].mxu0
      %3702 = vmatprep.mubr.f32.mxu0 0.0
      %3703 = vmatmul.mubr.f32.gmra.mrb[0].mxu0 %v3399
      %v3704 = vpop.f32.mrb[0].mxu0
      %v3705 = vadd.f32 0.0, %v3704
      %v3706 = vpop.f32.mrb[0].mxu0
      %3707 = vmatprep.mubr.f32.mxu0 0.0
      %3708 = vmatmul.mubr.f32.gmra.mrb[0].mxu0 %v3400
      %v3709 = vpop.f32.mrb[0].mxu0
      %v3710 = vadd.f32 0.0, %v3709
      %v3711 = vpop.f32.mrb[0].mxu0
      %3712 = vmatprep.mubr.f32.mxu0 0.0
      %3713 = vmatmul.mubr.f32.gmra.mrb[0].mxu0 %v3401
      %v3714 = vpop.f32.mrb[0].mxu0
      %v3715 = vadd.f32 0.0, %v3714
      %v3716 = vpop.f32.mrb[0].mxu0
      %3717 = vmatprep.mubr.f32.mxu0 0.0
      %3718 = vmatmul.mubr.f32.gmra.mrb[0].mxu0 %v3402
      %v3719 = vpop.f32.mrb[0].mxu0
      %v3720 = vadd.f32 0.0, %v3719
      %v3721 = vpop.f32.mrb[0].mxu0
      %3722 = vmatprep.mubr.f32.mxu0 0.0
      %3723 = vmatmul.mubr.f32.gmra.mrb[0].mxu0 %v3403
      %v3724 = vpop.f32.mrb[0].mxu0
      %v3725 = vadd.f32 0.0, %v3724
      %v3726 = vpop.f32.mrb[0].mxu0
      %3727 = vmatprep.mubr.f32.mxu0 0.0
      %3728 = vmatmul.mubr.f32.gmra.mrb[0].mxu0 %v3404
      %v3729 = vpop.f32.mrb[0].mxu0
      %v3730 = vadd.f32 0.0, %v3729
      %v3731 = vpop.f32.mrb[0].mxu0
      %3732 = vdwg.mxu0
      %v3733 = vadd.f32 %v3405, %v3530
      %v3734 = vadd.f32 %v3406, %v3535
      %v3735 = vadd.f32 %v3407, %v3540
      %v3736 = vadd.f32 %v3408, %v3545
      %v3737 = vadd.f32 %v3409, %v3550
      %v3738 = vadd.f32 %v3410, %v3555
      %v3739 = vadd.f32 %v3411, %v3560
      %v3740 = vadd.f32 %v3412, %v3565
      %v3741 = vadd.f32 %v3413, %v3570
      %v3742 = vadd.f32 %v3414, %v3575
      %v3743 = vadd.f32 %v3415, %v3580
      %v3744 = vadd.f32 %v3416, %v3585
      %v3745 = vadd.f32 %v3417, %v3590
      %v3746 = vadd.f32 %v3418, %v3595
      %v3747 = vadd.f32 %v3419, %v3600
      %v3748 = vadd.f32 %v3420, %v3605
      %v3749 = vadd.f32 %v3421, %v3610
      %v3750 = vadd.f32 %v3422, %v3615
      %v3751 = vadd.f32 %v3423, %v3620
      %v3752 = vadd.f32 %v3424, %v3625
      %v3753 = vadd.f32 %v3425, %v3630
      %v3754 = vadd.f32 %v3426, %v3635
      %v3755 = vadd.f32 %v3427, %v3640
      %v3756 = vadd.f32 %v3428, %v3645
      %v3757 = vadd.f32 %v3429, %v3650
      %v3758 = vadd.f32 %v3430, %v3655
      %v3759 = vadd.f32 %v3431, %v3660
      %v3760 = vadd.f32 %v3432, %v3665
      %v3761 = vadd.f32 %v3433, %v3670
      %v3762 = vadd.f32 %v3434, %v3675
      %v3763 = vadd.f32 %v3435, %v3680
      %v3764 = vadd.f32 %v3436, %v3685
      %v3765 = vadd.f32 %v3437, %v3690
      %v3766 = vadd.f32 %v3438, %v3695
      %v3767 = vadd.f32 %v3439, %v3700
      %v3768 = vadd.f32 %v3440, %v3705
      %v3769 = vadd.f32 %v3441, %v3710
      %v3770 = vadd.f32 %v3442, %v3715
      %v3771 = vadd.f32 %v3443, %v3720
      %v3772 = vadd.f32 %v3444, %v3725
      %v3773 = vadd.f32 %v3445, %v3730
      %3774 = vst [vmem:[#allocation3] sm:$0xff] %v3733
      %3775 = vst [vmem:[#allocation3 + $0x8] sm:$0xff] %v3734
      %3776 = vst [vmem:[#allocation3 + $0x10] sm:$0xff] %v3735
      %3777 = vst [vmem:[#allocation3 + $0x18] sm:$0xff] %v3736
      %3778 = vst [vmem:[#allocation3 + $0x20] sm:$0xff] %v3737
      %3779 = vst [vmem:[#allocation3 + $0x28] sm:$0xff] %v3738
      %3780 = vst [vmem:[#allocation3 + $0x30] sm:$0xff] %v3739
      %3781 = vst [vmem:[#allocation3 + $0x38] sm:$0xff] %v3740
      %3782 = vst [vmem:[#allocation3 + $0x40] sm:$0xff] %v3741
      %3783 = vst [vmem:[#allocation3 + $0x48] sm:$0xff] %v3742
      %3784 = vst [vmem:[#allocation3 + $0x50] sm:$0xff] %v3743
      %3785 = vst [vmem:[#allocation3 + $0x58] sm:$0xff] %v3744
      %3786 = vst [vmem:[#allocation3 + $0x60] sm:$0xff] %v3745
      %3787 = vst [vmem:[#allocation3 + $0x68] sm:$0xff] %v3746
      %3788 = vst [vmem:[#allocation3 + $0x70] sm:$0xff] %v3747
      %3789 = vst [vmem:[#allocation3 + $0x78] sm:$0xff] %v3748
      %3790 = vst [vmem:[#allocation3 + $0x80] sm:$0xff] %v3749
      %3791 = vst [vmem:[#allocation3 + $0x88] sm:$0xff] %v3750
      %3792 = vst [vmem:[#allocation3 + $0x90] sm:$0xff] %v3751
      %3793 = vst [vmem:[#allocation3 + $0x98] sm:$0xff] %v3752
      %3794 = vst [vmem:[#allocation3 + $0xa0] sm:$0xff] %v3753
      %3795 = vst [vmem:[#allocation3 + $0xa8] sm:$0xff] %v3754
      %3796 = vst [vmem:[#allocation3 + $0xb0] sm:$0xff] %v3755
      %3797 = vst [vmem:[#allocation3 + $0xb8] sm:$0xff] %v3756
      %3798 = vst [vmem:[#allocation3 + $0xc0] sm:$0xff] %v3757
      %3799 = vst [vmem:[#allocation3 + $0xc8] sm:$0xff] %v3758
      %3800 = vst [vmem:[#allocation3 + $0xd0] sm:$0xff] %v3759
      %3801 = vst [vmem:[#allocation3 + $0xd8] sm:$0xff] %v3760
      %3802 = vst [vmem:[#allocation3 + $0xe0] sm:$0xff] %v3761
      %3803 = vst [vmem:[#allocation3 + $0xe8] sm:$0xff] %v3762
      %3804 = vst [vmem:[#allocation3 + $0xf0] sm:$0xff] %v3763
      %3805 = vst [vmem:[#allocation3 + $0xf8] sm:$0xff] %v3764
      %3806 = vst [vmem:[#allocation3 + $0x100] sm:$0xff] %v3765
      %3807 = vst [vmem:[#allocation3 + $0x108] sm:$0xff] %v3766
      %3808 = vst [vmem:[#allocation3 + $0x110] sm:$0xff] %v3767
      %3809 = vst [vmem:[#allocation3 + $0x118] sm:$0xff] %v3768
      %3810 = vst [vmem:[#allocation3 + $0x120] sm:$0xff] %v3769
      %3811 = vst [vmem:[#allocation3 + $0x128] sm:$0xff] %v3770
      %3812 = vst [vmem:[#allocation3 + $0x130] sm:$0xff] %v3771
      %3813 = vst [vmem:[#allocation3 + $0x138] sm:$0xff] %v3772
      %3814 = vst [vmem:[#allocation3 + $0x140] sm:$0xff] %v3773
      %v3815 = vld [vmem:[#allocation2 + $0x29] sm:$0xff]
      %v3816 = vld [vmem:[#allocation2 + $0x31] sm:$0xff]
      %v3817 = vld [vmem:[#allocation2 + $0x39] sm:$0xff]
      %v3818 = vld [vmem:[#allocation2 + $0x41] sm:$0xff]
      %v3819 = vld [vmem:[#allocation2 + $0x49] sm:$0xff]
      %v3820 = vld [vmem:[#allocation2 + $0x51] sm:$0xff]
      %v3821 = vld [vmem:[#allocation2 + $0x59] sm:$0xff]
      %v3822 = vld [vmem:[#allocation2 + $0x61] sm:$0xff]
      %v3823 = vld [vmem:[#allocation2 + $0x69] sm:$0xff]
      %v3824 = vld [vmem:[#allocation2 + $0x71] sm:$0xff]
      %v3825 = vld [vmem:[#allocation2 + $0x79] sm:$0xff]
      %v3826 = vld [vmem:[#allocation2 + $0x81] sm:$0xff]
      %v3827 = vld [vmem:[#allocation2 + $0x89] sm:$0xff]
      %v3828 = vld [vmem:[#allocation2 + $0x91] sm:$0xff]
      %v3829 = vld [vmem:[#allocation2 + $0x99] sm:$0xff]
      %v3830 = vld [vmem:[#allocation2 + $0xa1] sm:$0xff]
      %v3831 = vld [vmem:[#allocation2 + $0xa9] sm:$0xff]
      %v3832 = vld [vmem:[#allocation2 + $0xb1] sm:$0xff]
      %v3833 = vld [vmem:[#allocation2 + $0xb9] sm:$0xff]
      %v3834 = vld [vmem:[#allocation2 + $0xc1] sm:$0xff]
      %v3835 = vld [vmem:[#allocation2 + $0xc9] sm:$0xff]
      %v3836 = vld [vmem:[#allocation2 + $0xd1] sm:$0xff]
      %v3837 = vld [vmem:[#allocation2 + $0xd9] sm:$0xff]
      %v3838 = vld [vmem:[#allocation2 + $0xe1] sm:$0xff]
      %v3839 = vld [vmem:[#allocation2 + $0xe9] sm:$0xff]
      %v3840 = vld [vmem:[#allocation2 + $0xf1] sm:$0xff]
      %v3841 = vld [vmem:[#allocation2 + $0xf9] sm:$0xff]
      %v3842 = vld [vmem:[#allocation2 + $0x101] sm:$0xff]
      %v3843 = vld [vmem:[#allocation2 + $0x109] sm:$0xff]
      %v3844 = vld [vmem:[#allocation2 + $0x111] sm:$0xff]
      %v3845 = vld [vmem:[#allocation2 + $0x119] sm:$0xff]
      %v3846 = vld [vmem:[#allocation2 + $0x121] sm:$0xff]
      %v3847 = vld [vmem:[#allocation2 + $0x129] sm:$0xff]
      %v3848 = vld [vmem:[#allocation2 + $0x131] sm:$0xff]
      %v3849 = vld [vmem:[#allocation2 + $0x139] sm:$0xff]
      %v3850 = vld [vmem:[#allocation2 + $0x141] sm:$0xff]
      %v3851 = vld [vmem:[#allocation2 + $0x149] sm:$0xff]
      %v3852 = vld [vmem:[#allocation2 + $0x151] sm:$0xff]
      %v3853 = vld [vmem:[#allocation2 + $0x159] sm:$0xff]
      %v3854 = vld [vmem:[#allocation2 + $0x161] sm:$0xff]
      %v3855 = vld [vmem:[#allocation2 + $0x169] sm:$0xff]
      %v3856 = vld [vmem:[#allocation3] sm:$0xff]
      %v3857 = vld [vmem:[#allocation3 + $0x8] sm:$0xff]
      %v3858 = vld [vmem:[#allocation3 + $0x10] sm:$0xff]
      %v3859 = vld [vmem:[#allocation3 + $0x18] sm:$0xff]
      %v3860 = vld [vmem:[#allocation3 + $0x20] sm:$0xff]
      %v3861 = vld [vmem:[#allocation3 + $0x28] sm:$0xff]
      %v3862 = vld [vmem:[#allocation3 + $0x30] sm:$0xff]
      %v3863 = vld [vmem:[#allocation3 + $0x38] sm:$0xff]
      %v3864 = vld [vmem:[#allocation3 + $0x40] sm:$0xff]
      %v3865 = vld [vmem:[#allocation3 + $0x48] sm:$0xff]
      %v3866 = vld [vmem:[#allocation3 + $0x50] sm:$0xff]
      %v3867 = vld [vmem:[#allocation3 + $0x58] sm:$0xff]
      %v3868 = vld [vmem:[#allocation3 + $0x60] sm:$0xff]
      %v3869 = vld [vmem:[#allocation3 + $0x68] sm:$0xff]
      %v3870 = vld [vmem:[#allocation3 + $0x70] sm:$0xff]
      %v3871 = vld [vmem:[#allocation3 + $0x78] sm:$0xff]
      %v3872 = vld [vmem:[#allocation3 + $0x80] sm:$0xff]
      %v3873 = vld [vmem:[#allocation3 + $0x88] sm:$0xff]
      %v3874 = vld [vmem:[#allocation3 + $0x90] sm:$0xff]
      %v3875 = vld [vmem:[#allocation3 + $0x98] sm:$0xff]
      %v3876 = vld [vmem:[#allocation3 + $0xa0] sm:$0xff]
      %v3877 = vld [vmem:[#allocation3 + $0xa8] sm:$0xff]
      %v3878 = vld [vmem:[#allocation3 + $0xb0] sm:$0xff]
      %v3879 = vld [vmem:[#allocation3 + $0xb8] sm:$0xff]
      %v3880 = vld [vmem:[#allocation3 + $0xc0] sm:$0xff]
      %v3881 = vld [vmem:[#allocation3 + $0xc8] sm:$0xff]
      %v3882 = vld [vmem:[#allocation3 + $0xd0] sm:$0xff]
      %v3883 = vld [vmem:[#allocation3 + $0xd8] sm:$0xff]
      %v3884 = vld [vmem:[#allocation3 + $0xe0] sm:$0xff]
      %v3885 = vld [vmem:[#allocation3 + $0xe8] sm:$0xff]
      %v3886 = vld [vmem:[#allocation3 + $0xf0] sm:$0xff]
      %v3887 = vld [vmem:[#allocation3 + $0xf8] sm:$0xff]
      %v3888 = vld [vmem:[#allocation3 + $0x100] sm:$0xff]
      %v3889 = vld [vmem:[#allocation3 + $0x108] sm:$0xff]
      %v3890 = vld [vmem:[#allocation3 + $0x110] sm:$0xff]
      %v3891 = vld [vmem:[#allocation3 + $0x118] sm:$0xff]
      %v3892 = vld [vmem:[#allocation3 + $0x120] sm:$0xff]
      %v3893 = vld [vmem:[#allocation3 + $0x128] sm:$0xff]
      %v3894 = vld [vmem:[#allocation3 + $0x130] sm:$0xff]
      %v3895 = vld [vmem:[#allocation3 + $0x138] sm:$0xff]
      %v3896 = vld [vmem:[#allocation3 + $0x140] sm:$0xff]
      %s3897 = scalar_lea.vmem %s4, 768
      %v3898 = vld [vmem:[%s3897] sm:$0xff]
      %v3899 = vld [vmem:[%s3897 + $0x8] sm:$0xff]
      %v3900 = vld [vmem:[%s3897 + $0x10] sm:$0xff]
      %v3901 = vld [vmem:[%s3897 + $0x18] sm:$0xff]
      %v3902 = vld [vmem:[%s3897 + $0x20] sm:$0xff]
      %v3903 = vld [vmem:[%s3897 + $0x28] sm:$0xff]
      %v3904 = vld [vmem:[%s3897 + $0x30] sm:$0xff]
      %v3905 = vld [vmem:[%s3897 + $0x38] sm:$0xff]
      %v3906 = vld [vmem:[%s3897 + $0x40] sm:$0xff]
      %v3907 = vld [vmem:[%s3897 + $0x48] sm:$0xff]
      %v3908 = vld [vmem:[%s3897 + $0x50] sm:$0xff]
      %v3909 = vld [vmem:[%s3897 + $0x58] sm:$0xff]
      %v3910 = vld [vmem:[%s3897 + $0x60] sm:$0xff]
      %v3911 = vld [vmem:[%s3897 + $0x68] sm:$0xff]
      %v3912 = vld [vmem:[%s3897 + $0x70] sm:$0xff]
      %v3913 = vld [vmem:[%s3897 + $0x78] sm:$0xff]
      %3914 = vmatprep.subr.mxu0 0.0
      %3915 = vmatpush1.msra.mxu0 %v3898
      %3916 = vmatprep.subr.mxu0 0.0
      %3917 = vmatpush1.msra.mxu0 %v3899
      %3918 = vmatprep.subr.mxu0 0.0
      %3919 = vmatpush1.msra.mxu0 %v3900
      %3920 = vmatprep.subr.mxu0 0.0
      %3921 = vmatpush1.msra.mxu0 %v3901
      %3922 = vmatprep.subr.mxu0 0.0
      %3923 = vmatpush1.msra.mxu0 %v3902
      %3924 = vmatprep.subr.mxu0 0.0
      %3925 = vmatpush1.msra.mxu0 %v3903
      %3926 = vmatprep.subr.mxu0 0.0
      %3927 = vmatpush1.msra.mxu0 %v3904
      %3928 = vmatprep.subr.mxu0 0.0
      %3929 = vmatpush1.msra.mxu0 %v3905
      %3930 = vmatprep.subr.mxu0 0.0
      %3931 = vmatpush1.msra.mxu0 %v3906
      %3932 = vmatprep.subr.mxu0 0.0
      %3933 = vmatpush1.msra.mxu0 %v3907
      %3934 = vmatprep.subr.mxu0 0.0
      %3935 = vmatpush1.msra.mxu0 %v3908
      %3936 = vmatprep.subr.mxu0 0.0
      %3937 = vmatpush1.msra.mxu0 %v3909
      %3938 = vmatprep.subr.mxu0 0.0
      %3939 = vmatpush1.msra.mxu0 %v3910
      %3940 = vmatprep.subr.mxu0 0.0
      %3941 = vmatpush1.msra.mxu0 %v3911
      %3942 = vmatprep.subr.mxu0 0.0
      %3943 = vmatpush1.msra.mxu0 %v3912
      %3944 = vmatprep.subr.mxu0 0.0
      %3945 = vmatpush1.msra.mxu0 %v3913
      %3946 = vmatprep.subr.mxu0 0.0
      %3947 = vmatpush1.msra.mxu0 0.0
      %3948 = vmatprep.subr.mxu0 0.0
      %3949 = vmatpush1.msra.mxu0 0.0
      %3950 = vmatprep.subr.mxu0 0.0
      %3951 = vmatpush1.msra.mxu0 0.0
      %3952 = vmatprep.subr.mxu0 0.0
      %3953 = vmatpush1.msra.mxu0 0.0
      %3954 = vmatprep.subr.mxu0 0.0
      %3955 = vmatpush1.msra.mxu0 0.0
      %3956 = vmatprep.subr.mxu0 0.0
      %3957 = vmatpush1.msra.mxu0 0.0
      %3958 = vmatprep.subr.mxu0 0.0
      %3959 = vmatpush1.msra.mxu0 0.0
      %3960 = vmatprep.subr.mxu0 0.0
      %3961 = vmatpush1.msra.mxu0 0.0
      %3962 = vmatprep.subr.mxu0 0.0
      %3963 = vmatpush1.msra.mxu0 0.0
      %3964 = vmatprep.subr.mxu0 0.0
      %3965 = vmatpush1.msra.mxu0 0.0
      %3966 = vmatprep.subr.mxu0 0.0
      %3967 = vmatpush1.msra.mxu0 0.0
      %3968 = vmatprep.subr.mxu0 0.0
      %3969 = vmatpush1.msra.mxu0 0.0
      %3970 = vmatprep.subr.mxu0 0.0
      %3971 = vmatpush1.msra.mxu0 0.0
      %3972 = vmatprep.subr.mxu0 0.0
      %3973 = vmatpush1.msra.mxu0 0.0
      %3974 = vmatprep.subr.mxu0 0.0
      %3975 = vmatpush1.msra.mxu0 0.0
      %3976 = vmatprep.subr.mxu0 0.0
      %3977 = vmatpush1.msra.mxu0 0.0
      %3978 = vmatprep.mubr.f32.mxu0 0.0
      %3979 = vmatmul.mubr.f32.gmra.mrb[0].mxu0 %v3815
      %v3980 = vpop.f32.mrb[0].mxu0
      %v3981 = vadd.f32 0.0, %v3980
      %v3982 = vpop.f32.mrb[0].mxu0
      %3983 = vmatprep.mubr.f32.mxu0 0.0
      %3984 = vmatmul.mubr.f32.gmra.mrb[0].mxu0 %v3816
      %v3985 = vpop.f32.mrb[0].mxu0
      %v3986 = vadd.f32 0.0, %v3985
      %v3987 = vpop.f32.mrb[0].mxu0
      %3988 = vmatprep.mubr.f32.mxu0 0.0
      %3989 = vmatmul.mubr.f32.gmra.mrb[0].mxu0 %v3817
      %v3990 = vpop.f32.mrb[0].mxu0
      %v3991 = vadd.f32 0.0, %v3990
      %v3992 = vpop.f32.mrb[0].mxu0
      %3993 = vmatprep.mubr.f32.mxu0 0.0
      %3994 = vmatmul.mubr.f32.gmra.mrb[0].mxu0 %v3818
      %v3995 = vpop.f32.mrb[0].mxu0
      %v3996 = vadd.f32 0.0, %v3995
      %v3997 = vpop.f32.mrb[0].mxu0
      %3998 = vmatprep.mubr.f32.mxu0 0.0
      %3999 = vmatmul.mubr.f32.gmra.mrb[0].mxu0 %v3819
      %v4000 = vpop.f32.mrb[0].mxu0
      %v4001 = vadd.f32 0.0, %v4000
      %v4002 = vpop.f32.mrb[0].mxu0
      %4003 = vmatprep.mubr.f32.mxu0 0.0
      %4004 = vmatmul.mubr.f32.gmra.mrb[0].mxu0 %v3820
      %v4005 = vpop.f32.mrb[0].mxu0
      %v4006 = vadd.f32 0.0, %v4005
      %v4007 = vpop.f32.mrb[0].mxu0
      %4008 = vmatprep.mubr.f32.mxu0 0.0
      %4009 = vmatmul.mubr.f32.gmra.mrb[0].mxu0 %v3821
      %v4010 = vpop.f32.mrb[0].mxu0
      %v4011 = vadd.f32 0.0, %v4010
      %v4012 = vpop.f32.mrb[0].mxu0
      %4013 = vmatprep.mubr.f32.mxu0 0.0
      %4014 = vmatmul.mubr.f32.gmra.mrb[0].mxu0 %v3822
      %v4015 = vpop.f32.mrb[0].mxu0
      %v4016 = vadd.f32 0.0, %v4015
      %v4017 = vpop.f32.mrb[0].mxu0
      %4018 = vmatprep.mubr.f32.mxu0 0.0
      %4019 = vmatmul.mubr.f32.gmra.mrb[0].mxu0 %v3823
      %v4020 = vpop.f32.mrb[0].mxu0
      %v4021 = vadd.f32 0.0, %v4020
      %v4022 = vpop.f32.mrb[0].mxu0
      %4023 = vmatprep.mubr.f32.mxu0 0.0
      %4024 = vmatmul.mubr.f32.gmra.mrb[0].mxu0 %v3824
      %v4025 = vpop.f32.mrb[0].mxu0
      %v4026 = vadd.f32 0.0, %v4025
      %v4027 = vpop.f32.mrb[0].mxu0
      %4028 = vmatprep.mubr.f32.mxu0 0.0
      %4029 = vmatmul.mubr.f32.gmra.mrb[0].mxu0 %v3825
      %v4030 = vpop.f32.mrb[0].mxu0
      %v4031 = vadd.f32 0.0, %v4030
      %v4032 = vpop.f32.mrb[0].mxu0
      %4033 = vmatprep.mubr.f32.mxu0 0.0
      %4034 = vmatmul.mubr.f32.gmra.mrb[0].mxu0 %v3826
      %v4035 = vpop.f32.mrb[0].mxu0
      %v4036 = vadd.f32 0.0, %v4035
      %v4037 = vpop.f32.mrb[0].mxu0
      %4038 = vmatprep.mubr.f32.mxu0 0.0
      %4039 = vmatmul.mubr.f32.gmra.mrb[0].mxu0 %v3827
      %v4040 = vpop.f32.mrb[0].mxu0
      %v4041 = vadd.f32 0.0, %v4040
      %v4042 = vpop.f32.mrb[0].mxu0
      %4043 = vmatprep.mubr.f32.mxu0 0.0
      %4044 = vmatmul.mubr.f32.gmra.mrb[0].mxu0 %v3828
      %v4045 = vpop.f32.mrb[0].mxu0
      %v4046 = vadd.f32 0.0, %v4045
      %v4047 = vpop.f32.mrb[0].mxu0
      %4048 = vmatprep.mubr.f32.mxu0 0.0
      %4049 = vmatmul.mubr.f32.gmra.mrb[0].mxu0 %v3829
      %v4050 = vpop.f32.mrb[0].mxu0
      %v4051 = vadd.f32 0.0, %v4050
      %v4052 = vpop.f32.mrb[0].mxu0
      %4053 = vmatprep.mubr.f32.mxu0 0.0
      %4054 = vmatmul.mubr.f32.gmra.mrb[0].mxu0 %v3830
      %v4055 = vpop.f32.mrb[0].mxu0
      %v4056 = vadd.f32 0.0, %v4055
      %v4057 = vpop.f32.mrb[0].mxu0
      %4058 = vmatprep.mubr.f32.mxu0 0.0
      %4059 = vmatmul.mubr.f32.gmra.mrb[0].mxu0 %v3831
      %v4060 = vpop.f32.mrb[0].mxu0
      %v4061 = vadd.f32 0.0, %v4060
      %v4062 = vpop.f32.mrb[0].mxu0
      %4063 = vmatprep.mubr.f32.mxu0 0.0
      %4064 = vmatmul.mubr.f32.gmra.mrb[0].mxu0 %v3832
      %v4065 = vpop.f32.mrb[0].mxu0
      %v4066 = vadd.f32 0.0, %v4065
      %v4067 = vpop.f32.mrb[0].mxu0
      %4068 = vmatprep.mubr.f32.mxu0 0.0
      %4069 = vmatmul.mubr.f32.gmra.mrb[0].mxu0 %v3833
      %v4070 = vpop.f32.mrb[0].mxu0
      %v4071 = vadd.f32 0.0, %v4070
      %v4072 = vpop.f32.mrb[0].mxu0
      %4073 = vmatprep.mubr.f32.mxu0 0.0
      %4074 = vmatmul.mubr.f32.gmra.mrb[0].mxu0 %v3834
      %v4075 = vpop.f32.mrb[0].mxu0
      %v4076 = vadd.f32 0.0, %v4075
      %v4077 = vpop.f32.mrb[0].mxu0
      %4078 = vmatprep.mubr.f32.mxu0 0.0
      %4079 = vmatmul.mubr.f32.gmra.mrb[0].mxu0 %v3835
      %v4080 = vpop.f32.mrb[0].mxu0
      %v4081 = vadd.f32 0.0, %v4080
      %v4082 = vpop.f32.mrb[0].mxu0
      %4083 = vmatprep.mubr.f32.mxu0 0.0
      %4084 = vmatmul.mubr.f32.gmra.mrb[0].mxu0 %v3836
      %v4085 = vpop.f32.mrb[0].mxu0
      %v4086 = vadd.f32 0.0, %v4085
      %v4087 = vpop.f32.mrb[0].mxu0
      %4088 = vmatprep.mubr.f32.mxu0 0.0
      %4089 = vmatmul.mubr.f32.gmra.mrb[0].mxu0 %v3837
      %v4090 = vpop.f32.mrb[0].mxu0
      %v4091 = vadd.f32 0.0, %v4090
      %v4092 = vpop.f32.mrb[0].mxu0
      %4093 = vmatprep.mubr.f32.mxu0 0.0
      %4094 = vmatmul.mubr.f32.gmra.mrb[0].mxu0 %v3838
      %v4095 = vpop.f32.mrb[0].mxu0
      %v4096 = vadd.f32 0.0, %v4095
      %v4097 = vpop.f32.mrb[0].mxu0
      %4098 = vmatprep.mubr.f32.mxu0 0.0
      %4099 = vmatmul.mubr.f32.gmra.mrb[0].mxu0 %v3839
      %v4100 = vpop.f32.mrb[0].mxu0
      %v4101 = vadd.f32 0.0, %v4100
      %v4102 = vpop.f32.mrb[0].mxu0
      %4103 = vmatprep.mubr.f32.mxu0 0.0
      %4104 = vmatmul.mubr.f32.gmra.mrb[0].mxu0 %v3840
      %v4105 = vpop.f32.mrb[0].mxu0
      %v4106 = vadd.f32 0.0, %v4105
      %v4107 = vpop.f32.mrb[0].mxu0
      %4108 = vmatprep.mubr.f32.mxu0 0.0
      %4109 = vmatmul.mubr.f32.gmra.mrb[0].mxu0 %v3841
      %v4110 = vpop.f32.mrb[0].mxu0
      %v4111 = vadd.f32 0.0, %v4110
      %v4112 = vpop.f32.mrb[0].mxu0
      %4113 = vmatprep.mubr.f32.mxu0 0.0
      %4114 = vmatmul.mubr.f32.gmra.mrb[0].mxu0 %v3842
      %v4115 = vpop.f32.mrb[0].mxu0
      %v4116 = vadd.f32 0.0, %v4115
      %v4117 = vpop.f32.mrb[0].mxu0
      %4118 = vmatprep.mubr.f32.mxu0 0.0
      %4119 = vmatmul.mubr.f32.gmra.mrb[0].mxu0 %v3843
      %v4120 = vpop.f32.mrb[0].mxu0
      %v4121 = vadd.f32 0.0, %v4120
      %v4122 = vpop.f32.mrb[0].mxu0
      %4123 = vmatprep.mubr.f32.mxu0 0.0
      %4124 = vmatmul.mubr.f32.gmra.mrb[0].mxu0 %v3844
      %v4125 = vpop.f32.mrb[0].mxu0
      %v4126 = vadd.f32 0.0, %v4125
      %v4127 = vpop.f32.mrb[0].mxu0
      %4128 = vmatprep.mubr.f32.mxu0 0.0
      %4129 = vmatmul.mubr.f32.gmra.mrb[0].mxu0 %v3845
      %v4130 = vpop.f32.mrb[0].mxu0
      %v4131 = vadd.f32 0.0, %v4130
      %v4132 = vpop.f32.mrb[0].mxu0
      %4133 = vmatprep.mubr.f32.mxu0 0.0
      %4134 = vmatmul.mubr.f32.gmra.mrb[0].mxu0 %v3846
      %v4135 = vpop.f32.mrb[0].mxu0
      %v4136 = vadd.f32 0.0, %v4135
      %v4137 = vpop.f32.mrb[0].mxu0
      %4138 = vmatprep.mubr.f32.mxu0 0.0
      %4139 = vmatmul.mubr.f32.gmra.mrb[0].mxu0 %v3847
      %v4140 = vpop.f32.mrb[0].mxu0
      %v4141 = vadd.f32 0.0, %v4140
      %v4142 = vpop.f32.mrb[0].mxu0
      %4143 = vmatprep.mubr.f32.mxu0 0.0
      %4144 = vmatmul.mubr.f32.gmra.mrb[0].mxu0 %v3848
      %v4145 = vpop.f32.mrb[0].mxu0
      %v4146 = vadd.f32 0.0, %v4145
      %v4147 = vpop.f32.mrb[0].mxu0
      %4148 = vmatprep.mubr.f32.mxu0 0.0
      %4149 = vmatmul.mubr.f32.gmra.mrb[0].mxu0 %v3849
      %v4150 = vpop.f32.mrb[0].mxu0
      %v4151 = vadd.f32 0.0, %v4150
      %v4152 = vpop.f32.mrb[0].mxu0
      %4153 = vmatprep.mubr.f32.mxu0 0.0
      %4154 = vmatmul.mubr.f32.gmra.mrb[0].mxu0 %v3850
      %v4155 = vpop.f32.mrb[0].mxu0
      %v4156 = vadd.f32 0.0, %v4155
      %v4157 = vpop.f32.mrb[0].mxu0
      %4158 = vmatprep.mubr.f32.mxu0 0.0
      %4159 = vmatmul.mubr.f32.gmra.mrb[0].mxu0 %v3851
      %v4160 = vpop.f32.mrb[0].mxu0
      %v4161 = vadd.f32 0.0, %v4160
      %v4162 = vpop.f32.mrb[0].mxu0
      %4163 = vmatprep.mubr.f32.mxu0 0.0
      %4164 = vmatmul.mubr.f32.gmra.mrb[0].mxu0 %v3852
      %v4165 = vpop.f32.mrb[0].mxu0
      %v4166 = vadd.f32 0.0, %v4165
      %v4167 = vpop.f32.mrb[0].mxu0
      %4168 = vmatprep.mubr.f32.mxu0 0.0
      %4169 = vmatmul.mubr.f32.gmra.mrb[0].mxu0 %v3853
      %v4170 = vpop.f32.mrb[0].mxu0
      %v4171 = vadd.f32 0.0, %v4170
      %v4172 = vpop.f32.mrb[0].mxu0
      %4173 = vmatprep.mubr.f32.mxu0 0.0
      %4174 = vmatmul.mubr.f32.gmra.mrb[0].mxu0 %v3854
      %v4175 = vpop.f32.mrb[0].mxu0
      %v4176 = vadd.f32 0.0, %v4175
      %v4177 = vpop.f32.mrb[0].mxu0
      %4178 = vmatprep.mubr.f32.mxu0 0.0
      %4179 = vmatmul.mubr.f32.gmra.mrb[0].mxu0 %v3855
      %v4180 = vpop.f32.mrb[0].mxu0
      %v4181 = vadd.f32 0.0, %v4180
      %v4182 = vpop.f32.mrb[0].mxu0
      %4183 = vdwg.mxu0
      %v4184 = vadd.f32 %v3856, %v3981
      %v4185 = vadd.f32 %v3857, %v3986
      %v4186 = vadd.f32 %v3858, %v3991
      %v4187 = vadd.f32 %v3859, %v3996
      %v4188 = vadd.f32 %v3860, %v4001
      %v4189 = vadd.f32 %v3861, %v4006
      %v4190 = vadd.f32 %v3862, %v4011
      %v4191 = vadd.f32 %v3863, %v4016
      %v4192 = vadd.f32 %v3864, %v4021
      %v4193 = vadd.f32 %v3865, %v4026
      %v4194 = vadd.f32 %v3866, %v4031
      %v4195 = vadd.f32 %v3867, %v4036
      %v4196 = vadd.f32 %v3868, %v4041
      %v4197 = vadd.f32 %v3869, %v4046
      %v4198 = vadd.f32 %v3870, %v4051
      %v4199 = vadd.f32 %v3871, %v4056
      %v4200 = vadd.f32 %v3872, %v4061
      %v4201 = vadd.f32 %v3873, %v4066
      %v4202 = vadd.f32 %v3874, %v4071
      %v4203 = vadd.f32 %v3875, %v4076
      %v4204 = vadd.f32 %v3876, %v4081
      %v4205 = vadd.f32 %v3877, %v4086
      %v4206 = vadd.f32 %v3878, %v4091
      %v4207 = vadd.f32 %v3879, %v4096
      %v4208 = vadd.f32 %v3880, %v4101
      %v4209 = vadd.f32 %v3881, %v4106
      %v4210 = vadd.f32 %v3882, %v4111
      %v4211 = vadd.f32 %v3883, %v4116
      %v4212 = vadd.f32 %v3884, %v4121
      %v4213 = vadd.f32 %v3885, %v4126
      %v4214 = vadd.f32 %v3886, %v4131
      %v4215 = vadd.f32 %v3887, %v4136
      %v4216 = vadd.f32 %v3888, %v4141
      %v4217 = vadd.f32 %v3889, %v4146
      %v4218 = vadd.f32 %v3890, %v4151
      %v4219 = vadd.f32 %v3891, %v4156
      %v4220 = vadd.f32 %v3892, %v4161
      %v4221 = vadd.f32 %v3893, %v4166
      %v4222 = vadd.f32 %v3894, %v4171
      %v4223 = vadd.f32 %v3895, %v4176
      %v4224 = vadd.f32 %v3896, %v4181
      %4225 = vst [vmem:[#allocation3] sm:$0xff] %v4184
      %4226 = vst [vmem:[#allocation3 + $0x8] sm:$0xff] %v4185
      %4227 = vst [vmem:[#allocation3 + $0x10] sm:$0xff] %v4186
      %4228 = vst [vmem:[#allocation3 + $0x18] sm:$0xff] %v4187
      %4229 = vst [vmem:[#allocation3 + $0x20] sm:$0xff] %v4188
      %4230 = vst [vmem:[#allocation3 + $0x28] sm:$0xff] %v4189
      %4231 = vst [vmem:[#allocation3 + $0x30] sm:$0xff] %v4190
      %4232 = vst [vmem:[#allocation3 + $0x38] sm:$0xff] %v4191
      %4233 = vst [vmem:[#allocation3 + $0x40] sm:$0xff] %v4192
      %4234 = vst [vmem:[#allocation3 + $0x48] sm:$0xff] %v4193
      %4235 = vst [vmem:[#allocation3 + $0x50] sm:$0xff] %v4194
      %4236 = vst [vmem:[#allocation3 + $0x58] sm:$0xff] %v4195
      %4237 = vst [vmem:[#allocation3 + $0x60] sm:$0xff] %v4196
      %4238 = vst [vmem:[#allocation3 + $0x68] sm:$0xff] %v4197
      %4239 = vst [vmem:[#allocation3 + $0x70] sm:$0xff] %v4198
      %4240 = vst [vmem:[#allocation3 + $0x78] sm:$0xff] %v4199
      %4241 = vst [vmem:[#allocation3 + $0x80] sm:$0xff] %v4200
      %4242 = vst [vmem:[#allocation3 + $0x88] sm:$0xff] %v4201
      %4243 = vst [vmem:[#allocation3 + $0x90] sm:$0xff] %v4202
      %4244 = vst [vmem:[#allocation3 + $0x98] sm:$0xff] %v4203
      %4245 = vst [vmem:[#allocation3 + $0xa0] sm:$0xff] %v4204
      %4246 = vst [vmem:[#allocation3 + $0xa8] sm:$0xff] %v4205
      %4247 = vst [vmem:[#allocation3 + $0xb0] sm:$0xff] %v4206
      %4248 = vst [vmem:[#allocation3 + $0xb8] sm:$0xff] %v4207
      %4249 = vst [vmem:[#allocation3 + $0xc0] sm:$0xff] %v4208
      %4250 = vst [vmem:[#allocation3 + $0xc8] sm:$0xff] %v4209
      %4251 = vst [vmem:[#allocation3 + $0xd0] sm:$0xff] %v4210
      %4252 = vst [vmem:[#allocation3 + $0xd8] sm:$0xff] %v4211
      %4253 = vst [vmem:[#allocation3 + $0xe0] sm:$0xff] %v4212
      %4254 = vst [vmem:[#allocation3 + $0xe8] sm:$0xff] %v4213
      %4255 = vst [vmem:[#allocation3 + $0xf0] sm:$0xff] %v4214
      %4256 = vst [vmem:[#allocation3 + $0xf8] sm:$0xff] %v4215
      %4257 = vst [vmem:[#allocation3 + $0x100] sm:$0xff] %v4216
      %4258 = vst [vmem:[#allocation3 + $0x108] sm:$0xff] %v4217
      %4259 = vst [vmem:[#allocation3 + $0x110] sm:$0xff] %v4218
      %4260 = vst [vmem:[#allocation3 + $0x118] sm:$0xff] %v4219
      %4261 = vst [vmem:[#allocation3 + $0x120] sm:$0xff] %v4220
      %4262 = vst [vmem:[#allocation3 + $0x128] sm:$0xff] %v4221
      %4263 = vst [vmem:[#allocation3 + $0x130] sm:$0xff] %v4222
      %4264 = vst [vmem:[#allocation3 + $0x138] sm:$0xff] %v4223
      %4265 = vst [vmem:[#allocation3 + $0x140] sm:$0xff] %v4224
      %v4266 = vld [vmem:[#allocation2 + $0x2a] sm:$0xff]
      %v4267 = vld [vmem:[#allocation2 + $0x32] sm:$0xff]
      %v4268 = vld [vmem:[#allocation2 + $0x3a] sm:$0xff]
      %v4269 = vld [vmem:[#allocation2 + $0x42] sm:$0xff]
      %v4270 = vld [vmem:[#allocation2 + $0x4a] sm:$0xff]
      %v4271 = vld [vmem:[#allocation2 + $0x52] sm:$0xff]
      %v4272 = vld [vmem:[#allocation2 + $0x5a] sm:$0xff]
      %v4273 = vld [vmem:[#allocation2 + $0x62] sm:$0xff]
      %v4274 = vld [vmem:[#allocation2 + $0x6a] sm:$0xff]
      %v4275 = vld [vmem:[#allocation2 + $0x72] sm:$0xff]
      %v4276 = vld [vmem:[#allocation2 + $0x7a] sm:$0xff]
      %v4277 = vld [vmem:[#allocation2 + $0x82] sm:$0xff]
      %v4278 = vld [vmem:[#allocation2 + $0x8a] sm:$0xff]
      %v4279 = vld [vmem:[#allocation2 + $0x92] sm:$0xff]
      %v4280 = vld [vmem:[#allocation2 + $0x9a] sm:$0xff]
      %v4281 = vld [vmem:[#allocation2 + $0xa2] sm:$0xff]
      %v4282 = vld [vmem:[#allocation2 + $0xaa] sm:$0xff]
      %v4283 = vld [vmem:[#allocation2 + $0xb2] sm:$0xff]
      %v4284 = vld [vmem:[#allocation2 + $0xba] sm:$0xff]
      %v4285 = vld [vmem:[#allocation2 + $0xc2] sm:$0xff]
      %v4286 = vld [vmem:[#allocation2 + $0xca] sm:$0xff]
      %v4287 = vld [vmem:[#allocation2 + $0xd2] sm:$0xff]
      %v4288 = vld [vmem:[#allocation2 + $0xda] sm:$0xff]
      %v4289 = vld [vmem:[#allocation2 + $0xe2] sm:$0xff]
      %v4290 = vld [vmem:[#allocation2 + $0xea] sm:$0xff]
      %v4291 = vld [vmem:[#allocation2 + $0xf2] sm:$0xff]
      %v4292 = vld [vmem:[#allocation2 + $0xfa] sm:$0xff]
      %v4293 = vld [vmem:[#allocation2 + $0x102] sm:$0xff]
      %v4294 = vld [vmem:[#allocation2 + $0x10a] sm:$0xff]
      %v4295 = vld [vmem:[#allocation2 + $0x112] sm:$0xff]
      %v4296 = vld [vmem:[#allocation2 + $0x11a] sm:$0xff]
      %v4297 = vld [vmem:[#allocation2 + $0x122] sm:$0xff]
      %v4298 = vld [vmem:[#allocation2 + $0x12a] sm:$0xff]
      %v4299 = vld [vmem:[#allocation2 + $0x132] sm:$0xff]
      %v4300 = vld [vmem:[#allocation2 + $0x13a] sm:$0xff]
      %v4301 = vld [vmem:[#allocation2 + $0x142] sm:$0xff]
      %v4302 = vld [vmem:[#allocation2 + $0x14a] sm:$0xff]
      %v4303 = vld [vmem:[#allocation2 + $0x152] sm:$0xff]
      %v4304 = vld [vmem:[#allocation2 + $0x15a] sm:$0xff]
      %v4305 = vld [vmem:[#allocation2 + $0x162] sm:$0xff]
      %v4306 = vld [vmem:[#allocation2 + $0x16a] sm:$0xff]
      %v4307 = vld [vmem:[#allocation3] sm:$0xff]
      %v4308 = vld [vmem:[#allocation3 + $0x8] sm:$0xff]
      %v4309 = vld [vmem:[#allocation3 + $0x10] sm:$0xff]
      %v4310 = vld [vmem:[#allocation3 + $0x18] sm:$0xff]
      %v4311 = vld [vmem:[#allocation3 + $0x20] sm:$0xff]
      %v4312 = vld [vmem:[#allocation3 + $0x28] sm:$0xff]
      %v4313 = vld [vmem:[#allocation3 + $0x30] sm:$0xff]
      %v4314 = vld [vmem:[#allocation3 + $0x38] sm:$0xff]
      %v4315 = vld [vmem:[#allocation3 + $0x40] sm:$0xff]
      %v4316 = vld [vmem:[#allocation3 + $0x48] sm:$0xff]
      %v4317 = vld [vmem:[#allocation3 + $0x50] sm:$0xff]
      %v4318 = vld [vmem:[#allocation3 + $0x58] sm:$0xff]
      %v4319 = vld [vmem:[#allocation3 + $0x60] sm:$0xff]
      %v4320 = vld [vmem:[#allocation3 + $0x68] sm:$0xff]
      %v4321 = vld [vmem:[#allocation3 + $0x70] sm:$0xff]
      %v4322 = vld [vmem:[#allocation3 + $0x78] sm:$0xff]
      %v4323 = vld [vmem:[#allocation3 + $0x80] sm:$0xff]
      %v4324 = vld [vmem:[#allocation3 + $0x88] sm:$0xff]
      %v4325 = vld [vmem:[#allocation3 + $0x90] sm:$0xff]
      %v4326 = vld [vmem:[#allocation3 + $0x98] sm:$0xff]
      %v4327 = vld [vmem:[#allocation3 + $0xa0] sm:$0xff]
      %v4328 = vld [vmem:[#allocation3 + $0xa8] sm:$0xff]
      %v4329 = vld [vmem:[#allocation3 + $0xb0] sm:$0xff]
      %v4330 = vld [vmem:[#allocation3 + $0xb8] sm:$0xff]
      %v4331 = vld [vmem:[#allocation3 + $0xc0] sm:$0xff]
      %v4332 = vld [vmem:[#allocation3 + $0xc8] sm:$0xff]
      %v4333 = vld [vmem:[#allocation3 + $0xd0] sm:$0xff]
      %v4334 = vld [vmem:[#allocation3 + $0xd8] sm:$0xff]
      %v4335 = vld [vmem:[#allocation3 + $0xe0] sm:$0xff]
      %v4336 = vld [vmem:[#allocation3 + $0xe8] sm:$0xff]
      %v4337 = vld [vmem:[#allocation3 + $0xf0] sm:$0xff]
      %v4338 = vld [vmem:[#allocation3 + $0xf8] sm:$0xff]
      %v4339 = vld [vmem:[#allocation3 + $0x100] sm:$0xff]
      %v4340 = vld [vmem:[#allocation3 + $0x108] sm:$0xff]
      %v4341 = vld [vmem:[#allocation3 + $0x110] sm:$0xff]
      %v4342 = vld [vmem:[#allocation3 + $0x118] sm:$0xff]
      %v4343 = vld [vmem:[#allocation3 + $0x120] sm:$0xff]
      %v4344 = vld [vmem:[#allocation3 + $0x128] sm:$0xff]
      %v4345 = vld [vmem:[#allocation3 + $0x130] sm:$0xff]
      %v4346 = vld [vmem:[#allocation3 + $0x138] sm:$0xff]
      %v4347 = vld [vmem:[#allocation3 + $0x140] sm:$0xff]
      %s4348 = scalar_lea.vmem %s4, 896
      %v4349 = vld [vmem:[%s4348] sm:$0xff]
      %v4350 = vld [vmem:[%s4348 + $0x8] sm:$0xff]
      %v4351 = vld [vmem:[%s4348 + $0x10] sm:$0xff]
      %v4352 = vld [vmem:[%s4348 + $0x18] sm:$0xff]
      %v4353 = vld [vmem:[%s4348 + $0x20] sm:$0xff]
      %v4354 = vld [vmem:[%s4348 + $0x28] sm:$0xff]
      %v4355 = vld [vmem:[%s4348 + $0x30] sm:$0xff]
      %v4356 = vld [vmem:[%s4348 + $0x38] sm:$0xff]
      %v4357 = vld [vmem:[%s4348 + $0x40] sm:$0xff]
      %v4358 = vld [vmem:[%s4348 + $0x48] sm:$0xff]
      %v4359 = vld [vmem:[%s4348 + $0x50] sm:$0xff]
      %v4360 = vld [vmem:[%s4348 + $0x58] sm:$0xff]
      %v4361 = vld [vmem:[%s4348 + $0x60] sm:$0xff]
      %v4362 = vld [vmem:[%s4348 + $0x68] sm:$0xff]
      %v4363 = vld [vmem:[%s4348 + $0x70] sm:$0xff]
      %v4364 = vld [vmem:[%s4348 + $0x78] sm:$0xff]
      %4365 = vmatprep.subr.mxu0 0.0
      %4366 = vmatpush1.msra.mxu0 %v4349
      %4367 = vmatprep.subr.mxu0 0.0
      %4368 = vmatpush1.msra.mxu0 %v4350
      %4369 = vmatprep.subr.mxu0 0.0
      %4370 = vmatpush1.msra.mxu0 %v4351
      %4371 = vmatprep.subr.mxu0 0.0
      %4372 = vmatpush1.msra.mxu0 %v4352
      %4373 = vmatprep.subr.mxu0 0.0
      %4374 = vmatpush1.msra.mxu0 %v4353
      %4375 = vmatprep.subr.mxu0 0.0
      %4376 = vmatpush1.msra.mxu0 %v4354
      %4377 = vmatprep.subr.mxu0 0.0
      %4378 = vmatpush1.msra.mxu0 %v4355
      %4379 = vmatprep.subr.mxu0 0.0
      %4380 = vmatpush1.msra.mxu0 %v4356
      %4381 = vmatprep.subr.mxu0 0.0
      %4382 = vmatpush1.msra.mxu0 %v4357
      %4383 = vmatprep.subr.mxu0 0.0
      %4384 = vmatpush1.msra.mxu0 %v4358
      %4385 = vmatprep.subr.mxu0 0.0
      %4386 = vmatpush1.msra.mxu0 %v4359
      %4387 = vmatprep.subr.mxu0 0.0
      %4388 = vmatpush1.msra.mxu0 %v4360
      %4389 = vmatprep.subr.mxu0 0.0
      %4390 = vmatpush1.msra.mxu0 %v4361
      %4391 = vmatprep.subr.mxu0 0.0
      %4392 = vmatpush1.msra.mxu0 %v4362
      %4393 = vmatprep.subr.mxu0 0.0
      %4394 = vmatpush1.msra.mxu0 %v4363
      %4395 = vmatprep.subr.mxu0 0.0
      %4396 = vmatpush1.msra.mxu0 %v4364
      %4397 = vmatprep.subr.mxu0 0.0
      %4398 = vmatpush1.msra.mxu0 0.0
      %4399 = vmatprep.subr.mxu0 0.0
      %4400 = vmatpush1.msra.mxu0 0.0
      %4401 = vmatprep.subr.mxu0 0.0
      %4402 = vmatpush1.msra.mxu0 0.0
      %4403 = vmatprep.subr.mxu0 0.0
      %4404 = vmatpush1.msra.mxu0 0.0
      %4405 = vmatprep.subr.mxu0 0.0
      %4406 = vmatpush1.msra.mxu0 0.0
      %4407 = vmatprep.subr.mxu0 0.0
      %4408 = vmatpush1.msra.mxu0 0.0
      %4409 = vmatprep.subr.mxu0 0.0
      %4410 = vmatpush1.msra.mxu0 0.0
      %4411 = vmatprep.subr.mxu0 0.0
      %4412 = vmatpush1.msra.mxu0 0.0
      %4413 = vmatprep.subr.mxu0 0.0
      %4414 = vmatpush1.msra.mxu0 0.0
      %4415 = vmatprep.subr.mxu0 0.0
      %4416 = vmatpush1.msra.mxu0 0.0
      %4417 = vmatprep.subr.mxu0 0.0
      %4418 = vmatpush1.msra.mxu0 0.0
      %4419 = vmatprep.subr.mxu0 0.0
      %4420 = vmatpush1.msra.mxu0 0.0
      %4421 = vmatprep.subr.mxu0 0.0
      %4422 = vmatpush1.msra.mxu0 0.0
      %4423 = vmatprep.subr.mxu0 0.0
      %4424 = vmatpush1.msra.mxu0 0.0
      %4425 = vmatprep.subr.mxu0 0.0
      %4426 = vmatpush1.msra.mxu0 0.0
      %4427 = vmatprep.subr.mxu0 0.0
      %4428 = vmatpush1.msra.mxu0 0.0
      %4429 = vmatprep.mubr.f32.mxu0 0.0
      %4430 = vmatmul.mubr.f32.gmra.mrb[0].mxu0 %v4266
      %v4431 = vpop.f32.mrb[0].mxu0
      %v4432 = vadd.f32 0.0, %v4431
      %v4433 = vpop.f32.mrb[0].mxu0
      %4434 = vmatprep.mubr.f32.mxu0 0.0
      %4435 = vmatmul.mubr.f32.gmra.mrb[0].mxu0 %v4267
      %v4436 = vpop.f32.mrb[0].mxu0
      %v4437 = vadd.f32 0.0, %v4436
      %v4438 = vpop.f32.mrb[0].mxu0
      %4439 = vmatprep.mubr.f32.mxu0 0.0
      %4440 = vmatmul.mubr.f32.gmra.mrb[0].mxu0 %v4268
      %v4441 = vpop.f32.mrb[0].mxu0
      %v4442 = vadd.f32 0.0, %v4441
      %v4443 = vpop.f32.mrb[0].mxu0
      %4444 = vmatprep.mubr.f32.mxu0 0.0
      %4445 = vmatmul.mubr.f32.gmra.mrb[0].mxu0 %v4269
      %v4446 = vpop.f32.mrb[0].mxu0
      %v4447 = vadd.f32 0.0, %v4446
      %v4448 = vpop.f32.mrb[0].mxu0
      %4449 = vmatprep.mubr.f32.mxu0 0.0
      %4450 = vmatmul.mubr.f32.gmra.mrb[0].mxu0 %v4270
      %v4451 = vpop.f32.mrb[0].mxu0
      %v4452 = vadd.f32 0.0, %v4451
      %v4453 = vpop.f32.mrb[0].mxu0
      %4454 = vmatprep.mubr.f32.mxu0 0.0
      %4455 = vmatmul.mubr.f32.gmra.mrb[0].mxu0 %v4271
      %v4456 = vpop.f32.mrb[0].mxu0
      %v4457 = vadd.f32 0.0, %v4456
      %v4458 = vpop.f32.mrb[0].mxu0
      %4459 = vmatprep.mubr.f32.mxu0 0.0
      %4460 = vmatmul.mubr.f32.gmra.mrb[0].mxu0 %v4272
      %v4461 = vpop.f32.mrb[0].mxu0
      %v4462 = vadd.f32 0.0, %v4461
      %v4463 = vpop.f32.mrb[0].mxu0
      %4464 = vmatprep.mubr.f32.mxu0 0.0
      %4465 = vmatmul.mubr.f32.gmra.mrb[0].mxu0 %v4273
      %v4466 = vpop.f32.mrb[0].mxu0
      %v4467 = vadd.f32 0.0, %v4466
      %v4468 = vpop.f32.mrb[0].mxu0
      %4469 = vmatprep.mubr.f32.mxu0 0.0
      %4470 = vmatmul.mubr.f32.gmra.mrb[0].mxu0 %v4274
      %v4471 = vpop.f32.mrb[0].mxu0
      %v4472 = vadd.f32 0.0, %v4471
      %v4473 = vpop.f32.mrb[0].mxu0
      %4474 = vmatprep.mubr.f32.mxu0 0.0
      %4475 = vmatmul.mubr.f32.gmra.mrb[0].mxu0 %v4275
      %v4476 = vpop.f32.mrb[0].mxu0
      %v4477 = vadd.f32 0.0, %v4476
      %v4478 = vpop.f32.mrb[0].mxu0
      %4479 = vmatprep.mubr.f32.mxu0 0.0
      %4480 = vmatmul.mubr.f32.gmra.mrb[0].mxu0 %v4276
      %v4481 = vpop.f32.mrb[0].mxu0
      %v4482 = vadd.f32 0.0, %v4481
      %v4483 = vpop.f32.mrb[0].mxu0
      %4484 = vmatprep.mubr.f32.mxu0 0.0
      %4485 = vmatmul.mubr.f32.gmra.mrb[0].mxu0 %v4277
      %v4486 = vpop.f32.mrb[0].mxu0
      %v4487 = vadd.f32 0.0, %v4486
      %v4488 = vpop.f32.mrb[0].mxu0
      %4489 = vmatprep.mubr.f32.mxu0 0.0
      %4490 = vmatmul.mubr.f32.gmra.mrb[0].mxu0 %v4278
      %v4491 = vpop.f32.mrb[0].mxu0
      %v4492 = vadd.f32 0.0, %v4491
      %v4493 = vpop.f32.mrb[0].mxu0
      %4494 = vmatprep.mubr.f32.mxu0 0.0
      %4495 = vmatmul.mubr.f32.gmra.mrb[0].mxu0 %v4279
      %v4496 = vpop.f32.mrb[0].mxu0
      %v4497 = vadd.f32 0.0, %v4496
      %v4498 = vpop.f32.mrb[0].mxu0
      %4499 = vmatprep.mubr.f32.mxu0 0.0
      %4500 = vmatmul.mubr.f32.gmra.mrb[0].mxu0 %v4280
      %v4501 = vpop.f32.mrb[0].mxu0
      %v4502 = vadd.f32 0.0, %v4501
      %v4503 = vpop.f32.mrb[0].mxu0
      %4504 = vmatprep.mubr.f32.mxu0 0.0
      %4505 = vmatmul.mubr.f32.gmra.mrb[0].mxu0 %v4281
      %v4506 = vpop.f32.mrb[0].mxu0
      %v4507 = vadd.f32 0.0, %v4506
      %v4508 = vpop.f32.mrb[0].mxu0
      %4509 = vmatprep.mubr.f32.mxu0 0.0
      %4510 = vmatmul.mubr.f32.gmra.mrb[0].mxu0 %v4282
      %v4511 = vpop.f32.mrb[0].mxu0
      %v4512 = vadd.f32 0.0, %v4511
      %v4513 = vpop.f32.mrb[0].mxu0
      %4514 = vmatprep.mubr.f32.mxu0 0.0
      %4515 = vmatmul.mubr.f32.gmra.mrb[0].mxu0 %v4283
      %v4516 = vpop.f32.mrb[0].mxu0
      %v4517 = vadd.f32 0.0, %v4516
      %v4518 = vpop.f32.mrb[0].mxu0
      %4519 = vmatprep.mubr.f32.mxu0 0.0
      %4520 = vmatmul.mubr.f32.gmra.mrb[0].mxu0 %v4284
      %v4521 = vpop.f32.mrb[0].mxu0
      %v4522 = vadd.f32 0.0, %v4521
      %v4523 = vpop.f32.mrb[0].mxu0
      %4524 = vmatprep.mubr.f32.mxu0 0.0
      %4525 = vmatmul.mubr.f32.gmra.mrb[0].mxu0 %v4285
      %v4526 = vpop.f32.mrb[0].mxu0
      %v4527 = vadd.f32 0.0, %v4526
      %v4528 = vpop.f32.mrb[0].mxu0
      %4529 = vmatprep.mubr.f32.mxu0 0.0
      %4530 = vmatmul.mubr.f32.gmra.mrb[0].mxu0 %v4286
      %v4531 = vpop.f32.mrb[0].mxu0
      %v4532 = vadd.f32 0.0, %v4531
      %v4533 = vpop.f32.mrb[0].mxu0
      %4534 = vmatprep.mubr.f32.mxu0 0.0
      %4535 = vmatmul.mubr.f32.gmra.mrb[0].mxu0 %v4287
      %v4536 = vpop.f32.mrb[0].mxu0
      %v4537 = vadd.f32 0.0, %v4536
      %v4538 = vpop.f32.mrb[0].mxu0
      %4539 = vmatprep.mubr.f32.mxu0 0.0
      %4540 = vmatmul.mubr.f32.gmra.mrb[0].mxu0 %v4288
      %v4541 = vpop.f32.mrb[0].mxu0
      %v4542 = vadd.f32 0.0, %v4541
      %v4543 = vpop.f32.mrb[0].mxu0
      %4544 = vmatprep.mubr.f32.mxu0 0.0
      %4545 = vmatmul.mubr.f32.gmra.mrb[0].mxu0 %v4289
      %v4546 = vpop.f32.mrb[0].mxu0
      %v4547 = vadd.f32 0.0, %v4546
      %v4548 = vpop.f32.mrb[0].mxu0
      %4549 = vmatprep.mubr.f32.mxu0 0.0
      %4550 = vmatmul.mubr.f32.gmra.mrb[0].mxu0 %v4290
      %v4551 = vpop.f32.mrb[0].mxu0
      %v4552 = vadd.f32 0.0, %v4551
      %v4553 = vpop.f32.mrb[0].mxu0
      %4554 = vmatprep.mubr.f32.mxu0 0.0
      %4555 = vmatmul.mubr.f32.gmra.mrb[0].mxu0 %v4291
      %v4556 = vpop.f32.mrb[0].mxu0
      %v4557 = vadd.f32 0.0, %v4556
      %v4558 = vpop.f32.mrb[0].mxu0
      %4559 = vmatprep.mubr.f32.mxu0 0.0
      %4560 = vmatmul.mubr.f32.gmra.mrb[0].mxu0 %v4292
      %v4561 = vpop.f32.mrb[0].mxu0
      %v4562 = vadd.f32 0.0, %v4561
      %v4563 = vpop.f32.mrb[0].mxu0
      %4564 = vmatprep.mubr.f32.mxu0 0.0
      %4565 = vmatmul.mubr.f32.gmra.mrb[0].mxu0 %v4293
      %v4566 = vpop.f32.mrb[0].mxu0
      %v4567 = vadd.f32 0.0, %v4566
      %v4568 = vpop.f32.mrb[0].mxu0
      %4569 = vmatprep.mubr.f32.mxu0 0.0
      %4570 = vmatmul.mubr.f32.gmra.mrb[0].mxu0 %v4294
      %v4571 = vpop.f32.mrb[0].mxu0
      %v4572 = vadd.f32 0.0, %v4571
      %v4573 = vpop.f32.mrb[0].mxu0
      %4574 = vmatprep.mubr.f32.mxu0 0.0
      %4575 = vmatmul.mubr.f32.gmra.mrb[0].mxu0 %v4295
      %v4576 = vpop.f32.mrb[0].mxu0
      %v4577 = vadd.f32 0.0, %v4576
      %v4578 = vpop.f32.mrb[0].mxu0
      %4579 = vmatprep.mubr.f32.mxu0 0.0
      %4580 = vmatmul.mubr.f32.gmra.mrb[0].mxu0 %v4296
      %v4581 = vpop.f32.mrb[0].mxu0
      %v4582 = vadd.f32 0.0, %v4581
      %v4583 = vpop.f32.mrb[0].mxu0
      %4584 = vmatprep.mubr.f32.mxu0 0.0
      %4585 = vmatmul.mubr.f32.gmra.mrb[0].mxu0 %v4297
      %v4586 = vpop.f32.mrb[0].mxu0
      %v4587 = vadd.f32 0.0, %v4586
      %v4588 = vpop.f32.mrb[0].mxu0
      %4589 = vmatprep.mubr.f32.mxu0 0.0
      %4590 = vmatmul.mubr.f32.gmra.mrb[0].mxu0 %v4298
      %v4591 = vpop.f32.mrb[0].mxu0
      %v4592 = vadd.f32 0.0, %v4591
      %v4593 = vpop.f32.mrb[0].mxu0
      %4594 = vmatprep.mubr.f32.mxu0 0.0
      %4595 = vmatmul.mubr.f32.gmra.mrb[0].mxu0 %v4299
      %v4596 = vpop.f32.mrb[0].mxu0
      %v4597 = vadd.f32 0.0, %v4596
      %v4598 = vpop.f32.mrb[0].mxu0
      %4599 = vmatprep.mubr.f32.mxu0 0.0
      %4600 = vmatmul.mubr.f32.gmra.mrb[0].mxu0 %v4300
      %v4601 = vpop.f32.mrb[0].mxu0
      %v4602 = vadd.f32 0.0, %v4601
      %v4603 = vpop.f32.mrb[0].mxu0
      %4604 = vmatprep.mubr.f32.mxu0 0.0
      %4605 = vmatmul.mubr.f32.gmra.mrb[0].mxu0 %v4301
      %v4606 = vpop.f32.mrb[0].mxu0
      %v4607 = vadd.f32 0.0, %v4606
      %v4608 = vpop.f32.mrb[0].mxu0
      %4609 = vmatprep.mubr.f32.mxu0 0.0
      %4610 = vmatmul.mubr.f32.gmra.mrb[0].mxu0 %v4302
      %v4611 = vpop.f32.mrb[0].mxu0
      %v4612 = vadd.f32 0.0, %v4611
      %v4613 = vpop.f32.mrb[0].mxu0
      %4614 = vmatprep.mubr.f32.mxu0 0.0
      %4615 = vmatmul.mubr.f32.gmra.mrb[0].mxu0 %v4303
      %v4616 = vpop.f32.mrb[0].mxu0
      %v4617 = vadd.f32 0.0, %v4616
      %v4618 = vpop.f32.mrb[0].mxu0
      %4619 = vmatprep.mubr.f32.mxu0 0.0
      %4620 = vmatmul.mubr.f32.gmra.mrb[0].mxu0 %v4304
      %v4621 = vpop.f32.mrb[0].mxu0
      %v4622 = vadd.f32 0.0, %v4621
      %v4623 = vpop.f32.mrb[0].mxu0
      %4624 = vmatprep.mubr.f32.mxu0 0.0
      %4625 = vmatmul.mubr.f32.gmra.mrb[0].mxu0 %v4305
      %v4626 = vpop.f32.mrb[0].mxu0
      %v4627 = vadd.f32 0.0, %v4626
      %v4628 = vpop.f32.mrb[0].mxu0
      %4629 = vmatprep.mubr.f32.mxu0 0.0
      %4630 = vmatmul.mubr.f32.gmra.mrb[0].mxu0 %v4306
      %v4631 = vpop.f32.mrb[0].mxu0
      %v4632 = vadd.f32 0.0, %v4631
      %v4633 = vpop.f32.mrb[0].mxu0
      %4634 = vdwg.mxu0
      %v4635 = vadd.f32 %v4307, %v4432
      %v4636 = vadd.f32 %v4308, %v4437
      %v4637 = vadd.f32 %v4309, %v4442
      %v4638 = vadd.f32 %v4310, %v4447
      %v4639 = vadd.f32 %v4311, %v4452
      %v4640 = vadd.f32 %v4312, %v4457
      %v4641 = vadd.f32 %v4313, %v4462
      %v4642 = vadd.f32 %v4314, %v4467
      %v4643 = vadd.f32 %v4315, %v4472
      %v4644 = vadd.f32 %v4316, %v4477
      %v4645 = vadd.f32 %v4317, %v4482
      %v4646 = vadd.f32 %v4318, %v4487
      %v4647 = vadd.f32 %v4319, %v4492
      %v4648 = vadd.f32 %v4320, %v4497
      %v4649 = vadd.f32 %v4321, %v4502
      %v4650 = vadd.f32 %v4322, %v4507
      %v4651 = vadd.f32 %v4323, %v4512
      %v4652 = vadd.f32 %v4324, %v4517
      %v4653 = vadd.f32 %v4325, %v4522
      %v4654 = vadd.f32 %v4326, %v4527
      %v4655 = vadd.f32 %v4327, %v4532
      %v4656 = vadd.f32 %v4328, %v4537
      %v4657 = vadd.f32 %v4329, %v4542
      %v4658 = vadd.f32 %v4330, %v4547
      %v4659 = vadd.f32 %v4331, %v4552
      %v4660 = vadd.f32 %v4332, %v4557
      %v4661 = vadd.f32 %v4333, %v4562
      %v4662 = vadd.f32 %v4334, %v4567
      %v4663 = vadd.f32 %v4335, %v4572
      %v4664 = vadd.f32 %v4336, %v4577
      %v4665 = vadd.f32 %v4337, %v4582
      %v4666 = vadd.f32 %v4338, %v4587
      %v4667 = vadd.f32 %v4339, %v4592
      %v4668 = vadd.f32 %v4340, %v4597
      %v4669 = vadd.f32 %v4341, %v4602
      %v4670 = vadd.f32 %v4342, %v4607
      %v4671 = vadd.f32 %v4343, %v4612
      %v4672 = vadd.f32 %v4344, %v4617
      %v4673 = vadd.f32 %v4345, %v4622
      %v4674 = vadd.f32 %v4346, %v4627
      %v4675 = vadd.f32 %v4347, %v4632
      %4676 = vst [vmem:[#allocation3] sm:$0xff] %v4635
      %4677 = vst [vmem:[#allocation3 + $0x8] sm:$0xff] %v4636
      %4678 = vst [vmem:[#allocation3 + $0x10] sm:$0xff] %v4637
      %4679 = vst [vmem:[#allocation3 + $0x18] sm:$0xff] %v4638
      %4680 = vst [vmem:[#allocation3 + $0x20] sm:$0xff] %v4639
      %4681 = vst [vmem:[#allocation3 + $0x28] sm:$0xff] %v4640
      %4682 = vst [vmem:[#allocation3 + $0x30] sm:$0xff] %v4641
      %4683 = vst [vmem:[#allocation3 + $0x38] sm:$0xff] %v4642
      %4684 = vst [vmem:[#allocation3 + $0x40] sm:$0xff] %v4643
      %4685 = vst [vmem:[#allocation3 + $0x48] sm:$0xff] %v4644
      %4686 = vst [vmem:[#allocation3 + $0x50] sm:$0xff] %v4645
      %4687 = vst [vmem:[#allocation3 + $0x58] sm:$0xff] %v4646
      %4688 = vst [vmem:[#allocation3 + $0x60] sm:$0xff] %v4647
      %4689 = vst [vmem:[#allocation3 + $0x68] sm:$0xff] %v4648
      %4690 = vst [vmem:[#allocation3 + $0x70] sm:$0xff] %v4649
      %4691 = vst [vmem:[#allocation3 + $0x78] sm:$0xff] %v4650
      %4692 = vst [vmem:[#allocation3 + $0x80] sm:$0xff] %v4651
      %4693 = vst [vmem:[#allocation3 + $0x88] sm:$0xff] %v4652
      %4694 = vst [vmem:[#allocation3 + $0x90] sm:$0xff] %v4653
      %4695 = vst [vmem:[#allocation3 + $0x98] sm:$0xff] %v4654
      %4696 = vst [vmem:[#allocation3 + $0xa0] sm:$0xff] %v4655
      %4697 = vst [vmem:[#allocation3 + $0xa8] sm:$0xff] %v4656
      %4698 = vst [vmem:[#allocation3 + $0xb0] sm:$0xff] %v4657
      %4699 = vst [vmem:[#allocation3 + $0xb8] sm:$0xff] %v4658
      %4700 = vst [vmem:[#allocation3 + $0xc0] sm:$0xff] %v4659
      %4701 = vst [vmem:[#allocation3 + $0xc8] sm:$0xff] %v4660
      %4702 = vst [vmem:[#allocation3 + $0xd0] sm:$0xff] %v4661
      %4703 = vst [vmem:[#allocation3 + $0xd8] sm:$0xff] %v4662
      %4704 = vst [vmem:[#allocation3 + $0xe0] sm:$0xff] %v4663
      %4705 = vst [vmem:[#allocation3 + $0xe8] sm:$0xff] %v4664
      %4706 = vst [vmem:[#allocation3 + $0xf0] sm:$0xff] %v4665
      %4707 = vst [vmem:[#allocation3 + $0xf8] sm:$0xff] %v4666
      %4708 = vst [vmem:[#allocation3 + $0x100] sm:$0xff] %v4667
      %4709 = vst [vmem:[#allocation3 + $0x108] sm:$0xff] %v4668
      %4710 = vst [vmem:[#allocation3 + $0x110] sm:$0xff] %v4669
      %4711 = vst [vmem:[#allocation3 + $0x118] sm:$0xff] %v4670
      %4712 = vst [vmem:[#allocation3 + $0x120] sm:$0xff] %v4671
      %4713 = vst [vmem:[#allocation3 + $0x128] sm:$0xff] %v4672
      %4714 = vst [vmem:[#allocation3 + $0x130] sm:$0xff] %v4673
      %4715 = vst [vmem:[#allocation3 + $0x138] sm:$0xff] %v4674
      %4716 = vst [vmem:[#allocation3 + $0x140] sm:$0xff] %v4675
      %v4717 = vld [vmem:[#allocation2 + $0x2b] sm:$0xff]
      %v4718 = vld [vmem:[#allocation2 + $0x33] sm:$0xff]
      %v4719 = vld [vmem:[#allocation2 + $0x3b] sm:$0xff]
      %v4720 = vld [vmem:[#allocation2 + $0x43] sm:$0xff]
      %v4721 = vld [vmem:[#allocation2 + $0x4b] sm:$0xff]
      %v4722 = vld [vmem:[#allocation2 + $0x53] sm:$0xff]
      %v4723 = vld [vmem:[#allocation2 + $0x5b] sm:$0xff]
      %v4724 = vld [vmem:[#allocation2 + $0x63] sm:$0xff]
      %v4725 = vld [vmem:[#allocation2 + $0x6b] sm:$0xff]
      %v4726 = vld [vmem:[#allocation2 + $0x73] sm:$0xff]
      %v4727 = vld [vmem:[#allocation2 + $0x7b] sm:$0xff]
      %v4728 = vld [vmem:[#allocation2 + $0x83] sm:$0xff]
      %v4729 = vld [vmem:[#allocation2 + $0x8b] sm:$0xff]
      %v4730 = vld [vmem:[#allocation2 + $0x93] sm:$0xff]
      %v4731 = vld [vmem:[#allocation2 + $0x9b] sm:$0xff]
      %v4732 = vld [vmem:[#allocation2 + $0xa3] sm:$0xff]
      %v4733 = vld [vmem:[#allocation2 + $0xab] sm:$0xff]
      %v4734 = vld [vmem:[#allocation2 + $0xb3] sm:$0xff]
      %v4735 = vld [vmem:[#allocation2 + $0xbb] sm:$0xff]
      %v4736 = vld [vmem:[#allocation2 + $0xc3] sm:$0xff]
      %v4737 = vld [vmem:[#allocation2 + $0xcb] sm:$0xff]
      %v4738 = vld [vmem:[#allocation2 + $0xd3] sm:$0xff]
      %v4739 = vld [vmem:[#allocation2 + $0xdb] sm:$0xff]
      %v4740 = vld [vmem:[#allocation2 + $0xe3] sm:$0xff]
      %v4741 = vld [vmem:[#allocation2 + $0xeb] sm:$0xff]
      %v4742 = vld [vmem:[#allocation2 + $0xf3] sm:$0xff]
      %v4743 = vld [vmem:[#allocation2 + $0xfb] sm:$0xff]
      %v4744 = vld [vmem:[#allocation2 + $0x103] sm:$0xff]
      %v4745 = vld [vmem:[#allocation2 + $0x10b] sm:$0xff]
      %v4746 = vld [vmem:[#allocation2 + $0x113] sm:$0xff]
      %v4747 = vld [vmem:[#allocation2 + $0x11b] sm:$0xff]
      %v4748 = vld [vmem:[#allocation2 + $0x123] sm:$0xff]
      %v4749 = vld [vmem:[#allocation2 + $0x12b] sm:$0xff]
      %v4750 = vld [vmem:[#allocation2 + $0x133] sm:$0xff]
      %v4751 = vld [vmem:[#allocation2 + $0x13b] sm:$0xff]
      %v4752 = vld [vmem:[#allocation2 + $0x143] sm:$0xff]
      %v4753 = vld [vmem:[#allocation2 + $0x14b] sm:$0xff]
      %v4754 = vld [vmem:[#allocation2 + $0x153] sm:$0xff]
      %v4755 = vld [vmem:[#allocation2 + $0x15b] sm:$0xff]
      %v4756 = vld [vmem:[#allocation2 + $0x163] sm:$0xff]
      %v4757 = vld [vmem:[#allocation2 + $0x16b] sm:$0xff]
      %v4758 = vld [vmem:[#allocation3] sm:$0xff]
      %v4759 = vld [vmem:[#allocation3 + $0x8] sm:$0xff]
      %v4760 = vld [vmem:[#allocation3 + $0x10] sm:$0xff]
      %v4761 = vld [vmem:[#allocation3 + $0x18] sm:$0xff]
      %v4762 = vld [vmem:[#allocation3 + $0x20] sm:$0xff]
      %v4763 = vld [vmem:[#allocation3 + $0x28] sm:$0xff]
      %v4764 = vld [vmem:[#allocation3 + $0x30] sm:$0xff]
      %v4765 = vld [vmem:[#allocation3 + $0x38] sm:$0xff]
      %v4766 = vld [vmem:[#allocation3 + $0x40] sm:$0xff]
      %v4767 = vld [vmem:[#allocation3 + $0x48] sm:$0xff]
      %v4768 = vld [vmem:[#allocation3 + $0x50] sm:$0xff]
      %v4769 = vld [vmem:[#allocation3 + $0x58] sm:$0xff]
      %v4770 = vld [vmem:[#allocation3 + $0x60] sm:$0xff]
      %v4771 = vld [vmem:[#allocation3 + $0x68] sm:$0xff]
      %v4772 = vld [vmem:[#allocation3 + $0x70] sm:$0xff]
      %v4773 = vld [vmem:[#allocation3 + $0x78] sm:$0xff]
      %v4774 = vld [vmem:[#allocation3 + $0x80] sm:$0xff]
      %v4775 = vld [vmem:[#allocation3 + $0x88] sm:$0xff]
      %v4776 = vld [vmem:[#allocation3 + $0x90] sm:$0xff]
      %v4777 = vld [vmem:[#allocation3 + $0x98] sm:$0xff]
      %v4778 = vld [vmem:[#allocation3 + $0xa0] sm:$0xff]
      %v4779 = vld [vmem:[#allocation3 + $0xa8] sm:$0xff]
      %v4780 = vld [vmem:[#allocation3 + $0xb0] sm:$0xff]
      %v4781 = vld [vmem:[#allocation3 + $0xb8] sm:$0xff]
      %v4782 = vld [vmem:[#allocation3 + $0xc0] sm:$0xff]
      %v4783 = vld [vmem:[#allocation3 + $0xc8] sm:$0xff]
      %v4784 = vld [vmem:[#allocation3 + $0xd0] sm:$0xff]
      %v4785 = vld [vmem:[#allocation3 + $0xd8] sm:$0xff]
      %v4786 = vld [vmem:[#allocation3 + $0xe0] sm:$0xff]
      %v4787 = vld [vmem:[#allocation3 + $0xe8] sm:$0xff]
      %v4788 = vld [vmem:[#allocation3 + $0xf0] sm:$0xff]
      %v4789 = vld [vmem:[#allocation3 + $0xf8] sm:$0xff]
      %v4790 = vld [vmem:[#allocation3 + $0x100] sm:$0xff]
      %v4791 = vld [vmem:[#allocation3 + $0x108] sm:$0xff]
      %v4792 = vld [vmem:[#allocation3 + $0x110] sm:$0xff]
      %v4793 = vld [vmem:[#allocation3 + $0x118] sm:$0xff]
      %v4794 = vld [vmem:[#allocation3 + $0x120] sm:$0xff]
      %v4795 = vld [vmem:[#allocation3 + $0x128] sm:$0xff]
      %v4796 = vld [vmem:[#allocation3 + $0x130] sm:$0xff]
      %v4797 = vld [vmem:[#allocation3 + $0x138] sm:$0xff]
      %v4798 = vld [vmem:[#allocation3 + $0x140] sm:$0xff]
      %s4799 = scalar_lea.vmem %s4, 1024
      %v4800 = vld [vmem:[%s4799] sm:$0xff]
      %v4801 = vld [vmem:[%s4799 + $0x8] sm:$0xff]
      %v4802 = vld [vmem:[%s4799 + $0x10] sm:$0xff]
      %v4803 = vld [vmem:[%s4799 + $0x18] sm:$0xff]
      %v4804 = vld [vmem:[%s4799 + $0x20] sm:$0xff]
      %v4805 = vld [vmem:[%s4799 + $0x28] sm:$0xff]
      %v4806 = vld [vmem:[%s4799 + $0x30] sm:$0xff]
      %v4807 = vld [vmem:[%s4799 + $0x38] sm:$0xff]
      %v4808 = vld [vmem:[%s4799 + $0x40] sm:$0xff]
      %v4809 = vld [vmem:[%s4799 + $0x48] sm:$0xff]
      %v4810 = vld [vmem:[%s4799 + $0x50] sm:$0xff]
      %v4811 = vld [vmem:[%s4799 + $0x58] sm:$0xff]
      %v4812 = vld [vmem:[%s4799 + $0x60] sm:$0xff]
      %v4813 = vld [vmem:[%s4799 + $0x68] sm:$0xff]
      %v4814 = vld [vmem:[%s4799 + $0x70] sm:$0xff]
      %v4815 = vld [vmem:[%s4799 + $0x78] sm:$0xff]
      %4816 = vmatprep.subr.mxu0 0.0
      %4817 = vmatpush1.msra.mxu0 %v4800
      %4818 = vmatprep.subr.mxu0 0.0
      %4819 = vmatpush1.msra.mxu0 %v4801
      %4820 = vmatprep.subr.mxu0 0.0
      %4821 = vmatpush1.msra.mxu0 %v4802
      %4822 = vmatprep.subr.mxu0 0.0
      %4823 = vmatpush1.msra.mxu0 %v4803
      %4824 = vmatprep.subr.mxu0 0.0
      %4825 = vmatpush1.msra.mxu0 %v4804
      %4826 = vmatprep.subr.mxu0 0.0
      %4827 = vmatpush1.msra.mxu0 %v4805
      %4828 = vmatprep.subr.mxu0 0.0
      %4829 = vmatpush1.msra.mxu0 %v4806
      %4830 = vmatprep.subr.mxu0 0.0
      %4831 = vmatpush1.msra.mxu0 %v4807
      %4832 = vmatprep.subr.mxu0 0.0
      %4833 = vmatpush1.msra.mxu0 %v4808
      %4834 = vmatprep.subr.mxu0 0.0
      %4835 = vmatpush1.msra.mxu0 %v4809
      %4836 = vmatprep.subr.mxu0 0.0
      %4837 = vmatpush1.msra.mxu0 %v4810
      %4838 = vmatprep.subr.mxu0 0.0
      %4839 = vmatpush1.msra.mxu0 %v4811
      %4840 = vmatprep.subr.mxu0 0.0
      %4841 = vmatpush1.msra.mxu0 %v4812
      %4842 = vmatprep.subr.mxu0 0.0
      %4843 = vmatpush1.msra.mxu0 %v4813
      %4844 = vmatprep.subr.mxu0 0.0
      %4845 = vmatpush1.msra.mxu0 %v4814
      %4846 = vmatprep.subr.mxu0 0.0
      %4847 = vmatpush1.msra.mxu0 %v4815
      %4848 = vmatprep.subr.mxu0 0.0
      %4849 = vmatpush1.msra.mxu0 0.0
      %4850 = vmatprep.subr.mxu0 0.0
      %4851 = vmatpush1.msra.mxu0 0.0
      %4852 = vmatprep.subr.mxu0 0.0
      %4853 = vmatpush1.msra.mxu0 0.0
      %4854 = vmatprep.subr.mxu0 0.0
      %4855 = vmatpush1.msra.mxu0 0.0
      %4856 = vmatprep.subr.mxu0 0.0
      %4857 = vmatpush1.msra.mxu0 0.0
      %4858 = vmatprep.subr.mxu0 0.0
      %4859 = vmatpush1.msra.mxu0 0.0
      %4860 = vmatprep.subr.mxu0 0.0
      %4861 = vmatpush1.msra.mxu0 0.0
      %4862 = vmatprep.subr.mxu0 0.0
      %4863 = vmatpush1.msra.mxu0 0.0
      %4864 = vmatprep.subr.mxu0 0.0
      %4865 = vmatpush1.msra.mxu0 0.0
      %4866 = vmatprep.subr.mxu0 0.0
      %4867 = vmatpush1.msra.mxu0 0.0
      %4868 = vmatprep.subr.mxu0 0.0
      %4869 = vmatpush1.msra.mxu0 0.0
      %4870 = vmatprep.subr.mxu0 0.0
      %4871 = vmatpush1.msra.mxu0 0.0
      %4872 = vmatprep.subr.mxu0 0.0
      %4873 = vmatpush1.msra.mxu0 0.0
      %4874 = vmatprep.subr.mxu0 0.0
      %4875 = vmatpush1.msra.mxu0 0.0
      %4876 = vmatprep.subr.mxu0 0.0
      %4877 = vmatpush1.msra.mxu0 0.0
      %4878 = vmatprep.subr.mxu0 0.0
      %4879 = vmatpush1.msra.mxu0 0.0
      %4880 = vmatprep.mubr.f32.mxu0 0.0
      %4881 = vmatmul.mubr.f32.gmra.mrb[0].mxu0 %v4717
      %v4882 = vpop.f32.mrb[0].mxu0
      %v4883 = vadd.f32 0.0, %v4882
      %v4884 = vpop.f32.mrb[0].mxu0
      %4885 = vmatprep.mubr.f32.mxu0 0.0
      %4886 = vmatmul.mubr.f32.gmra.mrb[0].mxu0 %v4718
      %v4887 = vpop.f32.mrb[0].mxu0
      %v4888 = vadd.f32 0.0, %v4887
      %v4889 = vpop.f32.mrb[0].mxu0
      %4890 = vmatprep.mubr.f32.mxu0 0.0
      %4891 = vmatmul.mubr.f32.gmra.mrb[0].mxu0 %v4719
      %v4892 = vpop.f32.mrb[0].mxu0
      %v4893 = vadd.f32 0.0, %v4892
      %v4894 = vpop.f32.mrb[0].mxu0
      %4895 = vmatprep.mubr.f32.mxu0 0.0
      %4896 = vmatmul.mubr.f32.gmra.mrb[0].mxu0 %v4720
      %v4897 = vpop.f32.mrb[0].mxu0
      %v4898 = vadd.f32 0.0, %v4897
      %v4899 = vpop.f32.mrb[0].mxu0
      %4900 = vmatprep.mubr.f32.mxu0 0.0
      %4901 = vmatmul.mubr.f32.gmra.mrb[0].mxu0 %v4721
      %v4902 = vpop.f32.mrb[0].mxu0
      %v4903 = vadd.f32 0.0, %v4902
      %v4904 = vpop.f32.mrb[0].mxu0
      %4905 = vmatprep.mubr.f32.mxu0 0.0
      %4906 = vmatmul.mubr.f32.gmra.mrb[0].mxu0 %v4722
      %v4907 = vpop.f32.mrb[0].mxu0
      %v4908 = vadd.f32 0.0, %v4907
      %v4909 = vpop.f32.mrb[0].mxu0
      %4910 = vmatprep.mubr.f32.mxu0 0.0
      %4911 = vmatmul.mubr.f32.gmra.mrb[0].mxu0 %v4723
      %v4912 = vpop.f32.mrb[0].mxu0
      %v4913 = vadd.f32 0.0, %v4912
      %v4914 = vpop.f32.mrb[0].mxu0
      %4915 = vmatprep.mubr.f32.mxu0 0.0
      %4916 = vmatmul.mubr.f32.gmra.mrb[0].mxu0 %v4724
      %v4917 = vpop.f32.mrb[0].mxu0
      %v4918 = vadd.f32 0.0, %v4917
      %v4919 = vpop.f32.mrb[0].mxu0
      %4920 = vmatprep.mubr.f32.mxu0 0.0
      %4921 = vmatmul.mubr.f32.gmra.mrb[0].mxu0 %v4725
      %v4922 = vpop.f32.mrb[0].mxu0
      %v4923 = vadd.f32 0.0, %v4922
      %v4924 = vpop.f32.mrb[0].mxu0
      %4925 = vmatprep.mubr.f32.mxu0 0.0
      %4926 = vmatmul.mubr.f32.gmra.mrb[0].mxu0 %v4726
      %v4927 = vpop.f32.mrb[0].mxu0
      %v4928 = vadd.f32 0.0, %v4927
      %v4929 = vpop.f32.mrb[0].mxu0
      %4930 = vmatprep.mubr.f32.mxu0 0.0
      %4931 = vmatmul.mubr.f32.gmra.mrb[0].mxu0 %v4727
      %v4932 = vpop.f32.mrb[0].mxu0
      %v4933 = vadd.f32 0.0, %v4932
      %v4934 = vpop.f32.mrb[0].mxu0
      %4935 = vmatprep.mubr.f32.mxu0 0.0
      %4936 = vmatmul.mubr.f32.gmra.mrb[0].mxu0 %v4728
      %v4937 = vpop.f32.mrb[0].mxu0
      %v4938 = vadd.f32 0.0, %v4937
      %v4939 = vpop.f32.mrb[0].mxu0
      %4940 = vmatprep.mubr.f32.mxu0 0.0
      %4941 = vmatmul.mubr.f32.gmra.mrb[0].mxu0 %v4729
      %v4942 = vpop.f32.mrb[0].mxu0
      %v4943 = vadd.f32 0.0, %v4942
      %v4944 = vpop.f32.mrb[0].mxu0
      %4945 = vmatprep.mubr.f32.mxu0 0.0
      %4946 = vmatmul.mubr.f32.gmra.mrb[0].mxu0 %v4730
      %v4947 = vpop.f32.mrb[0].mxu0
      %v4948 = vadd.f32 0.0, %v4947
      %v4949 = vpop.f32.mrb[0].mxu0
      %4950 = vmatprep.mubr.f32.mxu0 0.0
      %4951 = vmatmul.mubr.f32.gmra.mrb[0].mxu0 %v4731
      %v4952 = vpop.f32.mrb[0].mxu0
      %v4953 = vadd.f32 0.0, %v4952
      %v4954 = vpop.f32.mrb[0].mxu0
      %4955 = vmatprep.mubr.f32.mxu0 0.0
      %4956 = vmatmul.mubr.f32.gmra.mrb[0].mxu0 %v4732
      %v4957 = vpop.f32.mrb[0].mxu0
      %v4958 = vadd.f32 0.0, %v4957
      %v4959 = vpop.f32.mrb[0].mxu0
      %4960 = vmatprep.mubr.f32.mxu0 0.0
      %4961 = vmatmul.mubr.f32.gmra.mrb[0].mxu0 %v4733
      %v4962 = vpop.f32.mrb[0].mxu0
      %v4963 = vadd.f32 0.0, %v4962
      %v4964 = vpop.f32.mrb[0].mxu0
      %4965 = vmatprep.mubr.f32.mxu0 0.0
      %4966 = vmatmul.mubr.f32.gmra.mrb[0].mxu0 %v4734
      %v4967 = vpop.f32.mrb[0].mxu0
      %v4968 = vadd.f32 0.0, %v4967
      %v4969 = vpop.f32.mrb[0].mxu0
      %4970 = vmatprep.mubr.f32.mxu0 0.0
      %4971 = vmatmul.mubr.f32.gmra.mrb[0].mxu0 %v4735
      %v4972 = vpop.f32.mrb[0].mxu0
      %v4973 = vadd.f32 0.0, %v4972
      %v4974 = vpop.f32.mrb[0].mxu0
      %4975 = vmatprep.mubr.f32.mxu0 0.0
      %4976 = vmatmul.mubr.f32.gmra.mrb[0].mxu0 %v4736
      %v4977 = vpop.f32.mrb[0].mxu0
      %v4978 = vadd.f32 0.0, %v4977
      %v4979 = vpop.f32.mrb[0].mxu0
      %4980 = vmatprep.mubr.f32.mxu0 0.0
      %4981 = vmatmul.mubr.f32.gmra.mrb[0].mxu0 %v4737
      %v4982 = vpop.f32.mrb[0].mxu0
      %v4983 = vadd.f32 0.0, %v4982
      %v4984 = vpop.f32.mrb[0].mxu0
      %4985 = vmatprep.mubr.f32.mxu0 0.0
      %4986 = vmatmul.mubr.f32.gmra.mrb[0].mxu0 %v4738
      %v4987 = vpop.f32.mrb[0].mxu0
      %v4988 = vadd.f32 0.0, %v4987
      %v4989 = vpop.f32.mrb[0].mxu0
      %4990 = vmatprep.mubr.f32.mxu0 0.0
      %4991 = vmatmul.mubr.f32.gmra.mrb[0].mxu0 %v4739
      %v4992 = vpop.f32.mrb[0].mxu0
      %v4993 = vadd.f32 0.0, %v4992
      %v4994 = vpop.f32.mrb[0].mxu0
      %4995 = vmatprep.mubr.f32.mxu0 0.0
      %4996 = vmatmul.mubr.f32.gmra.mrb[0].mxu0 %v4740
      %v4997 = vpop.f32.mrb[0].mxu0
      %v4998 = vadd.f32 0.0, %v4997
      %v4999 = vpop.f32.mrb[0].mxu0
      %5000 = vmatprep.mubr.f32.mxu0 0.0
      %5001 = vmatmul.mubr.f32.gmra.mrb[0].mxu0 %v4741
      %v5002 = vpop.f32.mrb[0].mxu0
      %v5003 = vadd.f32 0.0, %v5002
      %v5004 = vpop.f32.mrb[0].mxu0
      %5005 = vmatprep.mubr.f32.mxu0 0.0
      %5006 = vmatmul.mubr.f32.gmra.mrb[0].mxu0 %v4742
      %v5007 = vpop.f32.mrb[0].mxu0
      %v5008 = vadd.f32 0.0, %v5007
      %v5009 = vpop.f32.mrb[0].mxu0
      %5010 = vmatprep.mubr.f32.mxu0 0.0
      %5011 = vmatmul.mubr.f32.gmra.mrb[0].mxu0 %v4743
      %v5012 = vpop.f32.mrb[0].mxu0
      %v5013 = vadd.f32 0.0, %v5012
      %v5014 = vpop.f32.mrb[0].mxu0
      %5015 = vmatprep.mubr.f32.mxu0 0.0
      %5016 = vmatmul.mubr.f32.gmra.mrb[0].mxu0 %v4744
      %v5017 = vpop.f32.mrb[0].mxu0
      %v5018 = vadd.f32 0.0, %v5017
      %v5019 = vpop.f32.mrb[0].mxu0
      %5020 = vmatprep.mubr.f32.mxu0 0.0
      %5021 = vmatmul.mubr.f32.gmra.mrb[0].mxu0 %v4745
      %v5022 = vpop.f32.mrb[0].mxu0
      %v5023 = vadd.f32 0.0, %v5022
      %v5024 = vpop.f32.mrb[0].mxu0
      %5025 = vmatprep.mubr.f32.mxu0 0.0
      %5026 = vmatmul.mubr.f32.gmra.mrb[0].mxu0 %v4746
      %v5027 = vpop.f32.mrb[0].mxu0
      %v5028 = vadd.f32 0.0, %v5027
      %v5029 = vpop.f32.mrb[0].mxu0
      %5030 = vmatprep.mubr.f32.mxu0 0.0
      %5031 = vmatmul.mubr.f32.gmra.mrb[0].mxu0 %v4747
      %v5032 = vpop.f32.mrb[0].mxu0
      %v5033 = vadd.f32 0.0, %v5032
      %v5034 = vpop.f32.mrb[0].mxu0
      %5035 = vmatprep.mubr.f32.mxu0 0.0
      %5036 = vmatmul.mubr.f32.gmra.mrb[0].mxu0 %v4748
      %v5037 = vpop.f32.mrb[0].mxu0
      %v5038 = vadd.f32 0.0, %v5037
      %v5039 = vpop.f32.mrb[0].mxu0
      %5040 = vmatprep.mubr.f32.mxu0 0.0
      %5041 = vmatmul.mubr.f32.gmra.mrb[0].mxu0 %v4749
      %v5042 = vpop.f32.mrb[0].mxu0
      %v5043 = vadd.f32 0.0, %v5042
      %v5044 = vpop.f32.mrb[0].mxu0
      %5045 = vmatprep.mubr.f32.mxu0 0.0
      %5046 = vmatmul.mubr.f32.gmra.mrb[0].mxu0 %v4750
      %v5047 = vpop.f32.mrb[0].mxu0
      %v5048 = vadd.f32 0.0, %v5047
      %v5049 = vpop.f32.mrb[0].mxu0
      %5050 = vmatprep.mubr.f32.mxu0 0.0
      %5051 = vmatmul.mubr.f32.gmra.mrb[0].mxu0 %v4751
      %v5052 = vpop.f32.mrb[0].mxu0
      %v5053 = vadd.f32 0.0, %v5052
      %v5054 = vpop.f32.mrb[0].mxu0
      %5055 = vmatprep.mubr.f32.mxu0 0.0
      %5056 = vmatmul.mubr.f32.gmra.mrb[0].mxu0 %v4752
      %v5057 = vpop.f32.mrb[0].mxu0
      %v5058 = vadd.f32 0.0, %v5057
      %v5059 = vpop.f32.mrb[0].mxu0
      %5060 = vmatprep.mubr.f32.mxu0 0.0
      %5061 = vmatmul.mubr.f32.gmra.mrb[0].mxu0 %v4753
      %v5062 = vpop.f32.mrb[0].mxu0
      %v5063 = vadd.f32 0.0, %v5062
      %v5064 = vpop.f32.mrb[0].mxu0
      %5065 = vmatprep.mubr.f32.mxu0 0.0
      %5066 = vmatmul.mubr.f32.gmra.mrb[0].mxu0 %v4754
      %v5067 = vpop.f32.mrb[0].mxu0
      %v5068 = vadd.f32 0.0, %v5067
      %v5069 = vpop.f32.mrb[0].mxu0
      %5070 = vmatprep.mubr.f32.mxu0 0.0
      %5071 = vmatmul.mubr.f32.gmra.mrb[0].mxu0 %v4755
      %v5072 = vpop.f32.mrb[0].mxu0
      %v5073 = vadd.f32 0.0, %v5072
      %v5074 = vpop.f32.mrb[0].mxu0
      %5075 = vmatprep.mubr.f32.mxu0 0.0
      %5076 = vmatmul.mubr.f32.gmra.mrb[0].mxu0 %v4756
      %v5077 = vpop.f32.mrb[0].mxu0
      %v5078 = vadd.f32 0.0, %v5077
      %v5079 = vpop.f32.mrb[0].mxu0
      %5080 = vmatprep.mubr.f32.mxu0 0.0
      %5081 = vmatmul.mubr.f32.gmra.mrb[0].mxu0 %v4757
      %v5082 = vpop.f32.mrb[0].mxu0
      %v5083 = vadd.f32 0.0, %v5082
      %v5084 = vpop.f32.mrb[0].mxu0
      %5085 = vdwg.mxu0
      %v5086 = vadd.f32 %v4758, %v4883
      %v5087 = vadd.f32 %v4759, %v4888
      %v5088 = vadd.f32 %v4760, %v4893
      %v5089 = vadd.f32 %v4761, %v4898
      %v5090 = vadd.f32 %v4762, %v4903
      %v5091 = vadd.f32 %v4763, %v4908
      %v5092 = vadd.f32 %v4764, %v4913
      %v5093 = vadd.f32 %v4765, %v4918
      %v5094 = vadd.f32 %v4766, %v4923
      %v5095 = vadd.f32 %v4767, %v4928
      %v5096 = vadd.f32 %v4768, %v4933
      %v5097 = vadd.f32 %v4769, %v4938
      %v5098 = vadd.f32 %v4770, %v4943
      %v5099 = vadd.f32 %v4771, %v4948
      %v5100 = vadd.f32 %v4772, %v4953
      %v5101 = vadd.f32 %v4773, %v4958
      %v5102 = vadd.f32 %v4774, %v4963
      %v5103 = vadd.f32 %v4775, %v4968
      %v5104 = vadd.f32 %v4776, %v4973
      %v5105 = vadd.f32 %v4777, %v4978
      %v5106 = vadd.f32 %v4778, %v4983
      %v5107 = vadd.f32 %v4779, %v4988
      %v5108 = vadd.f32 %v4780, %v4993
      %v5109 = vadd.f32 %v4781, %v4998
      %v5110 = vadd.f32 %v4782, %v5003
      %v5111 = vadd.f32 %v4783, %v5008
      %v5112 = vadd.f32 %v4784, %v5013
      %v5113 = vadd.f32 %v4785, %v5018
      %v5114 = vadd.f32 %v4786, %v5023
      %v5115 = vadd.f32 %v4787, %v5028
      %v5116 = vadd.f32 %v4788, %v5033
      %v5117 = vadd.f32 %v4789, %v5038
      %v5118 = vadd.f32 %v4790, %v5043
      %v5119 = vadd.f32 %v4791, %v5048
      %v5120 = vadd.f32 %v4792, %v5053
      %v5121 = vadd.f32 %v4793, %v5058
      %v5122 = vadd.f32 %v4794, %v5063
      %v5123 = vadd.f32 %v4795, %v5068
      %v5124 = vadd.f32 %v4796, %v5073
      %v5125 = vadd.f32 %v4797, %v5078
      %v5126 = vadd.f32 %v4798, %v5083
      %5127 = vst [vmem:[#allocation3] sm:$0xff] %v5086
      %5128 = vst [vmem:[#allocation3 + $0x8] sm:$0xff] %v5087
      %5129 = vst [vmem:[#allocation3 + $0x10] sm:$0xff] %v5088
      %5130 = vst [vmem:[#allocation3 + $0x18] sm:$0xff] %v5089
      %5131 = vst [vmem:[#allocation3 + $0x20] sm:$0xff] %v5090
      %5132 = vst [vmem:[#allocation3 + $0x28] sm:$0xff] %v5091
      %5133 = vst [vmem:[#allocation3 + $0x30] sm:$0xff] %v5092
      %5134 = vst [vmem:[#allocation3 + $0x38] sm:$0xff] %v5093
      %5135 = vst [vmem:[#allocation3 + $0x40] sm:$0xff] %v5094
      %5136 = vst [vmem:[#allocation3 + $0x48] sm:$0xff] %v5095
      %5137 = vst [vmem:[#allocation3 + $0x50] sm:$0xff] %v5096
      %5138 = vst [vmem:[#allocation3 + $0x58] sm:$0xff] %v5097
      %5139 = vst [vmem:[#allocation3 + $0x60] sm:$0xff] %v5098
      %5140 = vst [vmem:[#allocation3 + $0x68] sm:$0xff] %v5099
      %5141 = vst [vmem:[#allocation3 + $0x70] sm:$0xff] %v5100
      %5142 = vst [vmem:[#allocation3 + $0x78] sm:$0xff] %v5101
      %5143 = vst [vmem:[#allocation3 + $0x80] sm:$0xff] %v5102
      %5144 = vst [vmem:[#allocation3 + $0x88] sm:$0xff] %v5103
      %5145 = vst [vmem:[#allocation3 + $0x90] sm:$0xff] %v5104
      %5146 = vst [vmem:[#allocation3 + $0x98] sm:$0xff] %v5105
      %5147 = vst [vmem:[#allocation3 + $0xa0] sm:$0xff] %v5106
      %5148 = vst [vmem:[#allocation3 + $0xa8] sm:$0xff] %v5107
      %5149 = vst [vmem:[#allocation3 + $0xb0] sm:$0xff] %v5108
      %5150 = vst [vmem:[#allocation3 + $0xb8] sm:$0xff] %v5109
      %5151 = vst [vmem:[#allocation3 + $0xc0] sm:$0xff] %v5110
      %5152 = vst [vmem:[#allocation3 + $0xc8] sm:$0xff] %v5111
      %5153 = vst [vmem:[#allocation3 + $0xd0] sm:$0xff] %v5112
      %5154 = vst [vmem:[#allocation3 + $0xd8] sm:$0xff] %v5113
      %5155 = vst [vmem:[#allocation3 + $0xe0] sm:$0xff] %v5114
      %5156 = vst [vmem:[#allocation3 + $0xe8] sm:$0xff] %v5115
      %5157 = vst [vmem:[#allocation3 + $0xf0] sm:$0xff] %v5116
      %5158 = vst [vmem:[#allocation3 + $0xf8] sm:$0xff] %v5117
      %5159 = vst [vmem:[#allocation3 + $0x100] sm:$0xff] %v5118
      %5160 = vst [vmem:[#allocation3 + $0x108] sm:$0xff] %v5119
      %5161 = vst [vmem:[#allocation3 + $0x110] sm:$0xff] %v5120
      %5162 = vst [vmem:[#allocation3 + $0x118] sm:$0xff] %v5121
      %5163 = vst [vmem:[#allocation3 + $0x120] sm:$0xff] %v5122
      %5164 = vst [vmem:[#allocation3 + $0x128] sm:$0xff] %v5123
      %5165 = vst [vmem:[#allocation3 + $0x130] sm:$0xff] %v5124
      %5166 = vst [vmem:[#allocation3 + $0x138] sm:$0xff] %v5125
      %5167 = vst [vmem:[#allocation3 + $0x140] sm:$0xff] %v5126
      %v5168 = vld [vmem:[#allocation3] sm:$0xff]
      %v5169 = vld [vmem:[#allocation3 + $0x8] sm:$0xff]
      %v5170 = vld [vmem:[#allocation3 + $0x10] sm:$0xff]
      %v5171 = vld [vmem:[#allocation3 + $0x18] sm:$0xff]
      %v5172 = vld [vmem:[#allocation3 + $0x20] sm:$0xff]
      %v5173 = vld [vmem:[#allocation3 + $0x28] sm:$0xff]
      %v5174 = vld [vmem:[#allocation3 + $0x30] sm:$0xff]
      %v5175 = vld [vmem:[#allocation3 + $0x38] sm:$0xff]
      %v5176 = vld [vmem:[#allocation3 + $0x40] sm:$0xff]
      %v5177 = vld [vmem:[#allocation3 + $0x48] sm:$0xff]
      %v5178 = vld [vmem:[#allocation3 + $0x50] sm:$0xff]
      %v5179 = vld [vmem:[#allocation3 + $0x58] sm:$0xff]
      %v5180 = vld [vmem:[#allocation3 + $0x60] sm:$0xff]
      %v5181 = vld [vmem:[#allocation3 + $0x68] sm:$0xff]
      %v5182 = vld [vmem:[#allocation3 + $0x70] sm:$0xff]
      %v5183 = vld [vmem:[#allocation3 + $0x78] sm:$0xff]
      %v5184 = vld [vmem:[#allocation3 + $0x80] sm:$0xff]
      %v5185 = vld [vmem:[#allocation3 + $0x88] sm:$0xff]
      %v5186 = vld [vmem:[#allocation3 + $0x90] sm:$0xff]
      %v5187 = vld [vmem:[#allocation3 + $0x98] sm:$0xff]
      %v5188 = vld [vmem:[#allocation3 + $0xa0] sm:$0xff]
      %v5189 = vld [vmem:[#allocation3 + $0xa8] sm:$0xff]
      %v5190 = vld [vmem:[#allocation3 + $0xb0] sm:$0xff]
      %v5191 = vld [vmem:[#allocation3 + $0xb8] sm:$0xff]
      %v5192 = vld [vmem:[#allocation3 + $0xc0] sm:$0xff]
      %v5193 = vld [vmem:[#allocation3 + $0xc8] sm:$0xff]
      %v5194 = vld [vmem:[#allocation3 + $0xd0] sm:$0xff]
      %v5195 = vld [vmem:[#allocation3 + $0xd8] sm:$0xff]
      %v5196 = vld [vmem:[#allocation3 + $0xe0] sm:$0xff]
      %v5197 = vld [vmem:[#allocation3 + $0xe8] sm:$0xff]
      %v5198 = vld [vmem:[#allocation3 + $0xf0] sm:$0xff]
      %v5199 = vld [vmem:[#allocation3 + $0xf8] sm:$0xff]
      %v5200 = vld [vmem:[#allocation3 + $0x100] sm:$0xff]
      %v5201 = vld [vmem:[#allocation3 + $0x108] sm:$0xff]
      %v5202 = vld [vmem:[#allocation3 + $0x110] sm:$0xff]
      %v5203 = vld [vmem:[#allocation3 + $0x118] sm:$0xff]
      %v5204 = vld [vmem:[#allocation3 + $0x120] sm:$0xff]
      %v5205 = vld [vmem:[#allocation3 + $0x128] sm:$0xff]
      %v5206 = vld [vmem:[#allocation3 + $0x130] sm:$0xff]
      %v5207 = vld [vmem:[#allocation3 + $0x138] sm:$0xff]
      %v5208 = vld [vmem:[#allocation3 + $0x140] sm:$0xff]
      %v5209 = vld [vmem:[%s5] sm:$0x1]
      %v5211 = vlaneseq
      %v5212 = vshrl.u32 %v5211, 7
      %v5213 = vsub.s32 0, %v5212
      %v5214 = vrot.slane %v5209, %v5213
      %v5216 = vadd.f32 %v5168, %v5214
      %v5217 = vadd.f32 %v5169, %v5214
      %v5218 = vadd.f32 %v5170, %v5214
      %v5219 = vadd.f32 %v5171, %v5214
      %v5220 = vadd.f32 %v5172, %v5214
      %v5221 = vadd.f32 %v5173, %v5214
      %v5222 = vadd.f32 %v5174, %v5214
      %v5223 = vadd.f32 %v5175, %v5214
      %v5224 = vadd.f32 %v5176, %v5214
      %v5225 = vadd.f32 %v5177, %v5214
      %v5226 = vadd.f32 %v5178, %v5214
      %v5227 = vadd.f32 %v5179, %v5214
      %v5228 = vadd.f32 %v5180, %v5214
      %v5229 = vadd.f32 %v5181, %v5214
      %v5230 = vadd.f32 %v5182, %v5214
      %v5231 = vadd.f32 %v5183, %v5214
      %v5232 = vadd.f32 %v5184, %v5214
      %v5233 = vadd.f32 %v5185, %v5214
      %v5234 = vadd.f32 %v5186, %v5214
      %v5235 = vadd.f32 %v5187, %v5214
      %v5236 = vadd.f32 %v5188, %v5214
      %v5237 = vadd.f32 %v5189, %v5214
      %v5238 = vadd.f32 %v5190, %v5214
      %v5239 = vadd.f32 %v5191, %v5214
      %v5240 = vadd.f32 %v5192, %v5214
      %v5241 = vadd.f32 %v5193, %v5214
      %v5242 = vadd.f32 %v5194, %v5214
      %v5243 = vadd.f32 %v5195, %v5214
      %v5244 = vadd.f32 %v5196, %v5214
      %v5245 = vadd.f32 %v5197, %v5214
      %v5246 = vadd.f32 %v5198, %v5214
      %v5247 = vadd.f32 %v5199, %v5214
      %v5248 = vadd.f32 %v5200, %v5214
      %v5249 = vadd.f32 %v5201, %v5214
      %v5250 = vadd.f32 %v5202, %v5214
      %v5251 = vadd.f32 %v5203, %v5214
      %v5252 = vadd.f32 %v5204, %v5214
      %v5253 = vadd.f32 %v5205, %v5214
      %v5254 = vadd.f32 %v5206, %v5214
      %v5255 = vadd.f32 %v5207, %v5214
      %v5256 = vadd.f32 %v5208, %v5214
      %v5257 = vmax.f32 %v5216, 0.0
      %v5258 = vmax.f32 %v5217, 0.0
      %v5259 = vmax.f32 %v5218, 0.0
      %v5260 = vmax.f32 %v5219, 0.0
      %v5261 = vmax.f32 %v5220, 0.0
      %v5262 = vmax.f32 %v5221, 0.0
      %v5263 = vmax.f32 %v5222, 0.0
      %v5264 = vmax.f32 %v5223, 0.0
      %v5265 = vmax.f32 %v5224, 0.0
      %v5266 = vmax.f32 %v5225, 0.0
      %v5267 = vmax.f32 %v5226, 0.0
      %v5268 = vmax.f32 %v5227, 0.0
      %v5269 = vmax.f32 %v5228, 0.0
      %v5270 = vmax.f32 %v5229, 0.0
      %v5271 = vmax.f32 %v5230, 0.0
      %v5272 = vmax.f32 %v5231, 0.0
      %v5273 = vmax.f32 %v5232, 0.0
      %v5274 = vmax.f32 %v5233, 0.0
      %v5275 = vmax.f32 %v5234, 0.0
      %v5276 = vmax.f32 %v5235, 0.0
      %v5277 = vmax.f32 %v5236, 0.0
      %v5278 = vmax.f32 %v5237, 0.0
      %v5279 = vmax.f32 %v5238, 0.0
      %v5280 = vmax.f32 %v5239, 0.0
      %v5281 = vmax.f32 %v5240, 0.0
      %v5282 = vmax.f32 %v5241, 0.0
      %v5283 = vmax.f32 %v5242, 0.0
      %v5284 = vmax.f32 %v5243, 0.0
      %v5285 = vmax.f32 %v5244, 0.0
      %v5286 = vmax.f32 %v5245, 0.0
      %v5287 = vmax.f32 %v5246, 0.0
      %v5288 = vmax.f32 %v5247, 0.0
      %v5289 = vmax.f32 %v5248, 0.0
      %v5290 = vmax.f32 %v5249, 0.0
      %v5291 = vmax.f32 %v5250, 0.0
      %v5292 = vmax.f32 %v5251, 0.0
      %v5293 = vmax.f32 %v5252, 0.0
      %v5294 = vmax.f32 %v5253, 0.0
      %v5295 = vmax.f32 %v5254, 0.0
      %v5296 = vmax.f32 %v5255, 0.0
      %v5297 = vmax.f32 %v5256, 0.0
      %v5298 = vld [vmem:[%s6] sm:$0xff]
      %v5299 = vld [vmem:[%s6 + $0x8] sm:$0xff]
      %v5300 = vld [vmem:[%s6 + $0x10] sm:$0xff]
      %v5301 = vld [vmem:[%s6 + $0x18] sm:$0xff]
      %v5302 = vld [vmem:[%s6 + $0x20] sm:$0xff]
      %v5303 = vld [vmem:[%s6 + $0x28] sm:$0xff]
      %v5304 = vld [vmem:[%s6 + $0x30] sm:$0xff]
      %v5305 = vld [vmem:[%s6 + $0x38] sm:$0xff]
      %v5306 = vld [vmem:[%s6 + $0x40] sm:$0xff]
      %v5307 = vld [vmem:[%s6 + $0x48] sm:$0xff]
      %v5308 = vld [vmem:[%s6 + $0x50] sm:$0xff]
      %v5309 = vld [vmem:[%s6 + $0x58] sm:$0xff]
      %v5310 = vld [vmem:[%s6 + $0x60] sm:$0xff]
      %v5311 = vld [vmem:[%s6 + $0x68] sm:$0xff]
      %v5312 = vld [vmem:[%s6 + $0x70] sm:$0xff]
      %v5313 = vld [vmem:[%s6 + $0x78] sm:$0xff]
      %v5314 = vld [vmem:[%s7] sm:$0x1]
      %v5316 = vlaneseq
      %v5317 = vshrl.u32 %v5316, 7
      %v5318 = vsub.s32 0, %v5317
      %v5319 = vrot.slane %v5314, %v5318
      %5321 = vmatprep.subr.mxu0 0.0
      %5322 = vmatpush1.msra.mxu0 %v5298
      %5323 = vmatprep.subr.mxu0 0.0
      %5324 = vmatpush1.msra.mxu0 %v5299
      %5325 = vmatprep.subr.mxu0 0.0
      %5326 = vmatpush1.msra.mxu0 %v5300
      %5327 = vmatprep.subr.mxu0 0.0
      %5328 = vmatpush1.msra.mxu0 %v5301
      %5329 = vmatprep.subr.mxu0 0.0
      %5330 = vmatpush1.msra.mxu0 %v5302
      %5331 = vmatprep.subr.mxu0 0.0
      %5332 = vmatpush1.msra.mxu0 %v5303
      %5333 = vmatprep.subr.mxu0 0.0
      %5334 = vmatpush1.msra.mxu0 %v5304
      %5335 = vmatprep.subr.mxu0 0.0
      %5336 = vmatpush1.msra.mxu0 %v5305
      %5337 = vmatprep.subr.mxu0 0.0
      %5338 = vmatpush1.msra.mxu0 %v5306
      %5339 = vmatprep.subr.mxu0 0.0
      %5340 = vmatpush1.msra.mxu0 %v5307
      %5341 = vmatprep.subr.mxu0 0.0
      %5342 = vmatpush1.msra.mxu0 %v5308
      %5343 = vmatprep.subr.mxu0 0.0
      %5344 = vmatpush1.msra.mxu0 %v5309
      %5345 = vmatprep.subr.mxu0 0.0
      %5346 = vmatpush1.msra.mxu0 %v5310
      %5347 = vmatprep.subr.mxu0 0.0
      %5348 = vmatpush1.msra.mxu0 %v5311
      %5349 = vmatprep.subr.mxu0 0.0
      %5350 = vmatpush1.msra.mxu0 %v5312
      %5351 = vmatprep.subr.mxu0 0.0
      %5352 = vmatpush1.msra.mxu0 %v5313
      %5353 = vmatprep.subr.mxu0 0.0
      %5354 = vmatpush1.msra.mxu0 0.0
      %5355 = vmatprep.subr.mxu0 0.0
      %5356 = vmatpush1.msra.mxu0 0.0
      %5357 = vmatprep.subr.mxu0 0.0
      %5358 = vmatpush1.msra.mxu0 0.0
      %5359 = vmatprep.subr.mxu0 0.0
      %5360 = vmatpush1.msra.mxu0 0.0
      %5361 = vmatprep.subr.mxu0 0.0
      %5362 = vmatpush1.msra.mxu0 0.0
      %5363 = vmatprep.subr.mxu0 0.0
      %5364 = vmatpush1.msra.mxu0 0.0
      %5365 = vmatprep.subr.mxu0 0.0
      %5366 = vmatpush1.msra.mxu0 0.0
      %5367 = vmatprep.subr.mxu0 0.0
      %5368 = vmatpush1.msra.mxu0 0.0
      %5369 = vmatprep.subr.mxu0 0.0
      %5370 = vmatpush1.msra.mxu0 0.0
      %5371 = vmatprep.subr.mxu0 0.0
      %5372 = vmatpush1.msra.mxu0 0.0
      %5373 = vmatprep.subr.mxu0 0.0
      %5374 = vmatpush1.msra.mxu0 0.0
      %5375 = vmatprep.subr.mxu0 0.0
      %5376 = vmatpush1.msra.mxu0 0.0
      %5377 = vmatprep.subr.mxu0 0.0
      %5378 = vmatpush1.msra.mxu0 0.0
      %5379 = vmatprep.subr.mxu0 0.0
      %5380 = vmatpush1.msra.mxu0 0.0
      %5381 = vmatprep.subr.mxu0 0.0
      %5382 = vmatpush1.msra.mxu0 0.0
      %5383 = vmatprep.subr.mxu0 0.0
      %5384 = vmatpush1.msra.mxu0 0.0
      %5385 = vmatprep.mubr.f32.mxu0 0.0
      %5386 = vmatmul.mubr.f32.gmra.mrb[0].mxu0 %v5257
      %v5387 = vpop.f32.mrb[0].mxu0
      %v5388 = vadd.f32 %v5319, %v5387
      %v5389 = vpop.f32.mrb[0].mxu0
      %5390 = vmatprep.mubr.f32.mxu0 0.0
      %5391 = vmatmul.mubr.f32.gmra.mrb[0].mxu0 %v5258
      %v5392 = vpop.f32.mrb[0].mxu0
      %v5393 = vadd.f32 %v5319, %v5392
      %v5394 = vpop.f32.mrb[0].mxu0
      %5395 = vmatprep.mubr.f32.mxu0 0.0
      %5396 = vmatmul.mubr.f32.gmra.mrb[0].mxu0 %v5259
      %v5397 = vpop.f32.mrb[0].mxu0
      %v5398 = vadd.f32 %v5319, %v5397
      %v5399 = vpop.f32.mrb[0].mxu0
      %5400 = vmatprep.mubr.f32.mxu0 0.0
      %5401 = vmatmul.mubr.f32.gmra.mrb[0].mxu0 %v5260
      %v5402 = vpop.f32.mrb[0].mxu0
      %v5403 = vadd.f32 %v5319, %v5402
      %v5404 = vpop.f32.mrb[0].mxu0
      %5405 = vmatprep.mubr.f32.mxu0 0.0
      %5406 = vmatmul.mubr.f32.gmra.mrb[0].mxu0 %v5261
      %v5407 = vpop.f32.mrb[0].mxu0
      %v5408 = vadd.f32 %v5319, %v5407
      %v5409 = vpop.f32.mrb[0].mxu0
      %5410 = vmatprep.mubr.f32.mxu0 0.0
      %5411 = vmatmul.mubr.f32.gmra.mrb[0].mxu0 %v5262
      %v5412 = vpop.f32.mrb[0].mxu0
      %v5413 = vadd.f32 %v5319, %v5412
      %v5414 = vpop.f32.mrb[0].mxu0
      %5415 = vmatprep.mubr.f32.mxu0 0.0
      %5416 = vmatmul.mubr.f32.gmra.mrb[0].mxu0 %v5263
      %v5417 = vpop.f32.mrb[0].mxu0
      %v5418 = vadd.f32 %v5319, %v5417
      %v5419 = vpop.f32.mrb[0].mxu0
      %5420 = vmatprep.mubr.f32.mxu0 0.0
      %5421 = vmatmul.mubr.f32.gmra.mrb[0].mxu0 %v5264
      %v5422 = vpop.f32.mrb[0].mxu0
      %v5423 = vadd.f32 %v5319, %v5422
      %v5424 = vpop.f32.mrb[0].mxu0
      %5425 = vmatprep.mubr.f32.mxu0 0.0
      %5426 = vmatmul.mubr.f32.gmra.mrb[0].mxu0 %v5265
      %v5427 = vpop.f32.mrb[0].mxu0
      %v5428 = vadd.f32 %v5319, %v5427
      %v5429 = vpop.f32.mrb[0].mxu0
      %5430 = vmatprep.mubr.f32.mxu0 0.0
      %5431 = vmatmul.mubr.f32.gmra.mrb[0].mxu0 %v5266
      %v5432 = vpop.f32.mrb[0].mxu0
      %v5433 = vadd.f32 %v5319, %v5432
      %v5434 = vpop.f32.mrb[0].mxu0
      %5435 = vmatprep.mubr.f32.mxu0 0.0
      %5436 = vmatmul.mubr.f32.gmra.mrb[0].mxu0 %v5267
      %v5437 = vpop.f32.mrb[0].mxu0
      %v5438 = vadd.f32 %v5319, %v5437
      %v5439 = vpop.f32.mrb[0].mxu0
      %5440 = vmatprep.mubr.f32.mxu0 0.0
      %5441 = vmatmul.mubr.f32.gmra.mrb[0].mxu0 %v5268
      %v5442 = vpop.f32.mrb[0].mxu0
      %v5443 = vadd.f32 %v5319, %v5442
      %v5444 = vpop.f32.mrb[0].mxu0
      %5445 = vmatprep.mubr.f32.mxu0 0.0
      %5446 = vmatmul.mubr.f32.gmra.mrb[0].mxu0 %v5269
      %v5447 = vpop.f32.mrb[0].mxu0
      %v5448 = vadd.f32 %v5319, %v5447
      %v5449 = vpop.f32.mrb[0].mxu0
      %5450 = vmatprep.mubr.f32.mxu0 0.0
      %5451 = vmatmul.mubr.f32.gmra.mrb[0].mxu0 %v5270
      %v5452 = vpop.f32.mrb[0].mxu0
      %v5453 = vadd.f32 %v5319, %v5452
      %v5454 = vpop.f32.mrb[0].mxu0
      %5455 = vmatprep.mubr.f32.mxu0 0.0
      %5456 = vmatmul.mubr.f32.gmra.mrb[0].mxu0 %v5271
      %v5457 = vpop.f32.mrb[0].mxu0
      %v5458 = vadd.f32 %v5319, %v5457
      %v5459 = vpop.f32.mrb[0].mxu0
      %5460 = vmatprep.mubr.f32.mxu0 0.0
      %5461 = vmatmul.mubr.f32.gmra.mrb[0].mxu0 %v5272
      %v5462 = vpop.f32.mrb[0].mxu0
      %v5463 = vadd.f32 %v5319, %v5462
      %v5464 = vpop.f32.mrb[0].mxu0
      %5465 = vmatprep.mubr.f32.mxu0 0.0
      %5466 = vmatmul.mubr.f32.gmra.mrb[0].mxu0 %v5273
      %v5467 = vpop.f32.mrb[0].mxu0
      %v5468 = vadd.f32 %v5319, %v5467
      %v5469 = vpop.f32.mrb[0].mxu0
      %5470 = vmatprep.mubr.f32.mxu0 0.0
      %5471 = vmatmul.mubr.f32.gmra.mrb[0].mxu0 %v5274
      %v5472 = vpop.f32.mrb[0].mxu0
      %v5473 = vadd.f32 %v5319, %v5472
      %v5474 = vpop.f32.mrb[0].mxu0
      %5475 = vmatprep.mubr.f32.mxu0 0.0
      %5476 = vmatmul.mubr.f32.gmra.mrb[0].mxu0 %v5275
      %v5477 = vpop.f32.mrb[0].mxu0
      %v5478 = vadd.f32 %v5319, %v5477
      %v5479 = vpop.f32.mrb[0].mxu0
      %5480 = vmatprep.mubr.f32.mxu0 0.0
      %5481 = vmatmul.mubr.f32.gmra.mrb[0].mxu0 %v5276
      %v5482 = vpop.f32.mrb[0].mxu0
      %v5483 = vadd.f32 %v5319, %v5482
      %v5484 = vpop.f32.mrb[0].mxu0
      %5485 = vmatprep.mubr.f32.mxu0 0.0
      %5486 = vmatmul.mubr.f32.gmra.mrb[0].mxu0 %v5277
      %v5487 = vpop.f32.mrb[0].mxu0
      %v5488 = vadd.f32 %v5319, %v5487
      %v5489 = vpop.f32.mrb[0].mxu0
      %5490 = vmatprep.mubr.f32.mxu0 0.0
      %5491 = vmatmul.mubr.f32.gmra.mrb[0].mxu0 %v5278
      %v5492 = vpop.f32.mrb[0].mxu0
      %v5493 = vadd.f32 %v5319, %v5492
      %v5494 = vpop.f32.mrb[0].mxu0
      %5495 = vmatprep.mubr.f32.mxu0 0.0
      %5496 = vmatmul.mubr.f32.gmra.mrb[0].mxu0 %v5279
      %v5497 = vpop.f32.mrb[0].mxu0
      %v5498 = vadd.f32 %v5319, %v5497
      %v5499 = vpop.f32.mrb[0].mxu0
      %5500 = vmatprep.mubr.f32.mxu0 0.0
      %5501 = vmatmul.mubr.f32.gmra.mrb[0].mxu0 %v5280
      %v5502 = vpop.f32.mrb[0].mxu0
      %v5503 = vadd.f32 %v5319, %v5502
      %v5504 = vpop.f32.mrb[0].mxu0
      %5505 = vmatprep.mubr.f32.mxu0 0.0
      %5506 = vmatmul.mubr.f32.gmra.mrb[0].mxu0 %v5281
      %v5507 = vpop.f32.mrb[0].mxu0
      %v5508 = vadd.f32 %v5319, %v5507
      %v5509 = vpop.f32.mrb[0].mxu0
      %5510 = vmatprep.mubr.f32.mxu0 0.0
      %5511 = vmatmul.mubr.f32.gmra.mrb[0].mxu0 %v5282
      %v5512 = vpop.f32.mrb[0].mxu0
      %v5513 = vadd.f32 %v5319, %v5512
      %v5514 = vpop.f32.mrb[0].mxu0
      %5515 = vmatprep.mubr.f32.mxu0 0.0
      %5516 = vmatmul.mubr.f32.gmra.mrb[0].mxu0 %v5283
      %v5517 = vpop.f32.mrb[0].mxu0
      %v5518 = vadd.f32 %v5319, %v5517
      %v5519 = vpop.f32.mrb[0].mxu0
      %5520 = vmatprep.mubr.f32.mxu0 0.0
      %5521 = vmatmul.mubr.f32.gmra.mrb[0].mxu0 %v5284
      %v5522 = vpop.f32.mrb[0].mxu0
      %v5523 = vadd.f32 %v5319, %v5522
      %v5524 = vpop.f32.mrb[0].mxu0
      %5525 = vmatprep.mubr.f32.mxu0 0.0
      %5526 = vmatmul.mubr.f32.gmra.mrb[0].mxu0 %v5285
      %v5527 = vpop.f32.mrb[0].mxu0
      %v5528 = vadd.f32 %v5319, %v5527
      %v5529 = vpop.f32.mrb[0].mxu0
      %5530 = vmatprep.mubr.f32.mxu0 0.0
      %5531 = vmatmul.mubr.f32.gmra.mrb[0].mxu0 %v5286
      %v5532 = vpop.f32.mrb[0].mxu0
      %v5533 = vadd.f32 %v5319, %v5532
      %v5534 = vpop.f32.mrb[0].mxu0
      %5535 = vmatprep.mubr.f32.mxu0 0.0
      %5536 = vmatmul.mubr.f32.gmra.mrb[0].mxu0 %v5287
      %v5537 = vpop.f32.mrb[0].mxu0
      %v5538 = vadd.f32 %v5319, %v5537
      %v5539 = vpop.f32.mrb[0].mxu0
      %5540 = vmatprep.mubr.f32.mxu0 0.0
      %5541 = vmatmul.mubr.f32.gmra.mrb[0].mxu0 %v5288
      %v5542 = vpop.f32.mrb[0].mxu0
      %v5543 = vadd.f32 %v5319, %v5542
      %v5544 = vpop.f32.mrb[0].mxu0
      %5545 = vmatprep.mubr.f32.mxu0 0.0
      %5546 = vmatmul.mubr.f32.gmra.mrb[0].mxu0 %v5289
      %v5547 = vpop.f32.mrb[0].mxu0
      %v5548 = vadd.f32 %v5319, %v5547
      %v5549 = vpop.f32.mrb[0].mxu0
      %5550 = vmatprep.mubr.f32.mxu0 0.0
      %5551 = vmatmul.mubr.f32.gmra.mrb[0].mxu0 %v5290
      %v5552 = vpop.f32.mrb[0].mxu0
      %v5553 = vadd.f32 %v5319, %v5552
      %v5554 = vpop.f32.mrb[0].mxu0
      %5555 = vmatprep.mubr.f32.mxu0 0.0
      %5556 = vmatmul.mubr.f32.gmra.mrb[0].mxu0 %v5291
      %v5557 = vpop.f32.mrb[0].mxu0
      %v5558 = vadd.f32 %v5319, %v5557
      %v5559 = vpop.f32.mrb[0].mxu0
      %5560 = vmatprep.mubr.f32.mxu0 0.0
      %5561 = vmatmul.mubr.f32.gmra.mrb[0].mxu0 %v5292
      %v5562 = vpop.f32.mrb[0].mxu0
      %v5563 = vadd.f32 %v5319, %v5562
      %v5564 = vpop.f32.mrb[0].mxu0
      %5565 = vmatprep.mubr.f32.mxu0 0.0
      %5566 = vmatmul.mubr.f32.gmra.mrb[0].mxu0 %v5293
      %v5567 = vpop.f32.mrb[0].mxu0
      %v5568 = vadd.f32 %v5319, %v5567
      %v5569 = vpop.f32.mrb[0].mxu0
      %5570 = vmatprep.mubr.f32.mxu0 0.0
      %5571 = vmatmul.mubr.f32.gmra.mrb[0].mxu0 %v5294
      %v5572 = vpop.f32.mrb[0].mxu0
      %v5573 = vadd.f32 %v5319, %v5572
      %v5574 = vpop.f32.mrb[0].mxu0
      %5575 = vmatprep.mubr.f32.mxu0 0.0
      %5576 = vmatmul.mubr.f32.gmra.mrb[0].mxu0 %v5295
      %v5577 = vpop.f32.mrb[0].mxu0
      %v5578 = vadd.f32 %v5319, %v5577
      %v5579 = vpop.f32.mrb[0].mxu0
      %5580 = vmatprep.mubr.f32.mxu0 0.0
      %5581 = vmatmul.mubr.f32.gmra.mrb[0].mxu0 %v5296
      %v5582 = vpop.f32.mrb[0].mxu0
      %v5583 = vadd.f32 %v5319, %v5582
      %v5584 = vpop.f32.mrb[0].mxu0
      %5585 = vmatprep.mubr.f32.mxu0 0.0
      %5586 = vmatmul.mubr.f32.gmra.mrb[0].mxu0 %v5297
      %v5587 = vpop.f32.mrb[0].mxu0
      %v5588 = vadd.f32 %v5319, %v5587
      %v5589 = vpop.f32.mrb[0].mxu0
      %5590 = vdwg.mxu0
      %v5591 = vld [vmem:[%s8] sm:$0xff]
      %v5592 = vld [vmem:[%s8 + $0x8] sm:$0xff]
      %v5593 = vld [vmem:[%s8 + $0x10] sm:$0xff]
      %v5594 = vld [vmem:[%s8 + $0x18] sm:$0xff]
      %v5595 = vld [vmem:[%s8 + $0x20] sm:$0xff]
      %v5596 = vld [vmem:[%s8 + $0x28] sm:$0xff]
      %v5597 = vld [vmem:[%s8 + $0x30] sm:$0xff]
      %v5598 = vld [vmem:[%s8 + $0x38] sm:$0xff]
      %v5599 = vld [vmem:[%s8 + $0x40] sm:$0xff]
      %v5600 = vld [vmem:[%s8 + $0x48] sm:$0xff]
      %v5601 = vld [vmem:[%s8 + $0x50] sm:$0xff]
      %v5602 = vld [vmem:[%s8 + $0x58] sm:$0xff]
      %v5603 = vld [vmem:[%s8 + $0x60] sm:$0xff]
      %v5604 = vld [vmem:[%s8 + $0x68] sm:$0xff]
      %v5605 = vld [vmem:[%s8 + $0x70] sm:$0xff]
      %v5606 = vld [vmem:[%s8 + $0x78] sm:$0xff]
      %v5607 = vld [vmem:[%s9] sm:$0x1]
      %v5609 = vlaneseq
      %v5610 = vshrl.u32 %v5609, 7
      %v5611 = vsub.s32 0, %v5610
      %v5612 = vrot.slane %v5607, %v5611
      %5614 = vmatprep.subr.mxu0 0.0
      %5615 = vmatpush1.msra.mxu0 %v5591
      %5616 = vmatprep.subr.mxu0 0.0
      %5617 = vmatpush1.msra.mxu0 %v5592
      %5618 = vmatprep.subr.mxu0 0.0
      %5619 = vmatpush1.msra.mxu0 %v5593
      %5620 = vmatprep.subr.mxu0 0.0
      %5621 = vmatpush1.msra.mxu0 %v5594
      %5622 = vmatprep.subr.mxu0 0.0
      %5623 = vmatpush1.msra.mxu0 %v5595
      %5624 = vmatprep.subr.mxu0 0.0
      %5625 = vmatpush1.msra.mxu0 %v5596
      %5626 = vmatprep.subr.mxu0 0.0
      %5627 = vmatpush1.msra.mxu0 %v5597
      %5628 = vmatprep.subr.mxu0 0.0
      %5629 = vmatpush1.msra.mxu0 %v5598
      %5630 = vmatprep.subr.mxu0 0.0
      %5631 = vmatpush1.msra.mxu0 %v5599
      %5632 = vmatprep.subr.mxu0 0.0
      %5633 = vmatpush1.msra.mxu0 %v5600
      %5634 = vmatprep.subr.mxu0 0.0
      %5635 = vmatpush1.msra.mxu0 %v5601
      %5636 = vmatprep.subr.mxu0 0.0
      %5637 = vmatpush1.msra.mxu0 %v5602
      %5638 = vmatprep.subr.mxu0 0.0
      %5639 = vmatpush1.msra.mxu0 %v5603
      %5640 = vmatprep.subr.mxu0 0.0
      %5641 = vmatpush1.msra.mxu0 %v5604
      %5642 = vmatprep.subr.mxu0 0.0
      %5643 = vmatpush1.msra.mxu0 %v5605
      %5644 = vmatprep.subr.mxu0 0.0
      %5645 = vmatpush1.msra.mxu0 %v5606
      %5646 = vmatprep.subr.mxu0 0.0
      %5647 = vmatpush1.msra.mxu0 0.0
      %5648 = vmatprep.subr.mxu0 0.0
      %5649 = vmatpush1.msra.mxu0 0.0
      %5650 = vmatprep.subr.mxu0 0.0
      %5651 = vmatpush1.msra.mxu0 0.0
      %5652 = vmatprep.subr.mxu0 0.0
      %5653 = vmatpush1.msra.mxu0 0.0
      %5654 = vmatprep.subr.mxu0 0.0
      %5655 = vmatpush1.msra.mxu0 0.0
      %5656 = vmatprep.subr.mxu0 0.0
      %5657 = vmatpush1.msra.mxu0 0.0
      %5658 = vmatprep.subr.mxu0 0.0
      %5659 = vmatpush1.msra.mxu0 0.0
      %5660 = vmatprep.subr.mxu0 0.0
      %5661 = vmatpush1.msra.mxu0 0.0
      %5662 = vmatprep.subr.mxu0 0.0
      %5663 = vmatpush1.msra.mxu0 0.0
      %5664 = vmatprep.subr.mxu0 0.0
      %5665 = vmatpush1.msra.mxu0 0.0
      %5666 = vmatprep.subr.mxu0 0.0
      %5667 = vmatpush1.msra.mxu0 0.0
      %5668 = vmatprep.subr.mxu0 0.0
      %5669 = vmatpush1.msra.mxu0 0.0
      %5670 = vmatprep.subr.mxu0 0.0
      %5671 = vmatpush1.msra.mxu0 0.0
      %5672 = vmatprep.subr.mxu0 0.0
      %5673 = vmatpush1.msra.mxu0 0.0
      %5674 = vmatprep.subr.mxu0 0.0
      %5675 = vmatpush1.msra.mxu0 0.0
      %5676 = vmatprep.subr.mxu0 0.0
      %5677 = vmatpush1.msra.mxu0 0.0
      %5678 = vmatprep.mubr.f32.mxu0 0.0
      %5679 = vmatmul.mubr.f32.gmra.mrb[0].mxu0 %v360
      %v5680 = vpop.f32.mrb[0].mxu0
      %v5681 = vadd.f32 %v5612, %v5680
      %v5682 = vpop.f32.mrb[0].mxu0
      %5683 = vmatprep.mubr.f32.mxu0 0.0
      %5684 = vmatmul.mubr.f32.gmra.mrb[0].mxu0 %v361
      %v5685 = vpop.f32.mrb[0].mxu0
      %v5686 = vadd.f32 %v5612, %v5685
      %v5687 = vpop.f32.mrb[0].mxu0
      %5688 = vmatprep.mubr.f32.mxu0 0.0
      %5689 = vmatmul.mubr.f32.gmra.mrb[0].mxu0 %v362
      %v5690 = vpop.f32.mrb[0].mxu0
      %v5691 = vadd.f32 %v5612, %v5690
      %v5692 = vpop.f32.mrb[0].mxu0
      %5693 = vmatprep.mubr.f32.mxu0 0.0
      %5694 = vmatmul.mubr.f32.gmra.mrb[0].mxu0 %v363
      %v5695 = vpop.f32.mrb[0].mxu0
      %v5696 = vadd.f32 %v5612, %v5695
      %v5697 = vpop.f32.mrb[0].mxu0
      %5698 = vmatprep.mubr.f32.mxu0 0.0
      %5699 = vmatmul.mubr.f32.gmra.mrb[0].mxu0 %v364
      %v5700 = vpop.f32.mrb[0].mxu0
      %v5701 = vadd.f32 %v5612, %v5700
      %v5702 = vpop.f32.mrb[0].mxu0
      %5703 = vmatprep.mubr.f32.mxu0 0.0
      %5704 = vmatmul.mubr.f32.gmra.mrb[0].mxu0 %v365
      %v5705 = vpop.f32.mrb[0].mxu0
      %v5706 = vadd.f32 %v5612, %v5705
      %v5707 = vpop.f32.mrb[0].mxu0
      %5708 = vmatprep.mubr.f32.mxu0 0.0
      %5709 = vmatmul.mubr.f32.gmra.mrb[0].mxu0 %v366
      %v5710 = vpop.f32.mrb[0].mxu0
      %v5711 = vadd.f32 %v5612, %v5710
      %v5712 = vpop.f32.mrb[0].mxu0
      %5713 = vmatprep.mubr.f32.mxu0 0.0
      %5714 = vmatmul.mubr.f32.gmra.mrb[0].mxu0 %v367
      %v5715 = vpop.f32.mrb[0].mxu0
      %v5716 = vadd.f32 %v5612, %v5715
      %v5717 = vpop.f32.mrb[0].mxu0
      %5718 = vmatprep.mubr.f32.mxu0 0.0
      %5719 = vmatmul.mubr.f32.gmra.mrb[0].mxu0 %v368
      %v5720 = vpop.f32.mrb[0].mxu0
      %v5721 = vadd.f32 %v5612, %v5720
      %v5722 = vpop.f32.mrb[0].mxu0
      %5723 = vmatprep.mubr.f32.mxu0 0.0
      %5724 = vmatmul.mubr.f32.gmra.mrb[0].mxu0 %v369
      %v5725 = vpop.f32.mrb[0].mxu0
      %v5726 = vadd.f32 %v5612, %v5725
      %v5727 = vpop.f32.mrb[0].mxu0
      %5728 = vmatprep.mubr.f32.mxu0 0.0
      %5729 = vmatmul.mubr.f32.gmra.mrb[0].mxu0 %v370
      %v5730 = vpop.f32.mrb[0].mxu0
      %v5731 = vadd.f32 %v5612, %v5730
      %v5732 = vpop.f32.mrb[0].mxu0
      %5733 = vmatprep.mubr.f32.mxu0 0.0
      %5734 = vmatmul.mubr.f32.gmra.mrb[0].mxu0 %v371
      %v5735 = vpop.f32.mrb[0].mxu0
      %v5736 = vadd.f32 %v5612, %v5735
      %v5737 = vpop.f32.mrb[0].mxu0
      %5738 = vmatprep.mubr.f32.mxu0 0.0
      %5739 = vmatmul.mubr.f32.gmra.mrb[0].mxu0 %v372
      %v5740 = vpop.f32.mrb[0].mxu0
      %v5741 = vadd.f32 %v5612, %v5740
      %v5742 = vpop.f32.mrb[0].mxu0
      %5743 = vmatprep.mubr.f32.mxu0 0.0
      %5744 = vmatmul.mubr.f32.gmra.mrb[0].mxu0 %v373
      %v5745 = vpop.f32.mrb[0].mxu0
      %v5746 = vadd.f32 %v5612, %v5745
      %v5747 = vpop.f32.mrb[0].mxu0
      %5748 = vmatprep.mubr.f32.mxu0 0.0
      %5749 = vmatmul.mubr.f32.gmra.mrb[0].mxu0 %v374
      %v5750 = vpop.f32.mrb[0].mxu0
      %v5751 = vadd.f32 %v5612, %v5750
      %v5752 = vpop.f32.mrb[0].mxu0
      %5753 = vmatprep.mubr.f32.mxu0 0.0
      %5754 = vmatmul.mubr.f32.gmra.mrb[0].mxu0 %v375
      %v5755 = vpop.f32.mrb[0].mxu0
      %v5756 = vadd.f32 %v5612, %v5755
      %v5757 = vpop.f32.mrb[0].mxu0
      %5758 = vmatprep.mubr.f32.mxu0 0.0
      %5759 = vmatmul.mubr.f32.gmra.mrb[0].mxu0 %v376
      %v5760 = vpop.f32.mrb[0].mxu0
      %v5761 = vadd.f32 %v5612, %v5760
      %v5762 = vpop.f32.mrb[0].mxu0
      %5763 = vmatprep.mubr.f32.mxu0 0.0
      %5764 = vmatmul.mubr.f32.gmra.mrb[0].mxu0 %v377
      %v5765 = vpop.f32.mrb[0].mxu0
      %v5766 = vadd.f32 %v5612, %v5765
      %v5767 = vpop.f32.mrb[0].mxu0
      %5768 = vmatprep.mubr.f32.mxu0 0.0
      %5769 = vmatmul.mubr.f32.gmra.mrb[0].mxu0 %v378
      %v5770 = vpop.f32.mrb[0].mxu0
      %v5771 = vadd.f32 %v5612, %v5770
      %v5772 = vpop.f32.mrb[0].mxu0
      %5773 = vmatprep.mubr.f32.mxu0 0.0
      %5774 = vmatmul.mubr.f32.gmra.mrb[0].mxu0 %v379
      %v5775 = vpop.f32.mrb[0].mxu0
      %v5776 = vadd.f32 %v5612, %v5775
      %v5777 = vpop.f32.mrb[0].mxu0
      %5778 = vmatprep.mubr.f32.mxu0 0.0
      %5779 = vmatmul.mubr.f32.gmra.mrb[0].mxu0 %v380
      %v5780 = vpop.f32.mrb[0].mxu0
      %v5781 = vadd.f32 %v5612, %v5780
      %v5782 = vpop.f32.mrb[0].mxu0
      %5783 = vmatprep.mubr.f32.mxu0 0.0
      %5784 = vmatmul.mubr.f32.gmra.mrb[0].mxu0 %v381
      %v5785 = vpop.f32.mrb[0].mxu0
      %v5786 = vadd.f32 %v5612, %v5785
      %v5787 = vpop.f32.mrb[0].mxu0
      %5788 = vmatprep.mubr.f32.mxu0 0.0
      %5789 = vmatmul.mubr.f32.gmra.mrb[0].mxu0 %v382
      %v5790 = vpop.f32.mrb[0].mxu0
      %v5791 = vadd.f32 %v5612, %v5790
      %v5792 = vpop.f32.mrb[0].mxu0
      %5793 = vmatprep.mubr.f32.mxu0 0.0
      %5794 = vmatmul.mubr.f32.gmra.mrb[0].mxu0 %v383
      %v5795 = vpop.f32.mrb[0].mxu0
      %v5796 = vadd.f32 %v5612, %v5795
      %v5797 = vpop.f32.mrb[0].mxu0
      %5798 = vmatprep.mubr.f32.mxu0 0.0
      %5799 = vmatmul.mubr.f32.gmra.mrb[0].mxu0 %v384
      %v5800 = vpop.f32.mrb[0].mxu0
      %v5801 = vadd.f32 %v5612, %v5800
      %v5802 = vpop.f32.mrb[0].mxu0
      %5803 = vmatprep.mubr.f32.mxu0 0.0
      %5804 = vmatmul.mubr.f32.gmra.mrb[0].mxu0 %v385
      %v5805 = vpop.f32.mrb[0].mxu0
      %v5806 = vadd.f32 %v5612, %v5805
      %v5807 = vpop.f32.mrb[0].mxu0
      %5808 = vmatprep.mubr.f32.mxu0 0.0
      %5809 = vmatmul.mubr.f32.gmra.mrb[0].mxu0 %v386
      %v5810 = vpop.f32.mrb[0].mxu0
      %v5811 = vadd.f32 %v5612, %v5810
      %v5812 = vpop.f32.mrb[0].mxu0
      %5813 = vmatprep.mubr.f32.mxu0 0.0
      %5814 = vmatmul.mubr.f32.gmra.mrb[0].mxu0 %v387
      %v5815 = vpop.f32.mrb[0].mxu0
      %v5816 = vadd.f32 %v5612, %v5815
      %v5817 = vpop.f32.mrb[0].mxu0
      %5818 = vmatprep.mubr.f32.mxu0 0.0
      %5819 = vmatmul.mubr.f32.gmra.mrb[0].mxu0 %v388
      %v5820 = vpop.f32.mrb[0].mxu0
      %v5821 = vadd.f32 %v5612, %v5820
      %v5822 = vpop.f32.mrb[0].mxu0
      %5823 = vmatprep.mubr.f32.mxu0 0.0
      %5824 = vmatmul.mubr.f32.gmra.mrb[0].mxu0 %v389
      %v5825 = vpop.f32.mrb[0].mxu0
      %v5826 = vadd.f32 %v5612, %v5825
      %v5827 = vpop.f32.mrb[0].mxu0
      %5828 = vmatprep.mubr.f32.mxu0 0.0
      %5829 = vmatmul.mubr.f32.gmra.mrb[0].mxu0 %v390
      %v5830 = vpop.f32.mrb[0].mxu0
      %v5831 = vadd.f32 %v5612, %v5830
      %v5832 = vpop.f32.mrb[0].mxu0
      %5833 = vmatprep.mubr.f32.mxu0 0.0
      %5834 = vmatmul.mubr.f32.gmra.mrb[0].mxu0 %v391
      %v5835 = vpop.f32.mrb[0].mxu0
      %v5836 = vadd.f32 %v5612, %v5835
      %v5837 = vpop.f32.mrb[0].mxu0
      %5838 = vmatprep.mubr.f32.mxu0 0.0
      %5839 = vmatmul.mubr.f32.gmra.mrb[0].mxu0 %v392
      %v5840 = vpop.f32.mrb[0].mxu0
      %v5841 = vadd.f32 %v5612, %v5840
      %v5842 = vpop.f32.mrb[0].mxu0
      %5843 = vmatprep.mubr.f32.mxu0 0.0
      %5844 = vmatmul.mubr.f32.gmra.mrb[0].mxu0 %v393
      %v5845 = vpop.f32.mrb[0].mxu0
      %v5846 = vadd.f32 %v5612, %v5845
      %v5847 = vpop.f32.mrb[0].mxu0
      %5848 = vmatprep.mubr.f32.mxu0 0.0
      %5849 = vmatmul.mubr.f32.gmra.mrb[0].mxu0 %v394
      %v5850 = vpop.f32.mrb[0].mxu0
      %v5851 = vadd.f32 %v5612, %v5850
      %v5852 = vpop.f32.mrb[0].mxu0
      %5853 = vmatprep.mubr.f32.mxu0 0.0
      %5854 = vmatmul.mubr.f32.gmra.mrb[0].mxu0 %v395
      %v5855 = vpop.f32.mrb[0].mxu0
      %v5856 = vadd.f32 %v5612, %v5855
      %v5857 = vpop.f32.mrb[0].mxu0
      %5858 = vmatprep.mubr.f32.mxu0 0.0
      %5859 = vmatmul.mubr.f32.gmra.mrb[0].mxu0 %v396
      %v5860 = vpop.f32.mrb[0].mxu0
      %v5861 = vadd.f32 %v5612, %v5860
      %v5862 = vpop.f32.mrb[0].mxu0
      %5863 = vmatprep.mubr.f32.mxu0 0.0
      %5864 = vmatmul.mubr.f32.gmra.mrb[0].mxu0 %v397
      %v5865 = vpop.f32.mrb[0].mxu0
      %v5866 = vadd.f32 %v5612, %v5865
      %v5867 = vpop.f32.mrb[0].mxu0
      %5868 = vmatprep.mubr.f32.mxu0 0.0
      %5869 = vmatmul.mubr.f32.gmra.mrb[0].mxu0 %v398
      %v5870 = vpop.f32.mrb[0].mxu0
      %v5871 = vadd.f32 %v5612, %v5870
      %v5872 = vpop.f32.mrb[0].mxu0
      %5873 = vmatprep.mubr.f32.mxu0 0.0
      %5874 = vmatmul.mubr.f32.gmra.mrb[0].mxu0 %v399
      %v5875 = vpop.f32.mrb[0].mxu0
      %v5876 = vadd.f32 %v5612, %v5875
      %v5877 = vpop.f32.mrb[0].mxu0
      %5878 = vmatprep.mubr.f32.mxu0 0.0
      %5879 = vmatmul.mubr.f32.gmra.mrb[0].mxu0 %v400
      %v5880 = vpop.f32.mrb[0].mxu0
      %v5881 = vadd.f32 %v5612, %v5880
      %v5882 = vpop.f32.mrb[0].mxu0
      %5883 = vdwg.mxu0
      %v5884 = vadd.f32 %v5388, %v5681
      %v5885 = vadd.f32 %v5393, %v5686
      %v5886 = vadd.f32 %v5398, %v5691
      %v5887 = vadd.f32 %v5403, %v5696
      %v5888 = vadd.f32 %v5408, %v5701
      %v5889 = vadd.f32 %v5413, %v5706
      %v5890 = vadd.f32 %v5418, %v5711
      %v5891 = vadd.f32 %v5423, %v5716
      %v5892 = vadd.f32 %v5428, %v5721
      %v5893 = vadd.f32 %v5433, %v5726
      %v5894 = vadd.f32 %v5438, %v5731
      %v5895 = vadd.f32 %v5443, %v5736
      %v5896 = vadd.f32 %v5448, %v5741
      %v5897 = vadd.f32 %v5453, %v5746
      %v5898 = vadd.f32 %v5458, %v5751
      %v5899 = vadd.f32 %v5463, %v5756
      %v5900 = vadd.f32 %v5468, %v5761
      %v5901 = vadd.f32 %v5473, %v5766
      %v5902 = vadd.f32 %v5478, %v5771
      %v5903 = vadd.f32 %v5483, %v5776
      %v5904 = vadd.f32 %v5488, %v5781
      %v5905 = vadd.f32 %v5493, %v5786
      %v5906 = vadd.f32 %v5498, %v5791
      %v5907 = vadd.f32 %v5503, %v5796
      %v5908 = vadd.f32 %v5508, %v5801
      %v5909 = vadd.f32 %v5513, %v5806
      %v5910 = vadd.f32 %v5518, %v5811
      %v5911 = vadd.f32 %v5523, %v5816
      %v5912 = vadd.f32 %v5528, %v5821
      %v5913 = vadd.f32 %v5533, %v5826
      %v5914 = vadd.f32 %v5538, %v5831
      %v5915 = vadd.f32 %v5543, %v5836
      %v5916 = vadd.f32 %v5548, %v5841
      %v5917 = vadd.f32 %v5553, %v5846
      %v5918 = vadd.f32 %v5558, %v5851
      %v5919 = vadd.f32 %v5563, %v5856
      %v5920 = vadd.f32 %v5568, %v5861
      %v5921 = vadd.f32 %v5573, %v5866
      %v5922 = vadd.f32 %v5578, %v5871
      %v5923 = vadd.f32 %v5583, %v5876
      %v5924 = vadd.f32 %v5588, %v5881
      %v5925 = vmax.f32 %v5884, 0.0
      %v5926 = vmax.f32 %v5885, 0.0
      %v5927 = vmax.f32 %v5886, 0.0
      %v5928 = vmax.f32 %v5887, 0.0
      %v5929 = vmax.f32 %v5888, 0.0
      %v5930 = vmax.f32 %v5889, 0.0
      %v5931 = vmax.f32 %v5890, 0.0
      %v5932 = vmax.f32 %v5891, 0.0
      %v5933 = vmax.f32 %v5892, 0.0
      %v5934 = vmax.f32 %v5893, 0.0
      %v5935 = vmax.f32 %v5894, 0.0
      %v5936 = vmax.f32 %v5895, 0.0
      %v5937 = vmax.f32 %v5896, 0.0
      %v5938 = vmax.f32 %v5897, 0.0
      %v5939 = vmax.f32 %v5898, 0.0
      %v5940 = vmax.f32 %v5899, 0.0
      %v5941 = vmax.f32 %v5900, 0.0
      %v5942 = vmax.f32 %v5901, 0.0
      %v5943 = vmax.f32 %v5902, 0.0
      %v5944 = vmax.f32 %v5903, 0.0
      %v5945 = vmax.f32 %v5904, 0.0
      %v5946 = vmax.f32 %v5905, 0.0
      %v5947 = vmax.f32 %v5906, 0.0
      %v5948 = vmax.f32 %v5907, 0.0
      %v5949 = vmax.f32 %v5908, 0.0
      %v5950 = vmax.f32 %v5909, 0.0
      %v5951 = vmax.f32 %v5910, 0.0
      %v5952 = vmax.f32 %v5911, 0.0
      %v5953 = vmax.f32 %v5912, 0.0
      %v5954 = vmax.f32 %v5913, 0.0
      %v5955 = vmax.f32 %v5914, 0.0
      %v5956 = vmax.f32 %v5915, 0.0
      %v5957 = vmax.f32 %v5916, 0.0
      %v5958 = vmax.f32 %v5917, 0.0
      %v5959 = vmax.f32 %v5918, 0.0
      %v5960 = vmax.f32 %v5919, 0.0
      %v5961 = vmax.f32 %v5920, 0.0
      %v5962 = vmax.f32 %v5921, 0.0
      %v5963 = vmax.f32 %v5922, 0.0
      %v5964 = vmax.f32 %v5923, 0.0
      %v5965 = vmax.f32 %v5924, 0.0
      %5966 = vst [vmem:[%s359] sm:$0xff] %v5925
      %5967 = vst [vmem:[%s359 + $0x8] sm:$0xff] %v5926
      %5968 = vst [vmem:[%s359 + $0x10] sm:$0xff] %v5927
      %5969 = vst [vmem:[%s359 + $0x18] sm:$0xff] %v5928
      %5970 = vst [vmem:[%s359 + $0x20] sm:$0xff] %v5929
      %5971 = vst [vmem:[%s359 + $0x28] sm:$0xff] %v5930
      %5972 = vst [vmem:[%s359 + $0x30] sm:$0xff] %v5931
      %5973 = vst [vmem:[%s359 + $0x38] sm:$0xff] %v5932
      %5974 = vst [vmem:[%s359 + $0x40] sm:$0xff] %v5933
      %5975 = vst [vmem:[%s359 + $0x48] sm:$0xff] %v5934
      %5976 = vst [vmem:[%s359 + $0x50] sm:$0xff] %v5935
      %5977 = vst [vmem:[%s359 + $0x58] sm:$0xff] %v5936
      %5978 = vst [vmem:[%s359 + $0x60] sm:$0xff] %v5937
      %5979 = vst [vmem:[%s359 + $0x68] sm:$0xff] %v5938
      %5980 = vst [vmem:[%s359 + $0x70] sm:$0xff] %v5939
      %5981 = vst [vmem:[%s359 + $0x78] sm:$0xff] %v5940
      %5982 = vst [vmem:[%s359 + $0x80] sm:$0xff] %v5941
      %5983 = vst [vmem:[%s359 + $0x88] sm:$0xff] %v5942
      %5984 = vst [vmem:[%s359 + $0x90] sm:$0xff] %v5943
      %5985 = vst [vmem:[%s359 + $0x98] sm:$0xff] %v5944
      %5986 = vst [vmem:[%s359 + $0xa0] sm:$0xff] %v5945
      %5987 = vst [vmem:[%s359 + $0xa8] sm:$0xff] %v5946
      %5988 = vst [vmem:[%s359 + $0xb0] sm:$0xff] %v5947
      %5989 = vst [vmem:[%s359 + $0xb8] sm:$0xff] %v5948
      %5990 = vst [vmem:[%s359 + $0xc0] sm:$0xff] %v5949
      %5991 = vst [vmem:[%s359 + $0xc8] sm:$0xff] %v5950
      %5992 = vst [vmem:[%s359 + $0xd0] sm:$0xff] %v5951
      %5993 = vst [vmem:[%s359 + $0xd8] sm:$0xff] %v5952
      %5994 = vst [vmem:[%s359 + $0xe0] sm:$0xff] %v5953
      %5995 = vst [vmem:[%s359 + $0xe8] sm:$0xff] %v5954
      %5996 = vst [vmem:[%s359 + $0xf0] sm:$0xff] %v5955
      %5997 = vst [vmem:[%s359 + $0xf8] sm:$0xff] %v5956
      %5998 = vst [vmem:[%s359 + $0x100] sm:$0xff] %v5957
      %5999 = vst [vmem:[%s359 + $0x108] sm:$0xff] %v5958
      %6000 = vst [vmem:[%s359 + $0x110] sm:$0xff] %v5959
      %6001 = vst [vmem:[%s359 + $0x118] sm:$0xff] %v5960
      %6002 = vst [vmem:[%s359 + $0x120] sm:$0xff] %v5961
      %6003 = vst [vmem:[%s359 + $0x128] sm:$0xff] %v5962
      %6004 = vst [vmem:[%s359 + $0x130] sm:$0xff] %v5963
      %6005 = vst [vmem:[%s359 + $0x138] sm:$0xff] %v5964
      %6006 = vst [vmem:[%s359 + $0x140] sm:$0xff] %v5965
      %p6007 = scmp.lt.s32.totalorder %s21, 1
      %s6008 = scalar_select %p6007, %s21, 1
      %s6009 = smul.addr %s6008, 41
      %s6010 = smul.addr %s6009, 8
      %s6011 = scalar_lea.vmem %s10, %s6010
      // Predicated region
      $region61: #{bottleneck_forward.1} parent=59 // pred_check
        %p6012 = pneg %p254
      $region62: #{bottleneck_forward.1} parent=59 // pred_check_branch
        %6014 = sbr.rel (%p6012) target = $region64
      $region63: #{bottleneck_forward.1} parent=59 // pred_region
        _
      $region64: #{bottleneck_forward.1} parent=59 // pred_fallthru
        _
    $region60: #{bottleneck_forward.1} parent=5 // pred_fallthru
      _
    %p6015 = scmp.le.s32.totalorder 2, %s16
    // Predicated region
    $region65: #{bottleneck_forward.1} parent=5 // pred_check
      %p6016 = pneg %p6015
    $region66: #{bottleneck_forward.1} parent=5 // pred_check_branch
      %6018 = sbr.rel (%p6016) target = $region68
    $region67: #{bottleneck_forward.1} parent=5 // pred_region
      %s6019 = ssub.s32 %s16, 2
      // Predicated region
      $region69: #{bottleneck_forward.1} parent=67 // pred_check
        %p6020 = pneg %p260
      $region70: #{bottleneck_forward.1} parent=67 // pred_check_branch
        %6022 = sbr.rel (%p6020) target = $region72
      $region71: #{bottleneck_forward.1} parent=67 // pred_region
        %p6023 = scmp.lt.s32.totalorder %s22, 1
        %s6024 = scalar_select %p6023, %s22, 1
        %s6025 = smul.addr %s6024, 41
        %s6026 = smul.addr %s6025, 8
        %s6027 = scalar_lea.vmem %s10, %s6026
      $region72: #{bottleneck_forward.1} parent=67 // pred_fallthru
        _
    $region68: #{bottleneck_forward.1} parent=5 // pred_fallthru
      _
  $region6: #{bottleneck_forward.1} parent=0 // loop_footer
    %s20 = sadd.s32 1, %s16
  $region7: #{bottleneck_forward.1} parent=0 // loop_footer_branch
    %15 = sbr.rel target = $region3
  $region8: #{bottleneck_forward.1} parent=0 // loop_exit
    _

</llo_original>
